<compile_context>
chip_gen: v5e
topology: v5e:2x2
jax: 0.10.0
libtpu: 0.0.40
codegen_flags: <defaults>
</compile_context>

<pallas_src>
import jax
import jax.numpy as jnp
from jax.experimental import pallas as pl
from jax.experimental.pallas import tpu as pltpu

H = 32
W = 32
P = H * W          # 1024 spatial positions (H=W=32 required by the 32x32 conv1_5)
C_IN = 1024        # conv1_1 input channels
TILE_P = P         # full-sample pixel tile by default (use 512 on v5e)


def _conv_chain(x_bf16, w1, w2, w3, pb, b4):
    """Shared conv1_1..conv1_4 chain on a channels-first (C_IN, TP) tile.

    x_bf16 : (C_IN, TP) bf16
    w1     : (128, C_IN) bf16 (BN-folded)
    w2     : (32, 128) f32, w3: (8, 32) f32 (BN-folded)
    pb     : (176, 1) f32 packed [b1(128); b2(32); b3(8); conv1_4 weight(8)]
    b4     : scalar f32 (conv1_4 bias)
    returns: (1, TP) f32 — relu(conv1_4(...)) activations for this tile
    """
    b1 = pb[0:128, :]
    b2 = pb[128:160, :]
    b3 = pb[160:168, :]
    w4 = pb[168:176, :]
    # conv1_1 + bn1_1 + relu — bf16 MXU matmul, f32 accumulation
    h = jnp.dot(w1, x_bf16, preferred_element_type=jnp.float32)
    h = jax.nn.relu(h + b1)                                                   # (128, TP)
    # conv1_2 + bn1_2 + relu
    h = jax.nn.relu(jnp.dot(w2, h, preferred_element_type=jnp.float32) + b2)  # (32, TP)
    # conv1_3 + bn1_3 + relu
    h = jax.nn.relu(jnp.dot(w3, h, preferred_element_type=jnp.float32) + b3)  # (8, TP)
    # conv1_4 (8 -> 1) + relu: lane-dense 8-sublane reduce
    h = jax.nn.relu(jnp.sum(h * w4, axis=0, keepdims=True) + b4)              # (1, TP)
    return h


def _fusion_kernel_full(x_ref, w1_ref, w2_ref, w3_ref, pb_ref, w5_ref,
                        scal_ref, o_ref):
    """One sample per grid step (tile covers all P pixels; no accumulator)."""
    x = x_ref[0].astype(jnp.bfloat16)                                         # (C_IN, P)
    h = _conv_chain(x, w1_ref[...], w2_ref[...], w3_ref[...], pb_ref[...],
                    scal_ref[0])                                              # (1, P)
    # conv1_5 (32x32, valid) + relu: weighted lane reduce over all pixels
    s = jnp.sum(h * w5_ref[...], axis=1, keepdims=True) + scal_ref[1]         # (1, 1)
    o_ref[0] = jax.nn.relu(s)


def _fusion_kernel_tiled(x_ref, w1_ref, w2_ref, w3_ref, pb_ref, w5_ref,
                         scal_ref, o_ref, acc_ref):
    """Pixel-tiled variant (tile_p < P): conv1_5 partials accumulate in VMEM."""
    k = pl.program_id(1)

    @pl.when(k == 0)
    def _init():
        acc_ref[...] = jnp.zeros_like(acc_ref)

    x = x_ref[0].astype(jnp.bfloat16)                                         # (C_IN, TP)
    h = _conv_chain(x, w1_ref[...], w2_ref[...], w3_ref[...], pb_ref[...],
                    scal_ref[0])                                              # (1, TP)
    acc_ref[...] += jnp.sum(h * w5_ref[...], axis=1, keepdims=True)           # (1, 1)

    @pl.when(k == pl.num_programs(1) - 1)
    def _finish():
        o_ref[0] = jax.nn.relu(acc_ref[...] + scal_ref[1])


def agent_weighted_fusion(x, params, *, tile_p=TILE_P):
    """x: (..., 1024, H, W) NCHW, exactly as the PyTorch module's forward().

    x is passed to the kernel in its native dtype (f32 or bf16); the bf16 cast
    for the first matmul happens inside the kernel so no extra HBM pass is
    spent on a standalone convert.  Pass bf16 upstream where possible
    (strongly recommended on v5e).
    """
    # x = x.view(-1, C, H, W); then (N, C, H*W) — both are free views of NCHW.
    x = x.reshape(-1, x.shape[-3], x.shape[-2], x.shape[-1])
    n = x.shape[0]
    assert x.shape[1:] == (C_IN, H, W), x.shape
    assert P % tile_p == 0
    x_ncp = x.reshape(n, C_IN, P)                             # channels-first, native dtype

    # Kernel-layout parameters (weights as (Cout, Cin); biases as columns).
    w1 = params["w1"].astype(jnp.bfloat16)                    # (128, 1024) bf16
    w2 = params["w2"]                                         # (32, 128)
    w3 = params["w3"]                                         # (8, 32)
    # Packed small operands: [b1; b2; b3; conv1_4 weight] -> (176, 1) f32
    pb = jnp.concatenate(
        [params["b1"], params["b2"], params["b3"], params["w4"].reshape(8)]
    ).astype(jnp.float32)[:, None]                            # (176, 1)
    w5 = params["w5"][None, :].astype(jnp.float32)            # (1, P)
    scal = jnp.stack([params["b4"], params["b5"]]).astype(jnp.float32)   # (2,) -> SMEM

    flops = 2 * n * P * (128 * C_IN + 32 * 128 + 8 * 32 + 8 + 1)
    bytes_accessed = int(
        x_ncp.size * x_ncp.dtype.itemsize
        + w1.size * 2
        + (w2.size + w3.size + pb.size + w5.size + 2) * 4
        + n * 4)
    cost = pl.CostEstimate(flops=flops, transcendentals=0,
                           bytes_accessed=bytes_accessed)

    n_k = P // tile_p
    if n_k == 1:
        # One grid step per sample: no accumulator, no init/finalize gating.
        in_specs = [
            pl.BlockSpec((1, C_IN, P), lambda i: (i, 0, 0)),          # x (full sample)
            pl.BlockSpec(w1.shape, lambda i: (0, 0)),
            pl.BlockSpec(w2.shape, lambda i: (0, 0)),
            pl.BlockSpec(w3.shape, lambda i: (0, 0)),
            pl.BlockSpec(pb.shape, lambda i: (0, 0)),
            pl.BlockSpec((1, P), lambda i: (0, 0)),
            pl.BlockSpec(memory_space=pltpu.MemorySpace.SMEM),        # [b4, b5]
        ]
        out = pl.pallas_call(
            _fusion_kernel_full,
            out_shape=jax.ShapeDtypeStruct((n, 1, 1), jnp.float32),
            grid=(n,),
            in_specs=in_specs,
            out_specs=pl.BlockSpec((1, 1, 1), lambda i: (i, 0, 0)),
            compiler_params=pltpu.CompilerParams(
                dimension_semantics=("parallel",),
                vmem_limit_bytes=32 * 1024 * 1024,
            ),
            cost_estimate=cost,
        )(x_ncp, w1, w2, w3, pb, w5, scal)
    else:
        # Pixel-tiled path (e.g. tile_p=512 on v5e).
        in_specs = [
            pl.BlockSpec((1, C_IN, tile_p), lambda i, k: (i, 0, k)),  # x tile
            pl.BlockSpec(w1.shape, lambda i, k: (0, 0)),
            pl.BlockSpec(w2.shape, lambda i, k: (0, 0)),
            pl.BlockSpec(w3.shape, lambda i, k: (0, 0)),
            pl.BlockSpec(pb.shape, lambda i, k: (0, 0)),
            pl.BlockSpec((1, tile_p), lambda i, k: (0, k)),           # w5 slice
            pl.BlockSpec(memory_space=pltpu.MemorySpace.SMEM),        # [b4, b5]
        ]
        out = pl.pallas_call(
            _fusion_kernel_tiled,
            out_shape=jax.ShapeDtypeStruct((n, 1, 1), jnp.float32),
            grid=(n, n_k),
            in_specs=in_specs,
            out_specs=pl.BlockSpec((1, 1, 1), lambda i, k: (i, 0, 0)),
            scratch_shapes=[pltpu.VMEM((1, 1), jnp.float32)],
            compiler_params=pltpu.CompilerParams(
                dimension_semantics=("parallel", "arbitrary"),
                vmem_limit_bytes=32 * 1024 * 1024,
            ),
            cost_estimate=cost,
        )(x_ncp, w1, w2, w3, pb, w5, scal)

    # Match PyTorch output shape (N, 1, H-31, W-31) = (N, 1, 1, 1)
    return out.reshape(n, 1, 1, 1)


def init_params(key):
    """Deterministic synthetic parameters; BN folded into the 1x1 convs (eval mode)."""
    eps = 1e-5
    ks = jax.random.split(key, 13)

    def conv_w(k, cout, cin):
        # (Cout, Cin) == PyTorch weight[:, :, 0, 0]
        return jax.random.normal(k, (cout, cin), jnp.float32) / jnp.sqrt(cin)

    def conv_b(k, cout):
        return 0.1 * jax.random.normal(k, (cout,), jnp.float32)

    w1, bc1 = conv_w(ks[0], 128, C_IN), conv_b(ks[1], 128)
    w2, bc2 = conv_w(ks[2], 32, 128), conv_b(ks[3], 32)
    w3, bc3 = conv_w(ks[4], 8, 32), conv_b(ks[5], 8)
    w4, bc4 = conv_w(ks[6], 1, 8), conv_b(ks[7], 1)
    # conv1_5 weight (1, 1, 32, 32) flattened row-major -> (P,)
    w5 = jax.random.normal(ks[8], (P,), jnp.float32) / jnp.sqrt(P)
    bc5 = 0.1 * jax.random.normal(ks[9], (1,), jnp.float32)

    def bn_params(k, c):
        kg, kb, km, kv = jax.random.split(k, 4)
        gamma = 1.0 + 0.1 * jax.random.normal(kg, (c,), jnp.float32)
        beta = 0.1 * jax.random.normal(kb, (c,), jnp.float32)
        mean = 0.1 * jax.random.normal(km, (c,), jnp.float32)
        var = jax.random.uniform(kv, (c,), jnp.float32, minval=0.5, maxval=1.5)
        return gamma, beta, mean, var

    def fold(wc, bc, bn):   # wc: (Cout, Cin)
        gamma, beta, mean, var = bn
        scale = gamma / jnp.sqrt(var + eps)
        return wc * scale[:, None], (bc - mean) * scale + beta

    w1f, b1f = fold(w1, bc1, bn_params(ks[10], 128))
    w2f, b2f = fold(w2, bc2, bn_params(ks[11], 32))
    w3f, b3f = fold(w3, bc3, bn_params(ks[12], 8))

    return dict(
        w1=w1f, b1=b1f,        # (128,1024), (128,)
        w2=w2f, b2=b2f,        # (32,128),   (32,)
        w3=w3f, b3=b3f,        # (8,32),     (8,)
        w4=w4, b4=bc4[0],      # (1,8),      scalar
        w5=w5, b5=bc5[0],      # (P,),       scalar
    )


def reference(x, params):
    """Pure-JAX reference of the same (BN-folded, bf16 first layer) forward pass."""
    x = x.reshape(-1, x.shape[-3], x.shape[-2], x.shape[-1])
    n = x.shape[0]
    xf = x.reshape(n, C_IN, P)
    hp = jax.lax.Precision.HIGHEST
    h = jnp.einsum("oc,ncp->nop",
                   params["w1"].astype(jnp.bfloat16), xf.astype(jnp.bfloat16),
                   preferred_element_type=jnp.float32)
    h = jax.nn.relu(h + params["b1"][None, :, None])
    h = jax.nn.relu(jnp.einsum("oc,ncp->nop", params["w2"], h, precision=hp)
                    + params["b2"][None, :, None])
    h = jax.nn.relu(jnp.einsum("oc,ncp->nop", params["w3"], h, precision=hp)
                    + params["b3"][None, :, None])
    h = jax.nn.relu(jnp.einsum("oc,ncp->nop", params["w4"], h, precision=hp)
                    + params["b4"])
    s = jnp.einsum("nop,p->no", h, params["w5"], precision=hp) + params["b5"]
    return jax.nn.relu(s).reshape(n, 1, 1, 1)


if __name__ == "__main__":
    key = jax.random.PRNGKey(0)
    kx, kp = jax.random.split(key)

    # Module-style input: (batch, num_agents, 1024, 32, 32); forward views it
    # to (batch*num_agents, 1024, 32, 32).  C=1024 / H=W=32 are fixed by the
    # module (conv1_1 in-channels and the 32x32 conv1_5 kernel).
    x = jax.random.normal(kx, (1, 2, C_IN, H, W), jnp.float32)
    params = init_params(kp)

    # Default path: TILE_P = P (one grid step per sample, no accumulator).
    out = jax.block_until_ready(agent_weighted_fusion(x, params))
    # Also exercise the tiled/accumulator path once (the v5e-friendly config).
    out_tiled = jax.block_until_ready(agent_weighted_fusion(x, params, tile_p=512))
    ref = reference(x, params)

    assert out.shape == (2, 1, 1, 1), out.shape
    assert jnp.allclose(out, ref, atol=2e-2, rtol=2e-2), (out, ref)
    assert jnp.allclose(out_tiled, ref, atol=2e-2, rtol=2e-2), (out_tiled, ref)

    print("KERNEL_OK")
</pallas_src>

<mosaic_0001>
module attributes {stable_mosaic.version = 11 : i64} {
  func.func @_fusion_kernel_full(%arg0: i32, %arg1: memref<1x1024x1024xf32, #tpu.memory_space<vmem>>, %arg2: memref<128x1024xbf16, #tpu.memory_space<vmem>>, %arg3: memref<32x128xf32, #tpu.memory_space<vmem>>, %arg4: memref<8x32xf32, #tpu.memory_space<vmem>>, %arg5: memref<176x1xf32, #tpu.memory_space<vmem>>, %arg6: memref<1x1024xf32, #tpu.memory_space<vmem>>, %arg7: memref<2xf32, #tpu.memory_space<smem>>, %arg8: memref<1x1x1xf32, #tpu.memory_space<vmem>>) attributes {dimension_semantics = [#tpu.dimension_semantics<parallel>], iteration_bounds = array<i64: 2>, scalar_prefetch = 0 : i64, scratch_operands = 0 : i64, tpu.core_type = #tpu.core_type<tc>, window_params = [{transform_indices = @transform_0, window_bounds = array<i64: 1, 1024, 1024>}, {pipeline_mode = #tpu.pipeline_mode<synchronous>, transform_indices = @transform_1, window_bounds = array<i64: 128, 1024>}, {pipeline_mode = #tpu.pipeline_mode<synchronous>, transform_indices = @transform_2, window_bounds = array<i64: 32, 128>}, {pipeline_mode = #tpu.pipeline_mode<synchronous>, transform_indices = @transform_3, window_bounds = array<i64: 8, 32>}, {pipeline_mode = #tpu.pipeline_mode<synchronous>, transform_indices = @transform_4, window_bounds = array<i64: 176, 1>}, {pipeline_mode = #tpu.pipeline_mode<synchronous>, transform_indices = @transform_5, window_bounds = array<i64: 1, 1024>}, {transform_indices = @transform_6, window_bounds = array<i64: 2>}, {transform_indices = @transform_7, window_bounds = array<i64: 1, 1, 1>}]} {
    %c0 = arith.constant 0 : index
    %c0_0 = arith.constant 0 : index
    %c0_1 = arith.constant 0 : index
    %0 = vector.load %arg1[%c0, %c0_0, %c0_1] : memref<1x1024x1024xf32, #tpu.memory_space<vmem>>, vector<1x1024x1024xf32>
    %1 = vector.shape_cast %0 : vector<1x1024x1024xf32> to vector<1024x1024xf32>
    %2 = arith.truncf %1 : vector<1024x1024xf32> to vector<1024x1024xbf16>
    %c0_2 = arith.constant 0 : index
    %c0_3 = arith.constant 0 : index
    %3 = vector.load %arg2[%c0_2, %c0_3] : memref<128x1024xbf16, #tpu.memory_space<vmem>>, vector<128x1024xbf16>
    %c0_4 = arith.constant 0 : index
    %c0_5 = arith.constant 0 : index
    %4 = vector.load %arg3[%c0_4, %c0_5] : memref<32x128xf32, #tpu.memory_space<vmem>>, vector<32x128xf32>
    %c0_6 = arith.constant 0 : index
    %c0_7 = arith.constant 0 : index
    %5 = vector.load %arg4[%c0_6, %c0_7] : memref<8x32xf32, #tpu.memory_space<vmem>>, vector<8x32xf32>
    %c0_8 = arith.constant 0 : index
    %c0_9 = arith.constant 0 : index
    %6 = vector.load %arg5[%c0_8, %c0_9] : memref<176x1xf32, #tpu.memory_space<vmem>>, vector<176x1xf32>
    %c0_10 = arith.constant 0 : index
    %7 = memref.load %arg7[%c0_10] : memref<2xf32, #tpu.memory_space<smem>>
    %8 = vector.extract_strided_slice %6 {offsets = [0, 0], sizes = [128, 1], strides = [1, 1]} : vector<176x1xf32> to vector<128x1xf32>
    %9 = vector.extract_strided_slice %6 {offsets = [128, 0], sizes = [32, 1], strides = [1, 1]} : vector<176x1xf32> to vector<32x1xf32>
    %10 = vector.extract_strided_slice %6 {offsets = [160, 0], sizes = [8, 1], strides = [1, 1]} : vector<176x1xf32> to vector<8x1xf32>
    %11 = vector.extract_strided_slice %6 {offsets = [168, 0], sizes = [8, 1], strides = [1, 1]} : vector<176x1xf32> to vector<8x1xf32>
    %cst = arith.constant dense<0.000000e+00> : vector<128x1024xf32>
    %12 = tpu.matmul %3, %2, %cst {dimension_numbers = #tpu.dot_dimension_numbers<[1], [0], [0], [1], [0, 0, 1, 1], [], []>} : vector<128x1024xbf16>, vector<1024x1024xbf16>, vector<128x1024xf32> -> vector<128x1024xf32>
    %13 = vector.broadcast %8 : vector<128x1xf32> to vector<128x1024xf32>
    %14 = arith.addf %12, %13 : vector<128x1024xf32>
    %cst_11 = arith.constant 0.000000e+00 : f32
    %15 = vector.broadcast %cst_11 : f32 to vector<128x1024xf32>
    %16 = arith.maximumf %14, %15 : vector<128x1024xf32>
    %cst_12 = arith.constant dense<0.000000e+00> : vector<32x1024xf32>
    %17 = tpu.matmul %4, %16, %cst_12 {dimension_numbers = #tpu.dot_dimension_numbers<[1], [0], [0], [1], [0, 0, 1, 1], [], []>} : vector<32x128xf32>, vector<128x1024xf32>, vector<32x1024xf32> -> vector<32x1024xf32>
    %18 = vector.broadcast %9 : vector<32x1xf32> to vector<32x1024xf32>
    %19 = arith.addf %17, %18 : vector<32x1024xf32>
    %cst_13 = arith.constant 0.000000e+00 : f32
    %20 = vector.broadcast %cst_13 : f32 to vector<32x1024xf32>
    %21 = arith.maximumf %19, %20 : vector<32x1024xf32>
    %cst_14 = arith.constant dense<0.000000e+00> : vector<8x1024xf32>
    %22 = tpu.matmul %5, %21, %cst_14 {dimension_numbers = #tpu.dot_dimension_numbers<[1], [0], [0], [1], [0, 0, 1, 1], [], []>} : vector<8x32xf32>, vector<32x1024xf32>, vector<8x1024xf32> -> vector<8x1024xf32>
    %23 = vector.broadcast %10 : vector<8x1xf32> to vector<8x1024xf32>
    %24 = arith.addf %22, %23 : vector<8x1024xf32>
    %cst_15 = arith.constant 0.000000e+00 : f32
    %25 = vector.broadcast %cst_15 : f32 to vector<8x1024xf32>
    %26 = arith.maximumf %24, %25 : vector<8x1024xf32>
    %27 = vector.broadcast %11 : vector<8x1xf32> to vector<8x1024xf32>
    %28 = arith.mulf %26, %27 : vector<8x1024xf32>
    %cst_16 = arith.constant dense<0.000000e+00> : vector<1024xf32>
    %29 = vector.multi_reduction <add>, %28, %cst_16 [0] : vector<8x1024xf32> to vector<1024xf32>
    %30 = vector.shape_cast %29 : vector<1024xf32> to vector<1x1024xf32>
    %31 = vector.broadcast %7 : f32 to vector<1x1024xf32>
    %32 = arith.addf %30, %31 : vector<1x1024xf32>
    %cst_17 = arith.constant 0.000000e+00 : f32
    %33 = vector.broadcast %cst_17 : f32 to vector<1x1024xf32>
    %34 = arith.maximumf %32, %33 : vector<1x1024xf32>
    %c0_18 = arith.constant 0 : index
    %c0_19 = arith.constant 0 : index
    %35 = vector.load %arg6[%c0_18, %c0_19] : memref<1x1024xf32, #tpu.memory_space<vmem>>, vector<1x1024xf32>
    %36 = arith.mulf %34, %35 : vector<1x1024xf32>
    %cst_20 = arith.constant dense<0.000000e+00> : vector<1xf32>
    %37 = vector.multi_reduction <add>, %36, %cst_20 [1] : vector<1x1024xf32> to vector<1xf32>
    %38 = vector.shape_cast %37 : vector<1xf32> to vector<1x1xf32>
    %c1 = arith.constant 1 : index
    %39 = memref.load %arg7[%c1] : memref<2xf32, #tpu.memory_space<smem>>
    %40 = vector.broadcast %39 : f32 to vector<1x1xf32>
    %41 = arith.addf %38, %40 : vector<1x1xf32>
    %cst_21 = arith.constant 0.000000e+00 : f32
    %42 = vector.broadcast %cst_21 : f32 to vector<1x1xf32>
    %43 = arith.maximumf %41, %42 : vector<1x1xf32>
    %c0_22 = arith.constant 0 : index
    %c0_23 = arith.constant 0 : index
    %c0_24 = arith.constant 0 : index
    %44 = vector.load %arg8[%c0_22, %c0_23, %c0_24] : memref<1x1x1xf32, #tpu.memory_space<vmem>>, vector<1x1x1xf32>
    %45 = vector.shape_cast %44 : vector<1x1x1xf32> to vector<1x1xf32>
    %46 = vector.shape_cast %43 : vector<1x1xf32> to vector<1x1x1xf32>
    tpu.vector_store %arg8[%c0_22, %c0_23, %c0_24], %46 {strides = array<i32>} : memref<1x1x1xf32, #tpu.memory_space<vmem>>, vector<1x1x1xf32>,
    return
  }
  func.func @transform_0(%arg0: i32) -> (i32, i32, i32) {
    %c0_i32 = arith.constant 0 : i32
    %c0_i32_0 = arith.constant 0 : i32
    %c0_i32_1 = arith.constant 0 : i32
    return %arg0, %c0_i32, %c0_i32_0 : i32, i32, i32
  }
  func.func @transform_1(%arg0: i32) -> (i32, i32) {
    %c0_i32 = arith.constant 0 : i32
    %c0_i32_0 = arith.constant 0 : i32
    %c0_i32_1 = arith.constant 0 : i32
    return %c0_i32, %c0_i32_0 : i32, i32
  }
  func.func @transform_2(%arg0: i32) -> (i32, i32) {
    %c0_i32 = arith.constant 0 : i32
    %c0_i32_0 = arith.constant 0 : i32
    %c0_i32_1 = arith.constant 0 : i32
    return %c0_i32, %c0_i32_0 : i32, i32
  }
  func.func @transform_3(%arg0: i32) -> (i32, i32) {
    %c0_i32 = arith.constant 0 : i32
    %c0_i32_0 = arith.constant 0 : i32
    %c0_i32_1 = arith.constant 0 : i32
    return %c0_i32, %c0_i32_0 : i32, i32
  }
  func.func @transform_4(%arg0: i32) -> (i32, i32) {
    %c0_i32 = arith.constant 0 : i32
    %c0_i32_0 = arith.constant 0 : i32
    %c0_i32_1 = arith.constant 0 : i32
    return %c0_i32, %c0_i32_0 : i32, i32
  }
  func.func @transform_5(%arg0: i32) -> (i32, i32) {
    %c0_i32 = arith.constant 0 : i32
    %c0_i32_0 = arith.constant 0 : i32
    %c0_i32_1 = arith.constant 0 : i32
    return %c0_i32, %c0_i32_0 : i32, i32
  }
  func.func @transform_6(%arg0: i32) -> i32 {
    %c0_i32 = arith.constant 0 : i32
    %c0_i32_0 = arith.constant 0 : i32
    return %c0_i32 : i32
  }
  func.func @transform_7(%arg0: i32) -> (i32, i32, i32) {
    %c0_i32 = arith.constant 0 : i32
    %c0_i32_0 = arith.constant 0 : i32
    %c0_i32_1 = arith.constant 0 : i32
    return %arg0, %c0_i32, %c0_i32_0 : i32, i32, i32
  }
}

</mosaic_0001>

<llo_original>
// kernel: tpu_custom_call.1
$region0: #{tpu_custom_call.1}
  #allocation0 [shape = 'u32[]', space=smem, size = 0x4, offset = 0x4, fixed_abs, tag = 'smem constant byte address 0x4 - core index']
  #allocation1 [shape = 'u32[72,128]{1,0:T(1,128)}', space=vmem, size = 0x9000, scoped, tag = 'internal scratch']
  %s0 = inlined_call_operand.hbm [shape: f32[2,1024,1024], index: 0, kind: input, shape index: {}]
  %s1 = inlined_call_operand.hbm [shape: bf16[128,1024], index: 1, kind: input, shape index: {}]
  %s2 = inlined_call_operand.hbm [shape: f32[32,128], index: 2, kind: input, shape index: {}]
  %s3 = inlined_call_operand.hbm [shape: f32[8,32], index: 3, kind: input, shape index: {}]
  %s4 = inlined_call_operand.vmem [shape: f32[176,1], index: 4, kind: input, shape index: {}]
  %s5 = inlined_call_operand.hbm [shape: f32[1,1024], index: 5, kind: input, shape index: {}]
  %s6 = inlined_call_operand.hbm [shape: f32[2], index: 6, kind: input, shape index: {}]
  %s7 = inlined_call_operand.vmem [shape: f32[2,1,1], index: 7, kind: output, shape index: {}]
  %s8 = sld [smem:[#allocation0]]
  $region85: #{tpu_custom_call.1} parent=0
    _
  %s10 = ssub.s32 1, %s8
  %s11 = scalar_select 0, %s10, %s8
  $region1: #{tpu_custom_call.1} parent=0
    #allocation2 [shape = 'u8[8388608]{0}', space=vmem, size = 0x800000, scoped, tag = 'input window, operand 0']
    #allocation3 [shape = 's32[2]{0}', space=sflag, size = 0x8, scoped, tag = 'scoped memory for tpu_custom_call.1']
    #allocation4 [shape = 's32[2]{0}', space=sflag, size = 0x8, scoped, tag = 'scoped memory for tpu_custom_call.1']
    #allocation5 [shape = 'u8[262144]{0}', space=vmem, size = 0x40000, scoped, tag = 'input window, operand 1, single buffered']
    #allocation6 [shape = 's32[1]{0}', space=sflag, size = 0x4, scoped, tag = 'scoped memory for tpu_custom_call.1']
    #allocation7 [shape = 'u8[16384]{0}', space=vmem, size = 0x4000, scoped, tag = 'input window, operand 2, single buffered']
    #allocation8 [shape = 'u8[4096]{0}', space=vmem, size = 0x1000, scoped, tag = 'input window, operand 3, single buffered']
    #allocation9 [shape = 's32[1]{0}', space=sflag, size = 0x4, scoped, tag = 'scoped memory for tpu_custom_call.1']
    #allocation10 [shape = 'u8[4096]{0}', space=vmem, size = 0x1000, scoped, tag = 'input window, operand 5, single buffered']
    #allocation11 [shape = 'u8[512]{0}', space=smem, size = 0x200, scoped, tag = 'input window, operand 6, single buffered']
    %12 = vsyncpa [#allocation3], 0
    %s13 = scalar_lea.sflag [#allocation3], 1
    %14 = vsyncpa %s13, 0
    %15 = vsyncpa [#allocation6], 0
    %16 = vsyncpa [#allocation9], 0
    %17 = vsyncpa [#allocation4], 0
    loop: start=0, step=1, limit=4
    $region2: #{tpu_custom_call.1} parent=1 // loop_pre_header
      _
    $region3: #{tpu_custom_call.1} parent=1 // loop_header
      %s19 = sphi 0, %s23
      %p20 = scmp.ge.s32.totalorder %s19, 4
      %s29 = sphi 0, %s31
      %s32 = sphi 0, %s29
      %s33 = sphi 0, %s32
      %s49 = sphi 0, %s33
      %s53 = sphi 0, %s53
      %s55 = sphi 0, %s53
      %s56 = sphi 0, %s55
      %s70 = sphi 0, %s56
      %s74 = sphi 0, %s74
      %s76 = sphi 0, %s74
      %s77 = sphi 0, %s76
      %s91 = sphi 0, %s77
      %s95 = sphi 0, %s95
      %s97 = sphi 0, %s95
      %s98 = sphi 0, %s97
      %s112 = sphi 0, %s98
      %s116 = sphi 0, %s116
      %s118 = sphi 0, %s116
      %s119 = sphi 0, %s118
      %s133 = sphi 0, %s119
      %s137 = sphi 0, %s137
      %s139 = sphi 0, %s137
      %s140 = sphi 0, %s139
      %s154 = sphi 0, %s140
      %s158 = sphi 0, %s158
      %s160 = sphi 0, %s158
      %s161 = sphi 0, %s160
      %s175 = sphi 0, %s161
      %s181 = sphi 0, %s183
      %s184 = sphi 0, %s181
      %s185 = sphi 0, %s184
      %s201 = sphi 0, %s185
    $region4: #{tpu_custom_call.1} parent=1 // loop_header_branch
      %22 = sbr.rel (%p20) target = $region8
    $region5: #{tpu_custom_call.1} parent=1 // loop_body
      %s24 = ssub.s32 %s19, 1
      %s25 = ssub.s32 %s19, 2
      %s26 = sadd.s32 %s19, 1
      %s27 = ssub.s32 %s19, %s26
      %p28 = scmp.eq.s32.totalorder %s27, 0
      %s30 = sadd.s32 %s29, 1
      %s31 = scalar_select %p28, %s29, %s30
      %p34 = pneg %p28
      %p35 = scmp.eq.s32.totalorder %s19, 1
      %p36 = por %p34, %p35
      %p37 = scmp.ne.s32.totalorder %s29, %s32
      %p38 = scmp.eq.s32.totalorder %s19, 0
      %p39 = por %p37, %p38
      %p40 = scmp.ne.s32.totalorder %s29, %s32
      %p41 = scmp.eq.s32.totalorder %s24, 1
      %p42 = por %p40, %p41
      %p43 = scmp.ne.s32.totalorder %s32, %s33
      %p44 = scmp.eq.s32.totalorder %s24, 0
      %p45 = por %p43, %p44
      %p46 = scmp.ne.s32.totalorder %s32, %s33
      %p47 = scmp.eq.s32.totalorder %s25, 1
      %p48 = por %p46, %p47
      %p50 = scmp.ne.s32.totalorder %s33, %s49
      %p51 = scmp.eq.s32.totalorder %s25, 0
      %p52 = por %p50, %p51
      %s54 = sadd.s32 %s53, 1
      %p57 = scmp.eq.s32.totalorder %s19, 1
      %p58 = scmp.ne.s32.totalorder %s53, %s55
      %p59 = scmp.eq.s32.totalorder %s19, 0
      %p60 = por %p58, %p59
      %p61 = scmp.ne.s32.totalorder %s53, %s55
      %p62 = scmp.eq.s32.totalorder %s24, 1
      %p63 = por %p61, %p62
      %p64 = scmp.ne.s32.totalorder %s55, %s56
      %p65 = scmp.eq.s32.totalorder %s24, 0
      %p66 = por %p64, %p65
      %p67 = scmp.ne.s32.totalorder %s55, %s56
      %p68 = scmp.eq.s32.totalorder %s25, 1
      %p69 = por %p67, %p68
      %p71 = scmp.ne.s32.totalorder %s56, %s70
      %p72 = scmp.eq.s32.totalorder %s25, 0
      %p73 = por %p71, %p72
      %s75 = sadd.s32 %s74, 1
      %p78 = scmp.eq.s32.totalorder %s19, 1
      %p79 = scmp.ne.s32.totalorder %s74, %s76
      %p80 = scmp.eq.s32.totalorder %s19, 0
      %p81 = por %p79, %p80
      %p82 = scmp.ne.s32.totalorder %s74, %s76
      %p83 = scmp.eq.s32.totalorder %s24, 1
      %p84 = por %p82, %p83
      %p85 = scmp.ne.s32.totalorder %s76, %s77
      %p86 = scmp.eq.s32.totalorder %s24, 0
      %p87 = por %p85, %p86
      %p88 = scmp.ne.s32.totalorder %s76, %s77
      %p89 = scmp.eq.s32.totalorder %s25, 1
      %p90 = por %p88, %p89
      %p92 = scmp.ne.s32.totalorder %s77, %s91
      %p93 = scmp.eq.s32.totalorder %s25, 0
      %p94 = por %p92, %p93
      %s96 = sadd.s32 %s95, 1
      %p99 = scmp.eq.s32.totalorder %s19, 1
      %p100 = scmp.ne.s32.totalorder %s95, %s97
      %p101 = scmp.eq.s32.totalorder %s19, 0
      %p102 = por %p100, %p101
      %p103 = scmp.ne.s32.totalorder %s95, %s97
      %p104 = scmp.eq.s32.totalorder %s24, 1
      %p105 = por %p103, %p104
      %p106 = scmp.ne.s32.totalorder %s97, %s98
      %p107 = scmp.eq.s32.totalorder %s24, 0
      %p108 = por %p106, %p107
      %p109 = scmp.ne.s32.totalorder %s97, %s98
      %p110 = scmp.eq.s32.totalorder %s25, 1
      %p111 = por %p109, %p110
      %p113 = scmp.ne.s32.totalorder %s98, %s112
      %p114 = scmp.eq.s32.totalorder %s25, 0
      %p115 = por %p113, %p114
      %s117 = sadd.s32 %s116, 1
      %p120 = scmp.eq.s32.totalorder %s19, 1
      %p121 = scmp.ne.s32.totalorder %s116, %s118
      %p122 = scmp.eq.s32.totalorder %s19, 0
      %p123 = por %p121, %p122
      %p124 = scmp.ne.s32.totalorder %s116, %s118
      %p125 = scmp.eq.s32.totalorder %s24, 1
      %p126 = por %p124, %p125
      %p127 = scmp.ne.s32.totalorder %s118, %s119
      %p128 = scmp.eq.s32.totalorder %s24, 0
      %p129 = por %p127, %p128
      %p130 = scmp.ne.s32.totalorder %s118, %s119
      %p131 = scmp.eq.s32.totalorder %s25, 1
      %p132 = por %p130, %p131
      %p134 = scmp.ne.s32.totalorder %s119, %s133
      %p135 = scmp.eq.s32.totalorder %s25, 0
      %p136 = por %p134, %p135
      %s138 = sadd.s32 %s137, 1
      %p141 = scmp.eq.s32.totalorder %s19, 1
      %p142 = scmp.ne.s32.totalorder %s137, %s139
      %p143 = scmp.eq.s32.totalorder %s19, 0
      %p144 = por %p142, %p143
      %p145 = scmp.ne.s32.totalorder %s137, %s139
      %p146 = scmp.eq.s32.totalorder %s24, 1
      %p147 = por %p145, %p146
      %p148 = scmp.ne.s32.totalorder %s139, %s140
      %p149 = scmp.eq.s32.totalorder %s24, 0
      %p150 = por %p148, %p149
      %p151 = scmp.ne.s32.totalorder %s139, %s140
      %p152 = scmp.eq.s32.totalorder %s25, 1
      %p153 = por %p151, %p152
      %p155 = scmp.ne.s32.totalorder %s140, %s154
      %p156 = scmp.eq.s32.totalorder %s25, 0
      %p157 = por %p155, %p156
      %s159 = sadd.s32 %s158, 1
      %p162 = scmp.eq.s32.totalorder %s19, 1
      %p163 = scmp.ne.s32.totalorder %s158, %s160
      %p164 = scmp.eq.s32.totalorder %s19, 0
      %p165 = por %p163, %p164
      %p166 = scmp.ne.s32.totalorder %s158, %s160
      %p167 = scmp.eq.s32.totalorder %s24, 1
      %p168 = por %p166, %p167
      %p169 = scmp.ne.s32.totalorder %s160, %s161
      %p170 = scmp.eq.s32.totalorder %s24, 0
      %p171 = por %p169, %p170
      %p172 = scmp.ne.s32.totalorder %s160, %s161
      %p173 = scmp.eq.s32.totalorder %s25, 1
      %p174 = por %p172, %p173
      %p176 = scmp.ne.s32.totalorder %s161, %s175
      %p177 = scmp.eq.s32.totalorder %s25, 0
      %p178 = por %p176, %p177
      %s179 = ssub.s32 %s19, %s26
      %p180 = scmp.eq.s32.totalorder %s179, 0
      %s182 = sadd.s32 %s181, 1
      %s183 = scalar_select %p180, %s181, %s182
      %p186 = pneg %p180
      %p187 = scmp.eq.s32.totalorder %s19, 1
      %p188 = por %p186, %p187
      %p189 = scmp.ne.s32.totalorder %s181, %s184
      %p190 = scmp.eq.s32.totalorder %s19, 0
      %p191 = por %p189, %p190
      %p192 = scmp.ne.s32.totalorder %s181, %s184
      %p193 = scmp.eq.s32.totalorder %s24, 1
      %p194 = por %p192, %p193
      %p195 = scmp.ne.s32.totalorder %s184, %s185
      %p196 = scmp.eq.s32.totalorder %s24, 0
      %p197 = por %p195, %p196
      %p198 = scmp.ne.s32.totalorder %s184, %s185
      %p199 = scmp.eq.s32.totalorder %s25, 1
      %p200 = por %p198, %p199
      %p202 = scmp.ne.s32.totalorder %s185, %s201
      %p203 = scmp.eq.s32.totalorder %s25, 0
      %p204 = por %p202, %p203
      %p205 = scmp.le.s32.totalorder 1, %s19
      %p206 = scmp.lt.s32.totalorder %s19, 3
      %p207 = pnand %p205, %p206
      %p208 = pneg %p207
      // Predicated region
      $region9: #{tpu_custom_call.1} parent=5 // pred_check
        _
      $region10: #{tpu_custom_call.1} parent=5 // pred_check_branch
        %210 = sbr.rel (%p207) target = $region12
      $region11: #{tpu_custom_call.1} parent=5 // pred_region
        %s211 = ssub.s32 %s19, 1
        // Predicated region
        $region13: #{tpu_custom_call.1} parent=11 // pred_check
          %p212 = pneg %p66
        $region14: #{tpu_custom_call.1} parent=11 // pred_check_branch
          %214 = sbr.rel (%p212) target = $region16
        $region15: #{tpu_custom_call.1} parent=11 // pred_region
          %216 = vsyncadd [#allocation6], 0
          %s217 = sshll.u32 %s1, 4
          %s218 = int_to_ptr.hbm [resolvable:$true] %s217
          %s219 = sshll.u32 [#allocation5], 4
          %s220 = int_to_ptr.vmem [resolvable:$true] %s219
          %225 = dma.hbm_to_vmem [thread:$0]  %s218, 8192, %s220, [#allocation6], 512, 512, 32
        $region16: #{tpu_custom_call.1} parent=11 // pred_fallthru
          _
        // Predicated region
        $region17: #{tpu_custom_call.1} parent=11 // pred_check
          %p226 = pneg %p87
        $region18: #{tpu_custom_call.1} parent=11 // pred_check_branch
          %228 = sbr.rel (%p226) target = $region20
        $region19: #{tpu_custom_call.1} parent=11 // pred_region
          %230 = vsyncadd [#allocation6], 0
          %s231 = sshll.u32 %s2, 4
          %s232 = int_to_ptr.hbm [resolvable:$true] %s231
          %s233 = sshll.u32 [#allocation7], 4
          %s234 = int_to_ptr.vmem [resolvable:$true] %s233
          %239 = dma.hbm_to_vmem [thread:$0]  %s232, 512, %s234, [#allocation6], 128, 128, 8
        $region20: #{tpu_custom_call.1} parent=11 // pred_fallthru
          _
        // Predicated region
        $region21: #{tpu_custom_call.1} parent=11 // pred_check
          %p240 = pneg %p108
        $region22: #{tpu_custom_call.1} parent=11 // pred_check_branch
          %242 = sbr.rel (%p240) target = $region24
        $region23: #{tpu_custom_call.1} parent=11 // pred_region
          %244 = vsyncadd [#allocation9], 0
          %s246 = sshll.u32 %s3, 4
          %s247 = int_to_ptr.hbm [resolvable:$true] %s246
          %s248 = sshll.u32 [#allocation8], 4
          %s249 = int_to_ptr.vmem [resolvable:$true] %s248
          %251 = dma.hbm_to_vmem [thread:$0]  %s247, 128, %s249, [#allocation9]
        $region24: #{tpu_custom_call.1} parent=11 // pred_fallthru
          _
        // Predicated region
        $region25: #{tpu_custom_call.1} parent=11 // pred_check
          %p252 = pneg %p129
        $region26: #{tpu_custom_call.1} parent=11 // pred_check_branch
          %254 = sbr.rel (%p252) target = $region28
        $region27: #{tpu_custom_call.1} parent=11 // pred_region
          _
        $region28: #{tpu_custom_call.1} parent=11 // pred_fallthru
          _
        // Predicated region
        $region29: #{tpu_custom_call.1} parent=11 // pred_check
          %p255 = pneg %p150
        $region30: #{tpu_custom_call.1} parent=11 // pred_check_branch
          %257 = sbr.rel (%p255) target = $region32
        $region31: #{tpu_custom_call.1} parent=11 // pred_region
          %259 = vsyncadd [#allocation9], 0
          %s261 = sshll.u32 %s5, 4
          %s262 = int_to_ptr.hbm [resolvable:$true] %s261
          %s263 = sshll.u32 [#allocation10], 4
          %s264 = int_to_ptr.vmem [resolvable:$true] %s263
          %266 = dma.hbm_to_vmem [thread:$0]  %s262, 128, %s264, [#allocation9]
        $region32: #{tpu_custom_call.1} parent=11 // pred_fallthru
          _
        // Predicated region
        $region33: #{tpu_custom_call.1} parent=11 // pred_check
          %p267 = pneg %p171
        $region34: #{tpu_custom_call.1} parent=11 // pred_check_branch
          %269 = sbr.rel (%p267) target = $region36
        $region35: #{tpu_custom_call.1} parent=11 // pred_region
          %271 = vsyncadd [#allocation4], 0
          %s273 = sshll.u32 %s6, 4
          %s274 = int_to_ptr.hbm [resolvable:$true] %s273
          %276 = dma.hbm_to_smem %s274, 16, [#allocation11], [#allocation4]
        $region36: #{tpu_custom_call.1} parent=11 // pred_fallthru
          _
      $region12: #{tpu_custom_call.1} parent=5 // pred_fallthru
        _
      %p277 = scmp.lt.s32.totalorder %s19, 2
      // Predicated region
      $region37: #{tpu_custom_call.1} parent=5 // pred_check
        %p278 = pneg %p277
      $region38: #{tpu_custom_call.1} parent=5 // pred_check_branch
        %280 = sbr.rel (%p278) target = $region40
      $region39: #{tpu_custom_call.1} parent=5 // pred_region
        // Predicated region
        $region41: #{tpu_custom_call.1} parent=39 // pred_check
          %p281 = pneg %p39
        $region42: #{tpu_custom_call.1} parent=39 // pred_check_branch
          %283 = sbr.rel (%p281) target = $region44
        $region43: #{tpu_custom_call.1} parent=39 // pred_region
          %s284 = sand.u32 %s29, 1
          %s285 = scalar_lea.sflag [#allocation3], %s284
          %s286 = sand.u32 %s29, 1
          %s287 = smul.addr %s286, 8192
          %s288 = scalar_lea.vmem [#allocation2], %s287
          %290 = vsyncadd %s285, 0
          %s291 = smul.addr %s19, 1024
          %s292 = smul.addr %s291, 8
          %s293 = scalar_lea.hbm %s0, %s292
          %s294 = sshll.u32 %s293, 4
          %s295 = int_to_ptr.hbm [resolvable:$true] %s294
          %s296 = sshll.u32 %s288, 4
          %s297 = int_to_ptr.vmem [resolvable:$true] %s296
          %302 = dma.hbm_to_vmem [thread:$0]  %s295, 131072, %s297, %s285, 1024, 1024, 64
        $region44: #{tpu_custom_call.1} parent=39 // pred_fallthru
          _
      $region40: #{tpu_custom_call.1} parent=5 // pred_fallthru
        _
      %p303 = scmp.le.s32.totalorder 1, %s19
      %p304 = scmp.lt.s32.totalorder %s19, 3
      %p305 = pnand %p303, %p304
      %p306 = pneg %p305
      // Predicated region
      $region45: #{tpu_custom_call.1} parent=5 // pred_check
        _
      $region46: #{tpu_custom_call.1} parent=5 // pred_check_branch
        %308 = sbr.rel (%p305) target = $region48
      $region47: #{tpu_custom_call.1} parent=5 // pred_region
        %s309 = ssub.s32 %s19, 1
        %s310 = sand.u32 %s32, 1
        %s311 = scalar_lea.sflag [#allocation3], %s310
        %s312 = sand.u32 %s32, 1
        %s313 = smul.addr %s312, 8192
        %s314 = scalar_lea.vmem [#allocation2], %s313
        // Predicated region
        $region49: #{tpu_custom_call.1} parent=47 // pred_check
          %p315 = pneg %p45
        $region50: #{tpu_custom_call.1} parent=47 // pred_check_branch
          %317 = sbr.rel (%p315) target = $region52
        $region51: #{tpu_custom_call.1} parent=47 // pred_region
          %319 = dma.done %s311, 131072
        $region52: #{tpu_custom_call.1} parent=47 // pred_fallthru
          _
        // Predicated region
        $region53: #{tpu_custom_call.1} parent=47 // pred_check
          %p320 = pneg %p66
        $region54: #{tpu_custom_call.1} parent=47 // pred_check_branch
          %322 = sbr.rel (%p320) target = $region56
        $region55: #{tpu_custom_call.1} parent=47 // pred_region
          %324 = dma.done [#allocation6], 8192
        $region56: #{tpu_custom_call.1} parent=47 // pred_fallthru
          _
        // Predicated region
        $region57: #{tpu_custom_call.1} parent=47 // pred_check
          %p325 = pneg %p87
        $region58: #{tpu_custom_call.1} parent=47 // pred_check_branch
          %327 = sbr.rel (%p325) target = $region60
        $region59: #{tpu_custom_call.1} parent=47 // pred_region
          %329 = dma.done [#allocation6], 512
        $region60: #{tpu_custom_call.1} parent=47 // pred_fallthru
          _
        // Predicated region
        $region61: #{tpu_custom_call.1} parent=47 // pred_check
          %p330 = pneg %p108
        $region62: #{tpu_custom_call.1} parent=47 // pred_check_branch
          %332 = sbr.rel (%p330) target = $region64
        $region63: #{tpu_custom_call.1} parent=47 // pred_region
          %334 = dma.done [#allocation9], 128
        $region64: #{tpu_custom_call.1} parent=47 // pred_fallthru
          _
        // Predicated region
        $region65: #{tpu_custom_call.1} parent=47 // pred_check
          %p335 = pneg %p150
        $region66: #{tpu_custom_call.1} parent=47 // pred_check_branch
          %337 = sbr.rel (%p335) target = $region68
        $region67: #{tpu_custom_call.1} parent=47 // pred_region
          %339 = dma.done [#allocation9], 128
        $region68: #{tpu_custom_call.1} parent=47 // pred_fallthru
          _
        // Predicated region
        $region69: #{tpu_custom_call.1} parent=47 // pred_check
          %p340 = pneg %p171
        $region70: #{tpu_custom_call.1} parent=47 // pred_check_branch
          %342 = sbr.rel (%p340) target = $region72
        $region71: #{tpu_custom_call.1} parent=47 // pred_region
          %344 = dma.done [#allocation4], 16
        $region72: #{tpu_custom_call.1} parent=47 // pred_fallthru
          _
        %345 = sfence
        %s346 = sand.u32 %s32, 1
        %s347 = scalar_lea.sflag [#allocation3], %s346
        %s348 = sand.u32 %s32, 1
        %s349 = smul.addr %s348, 8192
        %s350 = scalar_lea.vmem [#allocation2], %s349
        %p351 = pneg %p45
        %p352 = pneg %p42
        %p353 = pneg %p66
        %p354 = pneg %p63
        %p355 = pneg %p87
        %p356 = pneg %p84
        %p357 = pneg %p108
        %p358 = pneg %p105
        %p359 = pneg %p129
        %p360 = pneg %p126
        %p361 = pneg %p150
        %p362 = pneg %p147
        %p363 = pneg %p171
        %p364 = pneg %p168
        %p365 = pneg %p197
        %p366 = pneg %p194
        %p367 = scmp.lt.s32.totalorder %s24, 1
        %s368 = scalar_select %p367, %s24, 1
        %s369 = scalar_lea.vmem %s7, %s368
        %p370 = scmp.lt.s32.totalorder %s24, 1
        %s371 = scalar_select %p370, %s24, 1
        %s372 = scalar_lea.vmem %s7, %s371
        %v373 = vld [vmem:[%s314] sm:$0xff]
        %v374 = vld [vmem:[%s314 + $0x8] sm:$0xff]
        %v375 = vld [vmem:[%s314 + $0x10] sm:$0xff]
        %v376 = vld [vmem:[%s314 + $0x18] sm:$0xff]
        %v377 = vld [vmem:[%s314 + $0x20] sm:$0xff]
        %v378 = vld [vmem:[%s314 + $0x28] sm:$0xff]
        %v379 = vld [vmem:[%s314 + $0x30] sm:$0xff]
        %v380 = vld [vmem:[%s314 + $0x38] sm:$0xff]
        %v381 = vld [vmem:[%s314 + $0x40] sm:$0xff]
        %v382 = vld [vmem:[%s314 + $0x48] sm:$0xff]
        %v383 = vld [vmem:[%s314 + $0x50] sm:$0xff]
        %v384 = vld [vmem:[%s314 + $0x58] sm:$0xff]
        %v385 = vld [vmem:[%s314 + $0x60] sm:$0xff]
        %v386 = vld [vmem:[%s314 + $0x68] sm:$0xff]
        %v387 = vld [vmem:[%s314 + $0x70] sm:$0xff]
        %v388 = vld [vmem:[%s314 + $0x78] sm:$0xff]
        %v389 = vld [vmem:[%s314 + $0x80] sm:$0xff]
        %v390 = vld [vmem:[%s314 + $0x88] sm:$0xff]
        %v391 = vld [vmem:[%s314 + $0x90] sm:$0xff]
        %v392 = vld [vmem:[%s314 + $0x98] sm:$0xff]
        %v393 = vld [vmem:[%s314 + $0xa0] sm:$0xff]
        %v394 = vld [vmem:[%s314 + $0xa8] sm:$0xff]
        %v395 = vld [vmem:[%s314 + $0xb0] sm:$0xff]
        %v396 = vld [vmem:[%s314 + $0xb8] sm:$0xff]
        %v397 = vld [vmem:[%s314 + $0xc0] sm:$0xff]
        %v398 = vld [vmem:[%s314 + $0xc8] sm:$0xff]
        %v399 = vld [vmem:[%s314 + $0xd0] sm:$0xff]
        %v400 = vld [vmem:[%s314 + $0xd8] sm:$0xff]
        %v401 = vld [vmem:[%s314 + $0xe0] sm:$0xff]
        %v402 = vld [vmem:[%s314 + $0xe8] sm:$0xff]
        %v403 = vld [vmem:[%s314 + $0xf0] sm:$0xff]
        %v404 = vld [vmem:[%s314 + $0xf8] sm:$0xff]
        %v405 = vld [vmem:[%s314 + $0x100] sm:$0xff]
        %v406 = vld [vmem:[%s314 + $0x108] sm:$0xff]
        %v407 = vld [vmem:[%s314 + $0x110] sm:$0xff]
        %v408 = vld [vmem:[%s314 + $0x118] sm:$0xff]
        %v409 = vld [vmem:[%s314 + $0x120] sm:$0xff]
        %v410 = vld [vmem:[%s314 + $0x128] sm:$0xff]
        %v411 = vld [vmem:[%s314 + $0x130] sm:$0xff]
        %v412 = vld [vmem:[%s314 + $0x138] sm:$0xff]
        %v413 = vld [vmem:[%s314 + $0x140] sm:$0xff]
        %v414 = vld [vmem:[%s314 + $0x148] sm:$0xff]
        %v415 = vld [vmem:[%s314 + $0x150] sm:$0xff]
        %v416 = vld [vmem:[%s314 + $0x158] sm:$0xff]
        %v417 = vld [vmem:[%s314 + $0x160] sm:$0xff]
        %v418 = vld [vmem:[%s314 + $0x168] sm:$0xff]
        %v419 = vld [vmem:[%s314 + $0x170] sm:$0xff]
        %v420 = vld [vmem:[%s314 + $0x178] sm:$0xff]
        %v421 = vld [vmem:[%s314 + $0x180] sm:$0xff]
        %v422 = vld [vmem:[%s314 + $0x188] sm:$0xff]
        %v423 = vld [vmem:[%s314 + $0x190] sm:$0xff]
        %v424 = vld [vmem:[%s314 + $0x198] sm:$0xff]
        %v425 = vld [vmem:[%s314 + $0x1a0] sm:$0xff]
        %v426 = vld [vmem:[%s314 + $0x1a8] sm:$0xff]
        %v427 = vld [vmem:[%s314 + $0x1b0] sm:$0xff]
        %v428 = vld [vmem:[%s314 + $0x1b8] sm:$0xff]
        %v429 = vld [vmem:[%s314 + $0x1c0] sm:$0xff]
        %v430 = vld [vmem:[%s314 + $0x1c8] sm:$0xff]
        %v431 = vld [vmem:[%s314 + $0x1d0] sm:$0xff]
        %v432 = vld [vmem:[%s314 + $0x1d8] sm:$0xff]
        %v433 = vld [vmem:[%s314 + $0x1e0] sm:$0xff]
        %v434 = vld [vmem:[%s314 + $0x1e8] sm:$0xff]
        %v435 = vld [vmem:[%s314 + $0x1f0] sm:$0xff]
        %v436 = vld [vmem:[%s314 + $0x1f8] sm:$0xff]
        %v437 = vld [vmem:[%s314 + $0x200] sm:$0xff]
        %v438 = vld [vmem:[%s314 + $0x208] sm:$0xff]
        %v439 = vld [vmem:[%s314 + $0x210] sm:$0xff]
        %v440 = vld [vmem:[%s314 + $0x218] sm:$0xff]
        %v441 = vld [vmem:[%s314 + $0x220] sm:$0xff]
        %v442 = vld [vmem:[%s314 + $0x228] sm:$0xff]
        %v443 = vld [vmem:[%s314 + $0x230] sm:$0xff]
        %v444 = vld [vmem:[%s314 + $0x238] sm:$0xff]
        %v445 = vld [vmem:[%s314 + $0x240] sm:$0xff]
        %v446 = vld [vmem:[%s314 + $0x248] sm:$0xff]
        %v447 = vld [vmem:[%s314 + $0x250] sm:$0xff]
        %v448 = vld [vmem:[%s314 + $0x258] sm:$0xff]
        %v449 = vld [vmem:[%s314 + $0x260] sm:$0xff]
        %v450 = vld [vmem:[%s314 + $0x268] sm:$0xff]
        %v451 = vld [vmem:[%s314 + $0x270] sm:$0xff]
        %v452 = vld [vmem:[%s314 + $0x278] sm:$0xff]
        %v453 = vld [vmem:[%s314 + $0x280] sm:$0xff]
        %v454 = vld [vmem:[%s314 + $0x288] sm:$0xff]
        %v455 = vld [vmem:[%s314 + $0x290] sm:$0xff]
        %v456 = vld [vmem:[%s314 + $0x298] sm:$0xff]
        %v457 = vld [vmem:[%s314 + $0x2a0] sm:$0xff]
        %v458 = vld [vmem:[%s314 + $0x2a8] sm:$0xff]
        %v459 = vld [vmem:[%s314 + $0x2b0] sm:$0xff]
        %v460 = vld [vmem:[%s314 + $0x2b8] sm:$0xff]
        %v461 = vld [vmem:[%s314 + $0x2c0] sm:$0xff]
        %v462 = vld [vmem:[%s314 + $0x2c8] sm:$0xff]
        %v463 = vld [vmem:[%s314 + $0x2d0] sm:$0xff]
        %v464 = vld [vmem:[%s314 + $0x2d8] sm:$0xff]
        %v465 = vld [vmem:[%s314 + $0x2e0] sm:$0xff]
        %v466 = vld [vmem:[%s314 + $0x2e8] sm:$0xff]
        %v467 = vld [vmem:[%s314 + $0x2f0] sm:$0xff]
        %v468 = vld [vmem:[%s314 + $0x2f8] sm:$0xff]
        %v469 = vld [vmem:[%s314 + $0x300] sm:$0xff]
        %v470 = vld [vmem:[%s314 + $0x308] sm:$0xff]
        %v471 = vld [vmem:[%s314 + $0x310] sm:$0xff]
        %v472 = vld [vmem:[%s314 + $0x318] sm:$0xff]
        %v473 = vld [vmem:[%s314 + $0x320] sm:$0xff]
        %v474 = vld [vmem:[%s314 + $0x328] sm:$0xff]
        %v475 = vld [vmem:[%s314 + $0x330] sm:$0xff]
        %v476 = vld [vmem:[%s314 + $0x338] sm:$0xff]
        %v477 = vld [vmem:[%s314 + $0x340] sm:$0xff]
        %v478 = vld [vmem:[%s314 + $0x348] sm:$0xff]
        %v479 = vld [vmem:[%s314 + $0x350] sm:$0xff]
        %v480 = vld [vmem:[%s314 + $0x358] sm:$0xff]
        %v481 = vld [vmem:[%s314 + $0x360] sm:$0xff]
        %v482 = vld [vmem:[%s314 + $0x368] sm:$0xff]
        %v483 = vld [vmem:[%s314 + $0x370] sm:$0xff]
        %v484 = vld [vmem:[%s314 + $0x378] sm:$0xff]
        %v485 = vld [vmem:[%s314 + $0x380] sm:$0xff]
        %v486 = vld [vmem:[%s314 + $0x388] sm:$0xff]
        %v487 = vld [vmem:[%s314 + $0x390] sm:$0xff]
        %v488 = vld [vmem:[%s314 + $0x398] sm:$0xff]
        %v489 = vld [vmem:[%s314 + $0x3a0] sm:$0xff]
        %v490 = vld [vmem:[%s314 + $0x3a8] sm:$0xff]
        %v491 = vld [vmem:[%s314 + $0x3b0] sm:$0xff]
        %v492 = vld [vmem:[%s314 + $0x3b8] sm:$0xff]
        %v493 = vld [vmem:[%s314 + $0x3c0] sm:$0xff]
        %v494 = vld [vmem:[%s314 + $0x3c8] sm:$0xff]
        %v495 = vld [vmem:[%s314 + $0x3d0] sm:$0xff]
        %v496 = vld [vmem:[%s314 + $0x3d8] sm:$0xff]
        %v497 = vld [vmem:[%s314 + $0x3e0] sm:$0xff]
        %v498 = vld [vmem:[%s314 + $0x3e8] sm:$0xff]
        %v499 = vld [vmem:[%s314 + $0x3f0] sm:$0xff]
        %v500 = vld [vmem:[%s314 + $0x3f8] sm:$0xff]
        %v501 = vld [vmem:[%s314 + $0x400] sm:$0xff]
        %v502 = vld [vmem:[%s314 + $0x408] sm:$0xff]
        %v503 = vld [vmem:[%s314 + $0x410] sm:$0xff]
        %v504 = vld [vmem:[%s314 + $0x418] sm:$0xff]
        %v505 = vld [vmem:[%s314 + $0x420] sm:$0xff]
        %v506 = vld [vmem:[%s314 + $0x428] sm:$0xff]
        %v507 = vld [vmem:[%s314 + $0x430] sm:$0xff]
        %v508 = vld [vmem:[%s314 + $0x438] sm:$0xff]
        %v509 = vld [vmem:[%s314 + $0x440] sm:$0xff]
        %v510 = vld [vmem:[%s314 + $0x448] sm:$0xff]
        %v511 = vld [vmem:[%s314 + $0x450] sm:$0xff]
        %v512 = vld [vmem:[%s314 + $0x458] sm:$0xff]
        %v513 = vld [vmem:[%s314 + $0x460] sm:$0xff]
        %v514 = vld [vmem:[%s314 + $0x468] sm:$0xff]
        %v515 = vld [vmem:[%s314 + $0x470] sm:$0xff]
        %v516 = vld [vmem:[%s314 + $0x478] sm:$0xff]
        %v517 = vld [vmem:[%s314 + $0x480] sm:$0xff]
        %v518 = vld [vmem:[%s314 + $0x488] sm:$0xff]
        %v519 = vld [vmem:[%s314 + $0x490] sm:$0xff]
        %v520 = vld [vmem:[%s314 + $0x498] sm:$0xff]
        %v521 = vld [vmem:[%s314 + $0x4a0] sm:$0xff]
        %v522 = vld [vmem:[%s314 + $0x4a8] sm:$0xff]
        %v523 = vld [vmem:[%s314 + $0x4b0] sm:$0xff]
        %v524 = vld [vmem:[%s314 + $0x4b8] sm:$0xff]
        %v525 = vld [vmem:[%s314 + $0x4c0] sm:$0xff]
        %v526 = vld [vmem:[%s314 + $0x4c8] sm:$0xff]
        %v527 = vld [vmem:[%s314 + $0x4d0] sm:$0xff]
        %v528 = vld [vmem:[%s314 + $0x4d8] sm:$0xff]
        %v529 = vld [vmem:[%s314 + $0x4e0] sm:$0xff]
        %v530 = vld [vmem:[%s314 + $0x4e8] sm:$0xff]
        %v531 = vld [vmem:[%s314 + $0x4f0] sm:$0xff]
        %v532 = vld [vmem:[%s314 + $0x4f8] sm:$0xff]
        %v533 = vld [vmem:[%s314 + $0x500] sm:$0xff]
        %v534 = vld [vmem:[%s314 + $0x508] sm:$0xff]
        %v535 = vld [vmem:[%s314 + $0x510] sm:$0xff]
        %v536 = vld [vmem:[%s314 + $0x518] sm:$0xff]
        %v537 = vld [vmem:[%s314 + $0x520] sm:$0xff]
        %v538 = vld [vmem:[%s314 + $0x528] sm:$0xff]
        %v539 = vld [vmem:[%s314 + $0x530] sm:$0xff]
        %v540 = vld [vmem:[%s314 + $0x538] sm:$0xff]
        %v541 = vld [vmem:[%s314 + $0x540] sm:$0xff]
        %v542 = vld [vmem:[%s314 + $0x548] sm:$0xff]
        %v543 = vld [vmem:[%s314 + $0x550] sm:$0xff]
        %v544 = vld [vmem:[%s314 + $0x558] sm:$0xff]
        %v545 = vld [vmem:[%s314 + $0x560] sm:$0xff]
        %v546 = vld [vmem:[%s314 + $0x568] sm:$0xff]
        %v547 = vld [vmem:[%s314 + $0x570] sm:$0xff]
        %v548 = vld [vmem:[%s314 + $0x578] sm:$0xff]
        %v549 = vld [vmem:[%s314 + $0x580] sm:$0xff]
        %v550 = vld [vmem:[%s314 + $0x588] sm:$0xff]
        %v551 = vld [vmem:[%s314 + $0x590] sm:$0xff]
        %v552 = vld [vmem:[%s314 + $0x598] sm:$0xff]
        %v553 = vld [vmem:[%s314 + $0x5a0] sm:$0xff]
        %v554 = vld [vmem:[%s314 + $0x5a8] sm:$0xff]
        %v555 = vld [vmem:[%s314 + $0x5b0] sm:$0xff]
        %v556 = vld [vmem:[%s314 + $0x5b8] sm:$0xff]
        %v557 = vld [vmem:[%s314 + $0x5c0] sm:$0xff]
        %v558 = vld [vmem:[%s314 + $0x5c8] sm:$0xff]
        %v559 = vld [vmem:[%s314 + $0x5d0] sm:$0xff]
        %v560 = vld [vmem:[%s314 + $0x5d8] sm:$0xff]
        %v561 = vld [vmem:[%s314 + $0x5e0] sm:$0xff]
        %v562 = vld [vmem:[%s314 + $0x5e8] sm:$0xff]
        %v563 = vld [vmem:[%s314 + $0x5f0] sm:$0xff]
        %v564 = vld [vmem:[%s314 + $0x5f8] sm:$0xff]
        %v565 = vld [vmem:[%s314 + $0x600] sm:$0xff]
        %v566 = vld [vmem:[%s314 + $0x608] sm:$0xff]
        %v567 = vld [vmem:[%s314 + $0x610] sm:$0xff]
        %v568 = vld [vmem:[%s314 + $0x618] sm:$0xff]
        %v569 = vld [vmem:[%s314 + $0x620] sm:$0xff]
        %v570 = vld [vmem:[%s314 + $0x628] sm:$0xff]
        %v571 = vld [vmem:[%s314 + $0x630] sm:$0xff]
        %v572 = vld [vmem:[%s314 + $0x638] sm:$0xff]
        %v573 = vld [vmem:[%s314 + $0x640] sm:$0xff]
        %v574 = vld [vmem:[%s314 + $0x648] sm:$0xff]
        %v575 = vld [vmem:[%s314 + $0x650] sm:$0xff]
        %v576 = vld [vmem:[%s314 + $0x658] sm:$0xff]
        %v577 = vld [vmem:[%s314 + $0x660] sm:$0xff]
        %v578 = vld [vmem:[%s314 + $0x668] sm:$0xff]
        %v579 = vld [vmem:[%s314 + $0x670] sm:$0xff]
        %v580 = vld [vmem:[%s314 + $0x678] sm:$0xff]
        %v581 = vld [vmem:[%s314 + $0x680] sm:$0xff]
        %v582 = vld [vmem:[%s314 + $0x688] sm:$0xff]
        %v583 = vld [vmem:[%s314 + $0x690] sm:$0xff]
        %v584 = vld [vmem:[%s314 + $0x698] sm:$0xff]
        %v585 = vld [vmem:[%s314 + $0x6a0] sm:$0xff]
        %v586 = vld [vmem:[%s314 + $0x6a8] sm:$0xff]
        %v587 = vld [vmem:[%s314 + $0x6b0] sm:$0xff]
        %v588 = vld [vmem:[%s314 + $0x6b8] sm:$0xff]
        %v589 = vld [vmem:[%s314 + $0x6c0] sm:$0xff]
        %v590 = vld [vmem:[%s314 + $0x6c8] sm:$0xff]
        %v591 = vld [vmem:[%s314 + $0x6d0] sm:$0xff]
        %v592 = vld [vmem:[%s314 + $0x6d8] sm:$0xff]
        %v593 = vld [vmem:[%s314 + $0x6e0] sm:$0xff]
        %v594 = vld [vmem:[%s314 + $0x6e8] sm:$0xff]
        %v595 = vld [vmem:[%s314 + $0x6f0] sm:$0xff]
        %v596 = vld [vmem:[%s314 + $0x6f8] sm:$0xff]
        %v597 = vld [vmem:[%s314 + $0x700] sm:$0xff]
        %v598 = vld [vmem:[%s314 + $0x708] sm:$0xff]
        %v599 = vld [vmem:[%s314 + $0x710] sm:$0xff]
        %v600 = vld [vmem:[%s314 + $0x718] sm:$0xff]
        %v601 = vld [vmem:[%s314 + $0x720] sm:$0xff]
        %v602 = vld [vmem:[%s314 + $0x728] sm:$0xff]
        %v603 = vld [vmem:[%s314 + $0x730] sm:$0xff]
        %v604 = vld [vmem:[%s314 + $0x738] sm:$0xff]
        %v605 = vld [vmem:[%s314 + $0x740] sm:$0xff]
        %v606 = vld [vmem:[%s314 + $0x748] sm:$0xff]
        %v607 = vld [vmem:[%s314 + $0x750] sm:$0xff]
        %v608 = vld [vmem:[%s314 + $0x758] sm:$0xff]
        %v609 = vld [vmem:[%s314 + $0x760] sm:$0xff]
        %v610 = vld [vmem:[%s314 + $0x768] sm:$0xff]
        %v611 = vld [vmem:[%s314 + $0x770] sm:$0xff]
        %v612 = vld [vmem:[%s314 + $0x778] sm:$0xff]
        %v613 = vld [vmem:[%s314 + $0x780] sm:$0xff]
        %v614 = vld [vmem:[%s314 + $0x788] sm:$0xff]
        %v615 = vld [vmem:[%s314 + $0x790] sm:$0xff]
        %v616 = vld [vmem:[%s314 + $0x798] sm:$0xff]
        %v617 = vld [vmem:[%s314 + $0x7a0] sm:$0xff]
        %v618 = vld [vmem:[%s314 + $0x7a8] sm:$0xff]
        %v619 = vld [vmem:[%s314 + $0x7b0] sm:$0xff]
        %v620 = vld [vmem:[%s314 + $0x7b8] sm:$0xff]
        %v621 = vld [vmem:[%s314 + $0x7c0] sm:$0xff]
        %v622 = vld [vmem:[%s314 + $0x7c8] sm:$0xff]
        %v623 = vld [vmem:[%s314 + $0x7d0] sm:$0xff]
        %v624 = vld [vmem:[%s314 + $0x7d8] sm:$0xff]
        %v625 = vld [vmem:[%s314 + $0x7e0] sm:$0xff]
        %v626 = vld [vmem:[%s314 + $0x7e8] sm:$0xff]
        %v627 = vld [vmem:[%s314 + $0x7f0] sm:$0xff]
        %v628 = vld [vmem:[%s314 + $0x7f8] sm:$0xff]
        %v629 = vld [vmem:[%s314 + $0x800] sm:$0xff]
        %v630 = vld [vmem:[%s314 + $0x808] sm:$0xff]
        %v631 = vld [vmem:[%s314 + $0x810] sm:$0xff]
        %v632 = vld [vmem:[%s314 + $0x818] sm:$0xff]
        %v633 = vld [vmem:[%s314 + $0x820] sm:$0xff]
        %v634 = vld [vmem:[%s314 + $0x828] sm:$0xff]
        %v635 = vld [vmem:[%s314 + $0x830] sm:$0xff]
        %v636 = vld [vmem:[%s314 + $0x838] sm:$0xff]
        %v637 = vld [vmem:[%s314 + $0x840] sm:$0xff]
        %v638 = vld [vmem:[%s314 + $0x848] sm:$0xff]
        %v639 = vld [vmem:[%s314 + $0x850] sm:$0xff]
        %v640 = vld [vmem:[%s314 + $0x858] sm:$0xff]
        %v641 = vld [vmem:[%s314 + $0x860] sm:$0xff]
        %v642 = vld [vmem:[%s314 + $0x868] sm:$0xff]
        %v643 = vld [vmem:[%s314 + $0x870] sm:$0xff]
        %v644 = vld [vmem:[%s314 + $0x878] sm:$0xff]
        %v645 = vld [vmem:[%s314 + $0x880] sm:$0xff]
        %v646 = vld [vmem:[%s314 + $0x888] sm:$0xff]
        %v647 = vld [vmem:[%s314 + $0x890] sm:$0xff]
        %v648 = vld [vmem:[%s314 + $0x898] sm:$0xff]
        %v649 = vld [vmem:[%s314 + $0x8a0] sm:$0xff]
        %v650 = vld [vmem:[%s314 + $0x8a8] sm:$0xff]
        %v651 = vld [vmem:[%s314 + $0x8b0] sm:$0xff]
        %v652 = vld [vmem:[%s314 + $0x8b8] sm:$0xff]
        %v653 = vld [vmem:[%s314 + $0x8c0] sm:$0xff]
        %v654 = vld [vmem:[%s314 + $0x8c8] sm:$0xff]
        %v655 = vld [vmem:[%s314 + $0x8d0] sm:$0xff]
        %v656 = vld [vmem:[%s314 + $0x8d8] sm:$0xff]
        %v657 = vld [vmem:[%s314 + $0x8e0] sm:$0xff]
        %v658 = vld [vmem:[%s314 + $0x8e8] sm:$0xff]
        %v659 = vld [vmem:[%s314 + $0x8f0] sm:$0xff]
        %v660 = vld [vmem:[%s314 + $0x8f8] sm:$0xff]
        %v661 = vld [vmem:[%s314 + $0x900] sm:$0xff]
        %v662 = vld [vmem:[%s314 + $0x908] sm:$0xff]
        %v663 = vld [vmem:[%s314 + $0x910] sm:$0xff]
        %v664 = vld [vmem:[%s314 + $0x918] sm:$0xff]
        %v665 = vld [vmem:[%s314 + $0x920] sm:$0xff]
        %v666 = vld [vmem:[%s314 + $0x928] sm:$0xff]
        %v667 = vld [vmem:[%s314 + $0x930] sm:$0xff]
        %v668 = vld [vmem:[%s314 + $0x938] sm:$0xff]
        %v669 = vld [vmem:[%s314 + $0x940] sm:$0xff]
        %v670 = vld [vmem:[%s314 + $0x948] sm:$0xff]
        %v671 = vld [vmem:[%s314 + $0x950] sm:$0xff]
        %v672 = vld [vmem:[%s314 + $0x958] sm:$0xff]
        %v673 = vld [vmem:[%s314 + $0x960] sm:$0xff]
        %v674 = vld [vmem:[%s314 + $0x968] sm:$0xff]
        %v675 = vld [vmem:[%s314 + $0x970] sm:$0xff]
        %v676 = vld [vmem:[%s314 + $0x978] sm:$0xff]
        %v677 = vld [vmem:[%s314 + $0x980] sm:$0xff]
        %v678 = vld [vmem:[%s314 + $0x988] sm:$0xff]
        %v679 = vld [vmem:[%s314 + $0x990] sm:$0xff]
        %v680 = vld [vmem:[%s314 + $0x998] sm:$0xff]
        %v681 = vld [vmem:[%s314 + $0x9a0] sm:$0xff]
        %v682 = vld [vmem:[%s314 + $0x9a8] sm:$0xff]
        %v683 = vld [vmem:[%s314 + $0x9b0] sm:$0xff]
        %v684 = vld [vmem:[%s314 + $0x9b8] sm:$0xff]
        %v685 = vld [vmem:[%s314 + $0x9c0] sm:$0xff]
        %v686 = vld [vmem:[%s314 + $0x9c8] sm:$0xff]
        %v687 = vld [vmem:[%s314 + $0x9d0] sm:$0xff]
        %v688 = vld [vmem:[%s314 + $0x9d8] sm:$0xff]
        %v689 = vld [vmem:[%s314 + $0x9e0] sm:$0xff]
        %v690 = vld [vmem:[%s314 + $0x9e8] sm:$0xff]
        %v691 = vld [vmem:[%s314 + $0x9f0] sm:$0xff]
        %v692 = vld [vmem:[%s314 + $0x9f8] sm:$0xff]
        %v693 = vld [vmem:[%s314 + $0xa00] sm:$0xff]
        %v694 = vld [vmem:[%s314 + $0xa08] sm:$0xff]
        %v695 = vld [vmem:[%s314 + $0xa10] sm:$0xff]
        %v696 = vld [vmem:[%s314 + $0xa18] sm:$0xff]
        %v697 = vld [vmem:[%s314 + $0xa20] sm:$0xff]
        %v698 = vld [vmem:[%s314 + $0xa28] sm:$0xff]
        %v699 = vld [vmem:[%s314 + $0xa30] sm:$0xff]
        %v700 = vld [vmem:[%s314 + $0xa38] sm:$0xff]
        %v701 = vld [vmem:[%s314 + $0xa40] sm:$0xff]
        %v702 = vld [vmem:[%s314 + $0xa48] sm:$0xff]
        %v703 = vld [vmem:[%s314 + $0xa50] sm:$0xff]
        %v704 = vld [vmem:[%s314 + $0xa58] sm:$0xff]
        %v705 = vld [vmem:[%s314 + $0xa60] sm:$0xff]
        %v706 = vld [vmem:[%s314 + $0xa68] sm:$0xff]
        %v707 = vld [vmem:[%s314 + $0xa70] sm:$0xff]
        %v708 = vld [vmem:[%s314 + $0xa78] sm:$0xff]
        %v709 = vld [vmem:[%s314 + $0xa80] sm:$0xff]
        %v710 = vld [vmem:[%s314 + $0xa88] sm:$0xff]
        %v711 = vld [vmem:[%s314 + $0xa90] sm:$0xff]
        %v712 = vld [vmem:[%s314 + $0xa98] sm:$0xff]
        %v713 = vld [vmem:[%s314 + $0xaa0] sm:$0xff]
        %v714 = vld [vmem:[%s314 + $0xaa8] sm:$0xff]
        %v715 = vld [vmem:[%s314 + $0xab0] sm:$0xff]
        %v716 = vld [vmem:[%s314 + $0xab8] sm:$0xff]
        %v717 = vld [vmem:[%s314 + $0xac0] sm:$0xff]
        %v718 = vld [vmem:[%s314 + $0xac8] sm:$0xff]
        %v719 = vld [vmem:[%s314 + $0xad0] sm:$0xff]
        %v720 = vld [vmem:[%s314 + $0xad8] sm:$0xff]
        %v721 = vld [vmem:[%s314 + $0xae0] sm:$0xff]
        %v722 = vld [vmem:[%s314 + $0xae8] sm:$0xff]
        %v723 = vld [vmem:[%s314 + $0xaf0] sm:$0xff]
        %v724 = vld [vmem:[%s314 + $0xaf8] sm:$0xff]
        %v725 = vld [vmem:[%s314 + $0xb00] sm:$0xff]
        %v726 = vld [vmem:[%s314 + $0xb08] sm:$0xff]
        %v727 = vld [vmem:[%s314 + $0xb10] sm:$0xff]
        %v728 = vld [vmem:[%s314 + $0xb18] sm:$0xff]
        %v729 = vld [vmem:[%s314 + $0xb20] sm:$0xff]
        %v730 = vld [vmem:[%s314 + $0xb28] sm:$0xff]
        %v731 = vld [vmem:[%s314 + $0xb30] sm:$0xff]
        %v732 = vld [vmem:[%s314 + $0xb38] sm:$0xff]
        %v733 = vld [vmem:[%s314 + $0xb40] sm:$0xff]
        %v734 = vld [vmem:[%s314 + $0xb48] sm:$0xff]
        %v735 = vld [vmem:[%s314 + $0xb50] sm:$0xff]
        %v736 = vld [vmem:[%s314 + $0xb58] sm:$0xff]
        %v737 = vld [vmem:[%s314 + $0xb60] sm:$0xff]
        %v738 = vld [vmem:[%s314 + $0xb68] sm:$0xff]
        %v739 = vld [vmem:[%s314 + $0xb70] sm:$0xff]
        %v740 = vld [vmem:[%s314 + $0xb78] sm:$0xff]
        %v741 = vld [vmem:[%s314 + $0xb80] sm:$0xff]
        %v742 = vld [vmem:[%s314 + $0xb88] sm:$0xff]
        %v743 = vld [vmem:[%s314 + $0xb90] sm:$0xff]
        %v744 = vld [vmem:[%s314 + $0xb98] sm:$0xff]
        %v745 = vld [vmem:[%s314 + $0xba0] sm:$0xff]
        %v746 = vld [vmem:[%s314 + $0xba8] sm:$0xff]
        %v747 = vld [vmem:[%s314 + $0xbb0] sm:$0xff]
        %v748 = vld [vmem:[%s314 + $0xbb8] sm:$0xff]
        %v749 = vld [vmem:[%s314 + $0xbc0] sm:$0xff]
        %v750 = vld [vmem:[%s314 + $0xbc8] sm:$0xff]
        %v751 = vld [vmem:[%s314 + $0xbd0] sm:$0xff]
        %v752 = vld [vmem:[%s314 + $0xbd8] sm:$0xff]
        %v753 = vld [vmem:[%s314 + $0xbe0] sm:$0xff]
        %v754 = vld [vmem:[%s314 + $0xbe8] sm:$0xff]
        %v755 = vld [vmem:[%s314 + $0xbf0] sm:$0xff]
        %v756 = vld [vmem:[%s314 + $0xbf8] sm:$0xff]
        %v757 = vld [vmem:[%s314 + $0xc00] sm:$0xff]
        %v758 = vld [vmem:[%s314 + $0xc08] sm:$0xff]
        %v759 = vld [vmem:[%s314 + $0xc10] sm:$0xff]
        %v760 = vld [vmem:[%s314 + $0xc18] sm:$0xff]
        %v761 = vld [vmem:[%s314 + $0xc20] sm:$0xff]
        %v762 = vld [vmem:[%s314 + $0xc28] sm:$0xff]
        %v763 = vld [vmem:[%s314 + $0xc30] sm:$0xff]
        %v764 = vld [vmem:[%s314 + $0xc38] sm:$0xff]
        %v765 = vld [vmem:[%s314 + $0xc40] sm:$0xff]
        %v766 = vld [vmem:[%s314 + $0xc48] sm:$0xff]
        %v767 = vld [vmem:[%s314 + $0xc50] sm:$0xff]
        %v768 = vld [vmem:[%s314 + $0xc58] sm:$0xff]
        %v769 = vld [vmem:[%s314 + $0xc60] sm:$0xff]
        %v770 = vld [vmem:[%s314 + $0xc68] sm:$0xff]
        %v771 = vld [vmem:[%s314 + $0xc70] sm:$0xff]
        %v772 = vld [vmem:[%s314 + $0xc78] sm:$0xff]
        %v773 = vld [vmem:[%s314 + $0xc80] sm:$0xff]
        %v774 = vld [vmem:[%s314 + $0xc88] sm:$0xff]
        %v775 = vld [vmem:[%s314 + $0xc90] sm:$0xff]
        %v776 = vld [vmem:[%s314 + $0xc98] sm:$0xff]
        %v777 = vld [vmem:[%s314 + $0xca0] sm:$0xff]
        %v778 = vld [vmem:[%s314 + $0xca8] sm:$0xff]
        %v779 = vld [vmem:[%s314 + $0xcb0] sm:$0xff]
        %v780 = vld [vmem:[%s314 + $0xcb8] sm:$0xff]
        %v781 = vld [vmem:[%s314 + $0xcc0] sm:$0xff]
        %v782 = vld [vmem:[%s314 + $0xcc8] sm:$0xff]
        %v783 = vld [vmem:[%s314 + $0xcd0] sm:$0xff]
        %v784 = vld [vmem:[%s314 + $0xcd8] sm:$0xff]
        %v785 = vld [vmem:[%s314 + $0xce0] sm:$0xff]
        %v786 = vld [vmem:[%s314 + $0xce8] sm:$0xff]
        %v787 = vld [vmem:[%s314 + $0xcf0] sm:$0xff]
        %v788 = vld [vmem:[%s314 + $0xcf8] sm:$0xff]
        %v789 = vld [vmem:[%s314 + $0xd00] sm:$0xff]
        %v790 = vld [vmem:[%s314 + $0xd08] sm:$0xff]
        %v791 = vld [vmem:[%s314 + $0xd10] sm:$0xff]
        %v792 = vld [vmem:[%s314 + $0xd18] sm:$0xff]
        %v793 = vld [vmem:[%s314 + $0xd20] sm:$0xff]
        %v794 = vld [vmem:[%s314 + $0xd28] sm:$0xff]
        %v795 = vld [vmem:[%s314 + $0xd30] sm:$0xff]
        %v796 = vld [vmem:[%s314 + $0xd38] sm:$0xff]
        %v797 = vld [vmem:[%s314 + $0xd40] sm:$0xff]
        %v798 = vld [vmem:[%s314 + $0xd48] sm:$0xff]
        %v799 = vld [vmem:[%s314 + $0xd50] sm:$0xff]
        %v800 = vld [vmem:[%s314 + $0xd58] sm:$0xff]
        %v801 = vld [vmem:[%s314 + $0xd60] sm:$0xff]
        %v802 = vld [vmem:[%s314 + $0xd68] sm:$0xff]
        %v803 = vld [vmem:[%s314 + $0xd70] sm:$0xff]
        %v804 = vld [vmem:[%s314 + $0xd78] sm:$0xff]
        %v805 = vld [vmem:[%s314 + $0xd80] sm:$0xff]
        %v806 = vld [vmem:[%s314 + $0xd88] sm:$0xff]
        %v807 = vld [vmem:[%s314 + $0xd90] sm:$0xff]
        %v808 = vld [vmem:[%s314 + $0xd98] sm:$0xff]
        %v809 = vld [vmem:[%s314 + $0xda0] sm:$0xff]
        %v810 = vld [vmem:[%s314 + $0xda8] sm:$0xff]
        %v811 = vld [vmem:[%s314 + $0xdb0] sm:$0xff]
        %v812 = vld [vmem:[%s314 + $0xdb8] sm:$0xff]
        %v813 = vld [vmem:[%s314 + $0xdc0] sm:$0xff]
        %v814 = vld [vmem:[%s314 + $0xdc8] sm:$0xff]
        %v815 = vld [vmem:[%s314 + $0xdd0] sm:$0xff]
        %v816 = vld [vmem:[%s314 + $0xdd8] sm:$0xff]
        %v817 = vld [vmem:[%s314 + $0xde0] sm:$0xff]
        %v818 = vld [vmem:[%s314 + $0xde8] sm:$0xff]
        %v819 = vld [vmem:[%s314 + $0xdf0] sm:$0xff]
        %v820 = vld [vmem:[%s314 + $0xdf8] sm:$0xff]
        %v821 = vld [vmem:[%s314 + $0xe00] sm:$0xff]
        %v822 = vld [vmem:[%s314 + $0xe08] sm:$0xff]
        %v823 = vld [vmem:[%s314 + $0xe10] sm:$0xff]
        %v824 = vld [vmem:[%s314 + $0xe18] sm:$0xff]
        %v825 = vld [vmem:[%s314 + $0xe20] sm:$0xff]
        %v826 = vld [vmem:[%s314 + $0xe28] sm:$0xff]
        %v827 = vld [vmem:[%s314 + $0xe30] sm:$0xff]
        %v828 = vld [vmem:[%s314 + $0xe38] sm:$0xff]
        %v829 = vld [vmem:[%s314 + $0xe40] sm:$0xff]
        %v830 = vld [vmem:[%s314 + $0xe48] sm:$0xff]
        %v831 = vld [vmem:[%s314 + $0xe50] sm:$0xff]
        %v832 = vld [vmem:[%s314 + $0xe58] sm:$0xff]
        %v833 = vld [vmem:[%s314 + $0xe60] sm:$0xff]
        %v834 = vld [vmem:[%s314 + $0xe68] sm:$0xff]
        %v835 = vld [vmem:[%s314 + $0xe70] sm:$0xff]
        %v836 = vld [vmem:[%s314 + $0xe78] sm:$0xff]
        %v837 = vld [vmem:[%s314 + $0xe80] sm:$0xff]
        %v838 = vld [vmem:[%s314 + $0xe88] sm:$0xff]
        %v839 = vld [vmem:[%s314 + $0xe90] sm:$0xff]
        %v840 = vld [vmem:[%s314 + $0xe98] sm:$0xff]
        %v841 = vld [vmem:[%s314 + $0xea0] sm:$0xff]
        %v842 = vld [vmem:[%s314 + $0xea8] sm:$0xff]
        %v843 = vld [vmem:[%s314 + $0xeb0] sm:$0xff]
        %v844 = vld [vmem:[%s314 + $0xeb8] sm:$0xff]
        %v845 = vld [vmem:[%s314 + $0xec0] sm:$0xff]
        %v846 = vld [vmem:[%s314 + $0xec8] sm:$0xff]
        %v847 = vld [vmem:[%s314 + $0xed0] sm:$0xff]
        %v848 = vld [vmem:[%s314 + $0xed8] sm:$0xff]
        %v849 = vld [vmem:[%s314 + $0xee0] sm:$0xff]
        %v850 = vld [vmem:[%s314 + $0xee8] sm:$0xff]
        %v851 = vld [vmem:[%s314 + $0xef0] sm:$0xff]
        %v852 = vld [vmem:[%s314 + $0xef8] sm:$0xff]
        %v853 = vld [vmem:[%s314 + $0xf00] sm:$0xff]
        %v854 = vld [vmem:[%s314 + $0xf08] sm:$0xff]
        %v855 = vld [vmem:[%s314 + $0xf10] sm:$0xff]
        %v856 = vld [vmem:[%s314 + $0xf18] sm:$0xff]
        %v857 = vld [vmem:[%s314 + $0xf20] sm:$0xff]
        %v858 = vld [vmem:[%s314 + $0xf28] sm:$0xff]
        %v859 = vld [vmem:[%s314 + $0xf30] sm:$0xff]
        %v860 = vld [vmem:[%s314 + $0xf38] sm:$0xff]
        %v861 = vld [vmem:[%s314 + $0xf40] sm:$0xff]
        %v862 = vld [vmem:[%s314 + $0xf48] sm:$0xff]
        %v863 = vld [vmem:[%s314 + $0xf50] sm:$0xff]
        %v864 = vld [vmem:[%s314 + $0xf58] sm:$0xff]
        %v865 = vld [vmem:[%s314 + $0xf60] sm:$0xff]
        %v866 = vld [vmem:[%s314 + $0xf68] sm:$0xff]
        %v867 = vld [vmem:[%s314 + $0xf70] sm:$0xff]
        %v868 = vld [vmem:[%s314 + $0xf78] sm:$0xff]
        %v869 = vld [vmem:[%s314 + $0xf80] sm:$0xff]
        %v870 = vld [vmem:[%s314 + $0xf88] sm:$0xff]
        %v871 = vld [vmem:[%s314 + $0xf90] sm:$0xff]
        %v872 = vld [vmem:[%s314 + $0xf98] sm:$0xff]
        %v873 = vld [vmem:[%s314 + $0xfa0] sm:$0xff]
        %v874 = vld [vmem:[%s314 + $0xfa8] sm:$0xff]
        %v875 = vld [vmem:[%s314 + $0xfb0] sm:$0xff]
        %v876 = vld [vmem:[%s314 + $0xfb8] sm:$0xff]
        %v877 = vld [vmem:[%s314 + $0xfc0] sm:$0xff]
        %v878 = vld [vmem:[%s314 + $0xfc8] sm:$0xff]
        %v879 = vld [vmem:[%s314 + $0xfd0] sm:$0xff]
        %v880 = vld [vmem:[%s314 + $0xfd8] sm:$0xff]
        %v881 = vld [vmem:[%s314 + $0xfe0] sm:$0xff]
        %v882 = vld [vmem:[%s314 + $0xfe8] sm:$0xff]
        %v883 = vld [vmem:[%s314 + $0xff0] sm:$0xff]
        %v884 = vld [vmem:[%s314 + $0xff8] sm:$0xff]
        %v885 = vld [vmem:[%s314 + $0x1000] sm:$0xff]
        %v886 = vld [vmem:[%s314 + $0x1008] sm:$0xff]
        %v887 = vld [vmem:[%s314 + $0x1010] sm:$0xff]
        %v888 = vld [vmem:[%s314 + $0x1018] sm:$0xff]
        %v889 = vld [vmem:[%s314 + $0x1020] sm:$0xff]
        %v890 = vld [vmem:[%s314 + $0x1028] sm:$0xff]
        %v891 = vld [vmem:[%s314 + $0x1030] sm:$0xff]
        %v892 = vld [vmem:[%s314 + $0x1038] sm:$0xff]
        %v893 = vld [vmem:[%s314 + $0x1040] sm:$0xff]
        %v894 = vld [vmem:[%s314 + $0x1048] sm:$0xff]
        %v895 = vld [vmem:[%s314 + $0x1050] sm:$0xff]
        %v896 = vld [vmem:[%s314 + $0x1058] sm:$0xff]
        %v897 = vld [vmem:[%s314 + $0x1060] sm:$0xff]
        %v898 = vld [vmem:[%s314 + $0x1068] sm:$0xff]
        %v899 = vld [vmem:[%s314 + $0x1070] sm:$0xff]
        %v900 = vld [vmem:[%s314 + $0x1078] sm:$0xff]
        %v901 = vld [vmem:[%s314 + $0x1080] sm:$0xff]
        %v902 = vld [vmem:[%s314 + $0x1088] sm:$0xff]
        %v903 = vld [vmem:[%s314 + $0x1090] sm:$0xff]
        %v904 = vld [vmem:[%s314 + $0x1098] sm:$0xff]
        %v905 = vld [vmem:[%s314 + $0x10a0] sm:$0xff]
        %v906 = vld [vmem:[%s314 + $0x10a8] sm:$0xff]
        %v907 = vld [vmem:[%s314 + $0x10b0] sm:$0xff]
        %v908 = vld [vmem:[%s314 + $0x10b8] sm:$0xff]
        %v909 = vld [vmem:[%s314 + $0x10c0] sm:$0xff]
        %v910 = vld [vmem:[%s314 + $0x10c8] sm:$0xff]
        %v911 = vld [vmem:[%s314 + $0x10d0] sm:$0xff]
        %v912 = vld [vmem:[%s314 + $0x10d8] sm:$0xff]
        %v913 = vld [vmem:[%s314 + $0x10e0] sm:$0xff]
        %v914 = vld [vmem:[%s314 + $0x10e8] sm:$0xff]
        %v915 = vld [vmem:[%s314 + $0x10f0] sm:$0xff]
        %v916 = vld [vmem:[%s314 + $0x10f8] sm:$0xff]
        %v917 = vld [vmem:[%s314 + $0x1100] sm:$0xff]
        %v918 = vld [vmem:[%s314 + $0x1108] sm:$0xff]
        %v919 = vld [vmem:[%s314 + $0x1110] sm:$0xff]
        %v920 = vld [vmem:[%s314 + $0x1118] sm:$0xff]
        %v921 = vld [vmem:[%s314 + $0x1120] sm:$0xff]
        %v922 = vld [vmem:[%s314 + $0x1128] sm:$0xff]
        %v923 = vld [vmem:[%s314 + $0x1130] sm:$0xff]
        %v924 = vld [vmem:[%s314 + $0x1138] sm:$0xff]
        %v925 = vld [vmem:[%s314 + $0x1140] sm:$0xff]
        %v926 = vld [vmem:[%s314 + $0x1148] sm:$0xff]
        %v927 = vld [vmem:[%s314 + $0x1150] sm:$0xff]
        %v928 = vld [vmem:[%s314 + $0x1158] sm:$0xff]
        %v929 = vld [vmem:[%s314 + $0x1160] sm:$0xff]
        %v930 = vld [vmem:[%s314 + $0x1168] sm:$0xff]
        %v931 = vld [vmem:[%s314 + $0x1170] sm:$0xff]
        %v932 = vld [vmem:[%s314 + $0x1178] sm:$0xff]
        %v933 = vld [vmem:[%s314 + $0x1180] sm:$0xff]
        %v934 = vld [vmem:[%s314 + $0x1188] sm:$0xff]
        %v935 = vld [vmem:[%s314 + $0x1190] sm:$0xff]
        %v936 = vld [vmem:[%s314 + $0x1198] sm:$0xff]
        %v937 = vld [vmem:[%s314 + $0x11a0] sm:$0xff]
        %v938 = vld [vmem:[%s314 + $0x11a8] sm:$0xff]
        %v939 = vld [vmem:[%s314 + $0x11b0] sm:$0xff]
        %v940 = vld [vmem:[%s314 + $0x11b8] sm:$0xff]
        %v941 = vld [vmem:[%s314 + $0x11c0] sm:$0xff]
        %v942 = vld [vmem:[%s314 + $0x11c8] sm:$0xff]
        %v943 = vld [vmem:[%s314 + $0x11d0] sm:$0xff]
        %v944 = vld [vmem:[%s314 + $0x11d8] sm:$0xff]
        %v945 = vld [vmem:[%s314 + $0x11e0] sm:$0xff]
        %v946 = vld [vmem:[%s314 + $0x11e8] sm:$0xff]
        %v947 = vld [vmem:[%s314 + $0x11f0] sm:$0xff]
        %v948 = vld [vmem:[%s314 + $0x11f8] sm:$0xff]
        %v949 = vld [vmem:[%s314 + $0x1200] sm:$0xff]
        %v950 = vld [vmem:[%s314 + $0x1208] sm:$0xff]
        %v951 = vld [vmem:[%s314 + $0x1210] sm:$0xff]
        %v952 = vld [vmem:[%s314 + $0x1218] sm:$0xff]
        %v953 = vld [vmem:[%s314 + $0x1220] sm:$0xff]
        %v954 = vld [vmem:[%s314 + $0x1228] sm:$0xff]
        %v955 = vld [vmem:[%s314 + $0x1230] sm:$0xff]
        %v956 = vld [vmem:[%s314 + $0x1238] sm:$0xff]
        %v957 = vld [vmem:[%s314 + $0x1240] sm:$0xff]
        %v958 = vld [vmem:[%s314 + $0x1248] sm:$0xff]
        %v959 = vld [vmem:[%s314 + $0x1250] sm:$0xff]
        %v960 = vld [vmem:[%s314 + $0x1258] sm:$0xff]
        %v961 = vld [vmem:[%s314 + $0x1260] sm:$0xff]
        %v962 = vld [vmem:[%s314 + $0x1268] sm:$0xff]
        %v963 = vld [vmem:[%s314 + $0x1270] sm:$0xff]
        %v964 = vld [vmem:[%s314 + $0x1278] sm:$0xff]
        %v965 = vld [vmem:[%s314 + $0x1280] sm:$0xff]
        %v966 = vld [vmem:[%s314 + $0x1288] sm:$0xff]
        %v967 = vld [vmem:[%s314 + $0x1290] sm:$0xff]
        %v968 = vld [vmem:[%s314 + $0x1298] sm:$0xff]
        %v969 = vld [vmem:[%s314 + $0x12a0] sm:$0xff]
        %v970 = vld [vmem:[%s314 + $0x12a8] sm:$0xff]
        %v971 = vld [vmem:[%s314 + $0x12b0] sm:$0xff]
        %v972 = vld [vmem:[%s314 + $0x12b8] sm:$0xff]
        %v973 = vld [vmem:[%s314 + $0x12c0] sm:$0xff]
        %v974 = vld [vmem:[%s314 + $0x12c8] sm:$0xff]
        %v975 = vld [vmem:[%s314 + $0x12d0] sm:$0xff]
        %v976 = vld [vmem:[%s314 + $0x12d8] sm:$0xff]
        %v977 = vld [vmem:[%s314 + $0x12e0] sm:$0xff]
        %v978 = vld [vmem:[%s314 + $0x12e8] sm:$0xff]
        %v979 = vld [vmem:[%s314 + $0x12f0] sm:$0xff]
        %v980 = vld [vmem:[%s314 + $0x12f8] sm:$0xff]
        %v981 = vld [vmem:[%s314 + $0x1300] sm:$0xff]
        %v982 = vld [vmem:[%s314 + $0x1308] sm:$0xff]
        %v983 = vld [vmem:[%s314 + $0x1310] sm:$0xff]
        %v984 = vld [vmem:[%s314 + $0x1318] sm:$0xff]
        %v985 = vld [vmem:[%s314 + $0x1320] sm:$0xff]
        %v986 = vld [vmem:[%s314 + $0x1328] sm:$0xff]
        %v987 = vld [vmem:[%s314 + $0x1330] sm:$0xff]
        %v988 = vld [vmem:[%s314 + $0x1338] sm:$0xff]
        %v989 = vld [vmem:[%s314 + $0x1340] sm:$0xff]
        %v990 = vld [vmem:[%s314 + $0x1348] sm:$0xff]
        %v991 = vld [vmem:[%s314 + $0x1350] sm:$0xff]
        %v992 = vld [vmem:[%s314 + $0x1358] sm:$0xff]
        %v993 = vld [vmem:[%s314 + $0x1360] sm:$0xff]
        %v994 = vld [vmem:[%s314 + $0x1368] sm:$0xff]
        %v995 = vld [vmem:[%s314 + $0x1370] sm:$0xff]
        %v996 = vld [vmem:[%s314 + $0x1378] sm:$0xff]
        %v997 = vld [vmem:[%s314 + $0x1380] sm:$0xff]
        %v998 = vld [vmem:[%s314 + $0x1388] sm:$0xff]
        %v999 = vld [vmem:[%s314 + $0x1390] sm:$0xff]
        %v1000 = vld [vmem:[%s314 + $0x1398] sm:$0xff]
        %v1001 = vld [vmem:[%s314 + $0x13a0] sm:$0xff]
        %v1002 = vld [vmem:[%s314 + $0x13a8] sm:$0xff]
        %v1003 = vld [vmem:[%s314 + $0x13b0] sm:$0xff]
        %v1004 = vld [vmem:[%s314 + $0x13b8] sm:$0xff]
        %v1005 = vld [vmem:[%s314 + $0x13c0] sm:$0xff]
        %v1006 = vld [vmem:[%s314 + $0x13c8] sm:$0xff]
        %v1007 = vld [vmem:[%s314 + $0x13d0] sm:$0xff]
        %v1008 = vld [vmem:[%s314 + $0x13d8] sm:$0xff]
        %v1009 = vld [vmem:[%s314 + $0x13e0] sm:$0xff]
        %v1010 = vld [vmem:[%s314 + $0x13e8] sm:$0xff]
        %v1011 = vld [vmem:[%s314 + $0x13f0] sm:$0xff]
        %v1012 = vld [vmem:[%s314 + $0x13f8] sm:$0xff]
        %v1013 = vld [vmem:[%s314 + $0x1400] sm:$0xff]
        %v1014 = vld [vmem:[%s314 + $0x1408] sm:$0xff]
        %v1015 = vld [vmem:[%s314 + $0x1410] sm:$0xff]
        %v1016 = vld [vmem:[%s314 + $0x1418] sm:$0xff]
        %v1017 = vld [vmem:[%s314 + $0x1420] sm:$0xff]
        %v1018 = vld [vmem:[%s314 + $0x1428] sm:$0xff]
        %v1019 = vld [vmem:[%s314 + $0x1430] sm:$0xff]
        %v1020 = vld [vmem:[%s314 + $0x1438] sm:$0xff]
        %v1021 = vld [vmem:[%s314 + $0x1440] sm:$0xff]
        %v1022 = vld [vmem:[%s314 + $0x1448] sm:$0xff]
        %v1023 = vld [vmem:[%s314 + $0x1450] sm:$0xff]
        %v1024 = vld [vmem:[%s314 + $0x1458] sm:$0xff]
        %v1025 = vld [vmem:[%s314 + $0x1460] sm:$0xff]
        %v1026 = vld [vmem:[%s314 + $0x1468] sm:$0xff]
        %v1027 = vld [vmem:[%s314 + $0x1470] sm:$0xff]
        %v1028 = vld [vmem:[%s314 + $0x1478] sm:$0xff]
        %v1029 = vld [vmem:[%s314 + $0x1480] sm:$0xff]
        %v1030 = vld [vmem:[%s314 + $0x1488] sm:$0xff]
        %v1031 = vld [vmem:[%s314 + $0x1490] sm:$0xff]
        %v1032 = vld [vmem:[%s314 + $0x1498] sm:$0xff]
        %v1033 = vld [vmem:[%s314 + $0x14a0] sm:$0xff]
        %v1034 = vld [vmem:[%s314 + $0x14a8] sm:$0xff]
        %v1035 = vld [vmem:[%s314 + $0x14b0] sm:$0xff]
        %v1036 = vld [vmem:[%s314 + $0x14b8] sm:$0xff]
        %v1037 = vld [vmem:[%s314 + $0x14c0] sm:$0xff]
        %v1038 = vld [vmem:[%s314 + $0x14c8] sm:$0xff]
        %v1039 = vld [vmem:[%s314 + $0x14d0] sm:$0xff]
        %v1040 = vld [vmem:[%s314 + $0x14d8] sm:$0xff]
        %v1041 = vld [vmem:[%s314 + $0x14e0] sm:$0xff]
        %v1042 = vld [vmem:[%s314 + $0x14e8] sm:$0xff]
        %v1043 = vld [vmem:[%s314 + $0x14f0] sm:$0xff]
        %v1044 = vld [vmem:[%s314 + $0x14f8] sm:$0xff]
        %v1045 = vld [vmem:[%s314 + $0x1500] sm:$0xff]
        %v1046 = vld [vmem:[%s314 + $0x1508] sm:$0xff]
        %v1047 = vld [vmem:[%s314 + $0x1510] sm:$0xff]
        %v1048 = vld [vmem:[%s314 + $0x1518] sm:$0xff]
        %v1049 = vld [vmem:[%s314 + $0x1520] sm:$0xff]
        %v1050 = vld [vmem:[%s314 + $0x1528] sm:$0xff]
        %v1051 = vld [vmem:[%s314 + $0x1530] sm:$0xff]
        %v1052 = vld [vmem:[%s314 + $0x1538] sm:$0xff]
        %v1053 = vld [vmem:[%s314 + $0x1540] sm:$0xff]
        %v1054 = vld [vmem:[%s314 + $0x1548] sm:$0xff]
        %v1055 = vld [vmem:[%s314 + $0x1550] sm:$0xff]
        %v1056 = vld [vmem:[%s314 + $0x1558] sm:$0xff]
        %v1057 = vld [vmem:[%s314 + $0x1560] sm:$0xff]
        %v1058 = vld [vmem:[%s314 + $0x1568] sm:$0xff]
        %v1059 = vld [vmem:[%s314 + $0x1570] sm:$0xff]
        %v1060 = vld [vmem:[%s314 + $0x1578] sm:$0xff]
        %v1061 = vld [vmem:[%s314 + $0x1580] sm:$0xff]
        %v1062 = vld [vmem:[%s314 + $0x1588] sm:$0xff]
        %v1063 = vld [vmem:[%s314 + $0x1590] sm:$0xff]
        %v1064 = vld [vmem:[%s314 + $0x1598] sm:$0xff]
        %v1065 = vld [vmem:[%s314 + $0x15a0] sm:$0xff]
        %v1066 = vld [vmem:[%s314 + $0x15a8] sm:$0xff]
        %v1067 = vld [vmem:[%s314 + $0x15b0] sm:$0xff]
        %v1068 = vld [vmem:[%s314 + $0x15b8] sm:$0xff]
        %v1069 = vld [vmem:[%s314 + $0x15c0] sm:$0xff]
        %v1070 = vld [vmem:[%s314 + $0x15c8] sm:$0xff]
        %v1071 = vld [vmem:[%s314 + $0x15d0] sm:$0xff]
        %v1072 = vld [vmem:[%s314 + $0x15d8] sm:$0xff]
        %v1073 = vld [vmem:[%s314 + $0x15e0] sm:$0xff]
        %v1074 = vld [vmem:[%s314 + $0x15e8] sm:$0xff]
        %v1075 = vld [vmem:[%s314 + $0x15f0] sm:$0xff]
        %v1076 = vld [vmem:[%s314 + $0x15f8] sm:$0xff]
        %v1077 = vld [vmem:[%s314 + $0x1600] sm:$0xff]
        %v1078 = vld [vmem:[%s314 + $0x1608] sm:$0xff]
        %v1079 = vld [vmem:[%s314 + $0x1610] sm:$0xff]
        %v1080 = vld [vmem:[%s314 + $0x1618] sm:$0xff]
        %v1081 = vld [vmem:[%s314 + $0x1620] sm:$0xff]
        %v1082 = vld [vmem:[%s314 + $0x1628] sm:$0xff]
        %v1083 = vld [vmem:[%s314 + $0x1630] sm:$0xff]
        %v1084 = vld [vmem:[%s314 + $0x1638] sm:$0xff]
        %v1085 = vld [vmem:[%s314 + $0x1640] sm:$0xff]
        %v1086 = vld [vmem:[%s314 + $0x1648] sm:$0xff]
        %v1087 = vld [vmem:[%s314 + $0x1650] sm:$0xff]
        %v1088 = vld [vmem:[%s314 + $0x1658] sm:$0xff]
        %v1089 = vld [vmem:[%s314 + $0x1660] sm:$0xff]
        %v1090 = vld [vmem:[%s314 + $0x1668] sm:$0xff]
        %v1091 = vld [vmem:[%s314 + $0x1670] sm:$0xff]
        %v1092 = vld [vmem:[%s314 + $0x1678] sm:$0xff]
        %v1093 = vld [vmem:[%s314 + $0x1680] sm:$0xff]
        %v1094 = vld [vmem:[%s314 + $0x1688] sm:$0xff]
        %v1095 = vld [vmem:[%s314 + $0x1690] sm:$0xff]
        %v1096 = vld [vmem:[%s314 + $0x1698] sm:$0xff]
        %v1097 = vld [vmem:[%s314 + $0x16a0] sm:$0xff]
        %v1098 = vld [vmem:[%s314 + $0x16a8] sm:$0xff]
        %v1099 = vld [vmem:[%s314 + $0x16b0] sm:$0xff]
        %v1100 = vld [vmem:[%s314 + $0x16b8] sm:$0xff]
        %v1101 = vld [vmem:[%s314 + $0x16c0] sm:$0xff]
        %v1102 = vld [vmem:[%s314 + $0x16c8] sm:$0xff]
        %v1103 = vld [vmem:[%s314 + $0x16d0] sm:$0xff]
        %v1104 = vld [vmem:[%s314 + $0x16d8] sm:$0xff]
        %v1105 = vld [vmem:[%s314 + $0x16e0] sm:$0xff]
        %v1106 = vld [vmem:[%s314 + $0x16e8] sm:$0xff]
        %v1107 = vld [vmem:[%s314 + $0x16f0] sm:$0xff]
        %v1108 = vld [vmem:[%s314 + $0x16f8] sm:$0xff]
        %v1109 = vld [vmem:[%s314 + $0x1700] sm:$0xff]
        %v1110 = vld [vmem:[%s314 + $0x1708] sm:$0xff]
        %v1111 = vld [vmem:[%s314 + $0x1710] sm:$0xff]
        %v1112 = vld [vmem:[%s314 + $0x1718] sm:$0xff]
        %v1113 = vld [vmem:[%s314 + $0x1720] sm:$0xff]
        %v1114 = vld [vmem:[%s314 + $0x1728] sm:$0xff]
        %v1115 = vld [vmem:[%s314 + $0x1730] sm:$0xff]
        %v1116 = vld [vmem:[%s314 + $0x1738] sm:$0xff]
        %v1117 = vld [vmem:[%s314 + $0x1740] sm:$0xff]
        %v1118 = vld [vmem:[%s314 + $0x1748] sm:$0xff]
        %v1119 = vld [vmem:[%s314 + $0x1750] sm:$0xff]
        %v1120 = vld [vmem:[%s314 + $0x1758] sm:$0xff]
        %v1121 = vld [vmem:[%s314 + $0x1760] sm:$0xff]
        %v1122 = vld [vmem:[%s314 + $0x1768] sm:$0xff]
        %v1123 = vld [vmem:[%s314 + $0x1770] sm:$0xff]
        %v1124 = vld [vmem:[%s314 + $0x1778] sm:$0xff]
        %v1125 = vld [vmem:[%s314 + $0x1780] sm:$0xff]
        %v1126 = vld [vmem:[%s314 + $0x1788] sm:$0xff]
        %v1127 = vld [vmem:[%s314 + $0x1790] sm:$0xff]
        %v1128 = vld [vmem:[%s314 + $0x1798] sm:$0xff]
        %v1129 = vld [vmem:[%s314 + $0x17a0] sm:$0xff]
        %v1130 = vld [vmem:[%s314 + $0x17a8] sm:$0xff]
        %v1131 = vld [vmem:[%s314 + $0x17b0] sm:$0xff]
        %v1132 = vld [vmem:[%s314 + $0x17b8] sm:$0xff]
        %v1133 = vld [vmem:[%s314 + $0x17c0] sm:$0xff]
        %v1134 = vld [vmem:[%s314 + $0x17c8] sm:$0xff]
        %v1135 = vld [vmem:[%s314 + $0x17d0] sm:$0xff]
        %v1136 = vld [vmem:[%s314 + $0x17d8] sm:$0xff]
        %v1137 = vld [vmem:[%s314 + $0x17e0] sm:$0xff]
        %v1138 = vld [vmem:[%s314 + $0x17e8] sm:$0xff]
        %v1139 = vld [vmem:[%s314 + $0x17f0] sm:$0xff]
        %v1140 = vld [vmem:[%s314 + $0x17f8] sm:$0xff]
        %v1141 = vld [vmem:[%s314 + $0x1800] sm:$0xff]
        %v1142 = vld [vmem:[%s314 + $0x1808] sm:$0xff]
        %v1143 = vld [vmem:[%s314 + $0x1810] sm:$0xff]
        %v1144 = vld [vmem:[%s314 + $0x1818] sm:$0xff]
        %v1145 = vld [vmem:[%s314 + $0x1820] sm:$0xff]
        %v1146 = vld [vmem:[%s314 + $0x1828] sm:$0xff]
        %v1147 = vld [vmem:[%s314 + $0x1830] sm:$0xff]
        %v1148 = vld [vmem:[%s314 + $0x1838] sm:$0xff]
        %v1149 = vld [vmem:[%s314 + $0x1840] sm:$0xff]
        %v1150 = vld [vmem:[%s314 + $0x1848] sm:$0xff]
        %v1151 = vld [vmem:[%s314 + $0x1850] sm:$0xff]
        %v1152 = vld [vmem:[%s314 + $0x1858] sm:$0xff]
        %v1153 = vld [vmem:[%s314 + $0x1860] sm:$0xff]
        %v1154 = vld [vmem:[%s314 + $0x1868] sm:$0xff]
        %v1155 = vld [vmem:[%s314 + $0x1870] sm:$0xff]
        %v1156 = vld [vmem:[%s314 + $0x1878] sm:$0xff]
        %v1157 = vld [vmem:[%s314 + $0x1880] sm:$0xff]
        %v1158 = vld [vmem:[%s314 + $0x1888] sm:$0xff]
        %v1159 = vld [vmem:[%s314 + $0x1890] sm:$0xff]
        %v1160 = vld [vmem:[%s314 + $0x1898] sm:$0xff]
        %v1161 = vld [vmem:[%s314 + $0x18a0] sm:$0xff]
        %v1162 = vld [vmem:[%s314 + $0x18a8] sm:$0xff]
        %v1163 = vld [vmem:[%s314 + $0x18b0] sm:$0xff]
        %v1164 = vld [vmem:[%s314 + $0x18b8] sm:$0xff]
        %v1165 = vld [vmem:[%s314 + $0x18c0] sm:$0xff]
        %v1166 = vld [vmem:[%s314 + $0x18c8] sm:$0xff]
        %v1167 = vld [vmem:[%s314 + $0x18d0] sm:$0xff]
        %v1168 = vld [vmem:[%s314 + $0x18d8] sm:$0xff]
        %v1169 = vld [vmem:[%s314 + $0x18e0] sm:$0xff]
        %v1170 = vld [vmem:[%s314 + $0x18e8] sm:$0xff]
        %v1171 = vld [vmem:[%s314 + $0x18f0] sm:$0xff]
        %v1172 = vld [vmem:[%s314 + $0x18f8] sm:$0xff]
        %v1173 = vld [vmem:[%s314 + $0x1900] sm:$0xff]
        %v1174 = vld [vmem:[%s314 + $0x1908] sm:$0xff]
        %v1175 = vld [vmem:[%s314 + $0x1910] sm:$0xff]
        %v1176 = vld [vmem:[%s314 + $0x1918] sm:$0xff]
        %v1177 = vld [vmem:[%s314 + $0x1920] sm:$0xff]
        %v1178 = vld [vmem:[%s314 + $0x1928] sm:$0xff]
        %v1179 = vld [vmem:[%s314 + $0x1930] sm:$0xff]
        %v1180 = vld [vmem:[%s314 + $0x1938] sm:$0xff]
        %v1181 = vld [vmem:[%s314 + $0x1940] sm:$0xff]
        %v1182 = vld [vmem:[%s314 + $0x1948] sm:$0xff]
        %v1183 = vld [vmem:[%s314 + $0x1950] sm:$0xff]
        %v1184 = vld [vmem:[%s314 + $0x1958] sm:$0xff]
        %v1185 = vld [vmem:[%s314 + $0x1960] sm:$0xff]
        %v1186 = vld [vmem:[%s314 + $0x1968] sm:$0xff]
        %v1187 = vld [vmem:[%s314 + $0x1970] sm:$0xff]
        %v1188 = vld [vmem:[%s314 + $0x1978] sm:$0xff]
        %v1189 = vld [vmem:[%s314 + $0x1980] sm:$0xff]
        %v1190 = vld [vmem:[%s314 + $0x1988] sm:$0xff]
        %v1191 = vld [vmem:[%s314 + $0x1990] sm:$0xff]
        %v1192 = vld [vmem:[%s314 + $0x1998] sm:$0xff]
        %v1193 = vld [vmem:[%s314 + $0x19a0] sm:$0xff]
        %v1194 = vld [vmem:[%s314 + $0x19a8] sm:$0xff]
        %v1195 = vld [vmem:[%s314 + $0x19b0] sm:$0xff]
        %v1196 = vld [vmem:[%s314 + $0x19b8] sm:$0xff]
        %v1197 = vld [vmem:[%s314 + $0x19c0] sm:$0xff]
        %v1198 = vld [vmem:[%s314 + $0x19c8] sm:$0xff]
        %v1199 = vld [vmem:[%s314 + $0x19d0] sm:$0xff]
        %v1200 = vld [vmem:[%s314 + $0x19d8] sm:$0xff]
        %v1201 = vld [vmem:[%s314 + $0x19e0] sm:$0xff]
        %v1202 = vld [vmem:[%s314 + $0x19e8] sm:$0xff]
        %v1203 = vld [vmem:[%s314 + $0x19f0] sm:$0xff]
        %v1204 = vld [vmem:[%s314 + $0x19f8] sm:$0xff]
        %v1205 = vld [vmem:[%s314 + $0x1a00] sm:$0xff]
        %v1206 = vld [vmem:[%s314 + $0x1a08] sm:$0xff]
        %v1207 = vld [vmem:[%s314 + $0x1a10] sm:$0xff]
        %v1208 = vld [vmem:[%s314 + $0x1a18] sm:$0xff]
        %v1209 = vld [vmem:[%s314 + $0x1a20] sm:$0xff]
        %v1210 = vld [vmem:[%s314 + $0x1a28] sm:$0xff]
        %v1211 = vld [vmem:[%s314 + $0x1a30] sm:$0xff]
        %v1212 = vld [vmem:[%s314 + $0x1a38] sm:$0xff]
        %v1213 = vld [vmem:[%s314 + $0x1a40] sm:$0xff]
        %v1214 = vld [vmem:[%s314 + $0x1a48] sm:$0xff]
        %v1215 = vld [vmem:[%s314 + $0x1a50] sm:$0xff]
        %v1216 = vld [vmem:[%s314 + $0x1a58] sm:$0xff]
        %v1217 = vld [vmem:[%s314 + $0x1a60] sm:$0xff]
        %v1218 = vld [vmem:[%s314 + $0x1a68] sm:$0xff]
        %v1219 = vld [vmem:[%s314 + $0x1a70] sm:$0xff]
        %v1220 = vld [vmem:[%s314 + $0x1a78] sm:$0xff]
        %v1221 = vld [vmem:[%s314 + $0x1a80] sm:$0xff]
        %v1222 = vld [vmem:[%s314 + $0x1a88] sm:$0xff]
        %v1223 = vld [vmem:[%s314 + $0x1a90] sm:$0xff]
        %v1224 = vld [vmem:[%s314 + $0x1a98] sm:$0xff]
        %v1225 = vld [vmem:[%s314 + $0x1aa0] sm:$0xff]
        %v1226 = vld [vmem:[%s314 + $0x1aa8] sm:$0xff]
        %v1227 = vld [vmem:[%s314 + $0x1ab0] sm:$0xff]
        %v1228 = vld [vmem:[%s314 + $0x1ab8] sm:$0xff]
        %v1229 = vld [vmem:[%s314 + $0x1ac0] sm:$0xff]
        %v1230 = vld [vmem:[%s314 + $0x1ac8] sm:$0xff]
        %v1231 = vld [vmem:[%s314 + $0x1ad0] sm:$0xff]
        %v1232 = vld [vmem:[%s314 + $0x1ad8] sm:$0xff]
        %v1233 = vld [vmem:[%s314 + $0x1ae0] sm:$0xff]
        %v1234 = vld [vmem:[%s314 + $0x1ae8] sm:$0xff]
        %v1235 = vld [vmem:[%s314 + $0x1af0] sm:$0xff]
        %v1236 = vld [vmem:[%s314 + $0x1af8] sm:$0xff]
        %v1237 = vld [vmem:[%s314 + $0x1b00] sm:$0xff]
        %v1238 = vld [vmem:[%s314 + $0x1b08] sm:$0xff]
        %v1239 = vld [vmem:[%s314 + $0x1b10] sm:$0xff]
        %v1240 = vld [vmem:[%s314 + $0x1b18] sm:$0xff]
        %v1241 = vld [vmem:[%s314 + $0x1b20] sm:$0xff]
        %v1242 = vld [vmem:[%s314 + $0x1b28] sm:$0xff]
        %v1243 = vld [vmem:[%s314 + $0x1b30] sm:$0xff]
        %v1244 = vld [vmem:[%s314 + $0x1b38] sm:$0xff]
        %v1245 = vld [vmem:[%s314 + $0x1b40] sm:$0xff]
        %v1246 = vld [vmem:[%s314 + $0x1b48] sm:$0xff]
        %v1247 = vld [vmem:[%s314 + $0x1b50] sm:$0xff]
        %v1248 = vld [vmem:[%s314 + $0x1b58] sm:$0xff]
        %v1249 = vld [vmem:[%s314 + $0x1b60] sm:$0xff]
        %v1250 = vld [vmem:[%s314 + $0x1b68] sm:$0xff]
        %v1251 = vld [vmem:[%s314 + $0x1b70] sm:$0xff]
        %v1252 = vld [vmem:[%s314 + $0x1b78] sm:$0xff]
        %v1253 = vld [vmem:[%s314 + $0x1b80] sm:$0xff]
        %v1254 = vld [vmem:[%s314 + $0x1b88] sm:$0xff]
        %v1255 = vld [vmem:[%s314 + $0x1b90] sm:$0xff]
        %v1256 = vld [vmem:[%s314 + $0x1b98] sm:$0xff]
        %v1257 = vld [vmem:[%s314 + $0x1ba0] sm:$0xff]
        %v1258 = vld [vmem:[%s314 + $0x1ba8] sm:$0xff]
        %v1259 = vld [vmem:[%s314 + $0x1bb0] sm:$0xff]
        %v1260 = vld [vmem:[%s314 + $0x1bb8] sm:$0xff]
        %v1261 = vld [vmem:[%s314 + $0x1bc0] sm:$0xff]
        %v1262 = vld [vmem:[%s314 + $0x1bc8] sm:$0xff]
        %v1263 = vld [vmem:[%s314 + $0x1bd0] sm:$0xff]
        %v1264 = vld [vmem:[%s314 + $0x1bd8] sm:$0xff]
        %v1265 = vld [vmem:[%s314 + $0x1be0] sm:$0xff]
        %v1266 = vld [vmem:[%s314 + $0x1be8] sm:$0xff]
        %v1267 = vld [vmem:[%s314 + $0x1bf0] sm:$0xff]
        %v1268 = vld [vmem:[%s314 + $0x1bf8] sm:$0xff]
        %v1269 = vld [vmem:[%s314 + $0x1c00] sm:$0xff]
        %v1270 = vld [vmem:[%s314 + $0x1c08] sm:$0xff]
        %v1271 = vld [vmem:[%s314 + $0x1c10] sm:$0xff]
        %v1272 = vld [vmem:[%s314 + $0x1c18] sm:$0xff]
        %v1273 = vld [vmem:[%s314 + $0x1c20] sm:$0xff]
        %v1274 = vld [vmem:[%s314 + $0x1c28] sm:$0xff]
        %v1275 = vld [vmem:[%s314 + $0x1c30] sm:$0xff]
        %v1276 = vld [vmem:[%s314 + $0x1c38] sm:$0xff]
        %v1277 = vld [vmem:[%s314 + $0x1c40] sm:$0xff]
        %v1278 = vld [vmem:[%s314 + $0x1c48] sm:$0xff]
        %v1279 = vld [vmem:[%s314 + $0x1c50] sm:$0xff]
        %v1280 = vld [vmem:[%s314 + $0x1c58] sm:$0xff]
        %v1281 = vld [vmem:[%s314 + $0x1c60] sm:$0xff]
        %v1282 = vld [vmem:[%s314 + $0x1c68] sm:$0xff]
        %v1283 = vld [vmem:[%s314 + $0x1c70] sm:$0xff]
        %v1284 = vld [vmem:[%s314 + $0x1c78] sm:$0xff]
        %v1285 = vld [vmem:[%s314 + $0x1c80] sm:$0xff]
        %v1286 = vld [vmem:[%s314 + $0x1c88] sm:$0xff]
        %v1287 = vld [vmem:[%s314 + $0x1c90] sm:$0xff]
        %v1288 = vld [vmem:[%s314 + $0x1c98] sm:$0xff]
        %v1289 = vld [vmem:[%s314 + $0x1ca0] sm:$0xff]
        %v1290 = vld [vmem:[%s314 + $0x1ca8] sm:$0xff]
        %v1291 = vld [vmem:[%s314 + $0x1cb0] sm:$0xff]
        %v1292 = vld [vmem:[%s314 + $0x1cb8] sm:$0xff]
        %v1293 = vld [vmem:[%s314 + $0x1cc0] sm:$0xff]
        %v1294 = vld [vmem:[%s314 + $0x1cc8] sm:$0xff]
        %v1295 = vld [vmem:[%s314 + $0x1cd0] sm:$0xff]
        %v1296 = vld [vmem:[%s314 + $0x1cd8] sm:$0xff]
        %v1297 = vld [vmem:[%s314 + $0x1ce0] sm:$0xff]
        %v1298 = vld [vmem:[%s314 + $0x1ce8] sm:$0xff]
        %v1299 = vld [vmem:[%s314 + $0x1cf0] sm:$0xff]
        %v1300 = vld [vmem:[%s314 + $0x1cf8] sm:$0xff]
        %v1301 = vld [vmem:[%s314 + $0x1d00] sm:$0xff]
        %v1302 = vld [vmem:[%s314 + $0x1d08] sm:$0xff]
        %v1303 = vld [vmem:[%s314 + $0x1d10] sm:$0xff]
        %v1304 = vld [vmem:[%s314 + $0x1d18] sm:$0xff]
        %v1305 = vld [vmem:[%s314 + $0x1d20] sm:$0xff]
        %v1306 = vld [vmem:[%s314 + $0x1d28] sm:$0xff]
        %v1307 = vld [vmem:[%s314 + $0x1d30] sm:$0xff]
        %v1308 = vld [vmem:[%s314 + $0x1d38] sm:$0xff]
        %v1309 = vld [vmem:[%s314 + $0x1d40] sm:$0xff]
        %v1310 = vld [vmem:[%s314 + $0x1d48] sm:$0xff]
        %v1311 = vld [vmem:[%s314 + $0x1d50] sm:$0xff]
        %v1312 = vld [vmem:[%s314 + $0x1d58] sm:$0xff]
        %v1313 = vld [vmem:[%s314 + $0x1d60] sm:$0xff]
        %v1314 = vld [vmem:[%s314 + $0x1d68] sm:$0xff]
        %v1315 = vld [vmem:[%s314 + $0x1d70] sm:$0xff]
        %v1316 = vld [vmem:[%s314 + $0x1d78] sm:$0xff]
        %v1317 = vld [vmem:[%s314 + $0x1d80] sm:$0xff]
        %v1318 = vld [vmem:[%s314 + $0x1d88] sm:$0xff]
        %v1319 = vld [vmem:[%s314 + $0x1d90] sm:$0xff]
        %v1320 = vld [vmem:[%s314 + $0x1d98] sm:$0xff]
        %v1321 = vld [vmem:[%s314 + $0x1da0] sm:$0xff]
        %v1322 = vld [vmem:[%s314 + $0x1da8] sm:$0xff]
        %v1323 = vld [vmem:[%s314 + $0x1db0] sm:$0xff]
        %v1324 = vld [vmem:[%s314 + $0x1db8] sm:$0xff]
        %v1325 = vld [vmem:[%s314 + $0x1dc0] sm:$0xff]
        %v1326 = vld [vmem:[%s314 + $0x1dc8] sm:$0xff]
        %v1327 = vld [vmem:[%s314 + $0x1dd0] sm:$0xff]
        %v1328 = vld [vmem:[%s314 + $0x1dd8] sm:$0xff]
        %v1329 = vld [vmem:[%s314 + $0x1de0] sm:$0xff]
        %v1330 = vld [vmem:[%s314 + $0x1de8] sm:$0xff]
        %v1331 = vld [vmem:[%s314 + $0x1df0] sm:$0xff]
        %v1332 = vld [vmem:[%s314 + $0x1df8] sm:$0xff]
        %v1333 = vld [vmem:[%s314 + $0x1e00] sm:$0xff]
        %v1334 = vld [vmem:[%s314 + $0x1e08] sm:$0xff]
        %v1335 = vld [vmem:[%s314 + $0x1e10] sm:$0xff]
        %v1336 = vld [vmem:[%s314 + $0x1e18] sm:$0xff]
        %v1337 = vld [vmem:[%s314 + $0x1e20] sm:$0xff]
        %v1338 = vld [vmem:[%s314 + $0x1e28] sm:$0xff]
        %v1339 = vld [vmem:[%s314 + $0x1e30] sm:$0xff]
        %v1340 = vld [vmem:[%s314 + $0x1e38] sm:$0xff]
        %v1341 = vld [vmem:[%s314 + $0x1e40] sm:$0xff]
        %v1342 = vld [vmem:[%s314 + $0x1e48] sm:$0xff]
        %v1343 = vld [vmem:[%s314 + $0x1e50] sm:$0xff]
        %v1344 = vld [vmem:[%s314 + $0x1e58] sm:$0xff]
        %v1345 = vld [vmem:[%s314 + $0x1e60] sm:$0xff]
        %v1346 = vld [vmem:[%s314 + $0x1e68] sm:$0xff]
        %v1347 = vld [vmem:[%s314 + $0x1e70] sm:$0xff]
        %v1348 = vld [vmem:[%s314 + $0x1e78] sm:$0xff]
        %v1349 = vld [vmem:[%s314 + $0x1e80] sm:$0xff]
        %v1350 = vld [vmem:[%s314 + $0x1e88] sm:$0xff]
        %v1351 = vld [vmem:[%s314 + $0x1e90] sm:$0xff]
        %v1352 = vld [vmem:[%s314 + $0x1e98] sm:$0xff]
        %v1353 = vld [vmem:[%s314 + $0x1ea0] sm:$0xff]
        %v1354 = vld [vmem:[%s314 + $0x1ea8] sm:$0xff]
        %v1355 = vld [vmem:[%s314 + $0x1eb0] sm:$0xff]
        %v1356 = vld [vmem:[%s314 + $0x1eb8] sm:$0xff]
        %v1357 = vld [vmem:[%s314 + $0x1ec0] sm:$0xff]
        %v1358 = vld [vmem:[%s314 + $0x1ec8] sm:$0xff]
        %v1359 = vld [vmem:[%s314 + $0x1ed0] sm:$0xff]
        %v1360 = vld [vmem:[%s314 + $0x1ed8] sm:$0xff]
        %v1361 = vld [vmem:[%s314 + $0x1ee0] sm:$0xff]
        %v1362 = vld [vmem:[%s314 + $0x1ee8] sm:$0xff]
        %v1363 = vld [vmem:[%s314 + $0x1ef0] sm:$0xff]
        %v1364 = vld [vmem:[%s314 + $0x1ef8] sm:$0xff]
        %v1365 = vld [vmem:[%s314 + $0x1f00] sm:$0xff]
        %v1366 = vld [vmem:[%s314 + $0x1f08] sm:$0xff]
        %v1367 = vld [vmem:[%s314 + $0x1f10] sm:$0xff]
        %v1368 = vld [vmem:[%s314 + $0x1f18] sm:$0xff]
        %v1369 = vld [vmem:[%s314 + $0x1f20] sm:$0xff]
        %v1370 = vld [vmem:[%s314 + $0x1f28] sm:$0xff]
        %v1371 = vld [vmem:[%s314 + $0x1f30] sm:$0xff]
        %v1372 = vld [vmem:[%s314 + $0x1f38] sm:$0xff]
        %v1373 = vld [vmem:[%s314 + $0x1f40] sm:$0xff]
        %v1374 = vld [vmem:[%s314 + $0x1f48] sm:$0xff]
        %v1375 = vld [vmem:[%s314 + $0x1f50] sm:$0xff]
        %v1376 = vld [vmem:[%s314 + $0x1f58] sm:$0xff]
        %v1377 = vld [vmem:[%s314 + $0x1f60] sm:$0xff]
        %v1378 = vld [vmem:[%s314 + $0x1f68] sm:$0xff]
        %v1379 = vld [vmem:[%s314 + $0x1f70] sm:$0xff]
        %v1380 = vld [vmem:[%s314 + $0x1f78] sm:$0xff]
        %v1381 = vld [vmem:[%s314 + $0x1f80] sm:$0xff]
        %v1382 = vld [vmem:[%s314 + $0x1f88] sm:$0xff]
        %v1383 = vld [vmem:[%s314 + $0x1f90] sm:$0xff]
        %v1384 = vld [vmem:[%s314 + $0x1f98] sm:$0xff]
        %v1385 = vld [vmem:[%s314 + $0x1fa0] sm:$0xff]
        %v1386 = vld [vmem:[%s314 + $0x1fa8] sm:$0xff]
        %v1387 = vld [vmem:[%s314 + $0x1fb0] sm:$0xff]
        %v1388 = vld [vmem:[%s314 + $0x1fb8] sm:$0xff]
        %v1389 = vld [vmem:[%s314 + $0x1fc0] sm:$0xff]
        %v1390 = vld [vmem:[%s314 + $0x1fc8] sm:$0xff]
        %v1391 = vld [vmem:[%s314 + $0x1fd0] sm:$0xff]
        %v1392 = vld [vmem:[%s314 + $0x1fd8] sm:$0xff]
        %v1393 = vld [vmem:[%s314 + $0x1fe0] sm:$0xff]
        %v1394 = vld [vmem:[%s314 + $0x1fe8] sm:$0xff]
        %v1395 = vld [vmem:[%s314 + $0x1ff0] sm:$0xff]
        %v1396 = vld [vmem:[%s314 + $0x1ff8] sm:$0xff]
        %v1397 = vpack.c.bf16 %v381, %v373
        %v1398 = vpack.c.bf16 %v382, %v374
        %v1399 = vpack.c.bf16 %v383, %v375
        %v1400 = vpack.c.bf16 %v384, %v376
        %v1401 = vpack.c.bf16 %v385, %v377
        %v1402 = vpack.c.bf16 %v386, %v378
        %v1403 = vpack.c.bf16 %v387, %v379
        %v1404 = vpack.c.bf16 %v388, %v380
        %v1405 = vpack.c.bf16 %v397, %v389
        %v1406 = vpack.c.bf16 %v398, %v390
        %v1407 = vpack.c.bf16 %v399, %v391
        %v1408 = vpack.c.bf16 %v400, %v392
        %v1409 = vpack.c.bf16 %v401, %v393
        %v1410 = vpack.c.bf16 %v402, %v394
        %v1411 = vpack.c.bf16 %v403, %v395
        %v1412 = vpack.c.bf16 %v404, %v396
        %v1413 = vpack.c.bf16 %v413, %v405
        %v1414 = vpack.c.bf16 %v414, %v406
        %v1415 = vpack.c.bf16 %v415, %v407
        %v1416 = vpack.c.bf16 %v416, %v408
        %v1417 = vpack.c.bf16 %v417, %v409
        %v1418 = vpack.c.bf16 %v418, %v410
        %v1419 = vpack.c.bf16 %v419, %v411
        %v1420 = vpack.c.bf16 %v420, %v412
        %v1421 = vpack.c.bf16 %v429, %v421
        %v1422 = vpack.c.bf16 %v430, %v422
        %v1423 = vpack.c.bf16 %v431, %v423
        %v1424 = vpack.c.bf16 %v432, %v424
        %v1425 = vpack.c.bf16 %v433, %v425
        %v1426 = vpack.c.bf16 %v434, %v426
        %v1427 = vpack.c.bf16 %v435, %v427
        %v1428 = vpack.c.bf16 %v436, %v428
        %v1429 = vpack.c.bf16 %v445, %v437
        %v1430 = vpack.c.bf16 %v446, %v438
        %v1431 = vpack.c.bf16 %v447, %v439
        %v1432 = vpack.c.bf16 %v448, %v440
        %v1433 = vpack.c.bf16 %v449, %v441
        %v1434 = vpack.c.bf16 %v450, %v442
        %v1435 = vpack.c.bf16 %v451, %v443
        %v1436 = vpack.c.bf16 %v452, %v444
        %v1437 = vpack.c.bf16 %v461, %v453
        %v1438 = vpack.c.bf16 %v462, %v454
        %v1439 = vpack.c.bf16 %v463, %v455
        %v1440 = vpack.c.bf16 %v464, %v456
        %v1441 = vpack.c.bf16 %v465, %v457
        %v1442 = vpack.c.bf16 %v466, %v458
        %v1443 = vpack.c.bf16 %v467, %v459
        %v1444 = vpack.c.bf16 %v468, %v460
        %v1445 = vpack.c.bf16 %v477, %v469
        %v1446 = vpack.c.bf16 %v478, %v470
        %v1447 = vpack.c.bf16 %v479, %v471
        %v1448 = vpack.c.bf16 %v480, %v472
        %v1449 = vpack.c.bf16 %v481, %v473
        %v1450 = vpack.c.bf16 %v482, %v474
        %v1451 = vpack.c.bf16 %v483, %v475
        %v1452 = vpack.c.bf16 %v484, %v476
        %v1453 = vpack.c.bf16 %v493, %v485
        %v1454 = vpack.c.bf16 %v494, %v486
        %v1455 = vpack.c.bf16 %v495, %v487
        %v1456 = vpack.c.bf16 %v496, %v488
        %v1457 = vpack.c.bf16 %v497, %v489
        %v1458 = vpack.c.bf16 %v498, %v490
        %v1459 = vpack.c.bf16 %v499, %v491
        %v1460 = vpack.c.bf16 %v500, %v492
        %v1461 = vpack.c.bf16 %v509, %v501
        %v1462 = vpack.c.bf16 %v510, %v502
        %v1463 = vpack.c.bf16 %v511, %v503
        %v1464 = vpack.c.bf16 %v512, %v504
        %v1465 = vpack.c.bf16 %v513, %v505
        %v1466 = vpack.c.bf16 %v514, %v506
        %v1467 = vpack.c.bf16 %v515, %v507
        %v1468 = vpack.c.bf16 %v516, %v508
        %v1469 = vpack.c.bf16 %v525, %v517
        %v1470 = vpack.c.bf16 %v526, %v518
        %v1471 = vpack.c.bf16 %v527, %v519
        %v1472 = vpack.c.bf16 %v528, %v520
        %v1473 = vpack.c.bf16 %v529, %v521
        %v1474 = vpack.c.bf16 %v530, %v522
        %v1475 = vpack.c.bf16 %v531, %v523
        %v1476 = vpack.c.bf16 %v532, %v524
        %v1477 = vpack.c.bf16 %v541, %v533
        %v1478 = vpack.c.bf16 %v542, %v534
        %v1479 = vpack.c.bf16 %v543, %v535
        %v1480 = vpack.c.bf16 %v544, %v536
        %v1481 = vpack.c.bf16 %v545, %v537
        %v1482 = vpack.c.bf16 %v546, %v538
        %v1483 = vpack.c.bf16 %v547, %v539
        %v1484 = vpack.c.bf16 %v548, %v540
        %v1485 = vpack.c.bf16 %v557, %v549
        %v1486 = vpack.c.bf16 %v558, %v550
        %v1487 = vpack.c.bf16 %v559, %v551
        %v1488 = vpack.c.bf16 %v560, %v552
        %v1489 = vpack.c.bf16 %v561, %v553
        %v1490 = vpack.c.bf16 %v562, %v554
        %v1491 = vpack.c.bf16 %v563, %v555
        %v1492 = vpack.c.bf16 %v564, %v556
        %v1493 = vpack.c.bf16 %v573, %v565
        %v1494 = vpack.c.bf16 %v574, %v566
        %v1495 = vpack.c.bf16 %v575, %v567
        %v1496 = vpack.c.bf16 %v576, %v568
        %v1497 = vpack.c.bf16 %v577, %v569
        %v1498 = vpack.c.bf16 %v578, %v570
        %v1499 = vpack.c.bf16 %v579, %v571
        %v1500 = vpack.c.bf16 %v580, %v572
        %v1501 = vpack.c.bf16 %v589, %v581
        %v1502 = vpack.c.bf16 %v590, %v582
        %v1503 = vpack.c.bf16 %v591, %v583
        %v1504 = vpack.c.bf16 %v592, %v584
        %v1505 = vpack.c.bf16 %v593, %v585
        %v1506 = vpack.c.bf16 %v594, %v586
        %v1507 = vpack.c.bf16 %v595, %v587
        %v1508 = vpack.c.bf16 %v596, %v588
        %v1509 = vpack.c.bf16 %v605, %v597
        %v1510 = vpack.c.bf16 %v606, %v598
        %v1511 = vpack.c.bf16 %v607, %v599
        %v1512 = vpack.c.bf16 %v608, %v600
        %v1513 = vpack.c.bf16 %v609, %v601
        %v1514 = vpack.c.bf16 %v610, %v602
        %v1515 = vpack.c.bf16 %v611, %v603
        %v1516 = vpack.c.bf16 %v612, %v604
        %v1517 = vpack.c.bf16 %v621, %v613
        %v1518 = vpack.c.bf16 %v622, %v614
        %v1519 = vpack.c.bf16 %v623, %v615
        %v1520 = vpack.c.bf16 %v624, %v616
        %v1521 = vpack.c.bf16 %v625, %v617
        %v1522 = vpack.c.bf16 %v626, %v618
        %v1523 = vpack.c.bf16 %v627, %v619
        %v1524 = vpack.c.bf16 %v628, %v620
        %v1525 = vpack.c.bf16 %v637, %v629
        %v1526 = vpack.c.bf16 %v638, %v630
        %v1527 = vpack.c.bf16 %v639, %v631
        %v1528 = vpack.c.bf16 %v640, %v632
        %v1529 = vpack.c.bf16 %v641, %v633
        %v1530 = vpack.c.bf16 %v642, %v634
        %v1531 = vpack.c.bf16 %v643, %v635
        %v1532 = vpack.c.bf16 %v644, %v636
        %v1533 = vpack.c.bf16 %v653, %v645
        %v1534 = vpack.c.bf16 %v654, %v646
        %v1535 = vpack.c.bf16 %v655, %v647
        %v1536 = vpack.c.bf16 %v656, %v648
        %v1537 = vpack.c.bf16 %v657, %v649
        %v1538 = vpack.c.bf16 %v658, %v650
        %v1539 = vpack.c.bf16 %v659, %v651
        %v1540 = vpack.c.bf16 %v660, %v652
        %v1541 = vpack.c.bf16 %v669, %v661
        %v1542 = vpack.c.bf16 %v670, %v662
        %v1543 = vpack.c.bf16 %v671, %v663
        %v1544 = vpack.c.bf16 %v672, %v664
        %v1545 = vpack.c.bf16 %v673, %v665
        %v1546 = vpack.c.bf16 %v674, %v666
        %v1547 = vpack.c.bf16 %v675, %v667
        %v1548 = vpack.c.bf16 %v676, %v668
        %v1549 = vpack.c.bf16 %v685, %v677
        %v1550 = vpack.c.bf16 %v686, %v678
        %v1551 = vpack.c.bf16 %v687, %v679
        %v1552 = vpack.c.bf16 %v688, %v680
        %v1553 = vpack.c.bf16 %v689, %v681
        %v1554 = vpack.c.bf16 %v690, %v682
        %v1555 = vpack.c.bf16 %v691, %v683
        %v1556 = vpack.c.bf16 %v692, %v684
        %v1557 = vpack.c.bf16 %v701, %v693
        %v1558 = vpack.c.bf16 %v702, %v694
        %v1559 = vpack.c.bf16 %v703, %v695
        %v1560 = vpack.c.bf16 %v704, %v696
        %v1561 = vpack.c.bf16 %v705, %v697
        %v1562 = vpack.c.bf16 %v706, %v698
        %v1563 = vpack.c.bf16 %v707, %v699
        %v1564 = vpack.c.bf16 %v708, %v700
        %v1565 = vpack.c.bf16 %v717, %v709
        %v1566 = vpack.c.bf16 %v718, %v710
        %v1567 = vpack.c.bf16 %v719, %v711
        %v1568 = vpack.c.bf16 %v720, %v712
        %v1569 = vpack.c.bf16 %v721, %v713
        %v1570 = vpack.c.bf16 %v722, %v714
        %v1571 = vpack.c.bf16 %v723, %v715
        %v1572 = vpack.c.bf16 %v724, %v716
        %v1573 = vpack.c.bf16 %v733, %v725
        %v1574 = vpack.c.bf16 %v734, %v726
        %v1575 = vpack.c.bf16 %v735, %v727
        %v1576 = vpack.c.bf16 %v736, %v728
        %v1577 = vpack.c.bf16 %v737, %v729
        %v1578 = vpack.c.bf16 %v738, %v730
        %v1579 = vpack.c.bf16 %v739, %v731
        %v1580 = vpack.c.bf16 %v740, %v732
        %v1581 = vpack.c.bf16 %v749, %v741
        %v1582 = vpack.c.bf16 %v750, %v742
        %v1583 = vpack.c.bf16 %v751, %v743
        %v1584 = vpack.c.bf16 %v752, %v744
        %v1585 = vpack.c.bf16 %v753, %v745
        %v1586 = vpack.c.bf16 %v754, %v746
        %v1587 = vpack.c.bf16 %v755, %v747
        %v1588 = vpack.c.bf16 %v756, %v748
        %v1589 = vpack.c.bf16 %v765, %v757
        %v1590 = vpack.c.bf16 %v766, %v758
        %v1591 = vpack.c.bf16 %v767, %v759
        %v1592 = vpack.c.bf16 %v768, %v760
        %v1593 = vpack.c.bf16 %v769, %v761
        %v1594 = vpack.c.bf16 %v770, %v762
        %v1595 = vpack.c.bf16 %v771, %v763
        %v1596 = vpack.c.bf16 %v772, %v764
        %v1597 = vpack.c.bf16 %v781, %v773
        %v1598 = vpack.c.bf16 %v782, %v774
        %v1599 = vpack.c.bf16 %v783, %v775
        %v1600 = vpack.c.bf16 %v784, %v776
        %v1601 = vpack.c.bf16 %v785, %v777
        %v1602 = vpack.c.bf16 %v786, %v778
        %v1603 = vpack.c.bf16 %v787, %v779
        %v1604 = vpack.c.bf16 %v788, %v780
        %v1605 = vpack.c.bf16 %v797, %v789
        %v1606 = vpack.c.bf16 %v798, %v790
        %v1607 = vpack.c.bf16 %v799, %v791
        %v1608 = vpack.c.bf16 %v800, %v792
        %v1609 = vpack.c.bf16 %v801, %v793
        %v1610 = vpack.c.bf16 %v802, %v794
        %v1611 = vpack.c.bf16 %v803, %v795
        %v1612 = vpack.c.bf16 %v804, %v796
        %v1613 = vpack.c.bf16 %v813, %v805
        %v1614 = vpack.c.bf16 %v814, %v806
        %v1615 = vpack.c.bf16 %v815, %v807
        %v1616 = vpack.c.bf16 %v816, %v808
        %v1617 = vpack.c.bf16 %v817, %v809
        %v1618 = vpack.c.bf16 %v818, %v810
        %v1619 = vpack.c.bf16 %v819, %v811
        %v1620 = vpack.c.bf16 %v820, %v812
        %v1621 = vpack.c.bf16 %v829, %v821
        %v1622 = vpack.c.bf16 %v830, %v822
        %v1623 = vpack.c.bf16 %v831, %v823
        %v1624 = vpack.c.bf16 %v832, %v824
        %v1625 = vpack.c.bf16 %v833, %v825
        %v1626 = vpack.c.bf16 %v834, %v826
        %v1627 = vpack.c.bf16 %v835, %v827
        %v1628 = vpack.c.bf16 %v836, %v828
        %v1629 = vpack.c.bf16 %v845, %v837
        %v1630 = vpack.c.bf16 %v846, %v838
        %v1631 = vpack.c.bf16 %v847, %v839
        %v1632 = vpack.c.bf16 %v848, %v840
        %v1633 = vpack.c.bf16 %v849, %v841
        %v1634 = vpack.c.bf16 %v850, %v842
        %v1635 = vpack.c.bf16 %v851, %v843
        %v1636 = vpack.c.bf16 %v852, %v844
        %v1637 = vpack.c.bf16 %v861, %v853
        %v1638 = vpack.c.bf16 %v862, %v854
        %v1639 = vpack.c.bf16 %v863, %v855
        %v1640 = vpack.c.bf16 %v864, %v856
        %v1641 = vpack.c.bf16 %v865, %v857
        %v1642 = vpack.c.bf16 %v866, %v858
        %v1643 = vpack.c.bf16 %v867, %v859
        %v1644 = vpack.c.bf16 %v868, %v860
        %v1645 = vpack.c.bf16 %v877, %v869
        %v1646 = vpack.c.bf16 %v878, %v870
        %v1647 = vpack.c.bf16 %v879, %v871
        %v1648 = vpack.c.bf16 %v880, %v872
        %v1649 = vpack.c.bf16 %v881, %v873
        %v1650 = vpack.c.bf16 %v882, %v874
        %v1651 = vpack.c.bf16 %v883, %v875
        %v1652 = vpack.c.bf16 %v884, %v876
        %v1653 = vpack.c.bf16 %v893, %v885
        %v1654 = vpack.c.bf16 %v894, %v886
        %v1655 = vpack.c.bf16 %v895, %v887
        %v1656 = vpack.c.bf16 %v896, %v888
        %v1657 = vpack.c.bf16 %v897, %v889
        %v1658 = vpack.c.bf16 %v898, %v890
        %v1659 = vpack.c.bf16 %v899, %v891
        %v1660 = vpack.c.bf16 %v900, %v892
        %v1661 = vpack.c.bf16 %v909, %v901
        %v1662 = vpack.c.bf16 %v910, %v902
        %v1663 = vpack.c.bf16 %v911, %v903
        %v1664 = vpack.c.bf16 %v912, %v904
        %v1665 = vpack.c.bf16 %v913, %v905
        %v1666 = vpack.c.bf16 %v914, %v906
        %v1667 = vpack.c.bf16 %v915, %v907
        %v1668 = vpack.c.bf16 %v916, %v908
        %v1669 = vpack.c.bf16 %v925, %v917
        %v1670 = vpack.c.bf16 %v926, %v918
        %v1671 = vpack.c.bf16 %v927, %v919
        %v1672 = vpack.c.bf16 %v928, %v920
        %v1673 = vpack.c.bf16 %v929, %v921
        %v1674 = vpack.c.bf16 %v930, %v922
        %v1675 = vpack.c.bf16 %v931, %v923
        %v1676 = vpack.c.bf16 %v932, %v924
        %v1677 = vpack.c.bf16 %v941, %v933
        %v1678 = vpack.c.bf16 %v942, %v934
        %v1679 = vpack.c.bf16 %v943, %v935
        %v1680 = vpack.c.bf16 %v944, %v936
        %v1681 = vpack.c.bf16 %v945, %v937
        %v1682 = vpack.c.bf16 %v946, %v938
        %v1683 = vpack.c.bf16 %v947, %v939
        %v1684 = vpack.c.bf16 %v948, %v940
        %v1685 = vpack.c.bf16 %v957, %v949
        %v1686 = vpack.c.bf16 %v958, %v950
        %v1687 = vpack.c.bf16 %v959, %v951
        %v1688 = vpack.c.bf16 %v960, %v952
        %v1689 = vpack.c.bf16 %v961, %v953
        %v1690 = vpack.c.bf16 %v962, %v954
        %v1691 = vpack.c.bf16 %v963, %v955
        %v1692 = vpack.c.bf16 %v964, %v956
        %v1693 = vpack.c.bf16 %v973, %v965
        %v1694 = vpack.c.bf16 %v974, %v966
        %v1695 = vpack.c.bf16 %v975, %v967
        %v1696 = vpack.c.bf16 %v976, %v968
        %v1697 = vpack.c.bf16 %v977, %v969
        %v1698 = vpack.c.bf16 %v978, %v970
        %v1699 = vpack.c.bf16 %v979, %v971
        %v1700 = vpack.c.bf16 %v980, %v972
        %v1701 = vpack.c.bf16 %v989, %v981
        %v1702 = vpack.c.bf16 %v990, %v982
        %v1703 = vpack.c.bf16 %v991, %v983
        %v1704 = vpack.c.bf16 %v992, %v984
        %v1705 = vpack.c.bf16 %v993, %v985
        %v1706 = vpack.c.bf16 %v994, %v986
        %v1707 = vpack.c.bf16 %v995, %v987
        %v1708 = vpack.c.bf16 %v996, %v988
        %v1709 = vpack.c.bf16 %v1005, %v997
        %v1710 = vpack.c.bf16 %v1006, %v998
        %v1711 = vpack.c.bf16 %v1007, %v999
        %v1712 = vpack.c.bf16 %v1008, %v1000
        %v1713 = vpack.c.bf16 %v1009, %v1001
        %v1714 = vpack.c.bf16 %v1010, %v1002
        %v1715 = vpack.c.bf16 %v1011, %v1003
        %v1716 = vpack.c.bf16 %v1012, %v1004
        %v1717 = vpack.c.bf16 %v1021, %v1013
        %v1718 = vpack.c.bf16 %v1022, %v1014
        %v1719 = vpack.c.bf16 %v1023, %v1015
        %v1720 = vpack.c.bf16 %v1024, %v1016
        %v1721 = vpack.c.bf16 %v1025, %v1017
        %v1722 = vpack.c.bf16 %v1026, %v1018
        %v1723 = vpack.c.bf16 %v1027, %v1019
        %v1724 = vpack.c.bf16 %v1028, %v1020
        %v1725 = vpack.c.bf16 %v1037, %v1029
        %v1726 = vpack.c.bf16 %v1038, %v1030
        %v1727 = vpack.c.bf16 %v1039, %v1031
        %v1728 = vpack.c.bf16 %v1040, %v1032
        %v1729 = vpack.c.bf16 %v1041, %v1033
        %v1730 = vpack.c.bf16 %v1042, %v1034
        %v1731 = vpack.c.bf16 %v1043, %v1035
        %v1732 = vpack.c.bf16 %v1044, %v1036
        %v1733 = vpack.c.bf16 %v1053, %v1045
        %v1734 = vpack.c.bf16 %v1054, %v1046
        %v1735 = vpack.c.bf16 %v1055, %v1047
        %v1736 = vpack.c.bf16 %v1056, %v1048
        %v1737 = vpack.c.bf16 %v1057, %v1049
        %v1738 = vpack.c.bf16 %v1058, %v1050
        %v1739 = vpack.c.bf16 %v1059, %v1051
        %v1740 = vpack.c.bf16 %v1060, %v1052
        %v1741 = vpack.c.bf16 %v1069, %v1061
        %v1742 = vpack.c.bf16 %v1070, %v1062
        %v1743 = vpack.c.bf16 %v1071, %v1063
        %v1744 = vpack.c.bf16 %v1072, %v1064
        %v1745 = vpack.c.bf16 %v1073, %v1065
        %v1746 = vpack.c.bf16 %v1074, %v1066
        %v1747 = vpack.c.bf16 %v1075, %v1067
        %v1748 = vpack.c.bf16 %v1076, %v1068
        %v1749 = vpack.c.bf16 %v1085, %v1077
        %v1750 = vpack.c.bf16 %v1086, %v1078
        %v1751 = vpack.c.bf16 %v1087, %v1079
        %v1752 = vpack.c.bf16 %v1088, %v1080
        %v1753 = vpack.c.bf16 %v1089, %v1081
        %v1754 = vpack.c.bf16 %v1090, %v1082
        %v1755 = vpack.c.bf16 %v1091, %v1083
        %v1756 = vpack.c.bf16 %v1092, %v1084
        %v1757 = vpack.c.bf16 %v1101, %v1093
        %v1758 = vpack.c.bf16 %v1102, %v1094
        %v1759 = vpack.c.bf16 %v1103, %v1095
        %v1760 = vpack.c.bf16 %v1104, %v1096
        %v1761 = vpack.c.bf16 %v1105, %v1097
        %v1762 = vpack.c.bf16 %v1106, %v1098
        %v1763 = vpack.c.bf16 %v1107, %v1099
        %v1764 = vpack.c.bf16 %v1108, %v1100
        %v1765 = vpack.c.bf16 %v1117, %v1109
        %v1766 = vpack.c.bf16 %v1118, %v1110
        %v1767 = vpack.c.bf16 %v1119, %v1111
        %v1768 = vpack.c.bf16 %v1120, %v1112
        %v1769 = vpack.c.bf16 %v1121, %v1113
        %v1770 = vpack.c.bf16 %v1122, %v1114
        %v1771 = vpack.c.bf16 %v1123, %v1115
        %v1772 = vpack.c.bf16 %v1124, %v1116
        %v1773 = vpack.c.bf16 %v1133, %v1125
        %v1774 = vpack.c.bf16 %v1134, %v1126
        %v1775 = vpack.c.bf16 %v1135, %v1127
        %v1776 = vpack.c.bf16 %v1136, %v1128
        %v1777 = vpack.c.bf16 %v1137, %v1129
        %v1778 = vpack.c.bf16 %v1138, %v1130
        %v1779 = vpack.c.bf16 %v1139, %v1131
        %v1780 = vpack.c.bf16 %v1140, %v1132
        %v1781 = vpack.c.bf16 %v1149, %v1141
        %v1782 = vpack.c.bf16 %v1150, %v1142
        %v1783 = vpack.c.bf16 %v1151, %v1143
        %v1784 = vpack.c.bf16 %v1152, %v1144
        %v1785 = vpack.c.bf16 %v1153, %v1145
        %v1786 = vpack.c.bf16 %v1154, %v1146
        %v1787 = vpack.c.bf16 %v1155, %v1147
        %v1788 = vpack.c.bf16 %v1156, %v1148
        %v1789 = vpack.c.bf16 %v1165, %v1157
        %v1790 = vpack.c.bf16 %v1166, %v1158
        %v1791 = vpack.c.bf16 %v1167, %v1159
        %v1792 = vpack.c.bf16 %v1168, %v1160
        %v1793 = vpack.c.bf16 %v1169, %v1161
        %v1794 = vpack.c.bf16 %v1170, %v1162
        %v1795 = vpack.c.bf16 %v1171, %v1163
        %v1796 = vpack.c.bf16 %v1172, %v1164
        %v1797 = vpack.c.bf16 %v1181, %v1173
        %v1798 = vpack.c.bf16 %v1182, %v1174
        %v1799 = vpack.c.bf16 %v1183, %v1175
        %v1800 = vpack.c.bf16 %v1184, %v1176
        %v1801 = vpack.c.bf16 %v1185, %v1177
        %v1802 = vpack.c.bf16 %v1186, %v1178
        %v1803 = vpack.c.bf16 %v1187, %v1179
        %v1804 = vpack.c.bf16 %v1188, %v1180
        %v1805 = vpack.c.bf16 %v1197, %v1189
        %v1806 = vpack.c.bf16 %v1198, %v1190
        %v1807 = vpack.c.bf16 %v1199, %v1191
        %v1808 = vpack.c.bf16 %v1200, %v1192
        %v1809 = vpack.c.bf16 %v1201, %v1193
        %v1810 = vpack.c.bf16 %v1202, %v1194
        %v1811 = vpack.c.bf16 %v1203, %v1195
        %v1812 = vpack.c.bf16 %v1204, %v1196
        %v1813 = vpack.c.bf16 %v1213, %v1205
        %v1814 = vpack.c.bf16 %v1214, %v1206
        %v1815 = vpack.c.bf16 %v1215, %v1207
        %v1816 = vpack.c.bf16 %v1216, %v1208
        %v1817 = vpack.c.bf16 %v1217, %v1209
        %v1818 = vpack.c.bf16 %v1218, %v1210
        %v1819 = vpack.c.bf16 %v1219, %v1211
        %v1820 = vpack.c.bf16 %v1220, %v1212
        %v1821 = vpack.c.bf16 %v1229, %v1221
        %v1822 = vpack.c.bf16 %v1230, %v1222
        %v1823 = vpack.c.bf16 %v1231, %v1223
        %v1824 = vpack.c.bf16 %v1232, %v1224
        %v1825 = vpack.c.bf16 %v1233, %v1225
        %v1826 = vpack.c.bf16 %v1234, %v1226
        %v1827 = vpack.c.bf16 %v1235, %v1227
        %v1828 = vpack.c.bf16 %v1236, %v1228
        %v1829 = vpack.c.bf16 %v1245, %v1237
        %v1830 = vpack.c.bf16 %v1246, %v1238
        %v1831 = vpack.c.bf16 %v1247, %v1239
        %v1832 = vpack.c.bf16 %v1248, %v1240
        %v1833 = vpack.c.bf16 %v1249, %v1241
        %v1834 = vpack.c.bf16 %v1250, %v1242
        %v1835 = vpack.c.bf16 %v1251, %v1243
        %v1836 = vpack.c.bf16 %v1252, %v1244
        %v1837 = vpack.c.bf16 %v1261, %v1253
        %v1838 = vpack.c.bf16 %v1262, %v1254
        %v1839 = vpack.c.bf16 %v1263, %v1255
        %v1840 = vpack.c.bf16 %v1264, %v1256
        %v1841 = vpack.c.bf16 %v1265, %v1257
        %v1842 = vpack.c.bf16 %v1266, %v1258
        %v1843 = vpack.c.bf16 %v1267, %v1259
        %v1844 = vpack.c.bf16 %v1268, %v1260
        %v1845 = vpack.c.bf16 %v1277, %v1269
        %v1846 = vpack.c.bf16 %v1278, %v1270
        %v1847 = vpack.c.bf16 %v1279, %v1271
        %v1848 = vpack.c.bf16 %v1280, %v1272
        %v1849 = vpack.c.bf16 %v1281, %v1273
        %v1850 = vpack.c.bf16 %v1282, %v1274
        %v1851 = vpack.c.bf16 %v1283, %v1275
        %v1852 = vpack.c.bf16 %v1284, %v1276
        %v1853 = vpack.c.bf16 %v1293, %v1285
        %v1854 = vpack.c.bf16 %v1294, %v1286
        %v1855 = vpack.c.bf16 %v1295, %v1287
        %v1856 = vpack.c.bf16 %v1296, %v1288
        %v1857 = vpack.c.bf16 %v1297, %v1289
        %v1858 = vpack.c.bf16 %v1298, %v1290
        %v1859 = vpack.c.bf16 %v1299, %v1291
        %v1860 = vpack.c.bf16 %v1300, %v1292
        %v1861 = vpack.c.bf16 %v1309, %v1301
        %v1862 = vpack.c.bf16 %v1310, %v1302
        %v1863 = vpack.c.bf16 %v1311, %v1303
        %v1864 = vpack.c.bf16 %v1312, %v1304
        %v1865 = vpack.c.bf16 %v1313, %v1305
        %v1866 = vpack.c.bf16 %v1314, %v1306
        %v1867 = vpack.c.bf16 %v1315, %v1307
        %v1868 = vpack.c.bf16 %v1316, %v1308
        %v1869 = vpack.c.bf16 %v1325, %v1317
        %v1870 = vpack.c.bf16 %v1326, %v1318
        %v1871 = vpack.c.bf16 %v1327, %v1319
        %v1872 = vpack.c.bf16 %v1328, %v1320
        %v1873 = vpack.c.bf16 %v1329, %v1321
        %v1874 = vpack.c.bf16 %v1330, %v1322
        %v1875 = vpack.c.bf16 %v1331, %v1323
        %v1876 = vpack.c.bf16 %v1332, %v1324
        %v1877 = vpack.c.bf16 %v1341, %v1333
        %v1878 = vpack.c.bf16 %v1342, %v1334
        %v1879 = vpack.c.bf16 %v1343, %v1335
        %v1880 = vpack.c.bf16 %v1344, %v1336
        %v1881 = vpack.c.bf16 %v1345, %v1337
        %v1882 = vpack.c.bf16 %v1346, %v1338
        %v1883 = vpack.c.bf16 %v1347, %v1339
        %v1884 = vpack.c.bf16 %v1348, %v1340
        %v1885 = vpack.c.bf16 %v1357, %v1349
        %v1886 = vpack.c.bf16 %v1358, %v1350
        %v1887 = vpack.c.bf16 %v1359, %v1351
        %v1888 = vpack.c.bf16 %v1360, %v1352
        %v1889 = vpack.c.bf16 %v1361, %v1353
        %v1890 = vpack.c.bf16 %v1362, %v1354
        %v1891 = vpack.c.bf16 %v1363, %v1355
        %v1892 = vpack.c.bf16 %v1364, %v1356
        %v1893 = vpack.c.bf16 %v1373, %v1365
        %v1894 = vpack.c.bf16 %v1374, %v1366
        %v1895 = vpack.c.bf16 %v1375, %v1367
        %v1896 = vpack.c.bf16 %v1376, %v1368
        %v1897 = vpack.c.bf16 %v1377, %v1369
        %v1898 = vpack.c.bf16 %v1378, %v1370
        %v1899 = vpack.c.bf16 %v1379, %v1371
        %v1900 = vpack.c.bf16 %v1380, %v1372
        %v1901 = vpack.c.bf16 %v1389, %v1381
        %v1902 = vpack.c.bf16 %v1390, %v1382
        %v1903 = vpack.c.bf16 %v1391, %v1383
        %v1904 = vpack.c.bf16 %v1392, %v1384
        %v1905 = vpack.c.bf16 %v1393, %v1385
        %v1906 = vpack.c.bf16 %v1394, %v1386
        %v1907 = vpack.c.bf16 %v1395, %v1387
        %v1908 = vpack.c.bf16 %v1396, %v1388
        %v1909 = vld [vmem:[#allocation5] sm:$0xff]
        %v1910 = vld [vmem:[#allocation5 + $0x8] sm:$0xff]
        %v1911 = vld [vmem:[#allocation5 + $0x10] sm:$0xff]
        %v1912 = vld [vmem:[#allocation5 + $0x18] sm:$0xff]
        %v1913 = vld [vmem:[#allocation5 + $0x20] sm:$0xff]
        %v1914 = vld [vmem:[#allocation5 + $0x28] sm:$0xff]
        %v1915 = vld [vmem:[#allocation5 + $0x30] sm:$0xff]
        %v1916 = vld [vmem:[#allocation5 + $0x38] sm:$0xff]
        %v1917 = vld [vmem:[#allocation5 + $0x40] sm:$0xff]
        %v1918 = vld [vmem:[#allocation5 + $0x48] sm:$0xff]
        %v1919 = vld [vmem:[#allocation5 + $0x50] sm:$0xff]
        %v1920 = vld [vmem:[#allocation5 + $0x58] sm:$0xff]
        %v1921 = vld [vmem:[#allocation5 + $0x60] sm:$0xff]
        %v1922 = vld [vmem:[#allocation5 + $0x68] sm:$0xff]
        %v1923 = vld [vmem:[#allocation5 + $0x70] sm:$0xff]
        %v1924 = vld [vmem:[#allocation5 + $0x78] sm:$0xff]
        %v1925 = vld [vmem:[#allocation5 + $0x80] sm:$0xff]
        %v1926 = vld [vmem:[#allocation5 + $0x88] sm:$0xff]
        %v1927 = vld [vmem:[#allocation5 + $0x90] sm:$0xff]
        %v1928 = vld [vmem:[#allocation5 + $0x98] sm:$0xff]
        %v1929 = vld [vmem:[#allocation5 + $0xa0] sm:$0xff]
        %v1930 = vld [vmem:[#allocation5 + $0xa8] sm:$0xff]
        %v1931 = vld [vmem:[#allocation5 + $0xb0] sm:$0xff]
        %v1932 = vld [vmem:[#allocation5 + $0xb8] sm:$0xff]
        %v1933 = vld [vmem:[#allocation5 + $0xc0] sm:$0xff]
        %v1934 = vld [vmem:[#allocation5 + $0xc8] sm:$0xff]
        %v1935 = vld [vmem:[#allocation5 + $0xd0] sm:$0xff]
        %v1936 = vld [vmem:[#allocation5 + $0xd8] sm:$0xff]
        %v1937 = vld [vmem:[#allocation5 + $0xe0] sm:$0xff]
        %v1938 = vld [vmem:[#allocation5 + $0xe8] sm:$0xff]
        %v1939 = vld [vmem:[#allocation5 + $0xf0] sm:$0xff]
        %v1940 = vld [vmem:[#allocation5 + $0xf8] sm:$0xff]
        %v1941 = vld [vmem:[#allocation5 + $0x100] sm:$0xff]
        %v1942 = vld [vmem:[#allocation5 + $0x108] sm:$0xff]
        %v1943 = vld [vmem:[#allocation5 + $0x110] sm:$0xff]
        %v1944 = vld [vmem:[#allocation5 + $0x118] sm:$0xff]
        %v1945 = vld [vmem:[#allocation5 + $0x120] sm:$0xff]
        %v1946 = vld [vmem:[#allocation5 + $0x128] sm:$0xff]
        %v1947 = vld [vmem:[#allocation5 + $0x130] sm:$0xff]
        %v1948 = vld [vmem:[#allocation5 + $0x138] sm:$0xff]
        %v1949 = vld [vmem:[#allocation5 + $0x140] sm:$0xff]
        %v1950 = vld [vmem:[#allocation5 + $0x148] sm:$0xff]
        %v1951 = vld [vmem:[#allocation5 + $0x150] sm:$0xff]
        %v1952 = vld [vmem:[#allocation5 + $0x158] sm:$0xff]
        %v1953 = vld [vmem:[#allocation5 + $0x160] sm:$0xff]
        %v1954 = vld [vmem:[#allocation5 + $0x168] sm:$0xff]
        %v1955 = vld [vmem:[#allocation5 + $0x170] sm:$0xff]
        %v1956 = vld [vmem:[#allocation5 + $0x178] sm:$0xff]
        %v1957 = vld [vmem:[#allocation5 + $0x180] sm:$0xff]
        %v1958 = vld [vmem:[#allocation5 + $0x188] sm:$0xff]
        %v1959 = vld [vmem:[#allocation5 + $0x190] sm:$0xff]
        %v1960 = vld [vmem:[#allocation5 + $0x198] sm:$0xff]
        %v1961 = vld [vmem:[#allocation5 + $0x1a0] sm:$0xff]
        %v1962 = vld [vmem:[#allocation5 + $0x1a8] sm:$0xff]
        %v1963 = vld [vmem:[#allocation5 + $0x1b0] sm:$0xff]
        %v1964 = vld [vmem:[#allocation5 + $0x1b8] sm:$0xff]
        %v1965 = vld [vmem:[#allocation5 + $0x1c0] sm:$0xff]
        %v1966 = vld [vmem:[#allocation5 + $0x1c8] sm:$0xff]
        %v1967 = vld [vmem:[#allocation5 + $0x1d0] sm:$0xff]
        %v1968 = vld [vmem:[#allocation5 + $0x1d8] sm:$0xff]
        %v1969 = vld [vmem:[#allocation5 + $0x1e0] sm:$0xff]
        %v1970 = vld [vmem:[#allocation5 + $0x1e8] sm:$0xff]
        %v1971 = vld [vmem:[#allocation5 + $0x1f0] sm:$0xff]
        %v1972 = vld [vmem:[#allocation5 + $0x1f8] sm:$0xff]
        %v1973 = vld [vmem:[#allocation7] sm:$0xff]
        %v1974 = vld [vmem:[#allocation7 + $0x8] sm:$0xff]
        %v1975 = vld [vmem:[#allocation7 + $0x10] sm:$0xff]
        %v1976 = vld [vmem:[#allocation7 + $0x18] sm:$0xff]
        %v1977 = vld [vmem:[#allocation8] sm:$0xff]
        %v1978 = vld [vmem:[%s4] sm:$0xff]
        %v1979 = vld [vmem:[%s4 + $0x8] sm:$0xff]
        %v1980 = vld [vmem:[%s4 + $0x10] sm:$0xff]
        %v1981 = vld [vmem:[%s4 + $0x18] sm:$0xff]
        %v1982 = vld [vmem:[%s4 + $0x20] sm:$0xff]
        %v1983 = vld [vmem:[%s4 + $0x28] sm:$0xff]
        %v1984 = vld [vmem:[%s4 + $0x30] sm:$0xff]
        %v1985 = vld [vmem:[%s4 + $0x38] sm:$0xff]
        %v1986 = vld [vmem:[%s4 + $0x40] sm:$0xff]
        %v1987 = vld [vmem:[%s4 + $0x48] sm:$0xff]
        %v1988 = vld [vmem:[%s4 + $0x50] sm:$0xff]
        %v1989 = vld [vmem:[%s4 + $0x58] sm:$0xff]
        %v1990 = vld [vmem:[%s4 + $0x60] sm:$0xff]
        %v1991 = vld [vmem:[%s4 + $0x68] sm:$0xff]
        %v1992 = vld [vmem:[%s4 + $0x70] sm:$0xff]
        %v1993 = vld [vmem:[%s4 + $0x78] sm:$0xff]
        %v1994 = vld [vmem:[%s4 + $0x80] sm:$0xff]
        %v1995 = vld [vmem:[%s4 + $0x88] sm:$0xff]
        %v1996 = vld [vmem:[%s4 + $0x90] sm:$0xff]
        %v1997 = vld [vmem:[%s4 + $0x98] sm:$0xff]
        %v1998 = vld [vmem:[%s4 + $0xa0] sm:$0xff]
        %v1999 = vld [vmem:[%s4 + $0xa8] sm:$0xff]
        %s2000 = sld [smem:[#allocation11]]
        %2002 = vset.pattern.permute.xlu0 0
        %2003 = vperm.xlu0 %2002, %v1978
        %v2004 = vpop.permute.xlu0 %2003
        %2007 = vset.pattern.permute.xlu0 0
        %2008 = vperm.xlu0 %2007, %v1979
        %v2009 = vpop.permute.xlu0 %2008
        %2012 = vset.pattern.permute.xlu0 0
        %2013 = vperm.xlu0 %2012, %v1980
        %v2014 = vpop.permute.xlu0 %2013
        %2017 = vset.pattern.permute.xlu0 0
        %2018 = vperm.xlu0 %2017, %v1981
        %v2019 = vpop.permute.xlu0 %2018
        %2022 = vset.pattern.permute.xlu0 0
        %2023 = vperm.xlu0 %2022, %v1982
        %v2024 = vpop.permute.xlu0 %2023
        %2027 = vset.pattern.permute.xlu0 0
        %2028 = vperm.xlu0 %2027, %v1983
        %v2029 = vpop.permute.xlu0 %2028
        %2032 = vset.pattern.permute.xlu0 0
        %2033 = vperm.xlu0 %2032, %v1984
        %v2034 = vpop.permute.xlu0 %2033
        %2037 = vset.pattern.permute.xlu0 0
        %2038 = vperm.xlu0 %2037, %v1985
        %v2039 = vpop.permute.xlu0 %2038
        %2042 = vset.pattern.permute.xlu0 0
        %2043 = vperm.xlu0 %2042, %v1986
        %v2044 = vpop.permute.xlu0 %2043
        %2047 = vset.pattern.permute.xlu0 0
        %2048 = vperm.xlu0 %2047, %v1987
        %v2049 = vpop.permute.xlu0 %2048
        %2052 = vset.pattern.permute.xlu0 0
        %2053 = vperm.xlu0 %2052, %v1988
        %v2054 = vpop.permute.xlu0 %2053
        %2057 = vset.pattern.permute.xlu0 0
        %2058 = vperm.xlu0 %2057, %v1989
        %v2059 = vpop.permute.xlu0 %2058
        %2062 = vset.pattern.permute.xlu0 0
        %2063 = vperm.xlu0 %2062, %v1990
        %v2064 = vpop.permute.xlu0 %2063
        %2067 = vset.pattern.permute.xlu0 0
        %2068 = vperm.xlu0 %2067, %v1991
        %v2069 = vpop.permute.xlu0 %2068
        %2072 = vset.pattern.permute.xlu0 0
        %2073 = vperm.xlu0 %2072, %v1992
        %v2074 = vpop.permute.xlu0 %2073
        %2077 = vset.pattern.permute.xlu0 0
        %2078 = vperm.xlu0 %2077, %v1993
        %v2079 = vpop.permute.xlu0 %2078
        %v2145 = vunpack.c.l.b16 %v1909
        %v2146 = vunpack.c.h.b16 %v1909
        %v2147 = vunpack.c.l.b16 %v1910
        %v2148 = vunpack.c.h.b16 %v1910
        %v2149 = vunpack.c.l.b16 %v1911
        %v2150 = vunpack.c.h.b16 %v1911
        %v2151 = vunpack.c.l.b16 %v1912
        %v2152 = vunpack.c.h.b16 %v1912
        %v2153 = vunpack.c.l.b16 %v1913
        %v2154 = vunpack.c.h.b16 %v1913
        %v2155 = vunpack.c.l.b16 %v1914
        %v2156 = vunpack.c.h.b16 %v1914
        %v2157 = vunpack.c.l.b16 %v1915
        %v2158 = vunpack.c.h.b16 %v1915
        %v2159 = vunpack.c.l.b16 %v1916
        %v2160 = vunpack.c.h.b16 %v1916
        %v2161 = vunpack.c.l.b16 %v1917
        %v2162 = vunpack.c.h.b16 %v1917
        %v2163 = vunpack.c.l.b16 %v1918
        %v2164 = vunpack.c.h.b16 %v1918
        %v2165 = vunpack.c.l.b16 %v1919
        %v2166 = vunpack.c.h.b16 %v1919
        %v2167 = vunpack.c.l.b16 %v1920
        %v2168 = vunpack.c.h.b16 %v1920
        %v2169 = vunpack.c.l.b16 %v1921
        %v2170 = vunpack.c.h.b16 %v1921
        %v2171 = vunpack.c.l.b16 %v1922
        %v2172 = vunpack.c.h.b16 %v1922
        %v2173 = vunpack.c.l.b16 %v1923
        %v2174 = vunpack.c.h.b16 %v1923
        %v2175 = vunpack.c.l.b16 %v1924
        %v2176 = vunpack.c.h.b16 %v1924
        %v2177 = vunpack.c.l.b16 %v1925
        %v2178 = vunpack.c.h.b16 %v1925
        %v2179 = vunpack.c.l.b16 %v1926
        %v2180 = vunpack.c.h.b16 %v1926
        %v2181 = vunpack.c.l.b16 %v1927
        %v2182 = vunpack.c.h.b16 %v1927
        %v2183 = vunpack.c.l.b16 %v1928
        %v2184 = vunpack.c.h.b16 %v1928
        %v2185 = vunpack.c.l.b16 %v1929
        %v2186 = vunpack.c.h.b16 %v1929
        %v2187 = vunpack.c.l.b16 %v1930
        %v2188 = vunpack.c.h.b16 %v1930
        %v2189 = vunpack.c.l.b16 %v1931
        %v2190 = vunpack.c.h.b16 %v1931
        %v2191 = vunpack.c.l.b16 %v1932
        %v2192 = vunpack.c.h.b16 %v1932
        %v2193 = vunpack.c.l.b16 %v1933
        %v2194 = vunpack.c.h.b16 %v1933
        %v2195 = vunpack.c.l.b16 %v1934
        %v2196 = vunpack.c.h.b16 %v1934
        %v2197 = vunpack.c.l.b16 %v1935
        %v2198 = vunpack.c.h.b16 %v1935
        %v2199 = vunpack.c.l.b16 %v1936
        %v2200 = vunpack.c.h.b16 %v1936
        %v2201 = vunpack.c.l.b16 %v1937
        %v2202 = vunpack.c.h.b16 %v1937
        %v2203 = vunpack.c.l.b16 %v1938
        %v2204 = vunpack.c.h.b16 %v1938
        %v2205 = vunpack.c.l.b16 %v1939
        %v2206 = vunpack.c.h.b16 %v1939
        %v2207 = vunpack.c.l.b16 %v1940
        %v2208 = vunpack.c.h.b16 %v1940
        %v2209 = vunpack.c.l.b16 %v1941
        %v2210 = vunpack.c.h.b16 %v1941
        %v2211 = vunpack.c.l.b16 %v1942
        %v2212 = vunpack.c.h.b16 %v1942
        %v2213 = vunpack.c.l.b16 %v1943
        %v2214 = vunpack.c.h.b16 %v1943
        %v2215 = vunpack.c.l.b16 %v1944
        %v2216 = vunpack.c.h.b16 %v1944
        %v2217 = vunpack.c.l.b16 %v1945
        %v2218 = vunpack.c.h.b16 %v1945
        %v2219 = vunpack.c.l.b16 %v1946
        %v2220 = vunpack.c.h.b16 %v1946
        %v2221 = vunpack.c.l.b16 %v1947
        %v2222 = vunpack.c.h.b16 %v1947
        %v2223 = vunpack.c.l.b16 %v1948
        %v2224 = vunpack.c.h.b16 %v1948
        %v2225 = vunpack.c.l.b16 %v1949
        %v2226 = vunpack.c.h.b16 %v1949
        %v2227 = vunpack.c.l.b16 %v1950
        %v2228 = vunpack.c.h.b16 %v1950
        %v2229 = vunpack.c.l.b16 %v1951
        %v2230 = vunpack.c.h.b16 %v1951
        %v2231 = vunpack.c.l.b16 %v1952
        %v2232 = vunpack.c.h.b16 %v1952
        %v2233 = vunpack.c.l.b16 %v1953
        %v2234 = vunpack.c.h.b16 %v1953
        %v2235 = vunpack.c.l.b16 %v1954
        %v2236 = vunpack.c.h.b16 %v1954
        %v2237 = vunpack.c.l.b16 %v1955
        %v2238 = vunpack.c.h.b16 %v1955
        %v2239 = vunpack.c.l.b16 %v1956
        %v2240 = vunpack.c.h.b16 %v1956
        %v2241 = vunpack.c.l.b16 %v1957
        %v2242 = vunpack.c.h.b16 %v1957
        %v2243 = vunpack.c.l.b16 %v1958
        %v2244 = vunpack.c.h.b16 %v1958
        %v2245 = vunpack.c.l.b16 %v1959
        %v2246 = vunpack.c.h.b16 %v1959
        %v2247 = vunpack.c.l.b16 %v1960
        %v2248 = vunpack.c.h.b16 %v1960
        %v2249 = vunpack.c.l.b16 %v1961
        %v2250 = vunpack.c.h.b16 %v1961
        %v2251 = vunpack.c.l.b16 %v1962
        %v2252 = vunpack.c.h.b16 %v1962
        %v2253 = vunpack.c.l.b16 %v1963
        %v2254 = vunpack.c.h.b16 %v1963
        %v2255 = vunpack.c.l.b16 %v1964
        %v2256 = vunpack.c.h.b16 %v1964
        %v2257 = vunpack.c.l.b16 %v1965
        %v2258 = vunpack.c.h.b16 %v1965
        %v2259 = vunpack.c.l.b16 %v1966
        %v2260 = vunpack.c.h.b16 %v1966
        %v2261 = vunpack.c.l.b16 %v1967
        %v2262 = vunpack.c.h.b16 %v1967
        %v2263 = vunpack.c.l.b16 %v1968
        %v2264 = vunpack.c.h.b16 %v1968
        %v2265 = vunpack.c.l.b16 %v1969
        %v2266 = vunpack.c.h.b16 %v1969
        %v2267 = vunpack.c.l.b16 %v1970
        %v2268 = vunpack.c.h.b16 %v1970
        %v2269 = vunpack.c.l.b16 %v1971
        %v2270 = vunpack.c.h.b16 %v1971
        %v2271 = vunpack.c.l.b16 %v1972
        %v2272 = vunpack.c.h.b16 %v1972
        %v2273 = vpack.c.b16 %v2153, %v2145
        %v2274 = vpack.c.b16 %v2154, %v2146
        %v2275 = vpack.c.b16 %v2155, %v2147
        %v2276 = vpack.c.b16 %v2156, %v2148
        %v2277 = vpack.c.b16 %v2157, %v2149
        %v2278 = vpack.c.b16 %v2158, %v2150
        %v2279 = vpack.c.b16 %v2159, %v2151
        %v2280 = vpack.c.b16 %v2160, %v2152
        %v2281 = vpack.c.b16 %v2169, %v2161
        %v2282 = vpack.c.b16 %v2170, %v2162
        %v2283 = vpack.c.b16 %v2171, %v2163
        %v2284 = vpack.c.b16 %v2172, %v2164
        %v2285 = vpack.c.b16 %v2173, %v2165
        %v2286 = vpack.c.b16 %v2174, %v2166
        %v2287 = vpack.c.b16 %v2175, %v2167
        %v2288 = vpack.c.b16 %v2176, %v2168
        %v2289 = vpack.c.b16 %v2185, %v2177
        %v2290 = vpack.c.b16 %v2186, %v2178
        %v2291 = vpack.c.b16 %v2187, %v2179
        %v2292 = vpack.c.b16 %v2188, %v2180
        %v2293 = vpack.c.b16 %v2189, %v2181
        %v2294 = vpack.c.b16 %v2190, %v2182
        %v2295 = vpack.c.b16 %v2191, %v2183
        %v2296 = vpack.c.b16 %v2192, %v2184
        %v2297 = vpack.c.b16 %v2201, %v2193
        %v2298 = vpack.c.b16 %v2202, %v2194
        %v2299 = vpack.c.b16 %v2203, %v2195
        %v2300 = vpack.c.b16 %v2204, %v2196
        %v2301 = vpack.c.b16 %v2205, %v2197
        %v2302 = vpack.c.b16 %v2206, %v2198
        %v2303 = vpack.c.b16 %v2207, %v2199
        %v2304 = vpack.c.b16 %v2208, %v2200
        %v2305 = vpack.c.b16 %v2217, %v2209
        %v2306 = vpack.c.b16 %v2218, %v2210
        %v2307 = vpack.c.b16 %v2219, %v2211
        %v2308 = vpack.c.b16 %v2220, %v2212
        %v2309 = vpack.c.b16 %v2221, %v2213
        %v2310 = vpack.c.b16 %v2222, %v2214
        %v2311 = vpack.c.b16 %v2223, %v2215
        %v2312 = vpack.c.b16 %v2224, %v2216
        %v2313 = vpack.c.b16 %v2233, %v2225
        %v2314 = vpack.c.b16 %v2234, %v2226
        %v2315 = vpack.c.b16 %v2235, %v2227
        %v2316 = vpack.c.b16 %v2236, %v2228
        %v2317 = vpack.c.b16 %v2237, %v2229
        %v2318 = vpack.c.b16 %v2238, %v2230
        %v2319 = vpack.c.b16 %v2239, %v2231
        %v2320 = vpack.c.b16 %v2240, %v2232
        %v2321 = vpack.c.b16 %v2249, %v2241
        %v2322 = vpack.c.b16 %v2250, %v2242
        %v2323 = vpack.c.b16 %v2251, %v2243
        %v2324 = vpack.c.b16 %v2252, %v2244
        %v2325 = vpack.c.b16 %v2253, %v2245
        %v2326 = vpack.c.b16 %v2254, %v2246
        %v2327 = vpack.c.b16 %v2255, %v2247
        %v2328 = vpack.c.b16 %v2256, %v2248
        %v2329 = vpack.c.b16 %v2265, %v2257
        %v2330 = vpack.c.b16 %v2266, %v2258
        %v2331 = vpack.c.b16 %v2267, %v2259
        %v2332 = vpack.c.b16 %v2268, %v2260
        %v2333 = vpack.c.b16 %v2269, %v2261
        %v2334 = vpack.c.b16 %v2270, %v2262
        %v2335 = vpack.c.b16 %v2271, %v2263
        %v2336 = vpack.c.b16 %v2272, %v2264
        %2401 = vmatpush.bf16.msra.mxu0 %v1453
        %2402 = vmatpush.bf16.msra.mxu0 %v1445
        %2403 = vmatpush.bf16.msra.mxu0 %v1437
        %2404 = vmatpush.bf16.msra.mxu0 %v1429
        %2405 = vmatpush.bf16.msra.mxu0 %v1421
        %2406 = vmatpush.bf16.msra.mxu0 %v1413
        %2407 = vmatpush.bf16.msra.mxu0 %v1405
        %2408 = vmatpush.bf16.msra.mxu0 %v1397
        %2409 = vmatmul.bf16.gmra.mxu0 %v2273
        %v2410 = vpop.f32.mrf.mxu0
        %v2411 = vadd.f32 %v2004, %v2410
        %v2412 = vpop.f32.mrf.mxu0
        %v2413 = vadd.f32 %v2009, %v2412
        %2414 = vmatmul.bf16.gmra.mxu0 %v2281
        %v2415 = vpop.f32.mrf.mxu0
        %v2416 = vadd.f32 %v2014, %v2415
        %v2417 = vpop.f32.mrf.mxu0
        %v2418 = vadd.f32 %v2019, %v2417
        %2419 = vmatmul.bf16.gmra.mxu0 %v2289
        %v2420 = vpop.f32.mrf.mxu0
        %v2421 = vadd.f32 %v2024, %v2420
        %v2422 = vpop.f32.mrf.mxu0
        %v2423 = vadd.f32 %v2029, %v2422
        %2424 = vmatmul.bf16.gmra.mxu0 %v2297
        %v2425 = vpop.f32.mrf.mxu0
        %v2426 = vadd.f32 %v2034, %v2425
        %v2427 = vpop.f32.mrf.mxu0
        %v2428 = vadd.f32 %v2039, %v2427
        %2429 = vmatmul.bf16.gmra.mxu0 %v2305
        %v2430 = vpop.f32.mrf.mxu0
        %v2431 = vadd.f32 %v2044, %v2430
        %v2432 = vpop.f32.mrf.mxu0
        %v2433 = vadd.f32 %v2049, %v2432
        %2434 = vmatmul.bf16.gmra.mxu0 %v2313
        %v2435 = vpop.f32.mrf.mxu0
        %v2436 = vadd.f32 %v2054, %v2435
        %v2437 = vpop.f32.mrf.mxu0
        %v2438 = vadd.f32 %v2059, %v2437
        %2439 = vmatmul.bf16.gmra.mxu0 %v2321
        %v2440 = vpop.f32.mrf.mxu0
        %v2441 = vadd.f32 %v2064, %v2440
        %v2442 = vpop.f32.mrf.mxu0
        %v2443 = vadd.f32 %v2069, %v2442
        %2444 = vmatmul.bf16.gmra.mxu0 %v2329
        %v2445 = vpop.f32.mrf.mxu0
        %v2446 = vadd.f32 %v2074, %v2445
        %v2447 = vpop.f32.mrf.mxu0
        %v2448 = vadd.f32 %v2079, %v2447
        %2449 = vdwg.mxu0
        %2450 = vmatpush.bf16.msra.mxu0 %v1517
        %2451 = vmatpush.bf16.msra.mxu0 %v1509
        %2452 = vmatpush.bf16.msra.mxu0 %v1501
        %2453 = vmatpush.bf16.msra.mxu0 %v1493
        %2454 = vmatpush.bf16.msra.mxu0 %v1485
        %2455 = vmatpush.bf16.msra.mxu0 %v1477
        %2456 = vmatpush.bf16.msra.mxu0 %v1469
        %2457 = vmatpush.bf16.msra.mxu0 %v1461
        %2458 = vmatmul.bf16.gmra.mxu0 %v2274
        %v2459 = vpop.f32.mrf.mxu0
        %v2460 = vadd.f32 %v2411, %v2459
        %v2461 = vpop.f32.mrf.mxu0
        %v2462 = vadd.f32 %v2413, %v2461
        %2463 = vmatmul.bf16.gmra.mxu0 %v2282
        %v2464 = vpop.f32.mrf.mxu0
        %v2465 = vadd.f32 %v2416, %v2464
        %v2466 = vpop.f32.mrf.mxu0
        %v2467 = vadd.f32 %v2418, %v2466
        %2468 = vmatmul.bf16.gmra.mxu0 %v2290
        %v2469 = vpop.f32.mrf.mxu0
        %v2470 = vadd.f32 %v2421, %v2469
        %v2471 = vpop.f32.mrf.mxu0
        %v2472 = vadd.f32 %v2423, %v2471
        %2473 = vmatmul.bf16.gmra.mxu0 %v2298
        %v2474 = vpop.f32.mrf.mxu0
        %v2475 = vadd.f32 %v2426, %v2474
        %v2476 = vpop.f32.mrf.mxu0
        %v2477 = vadd.f32 %v2428, %v2476
        %2478 = vmatmul.bf16.gmra.mxu0 %v2306
        %v2479 = vpop.f32.mrf.mxu0
        %v2480 = vadd.f32 %v2431, %v2479
        %v2481 = vpop.f32.mrf.mxu0
        %v2482 = vadd.f32 %v2433, %v2481
        %2483 = vmatmul.bf16.gmra.mxu0 %v2314
        %v2484 = vpop.f32.mrf.mxu0
        %v2485 = vadd.f32 %v2436, %v2484
        %v2486 = vpop.f32.mrf.mxu0
        %v2487 = vadd.f32 %v2438, %v2486
        %2488 = vmatmul.bf16.gmra.mxu0 %v2322
        %v2489 = vpop.f32.mrf.mxu0
        %v2490 = vadd.f32 %v2441, %v2489
        %v2491 = vpop.f32.mrf.mxu0
        %v2492 = vadd.f32 %v2443, %v2491
        %2493 = vmatmul.bf16.gmra.mxu0 %v2330
        %v2494 = vpop.f32.mrf.mxu0
        %v2495 = vadd.f32 %v2446, %v2494
        %v2496 = vpop.f32.mrf.mxu0
        %v2497 = vadd.f32 %v2448, %v2496
        %2498 = vdwg.mxu0
        %2499 = vmatpush.bf16.msra.mxu0 %v1581
        %2500 = vmatpush.bf16.msra.mxu0 %v1573
        %2501 = vmatpush.bf16.msra.mxu0 %v1565
        %2502 = vmatpush.bf16.msra.mxu0 %v1557
        %2503 = vmatpush.bf16.msra.mxu0 %v1549
        %2504 = vmatpush.bf16.msra.mxu0 %v1541
        %2505 = vmatpush.bf16.msra.mxu0 %v1533
        %2506 = vmatpush.bf16.msra.mxu0 %v1525
        %2507 = vmatmul.bf16.gmra.mxu0 %v2275
        %v2508 = vpop.f32.mrf.mxu0
        %v2509 = vadd.f32 %v2460, %v2508
        %v2510 = vpop.f32.mrf.mxu0
        %v2511 = vadd.f32 %v2462, %v2510
        %2512 = vmatmul.bf16.gmra.mxu0 %v2283
        %v2513 = vpop.f32.mrf.mxu0
        %v2514 = vadd.f32 %v2465, %v2513
        %v2515 = vpop.f32.mrf.mxu0
        %v2516 = vadd.f32 %v2467, %v2515
        %2517 = vmatmul.bf16.gmra.mxu0 %v2291
        %v2518 = vpop.f32.mrf.mxu0
        %v2519 = vadd.f32 %v2470, %v2518
        %v2520 = vpop.f32.mrf.mxu0
        %v2521 = vadd.f32 %v2472, %v2520
        %2522 = vmatmul.bf16.gmra.mxu0 %v2299
        %v2523 = vpop.f32.mrf.mxu0
        %v2524 = vadd.f32 %v2475, %v2523
        %v2525 = vpop.f32.mrf.mxu0
        %v2526 = vadd.f32 %v2477, %v2525
        %2527 = vmatmul.bf16.gmra.mxu0 %v2307
        %v2528 = vpop.f32.mrf.mxu0
        %v2529 = vadd.f32 %v2480, %v2528
        %v2530 = vpop.f32.mrf.mxu0
        %v2531 = vadd.f32 %v2482, %v2530
        %2532 = vmatmul.bf16.gmra.mxu0 %v2315
        %v2533 = vpop.f32.mrf.mxu0
        %v2534 = vadd.f32 %v2485, %v2533
        %v2535 = vpop.f32.mrf.mxu0
        %v2536 = vadd.f32 %v2487, %v2535
        %2537 = vmatmul.bf16.gmra.mxu0 %v2323
        %v2538 = vpop.f32.mrf.mxu0
        %v2539 = vadd.f32 %v2490, %v2538
        %v2540 = vpop.f32.mrf.mxu0
        %v2541 = vadd.f32 %v2492, %v2540
        %2542 = vmatmul.bf16.gmra.mxu0 %v2331
        %v2543 = vpop.f32.mrf.mxu0
        %v2544 = vadd.f32 %v2495, %v2543
        %v2545 = vpop.f32.mrf.mxu0
        %v2546 = vadd.f32 %v2497, %v2545
        %2547 = vdwg.mxu0
        %2548 = vmatpush.bf16.msra.mxu0 %v1645
        %2549 = vmatpush.bf16.msra.mxu0 %v1637
        %2550 = vmatpush.bf16.msra.mxu0 %v1629
        %2551 = vmatpush.bf16.msra.mxu0 %v1621
        %2552 = vmatpush.bf16.msra.mxu0 %v1613
        %2553 = vmatpush.bf16.msra.mxu0 %v1605
        %2554 = vmatpush.bf16.msra.mxu0 %v1597
        %2555 = vmatpush.bf16.msra.mxu0 %v1589
        %2556 = vmatmul.bf16.gmra.mxu0 %v2276
        %v2557 = vpop.f32.mrf.mxu0
        %v2558 = vadd.f32 %v2509, %v2557
        %v2559 = vpop.f32.mrf.mxu0
        %v2560 = vadd.f32 %v2511, %v2559
        %2561 = vmatmul.bf16.gmra.mxu0 %v2284
        %v2562 = vpop.f32.mrf.mxu0
        %v2563 = vadd.f32 %v2514, %v2562
        %v2564 = vpop.f32.mrf.mxu0
        %v2565 = vadd.f32 %v2516, %v2564
        %2566 = vmatmul.bf16.gmra.mxu0 %v2292
        %v2567 = vpop.f32.mrf.mxu0
        %v2568 = vadd.f32 %v2519, %v2567
        %v2569 = vpop.f32.mrf.mxu0
        %v2570 = vadd.f32 %v2521, %v2569
        %2571 = vmatmul.bf16.gmra.mxu0 %v2300
        %v2572 = vpop.f32.mrf.mxu0
        %v2573 = vadd.f32 %v2524, %v2572
        %v2574 = vpop.f32.mrf.mxu0
        %v2575 = vadd.f32 %v2526, %v2574
        %2576 = vmatmul.bf16.gmra.mxu0 %v2308
        %v2577 = vpop.f32.mrf.mxu0
        %v2578 = vadd.f32 %v2529, %v2577
        %v2579 = vpop.f32.mrf.mxu0
        %v2580 = vadd.f32 %v2531, %v2579
        %2581 = vmatmul.bf16.gmra.mxu0 %v2316
        %v2582 = vpop.f32.mrf.mxu0
        %v2583 = vadd.f32 %v2534, %v2582
        %v2584 = vpop.f32.mrf.mxu0
        %v2585 = vadd.f32 %v2536, %v2584
        %2586 = vmatmul.bf16.gmra.mxu0 %v2324
        %v2587 = vpop.f32.mrf.mxu0
        %v2588 = vadd.f32 %v2539, %v2587
        %v2589 = vpop.f32.mrf.mxu0
        %v2590 = vadd.f32 %v2541, %v2589
        %2591 = vmatmul.bf16.gmra.mxu0 %v2332
        %v2592 = vpop.f32.mrf.mxu0
        %v2593 = vadd.f32 %v2544, %v2592
        %v2594 = vpop.f32.mrf.mxu0
        %v2595 = vadd.f32 %v2546, %v2594
        %2596 = vdwg.mxu0
        %2597 = vmatpush.bf16.msra.mxu0 %v1709
        %2598 = vmatpush.bf16.msra.mxu0 %v1701
        %2599 = vmatpush.bf16.msra.mxu0 %v1693
        %2600 = vmatpush.bf16.msra.mxu0 %v1685
        %2601 = vmatpush.bf16.msra.mxu0 %v1677
        %2602 = vmatpush.bf16.msra.mxu0 %v1669
        %2603 = vmatpush.bf16.msra.mxu0 %v1661
        %2604 = vmatpush.bf16.msra.mxu0 %v1653
        %2605 = vmatmul.bf16.gmra.mxu0 %v2277
        %v2606 = vpop.f32.mrf.mxu0
        %v2607 = vadd.f32 %v2558, %v2606
        %v2608 = vpop.f32.mrf.mxu0
        %v2609 = vadd.f32 %v2560, %v2608
        %2610 = vmatmul.bf16.gmra.mxu0 %v2285
        %v2611 = vpop.f32.mrf.mxu0
        %v2612 = vadd.f32 %v2563, %v2611
        %v2613 = vpop.f32.mrf.mxu0
        %v2614 = vadd.f32 %v2565, %v2613
        %2615 = vmatmul.bf16.gmra.mxu0 %v2293
        %v2616 = vpop.f32.mrf.mxu0
        %v2617 = vadd.f32 %v2568, %v2616
        %v2618 = vpop.f32.mrf.mxu0
        %v2619 = vadd.f32 %v2570, %v2618
        %2620 = vmatmul.bf16.gmra.mxu0 %v2301
        %v2621 = vpop.f32.mrf.mxu0
        %v2622 = vadd.f32 %v2573, %v2621
        %v2623 = vpop.f32.mrf.mxu0
        %v2624 = vadd.f32 %v2575, %v2623
        %2625 = vmatmul.bf16.gmra.mxu0 %v2309
        %v2626 = vpop.f32.mrf.mxu0
        %v2627 = vadd.f32 %v2578, %v2626
        %v2628 = vpop.f32.mrf.mxu0
        %v2629 = vadd.f32 %v2580, %v2628
        %2630 = vmatmul.bf16.gmra.mxu0 %v2317
        %v2631 = vpop.f32.mrf.mxu0
        %v2632 = vadd.f32 %v2583, %v2631
        %v2633 = vpop.f32.mrf.mxu0
        %v2634 = vadd.f32 %v2585, %v2633
        %2635 = vmatmul.bf16.gmra.mxu0 %v2325
        %v2636 = vpop.f32.mrf.mxu0
        %v2637 = vadd.f32 %v2588, %v2636
        %v2638 = vpop.f32.mrf.mxu0
        %v2639 = vadd.f32 %v2590, %v2638
        %2640 = vmatmul.bf16.gmra.mxu0 %v2333
        %v2641 = vpop.f32.mrf.mxu0
        %v2642 = vadd.f32 %v2593, %v2641
        %v2643 = vpop.f32.mrf.mxu0
        %v2644 = vadd.f32 %v2595, %v2643
        %2645 = vdwg.mxu0
        %2646 = vmatpush.bf16.msra.mxu0 %v1773
        %2647 = vmatpush.bf16.msra.mxu0 %v1765
        %2648 = vmatpush.bf16.msra.mxu0 %v1757
        %2649 = vmatpush.bf16.msra.mxu0 %v1749
        %2650 = vmatpush.bf16.msra.mxu0 %v1741
        %2651 = vmatpush.bf16.msra.mxu0 %v1733
        %2652 = vmatpush.bf16.msra.mxu0 %v1725
        %2653 = vmatpush.bf16.msra.mxu0 %v1717
        %2654 = vmatmul.bf16.gmra.mxu0 %v2278
        %v2655 = vpop.f32.mrf.mxu0
        %v2656 = vadd.f32 %v2607, %v2655
        %v2657 = vpop.f32.mrf.mxu0
        %v2658 = vadd.f32 %v2609, %v2657
        %2659 = vmatmul.bf16.gmra.mxu0 %v2286
        %v2660 = vpop.f32.mrf.mxu0
        %v2661 = vadd.f32 %v2612, %v2660
        %v2662 = vpop.f32.mrf.mxu0
        %v2663 = vadd.f32 %v2614, %v2662
        %2664 = vmatmul.bf16.gmra.mxu0 %v2294
        %v2665 = vpop.f32.mrf.mxu0
        %v2666 = vadd.f32 %v2617, %v2665
        %v2667 = vpop.f32.mrf.mxu0
        %v2668 = vadd.f32 %v2619, %v2667
        %2669 = vmatmul.bf16.gmra.mxu0 %v2302
        %v2670 = vpop.f32.mrf.mxu0
        %v2671 = vadd.f32 %v2622, %v2670
        %v2672 = vpop.f32.mrf.mxu0
        %v2673 = vadd.f32 %v2624, %v2672
        %2674 = vmatmul.bf16.gmra.mxu0 %v2310
        %v2675 = vpop.f32.mrf.mxu0
        %v2676 = vadd.f32 %v2627, %v2675
        %v2677 = vpop.f32.mrf.mxu0
        %v2678 = vadd.f32 %v2629, %v2677
        %2679 = vmatmul.bf16.gmra.mxu0 %v2318
        %v2680 = vpop.f32.mrf.mxu0
        %v2681 = vadd.f32 %v2632, %v2680
        %v2682 = vpop.f32.mrf.mxu0
        %v2683 = vadd.f32 %v2634, %v2682
        %2684 = vmatmul.bf16.gmra.mxu0 %v2326
        %v2685 = vpop.f32.mrf.mxu0
        %v2686 = vadd.f32 %v2637, %v2685
        %v2687 = vpop.f32.mrf.mxu0
        %v2688 = vadd.f32 %v2639, %v2687
        %2689 = vmatmul.bf16.gmra.mxu0 %v2334
        %v2690 = vpop.f32.mrf.mxu0
        %v2691 = vadd.f32 %v2642, %v2690
        %v2692 = vpop.f32.mrf.mxu0
        %v2693 = vadd.f32 %v2644, %v2692
        %2694 = vdwg.mxu0
        %2695 = vmatpush.bf16.msra.mxu0 %v1837
        %2696 = vmatpush.bf16.msra.mxu0 %v1829
        %2697 = vmatpush.bf16.msra.mxu0 %v1821
        %2698 = vmatpush.bf16.msra.mxu0 %v1813
        %2699 = vmatpush.bf16.msra.mxu0 %v1805
        %2700 = vmatpush.bf16.msra.mxu0 %v1797
        %2701 = vmatpush.bf16.msra.mxu0 %v1789
        %2702 = vmatpush.bf16.msra.mxu0 %v1781
        %2703 = vmatmul.bf16.gmra.mxu0 %v2279
        %v2704 = vpop.f32.mrf.mxu0
        %v2705 = vadd.f32 %v2656, %v2704
        %v2706 = vpop.f32.mrf.mxu0
        %v2707 = vadd.f32 %v2658, %v2706
        %2708 = vmatmul.bf16.gmra.mxu0 %v2287
        %v2709 = vpop.f32.mrf.mxu0
        %v2710 = vadd.f32 %v2661, %v2709
        %v2711 = vpop.f32.mrf.mxu0
        %v2712 = vadd.f32 %v2663, %v2711
        %2713 = vmatmul.bf16.gmra.mxu0 %v2295
        %v2714 = vpop.f32.mrf.mxu0
        %v2715 = vadd.f32 %v2666, %v2714
        %v2716 = vpop.f32.mrf.mxu0
        %v2717 = vadd.f32 %v2668, %v2716
        %2718 = vmatmul.bf16.gmra.mxu0 %v2303
        %v2719 = vpop.f32.mrf.mxu0
        %v2720 = vadd.f32 %v2671, %v2719
        %v2721 = vpop.f32.mrf.mxu0
        %v2722 = vadd.f32 %v2673, %v2721
        %2723 = vmatmul.bf16.gmra.mxu0 %v2311
        %v2724 = vpop.f32.mrf.mxu0
        %v2725 = vadd.f32 %v2676, %v2724
        %v2726 = vpop.f32.mrf.mxu0
        %v2727 = vadd.f32 %v2678, %v2726
        %2728 = vmatmul.bf16.gmra.mxu0 %v2319
        %v2729 = vpop.f32.mrf.mxu0
        %v2730 = vadd.f32 %v2681, %v2729
        %v2731 = vpop.f32.mrf.mxu0
        %v2732 = vadd.f32 %v2683, %v2731
        %2733 = vmatmul.bf16.gmra.mxu0 %v2327
        %v2734 = vpop.f32.mrf.mxu0
        %v2735 = vadd.f32 %v2686, %v2734
        %v2736 = vpop.f32.mrf.mxu0
        %v2737 = vadd.f32 %v2688, %v2736
        %2738 = vmatmul.bf16.gmra.mxu0 %v2335
        %v2739 = vpop.f32.mrf.mxu0
        %v2740 = vadd.f32 %v2691, %v2739
        %v2741 = vpop.f32.mrf.mxu0
        %v2742 = vadd.f32 %v2693, %v2741
        %2743 = vdwg.mxu0
        %2744 = vmatpush.bf16.msra.mxu0 %v1901
        %2745 = vmatpush.bf16.msra.mxu0 %v1893
        %2746 = vmatpush.bf16.msra.mxu0 %v1885
        %2747 = vmatpush.bf16.msra.mxu0 %v1877
        %2748 = vmatpush.bf16.msra.mxu0 %v1869
        %2749 = vmatpush.bf16.msra.mxu0 %v1861
        %2750 = vmatpush.bf16.msra.mxu0 %v1853
        %2751 = vmatpush.bf16.msra.mxu0 %v1845
        %2752 = vmatmul.bf16.gmra.mxu0 %v2280
        %v2753 = vpop.f32.mrf.mxu0
        %v2754 = vadd.f32 %v2705, %v2753
        %v2755 = vpop.f32.mrf.mxu0
        %v2756 = vadd.f32 %v2707, %v2755
        %2757 = vmatmul.bf16.gmra.mxu0 %v2288
        %v2758 = vpop.f32.mrf.mxu0
        %v2759 = vadd.f32 %v2710, %v2758
        %v2760 = vpop.f32.mrf.mxu0
        %v2761 = vadd.f32 %v2712, %v2760
        %2762 = vmatmul.bf16.gmra.mxu0 %v2296
        %v2763 = vpop.f32.mrf.mxu0
        %v2764 = vadd.f32 %v2715, %v2763
        %v2765 = vpop.f32.mrf.mxu0
        %v2766 = vadd.f32 %v2717, %v2765
        %2767 = vmatmul.bf16.gmra.mxu0 %v2304
        %v2768 = vpop.f32.mrf.mxu0
        %v2769 = vadd.f32 %v2720, %v2768
        %v2770 = vpop.f32.mrf.mxu0
        %v2771 = vadd.f32 %v2722, %v2770
        %2772 = vmatmul.bf16.gmra.mxu0 %v2312
        %v2773 = vpop.f32.mrf.mxu0
        %v2774 = vadd.f32 %v2725, %v2773
        %v2775 = vpop.f32.mrf.mxu0
        %v2776 = vadd.f32 %v2727, %v2775
        %2777 = vmatmul.bf16.gmra.mxu0 %v2320
        %v2778 = vpop.f32.mrf.mxu0
        %v2779 = vadd.f32 %v2730, %v2778
        %v2780 = vpop.f32.mrf.mxu0
        %v2781 = vadd.f32 %v2732, %v2780
        %2782 = vmatmul.bf16.gmra.mxu0 %v2328
        %v2783 = vpop.f32.mrf.mxu0
        %v2784 = vadd.f32 %v2735, %v2783
        %v2785 = vpop.f32.mrf.mxu0
        %v2786 = vadd.f32 %v2737, %v2785
        %2787 = vmatmul.bf16.gmra.mxu0 %v2336
        %v2788 = vpop.f32.mrf.mxu0
        %v2789 = vadd.f32 %v2740, %v2788
        %v2790 = vpop.f32.mrf.mxu0
        %v2791 = vadd.f32 %v2742, %v2790
        %2792 = vdwg.mxu0
        %2793 = vmatpush.bf16.msra.mxu0 %v1454
        %2794 = vmatpush.bf16.msra.mxu0 %v1446
        %2795 = vmatpush.bf16.msra.mxu0 %v1438
        %2796 = vmatpush.bf16.msra.mxu0 %v1430
        %2797 = vmatpush.bf16.msra.mxu0 %v1422
        %2798 = vmatpush.bf16.msra.mxu0 %v1414
        %2799 = vmatpush.bf16.msra.mxu0 %v1406
        %2800 = vmatpush.bf16.msra.mxu0 %v1398
        %2801 = vmatmul.bf16.gmra.mxu0 %v2273
        %v2802 = vpop.f32.mrf.mxu0
        %v2803 = vadd.f32 %v2004, %v2802
        %v2804 = vpop.f32.mrf.mxu0
        %v2805 = vadd.f32 %v2009, %v2804
        %2806 = vmatmul.bf16.gmra.mxu0 %v2281
        %v2807 = vpop.f32.mrf.mxu0
        %v2808 = vadd.f32 %v2014, %v2807
        %v2809 = vpop.f32.mrf.mxu0
        %v2810 = vadd.f32 %v2019, %v2809
        %2811 = vmatmul.bf16.gmra.mxu0 %v2289
        %v2812 = vpop.f32.mrf.mxu0
        %v2813 = vadd.f32 %v2024, %v2812
        %v2814 = vpop.f32.mrf.mxu0
        %v2815 = vadd.f32 %v2029, %v2814
        %2816 = vmatmul.bf16.gmra.mxu0 %v2297
        %v2817 = vpop.f32.mrf.mxu0
        %v2818 = vadd.f32 %v2034, %v2817
        %v2819 = vpop.f32.mrf.mxu0
        %v2820 = vadd.f32 %v2039, %v2819
        %2821 = vmatmul.bf16.gmra.mxu0 %v2305
        %v2822 = vpop.f32.mrf.mxu0
        %v2823 = vadd.f32 %v2044, %v2822
        %v2824 = vpop.f32.mrf.mxu0
        %v2825 = vadd.f32 %v2049, %v2824
        %2826 = vmatmul.bf16.gmra.mxu0 %v2313
        %v2827 = vpop.f32.mrf.mxu0
        %v2828 = vadd.f32 %v2054, %v2827
        %v2829 = vpop.f32.mrf.mxu0
        %v2830 = vadd.f32 %v2059, %v2829
        %2831 = vmatmul.bf16.gmra.mxu0 %v2321
        %v2832 = vpop.f32.mrf.mxu0
        %v2833 = vadd.f32 %v2064, %v2832
        %v2834 = vpop.f32.mrf.mxu0
        %v2835 = vadd.f32 %v2069, %v2834
        %2836 = vmatmul.bf16.gmra.mxu0 %v2329
        %v2837 = vpop.f32.mrf.mxu0
        %v2838 = vadd.f32 %v2074, %v2837
        %v2839 = vpop.f32.mrf.mxu0
        %v2840 = vadd.f32 %v2079, %v2839
        %2841 = vdwg.mxu0
        %2842 = vmatpush.bf16.msra.mxu0 %v1518
        %2843 = vmatpush.bf16.msra.mxu0 %v1510
        %2844 = vmatpush.bf16.msra.mxu0 %v1502
        %2845 = vmatpush.bf16.msra.mxu0 %v1494
        %2846 = vmatpush.bf16.msra.mxu0 %v1486
        %2847 = vmatpush.bf16.msra.mxu0 %v1478
        %2848 = vmatpush.bf16.msra.mxu0 %v1470
        %2849 = vmatpush.bf16.msra.mxu0 %v1462
        %2850 = vmatmul.bf16.gmra.mxu0 %v2274
        %v2851 = vpop.f32.mrf.mxu0
        %v2852 = vadd.f32 %v2803, %v2851
        %v2853 = vpop.f32.mrf.mxu0
        %v2854 = vadd.f32 %v2805, %v2853
        %2855 = vmatmul.bf16.gmra.mxu0 %v2282
        %v2856 = vpop.f32.mrf.mxu0
        %v2857 = vadd.f32 %v2808, %v2856
        %v2858 = vpop.f32.mrf.mxu0
        %v2859 = vadd.f32 %v2810, %v2858
        %2860 = vmatmul.bf16.gmra.mxu0 %v2290
        %v2861 = vpop.f32.mrf.mxu0
        %v2862 = vadd.f32 %v2813, %v2861
        %v2863 = vpop.f32.mrf.mxu0
        %v2864 = vadd.f32 %v2815, %v2863
        %2865 = vmatmul.bf16.gmra.mxu0 %v2298
        %v2866 = vpop.f32.mrf.mxu0
        %v2867 = vadd.f32 %v2818, %v2866
        %v2868 = vpop.f32.mrf.mxu0
        %v2869 = vadd.f32 %v2820, %v2868
        %2870 = vmatmul.bf16.gmra.mxu0 %v2306
        %v2871 = vpop.f32.mrf.mxu0
        %v2872 = vadd.f32 %v2823, %v2871
        %v2873 = vpop.f32.mrf.mxu0
        %v2874 = vadd.f32 %v2825, %v2873
        %2875 = vmatmul.bf16.gmra.mxu0 %v2314
        %v2876 = vpop.f32.mrf.mxu0
        %v2877 = vadd.f32 %v2828, %v2876
        %v2878 = vpop.f32.mrf.mxu0
        %v2879 = vadd.f32 %v2830, %v2878
        %2880 = vmatmul.bf16.gmra.mxu0 %v2322
        %v2881 = vpop.f32.mrf.mxu0
        %v2882 = vadd.f32 %v2833, %v2881
        %v2883 = vpop.f32.mrf.mxu0
        %v2884 = vadd.f32 %v2835, %v2883
        %2885 = vmatmul.bf16.gmra.mxu0 %v2330
        %v2886 = vpop.f32.mrf.mxu0
        %v2887 = vadd.f32 %v2838, %v2886
        %v2888 = vpop.f32.mrf.mxu0
        %v2889 = vadd.f32 %v2840, %v2888
        %2890 = vdwg.mxu0
        %2891 = vmatpush.bf16.msra.mxu0 %v1582
        %2892 = vmatpush.bf16.msra.mxu0 %v1574
        %2893 = vmatpush.bf16.msra.mxu0 %v1566
        %2894 = vmatpush.bf16.msra.mxu0 %v1558
        %2895 = vmatpush.bf16.msra.mxu0 %v1550
        %2896 = vmatpush.bf16.msra.mxu0 %v1542
        %2897 = vmatpush.bf16.msra.mxu0 %v1534
        %2898 = vmatpush.bf16.msra.mxu0 %v1526
        %2899 = vmatmul.bf16.gmra.mxu0 %v2275
        %v2900 = vpop.f32.mrf.mxu0
        %v2901 = vadd.f32 %v2852, %v2900
        %v2902 = vpop.f32.mrf.mxu0
        %v2903 = vadd.f32 %v2854, %v2902
        %2904 = vmatmul.bf16.gmra.mxu0 %v2283
        %v2905 = vpop.f32.mrf.mxu0
        %v2906 = vadd.f32 %v2857, %v2905
        %v2907 = vpop.f32.mrf.mxu0
        %v2908 = vadd.f32 %v2859, %v2907
        %2909 = vmatmul.bf16.gmra.mxu0 %v2291
        %v2910 = vpop.f32.mrf.mxu0
        %v2911 = vadd.f32 %v2862, %v2910
        %v2912 = vpop.f32.mrf.mxu0
        %v2913 = vadd.f32 %v2864, %v2912
        %2914 = vmatmul.bf16.gmra.mxu0 %v2299
        %v2915 = vpop.f32.mrf.mxu0
        %v2916 = vadd.f32 %v2867, %v2915
        %v2917 = vpop.f32.mrf.mxu0
        %v2918 = vadd.f32 %v2869, %v2917
        %2919 = vmatmul.bf16.gmra.mxu0 %v2307
        %v2920 = vpop.f32.mrf.mxu0
        %v2921 = vadd.f32 %v2872, %v2920
        %v2922 = vpop.f32.mrf.mxu0
        %v2923 = vadd.f32 %v2874, %v2922
        %2924 = vmatmul.bf16.gmra.mxu0 %v2315
        %v2925 = vpop.f32.mrf.mxu0
        %v2926 = vadd.f32 %v2877, %v2925
        %v2927 = vpop.f32.mrf.mxu0
        %v2928 = vadd.f32 %v2879, %v2927
        %2929 = vmatmul.bf16.gmra.mxu0 %v2323
        %v2930 = vpop.f32.mrf.mxu0
        %v2931 = vadd.f32 %v2882, %v2930
        %v2932 = vpop.f32.mrf.mxu0
        %v2933 = vadd.f32 %v2884, %v2932
        %2934 = vmatmul.bf16.gmra.mxu0 %v2331
        %v2935 = vpop.f32.mrf.mxu0
        %v2936 = vadd.f32 %v2887, %v2935
        %v2937 = vpop.f32.mrf.mxu0
        %v2938 = vadd.f32 %v2889, %v2937
        %2939 = vdwg.mxu0
        %2940 = vmatpush.bf16.msra.mxu0 %v1646
        %2941 = vmatpush.bf16.msra.mxu0 %v1638
        %2942 = vmatpush.bf16.msra.mxu0 %v1630
        %2943 = vmatpush.bf16.msra.mxu0 %v1622
        %2944 = vmatpush.bf16.msra.mxu0 %v1614
        %2945 = vmatpush.bf16.msra.mxu0 %v1606
        %2946 = vmatpush.bf16.msra.mxu0 %v1598
        %2947 = vmatpush.bf16.msra.mxu0 %v1590
        %2948 = vmatmul.bf16.gmra.mxu0 %v2276
        %v2949 = vpop.f32.mrf.mxu0
        %v2950 = vadd.f32 %v2901, %v2949
        %v2951 = vpop.f32.mrf.mxu0
        %v2952 = vadd.f32 %v2903, %v2951
        %2953 = vmatmul.bf16.gmra.mxu0 %v2284
        %v2954 = vpop.f32.mrf.mxu0
        %v2955 = vadd.f32 %v2906, %v2954
        %v2956 = vpop.f32.mrf.mxu0
        %v2957 = vadd.f32 %v2908, %v2956
        %2958 = vmatmul.bf16.gmra.mxu0 %v2292
        %v2959 = vpop.f32.mrf.mxu0
        %v2960 = vadd.f32 %v2911, %v2959
        %v2961 = vpop.f32.mrf.mxu0
        %v2962 = vadd.f32 %v2913, %v2961
        %2963 = vmatmul.bf16.gmra.mxu0 %v2300
        %v2964 = vpop.f32.mrf.mxu0
        %v2965 = vadd.f32 %v2916, %v2964
        %v2966 = vpop.f32.mrf.mxu0
        %v2967 = vadd.f32 %v2918, %v2966
        %2968 = vmatmul.bf16.gmra.mxu0 %v2308
        %v2969 = vpop.f32.mrf.mxu0
        %v2970 = vadd.f32 %v2921, %v2969
        %v2971 = vpop.f32.mrf.mxu0
        %v2972 = vadd.f32 %v2923, %v2971
        %2973 = vmatmul.bf16.gmra.mxu0 %v2316
        %v2974 = vpop.f32.mrf.mxu0
        %v2975 = vadd.f32 %v2926, %v2974
        %v2976 = vpop.f32.mrf.mxu0
        %v2977 = vadd.f32 %v2928, %v2976
        %2978 = vmatmul.bf16.gmra.mxu0 %v2324
        %v2979 = vpop.f32.mrf.mxu0
        %v2980 = vadd.f32 %v2931, %v2979
        %v2981 = vpop.f32.mrf.mxu0
        %v2982 = vadd.f32 %v2933, %v2981
        %2983 = vmatmul.bf16.gmra.mxu0 %v2332
        %v2984 = vpop.f32.mrf.mxu0
        %v2985 = vadd.f32 %v2936, %v2984
        %v2986 = vpop.f32.mrf.mxu0
        %v2987 = vadd.f32 %v2938, %v2986
        %2988 = vdwg.mxu0
        %2989 = vmatpush.bf16.msra.mxu0 %v1710
        %2990 = vmatpush.bf16.msra.mxu0 %v1702
        %2991 = vmatpush.bf16.msra.mxu0 %v1694
        %2992 = vmatpush.bf16.msra.mxu0 %v1686
        %2993 = vmatpush.bf16.msra.mxu0 %v1678
        %2994 = vmatpush.bf16.msra.mxu0 %v1670
        %2995 = vmatpush.bf16.msra.mxu0 %v1662
        %2996 = vmatpush.bf16.msra.mxu0 %v1654
        %2997 = vmatmul.bf16.gmra.mxu0 %v2277
        %v2998 = vpop.f32.mrf.mxu0
        %v2999 = vadd.f32 %v2950, %v2998
        %v3000 = vpop.f32.mrf.mxu0
        %v3001 = vadd.f32 %v2952, %v3000
        %3002 = vmatmul.bf16.gmra.mxu0 %v2285
        %v3003 = vpop.f32.mrf.mxu0
        %v3004 = vadd.f32 %v2955, %v3003
        %v3005 = vpop.f32.mrf.mxu0
        %v3006 = vadd.f32 %v2957, %v3005
        %3007 = vmatmul.bf16.gmra.mxu0 %v2293
        %v3008 = vpop.f32.mrf.mxu0
        %v3009 = vadd.f32 %v2960, %v3008
        %v3010 = vpop.f32.mrf.mxu0
        %v3011 = vadd.f32 %v2962, %v3010
        %3012 = vmatmul.bf16.gmra.mxu0 %v2301
        %v3013 = vpop.f32.mrf.mxu0
        %v3014 = vadd.f32 %v2965, %v3013
        %v3015 = vpop.f32.mrf.mxu0
        %v3016 = vadd.f32 %v2967, %v3015
        %3017 = vmatmul.bf16.gmra.mxu0 %v2309
        %v3018 = vpop.f32.mrf.mxu0
        %v3019 = vadd.f32 %v2970, %v3018
        %v3020 = vpop.f32.mrf.mxu0
        %v3021 = vadd.f32 %v2972, %v3020
        %3022 = vmatmul.bf16.gmra.mxu0 %v2317
        %v3023 = vpop.f32.mrf.mxu0
        %v3024 = vadd.f32 %v2975, %v3023
        %v3025 = vpop.f32.mrf.mxu0
        %v3026 = vadd.f32 %v2977, %v3025
        %3027 = vmatmul.bf16.gmra.mxu0 %v2325
        %v3028 = vpop.f32.mrf.mxu0
        %v3029 = vadd.f32 %v2980, %v3028
        %v3030 = vpop.f32.mrf.mxu0
        %v3031 = vadd.f32 %v2982, %v3030
        %3032 = vmatmul.bf16.gmra.mxu0 %v2333
        %v3033 = vpop.f32.mrf.mxu0
        %v3034 = vadd.f32 %v2985, %v3033
        %v3035 = vpop.f32.mrf.mxu0
        %v3036 = vadd.f32 %v2987, %v3035
        %3037 = vdwg.mxu0
        %3038 = vmatpush.bf16.msra.mxu0 %v1774
        %3039 = vmatpush.bf16.msra.mxu0 %v1766
        %3040 = vmatpush.bf16.msra.mxu0 %v1758
        %3041 = vmatpush.bf16.msra.mxu0 %v1750
        %3042 = vmatpush.bf16.msra.mxu0 %v1742
        %3043 = vmatpush.bf16.msra.mxu0 %v1734
        %3044 = vmatpush.bf16.msra.mxu0 %v1726
        %3045 = vmatpush.bf16.msra.mxu0 %v1718
        %3046 = vmatmul.bf16.gmra.mxu0 %v2278
        %v3047 = vpop.f32.mrf.mxu0
        %v3048 = vadd.f32 %v2999, %v3047
        %v3049 = vpop.f32.mrf.mxu0
        %v3050 = vadd.f32 %v3001, %v3049
        %3051 = vmatmul.bf16.gmra.mxu0 %v2286
        %v3052 = vpop.f32.mrf.mxu0
        %v3053 = vadd.f32 %v3004, %v3052
        %v3054 = vpop.f32.mrf.mxu0
        %v3055 = vadd.f32 %v3006, %v3054
        %3056 = vmatmul.bf16.gmra.mxu0 %v2294
        %v3057 = vpop.f32.mrf.mxu0
        %v3058 = vadd.f32 %v3009, %v3057
        %v3059 = vpop.f32.mrf.mxu0
        %v3060 = vadd.f32 %v3011, %v3059
        %3061 = vmatmul.bf16.gmra.mxu0 %v2302
        %v3062 = vpop.f32.mrf.mxu0
        %v3063 = vadd.f32 %v3014, %v3062
        %v3064 = vpop.f32.mrf.mxu0
        %v3065 = vadd.f32 %v3016, %v3064
        %3066 = vmatmul.bf16.gmra.mxu0 %v2310
        %v3067 = vpop.f32.mrf.mxu0
        %v3068 = vadd.f32 %v3019, %v3067
        %v3069 = vpop.f32.mrf.mxu0
        %v3070 = vadd.f32 %v3021, %v3069
        %3071 = vmatmul.bf16.gmra.mxu0 %v2318
        %v3072 = vpop.f32.mrf.mxu0
        %v3073 = vadd.f32 %v3024, %v3072
        %v3074 = vpop.f32.mrf.mxu0
        %v3075 = vadd.f32 %v3026, %v3074
        %3076 = vmatmul.bf16.gmra.mxu0 %v2326
        %v3077 = vpop.f32.mrf.mxu0
        %v3078 = vadd.f32 %v3029, %v3077
        %v3079 = vpop.f32.mrf.mxu0
        %v3080 = vadd.f32 %v3031, %v3079
        %3081 = vmatmul.bf16.gmra.mxu0 %v2334
        %v3082 = vpop.f32.mrf.mxu0
        %v3083 = vadd.f32 %v3034, %v3082
        %v3084 = vpop.f32.mrf.mxu0
        %v3085 = vadd.f32 %v3036, %v3084
        %3086 = vdwg.mxu0
        %3087 = vmatpush.bf16.msra.mxu0 %v1838
        %3088 = vmatpush.bf16.msra.mxu0 %v1830
        %3089 = vmatpush.bf16.msra.mxu0 %v1822
        %3090 = vmatpush.bf16.msra.mxu0 %v1814
        %3091 = vmatpush.bf16.msra.mxu0 %v1806
        %3092 = vmatpush.bf16.msra.mxu0 %v1798
        %3093 = vmatpush.bf16.msra.mxu0 %v1790
        %3094 = vmatpush.bf16.msra.mxu0 %v1782
        %3095 = vmatmul.bf16.gmra.mxu0 %v2279
        %v3096 = vpop.f32.mrf.mxu0
        %v3097 = vadd.f32 %v3048, %v3096
        %v3098 = vpop.f32.mrf.mxu0
        %v3099 = vadd.f32 %v3050, %v3098
        %3100 = vmatmul.bf16.gmra.mxu0 %v2287
        %v3101 = vpop.f32.mrf.mxu0
        %v3102 = vadd.f32 %v3053, %v3101
        %v3103 = vpop.f32.mrf.mxu0
        %v3104 = vadd.f32 %v3055, %v3103
        %3105 = vmatmul.bf16.gmra.mxu0 %v2295
        %v3106 = vpop.f32.mrf.mxu0
        %v3107 = vadd.f32 %v3058, %v3106
        %v3108 = vpop.f32.mrf.mxu0
        %v3109 = vadd.f32 %v3060, %v3108
        %3110 = vmatmul.bf16.gmra.mxu0 %v2303
        %v3111 = vpop.f32.mrf.mxu0
        %v3112 = vadd.f32 %v3063, %v3111
        %v3113 = vpop.f32.mrf.mxu0
        %v3114 = vadd.f32 %v3065, %v3113
        %3115 = vmatmul.bf16.gmra.mxu0 %v2311
        %v3116 = vpop.f32.mrf.mxu0
        %v3117 = vadd.f32 %v3068, %v3116
        %v3118 = vpop.f32.mrf.mxu0
        %v3119 = vadd.f32 %v3070, %v3118
        %3120 = vmatmul.bf16.gmra.mxu0 %v2319
        %v3121 = vpop.f32.mrf.mxu0
        %v3122 = vadd.f32 %v3073, %v3121
        %v3123 = vpop.f32.mrf.mxu0
        %v3124 = vadd.f32 %v3075, %v3123
        %3125 = vmatmul.bf16.gmra.mxu0 %v2327
        %v3126 = vpop.f32.mrf.mxu0
        %v3127 = vadd.f32 %v3078, %v3126
        %v3128 = vpop.f32.mrf.mxu0
        %v3129 = vadd.f32 %v3080, %v3128
        %3130 = vmatmul.bf16.gmra.mxu0 %v2335
        %v3131 = vpop.f32.mrf.mxu0
        %v3132 = vadd.f32 %v3083, %v3131
        %v3133 = vpop.f32.mrf.mxu0
        %v3134 = vadd.f32 %v3085, %v3133
        %3135 = vdwg.mxu0
        %3136 = vmatpush.bf16.msra.mxu0 %v1902
        %3137 = vmatpush.bf16.msra.mxu0 %v1894
        %3138 = vmatpush.bf16.msra.mxu0 %v1886
        %3139 = vmatpush.bf16.msra.mxu0 %v1878
        %3140 = vmatpush.bf16.msra.mxu0 %v1870
        %3141 = vmatpush.bf16.msra.mxu0 %v1862
        %3142 = vmatpush.bf16.msra.mxu0 %v1854
        %3143 = vmatpush.bf16.msra.mxu0 %v1846
        %3144 = vmatmul.bf16.gmra.mxu0 %v2280
        %v3145 = vpop.f32.mrf.mxu0
        %v3146 = vadd.f32 %v3097, %v3145
        %v3147 = vpop.f32.mrf.mxu0
        %v3148 = vadd.f32 %v3099, %v3147
        %3149 = vmatmul.bf16.gmra.mxu0 %v2288
        %v3150 = vpop.f32.mrf.mxu0
        %v3151 = vadd.f32 %v3102, %v3150
        %v3152 = vpop.f32.mrf.mxu0
        %v3153 = vadd.f32 %v3104, %v3152
        %3154 = vmatmul.bf16.gmra.mxu0 %v2296
        %v3155 = vpop.f32.mrf.mxu0
        %v3156 = vadd.f32 %v3107, %v3155
        %v3157 = vpop.f32.mrf.mxu0
        %v3158 = vadd.f32 %v3109, %v3157
        %3159 = vmatmul.bf16.gmra.mxu0 %v2304
        %v3160 = vpop.f32.mrf.mxu0
        %v3161 = vadd.f32 %v3112, %v3160
        %v3162 = vpop.f32.mrf.mxu0
        %v3163 = vadd.f32 %v3114, %v3162
        %3164 = vmatmul.bf16.gmra.mxu0 %v2312
        %v3165 = vpop.f32.mrf.mxu0
        %v3166 = vadd.f32 %v3117, %v3165
        %v3167 = vpop.f32.mrf.mxu0
        %v3168 = vadd.f32 %v3119, %v3167
        %3169 = vmatmul.bf16.gmra.mxu0 %v2320
        %v3170 = vpop.f32.mrf.mxu0
        %v3171 = vadd.f32 %v3122, %v3170
        %v3172 = vpop.f32.mrf.mxu0
        %v3173 = vadd.f32 %v3124, %v3172
        %3174 = vmatmul.bf16.gmra.mxu0 %v2328
        %v3175 = vpop.f32.mrf.mxu0
        %v3176 = vadd.f32 %v3127, %v3175
        %v3177 = vpop.f32.mrf.mxu0
        %v3178 = vadd.f32 %v3129, %v3177
        %3179 = vmatmul.bf16.gmra.mxu0 %v2336
        %v3180 = vpop.f32.mrf.mxu0
        %v3181 = vadd.f32 %v3132, %v3180
        %v3182 = vpop.f32.mrf.mxu0
        %v3183 = vadd.f32 %v3134, %v3182
        %3184 = vdwg.mxu0
        %3185 = vmatpush.bf16.msra.mxu0 %v1455
        %3186 = vmatpush.bf16.msra.mxu0 %v1447
        %3187 = vmatpush.bf16.msra.mxu0 %v1439
        %3188 = vmatpush.bf16.msra.mxu0 %v1431
        %3189 = vmatpush.bf16.msra.mxu0 %v1423
        %3190 = vmatpush.bf16.msra.mxu0 %v1415
        %3191 = vmatpush.bf16.msra.mxu0 %v1407
        %3192 = vmatpush.bf16.msra.mxu0 %v1399
        %3193 = vmatmul.bf16.gmra.mxu0 %v2273
        %v3194 = vpop.f32.mrf.mxu0
        %v3195 = vadd.f32 %v2004, %v3194
        %v3196 = vpop.f32.mrf.mxu0
        %v3197 = vadd.f32 %v2009, %v3196
        %3198 = vmatmul.bf16.gmra.mxu0 %v2281
        %v3199 = vpop.f32.mrf.mxu0
        %v3200 = vadd.f32 %v2014, %v3199
        %v3201 = vpop.f32.mrf.mxu0
        %v3202 = vadd.f32 %v2019, %v3201
        %3203 = vmatmul.bf16.gmra.mxu0 %v2289
        %v3204 = vpop.f32.mrf.mxu0
        %v3205 = vadd.f32 %v2024, %v3204
        %v3206 = vpop.f32.mrf.mxu0
        %v3207 = vadd.f32 %v2029, %v3206
        %3208 = vmatmul.bf16.gmra.mxu0 %v2297
        %v3209 = vpop.f32.mrf.mxu0
        %v3210 = vadd.f32 %v2034, %v3209
        %v3211 = vpop.f32.mrf.mxu0
        %v3212 = vadd.f32 %v2039, %v3211
        %3213 = vmatmul.bf16.gmra.mxu0 %v2305
        %v3214 = vpop.f32.mrf.mxu0
        %v3215 = vadd.f32 %v2044, %v3214
        %v3216 = vpop.f32.mrf.mxu0
        %v3217 = vadd.f32 %v2049, %v3216
        %3218 = vmatmul.bf16.gmra.mxu0 %v2313
        %v3219 = vpop.f32.mrf.mxu0
        %v3220 = vadd.f32 %v2054, %v3219
        %v3221 = vpop.f32.mrf.mxu0
        %v3222 = vadd.f32 %v2059, %v3221
        %3223 = vmatmul.bf16.gmra.mxu0 %v2321
        %v3224 = vpop.f32.mrf.mxu0
        %v3225 = vadd.f32 %v2064, %v3224
        %v3226 = vpop.f32.mrf.mxu0
        %v3227 = vadd.f32 %v2069, %v3226
        %3228 = vmatmul.bf16.gmra.mxu0 %v2329
        %v3229 = vpop.f32.mrf.mxu0
        %v3230 = vadd.f32 %v2074, %v3229
        %v3231 = vpop.f32.mrf.mxu0
        %v3232 = vadd.f32 %v2079, %v3231
        %3233 = vdwg.mxu0
        %3234 = vmatpush.bf16.msra.mxu0 %v1519
        %3235 = vmatpush.bf16.msra.mxu0 %v1511
        %3236 = vmatpush.bf16.msra.mxu0 %v1503
        %3237 = vmatpush.bf16.msra.mxu0 %v1495
        %3238 = vmatpush.bf16.msra.mxu0 %v1487
        %3239 = vmatpush.bf16.msra.mxu0 %v1479
        %3240 = vmatpush.bf16.msra.mxu0 %v1471
        %3241 = vmatpush.bf16.msra.mxu0 %v1463
        %3242 = vmatmul.bf16.gmra.mxu0 %v2274
        %v3243 = vpop.f32.mrf.mxu0
        %v3244 = vadd.f32 %v3195, %v3243
        %v3245 = vpop.f32.mrf.mxu0
        %v3246 = vadd.f32 %v3197, %v3245
        %3247 = vmatmul.bf16.gmra.mxu0 %v2282
        %v3248 = vpop.f32.mrf.mxu0
        %v3249 = vadd.f32 %v3200, %v3248
        %v3250 = vpop.f32.mrf.mxu0
        %v3251 = vadd.f32 %v3202, %v3250
        %3252 = vmatmul.bf16.gmra.mxu0 %v2290
        %v3253 = vpop.f32.mrf.mxu0
        %v3254 = vadd.f32 %v3205, %v3253
        %v3255 = vpop.f32.mrf.mxu0
        %v3256 = vadd.f32 %v3207, %v3255
        %3257 = vmatmul.bf16.gmra.mxu0 %v2298
        %v3258 = vpop.f32.mrf.mxu0
        %v3259 = vadd.f32 %v3210, %v3258
        %v3260 = vpop.f32.mrf.mxu0
        %v3261 = vadd.f32 %v3212, %v3260
        %3262 = vmatmul.bf16.gmra.mxu0 %v2306
        %v3263 = vpop.f32.mrf.mxu0
        %v3264 = vadd.f32 %v3215, %v3263
        %v3265 = vpop.f32.mrf.mxu0
        %v3266 = vadd.f32 %v3217, %v3265
        %3267 = vmatmul.bf16.gmra.mxu0 %v2314
        %v3268 = vpop.f32.mrf.mxu0
        %v3269 = vadd.f32 %v3220, %v3268
        %v3270 = vpop.f32.mrf.mxu0
        %v3271 = vadd.f32 %v3222, %v3270
        %3272 = vmatmul.bf16.gmra.mxu0 %v2322
        %v3273 = vpop.f32.mrf.mxu0
        %v3274 = vadd.f32 %v3225, %v3273
        %v3275 = vpop.f32.mrf.mxu0
        %v3276 = vadd.f32 %v3227, %v3275
        %3277 = vmatmul.bf16.gmra.mxu0 %v2330
        %v3278 = vpop.f32.mrf.mxu0
        %v3279 = vadd.f32 %v3230, %v3278
        %v3280 = vpop.f32.mrf.mxu0
        %v3281 = vadd.f32 %v3232, %v3280
        %3282 = vdwg.mxu0
        %3283 = vmatpush.bf16.msra.mxu0 %v1583
        %3284 = vmatpush.bf16.msra.mxu0 %v1575
        %3285 = vmatpush.bf16.msra.mxu0 %v1567
        %3286 = vmatpush.bf16.msra.mxu0 %v1559
        %3287 = vmatpush.bf16.msra.mxu0 %v1551
        %3288 = vmatpush.bf16.msra.mxu0 %v1543
        %3289 = vmatpush.bf16.msra.mxu0 %v1535
        %3290 = vmatpush.bf16.msra.mxu0 %v1527
        %3291 = vmatmul.bf16.gmra.mxu0 %v2275
        %v3292 = vpop.f32.mrf.mxu0
        %v3293 = vadd.f32 %v3244, %v3292
        %v3294 = vpop.f32.mrf.mxu0
        %v3295 = vadd.f32 %v3246, %v3294
        %3296 = vmatmul.bf16.gmra.mxu0 %v2283
        %v3297 = vpop.f32.mrf.mxu0
        %v3298 = vadd.f32 %v3249, %v3297
        %v3299 = vpop.f32.mrf.mxu0
        %v3300 = vadd.f32 %v3251, %v3299
        %3301 = vmatmul.bf16.gmra.mxu0 %v2291
        %v3302 = vpop.f32.mrf.mxu0
        %v3303 = vadd.f32 %v3254, %v3302
        %v3304 = vpop.f32.mrf.mxu0
        %v3305 = vadd.f32 %v3256, %v3304
        %3306 = vmatmul.bf16.gmra.mxu0 %v2299
        %v3307 = vpop.f32.mrf.mxu0
        %v3308 = vadd.f32 %v3259, %v3307
        %v3309 = vpop.f32.mrf.mxu0
        %v3310 = vadd.f32 %v3261, %v3309
        %3311 = vmatmul.bf16.gmra.mxu0 %v2307
        %v3312 = vpop.f32.mrf.mxu0
        %v3313 = vadd.f32 %v3264, %v3312
        %v3314 = vpop.f32.mrf.mxu0
        %v3315 = vadd.f32 %v3266, %v3314
        %3316 = vmatmul.bf16.gmra.mxu0 %v2315
        %v3317 = vpop.f32.mrf.mxu0
        %v3318 = vadd.f32 %v3269, %v3317
        %v3319 = vpop.f32.mrf.mxu0
        %v3320 = vadd.f32 %v3271, %v3319
        %3321 = vmatmul.bf16.gmra.mxu0 %v2323
        %v3322 = vpop.f32.mrf.mxu0
        %v3323 = vadd.f32 %v3274, %v3322
        %v3324 = vpop.f32.mrf.mxu0
        %v3325 = vadd.f32 %v3276, %v3324
        %3326 = vmatmul.bf16.gmra.mxu0 %v2331
        %v3327 = vpop.f32.mrf.mxu0
        %v3328 = vadd.f32 %v3279, %v3327
        %v3329 = vpop.f32.mrf.mxu0
        %v3330 = vadd.f32 %v3281, %v3329
        %3331 = vdwg.mxu0
        %3332 = vmatpush.bf16.msra.mxu0 %v1647
        %3333 = vmatpush.bf16.msra.mxu0 %v1639
        %3334 = vmatpush.bf16.msra.mxu0 %v1631
        %3335 = vmatpush.bf16.msra.mxu0 %v1623
        %3336 = vmatpush.bf16.msra.mxu0 %v1615
        %3337 = vmatpush.bf16.msra.mxu0 %v1607
        %3338 = vmatpush.bf16.msra.mxu0 %v1599
        %3339 = vmatpush.bf16.msra.mxu0 %v1591
        %3340 = vmatmul.bf16.gmra.mxu0 %v2276
        %v3341 = vpop.f32.mrf.mxu0
        %v3342 = vadd.f32 %v3293, %v3341
        %v3343 = vpop.f32.mrf.mxu0
        %v3344 = vadd.f32 %v3295, %v3343
        %3345 = vmatmul.bf16.gmra.mxu0 %v2284
        %v3346 = vpop.f32.mrf.mxu0
        %v3347 = vadd.f32 %v3298, %v3346
        %v3348 = vpop.f32.mrf.mxu0
        %v3349 = vadd.f32 %v3300, %v3348
        %3350 = vmatmul.bf16.gmra.mxu0 %v2292
        %v3351 = vpop.f32.mrf.mxu0
        %v3352 = vadd.f32 %v3303, %v3351
        %v3353 = vpop.f32.mrf.mxu0
        %v3354 = vadd.f32 %v3305, %v3353
        %3355 = vmatmul.bf16.gmra.mxu0 %v2300
        %v3356 = vpop.f32.mrf.mxu0
        %v3357 = vadd.f32 %v3308, %v3356
        %v3358 = vpop.f32.mrf.mxu0
        %v3359 = vadd.f32 %v3310, %v3358
        %3360 = vmatmul.bf16.gmra.mxu0 %v2308
        %v3361 = vpop.f32.mrf.mxu0
        %v3362 = vadd.f32 %v3313, %v3361
        %v3363 = vpop.f32.mrf.mxu0
        %v3364 = vadd.f32 %v3315, %v3363
        %3365 = vmatmul.bf16.gmra.mxu0 %v2316
        %v3366 = vpop.f32.mrf.mxu0
        %v3367 = vadd.f32 %v3318, %v3366
        %v3368 = vpop.f32.mrf.mxu0
        %v3369 = vadd.f32 %v3320, %v3368
        %3370 = vmatmul.bf16.gmra.mxu0 %v2324
        %v3371 = vpop.f32.mrf.mxu0
        %v3372 = vadd.f32 %v3323, %v3371
        %v3373 = vpop.f32.mrf.mxu0
        %v3374 = vadd.f32 %v3325, %v3373
        %3375 = vmatmul.bf16.gmra.mxu0 %v2332
        %v3376 = vpop.f32.mrf.mxu0
        %v3377 = vadd.f32 %v3328, %v3376
        %v3378 = vpop.f32.mrf.mxu0
        %v3379 = vadd.f32 %v3330, %v3378
        %3380 = vdwg.mxu0
        %3381 = vmatpush.bf16.msra.mxu0 %v1711
        %3382 = vmatpush.bf16.msra.mxu0 %v1703
        %3383 = vmatpush.bf16.msra.mxu0 %v1695
        %3384 = vmatpush.bf16.msra.mxu0 %v1687
        %3385 = vmatpush.bf16.msra.mxu0 %v1679
        %3386 = vmatpush.bf16.msra.mxu0 %v1671
        %3387 = vmatpush.bf16.msra.mxu0 %v1663
        %3388 = vmatpush.bf16.msra.mxu0 %v1655
        %3389 = vmatmul.bf16.gmra.mxu0 %v2277
        %v3390 = vpop.f32.mrf.mxu0
        %v3391 = vadd.f32 %v3342, %v3390
        %v3392 = vpop.f32.mrf.mxu0
        %v3393 = vadd.f32 %v3344, %v3392
        %3394 = vmatmul.bf16.gmra.mxu0 %v2285
        %v3395 = vpop.f32.mrf.mxu0
        %v3396 = vadd.f32 %v3347, %v3395
        %v3397 = vpop.f32.mrf.mxu0
        %v3398 = vadd.f32 %v3349, %v3397
        %3399 = vmatmul.bf16.gmra.mxu0 %v2293
        %v3400 = vpop.f32.mrf.mxu0
        %v3401 = vadd.f32 %v3352, %v3400
        %v3402 = vpop.f32.mrf.mxu0
        %v3403 = vadd.f32 %v3354, %v3402
        %3404 = vmatmul.bf16.gmra.mxu0 %v2301
        %v3405 = vpop.f32.mrf.mxu0
        %v3406 = vadd.f32 %v3357, %v3405
        %v3407 = vpop.f32.mrf.mxu0
        %v3408 = vadd.f32 %v3359, %v3407
        %3409 = vmatmul.bf16.gmra.mxu0 %v2309
        %v3410 = vpop.f32.mrf.mxu0
        %v3411 = vadd.f32 %v3362, %v3410
        %v3412 = vpop.f32.mrf.mxu0
        %v3413 = vadd.f32 %v3364, %v3412
        %3414 = vmatmul.bf16.gmra.mxu0 %v2317
        %v3415 = vpop.f32.mrf.mxu0
        %v3416 = vadd.f32 %v3367, %v3415
        %v3417 = vpop.f32.mrf.mxu0
        %v3418 = vadd.f32 %v3369, %v3417
        %3419 = vmatmul.bf16.gmra.mxu0 %v2325
        %v3420 = vpop.f32.mrf.mxu0
        %v3421 = vadd.f32 %v3372, %v3420
        %v3422 = vpop.f32.mrf.mxu0
        %v3423 = vadd.f32 %v3374, %v3422
        %3424 = vmatmul.bf16.gmra.mxu0 %v2333
        %v3425 = vpop.f32.mrf.mxu0
        %v3426 = vadd.f32 %v3377, %v3425
        %v3427 = vpop.f32.mrf.mxu0
        %v3428 = vadd.f32 %v3379, %v3427
        %3429 = vdwg.mxu0
        %3430 = vmatpush.bf16.msra.mxu0 %v1775
        %3431 = vmatpush.bf16.msra.mxu0 %v1767
        %3432 = vmatpush.bf16.msra.mxu0 %v1759
        %3433 = vmatpush.bf16.msra.mxu0 %v1751
        %3434 = vmatpush.bf16.msra.mxu0 %v1743
        %3435 = vmatpush.bf16.msra.mxu0 %v1735
        %3436 = vmatpush.bf16.msra.mxu0 %v1727
        %3437 = vmatpush.bf16.msra.mxu0 %v1719
        %3438 = vmatmul.bf16.gmra.mxu0 %v2278
        %v3439 = vpop.f32.mrf.mxu0
        %v3440 = vadd.f32 %v3391, %v3439
        %v3441 = vpop.f32.mrf.mxu0
        %v3442 = vadd.f32 %v3393, %v3441
        %3443 = vmatmul.bf16.gmra.mxu0 %v2286
        %v3444 = vpop.f32.mrf.mxu0
        %v3445 = vadd.f32 %v3396, %v3444
        %v3446 = vpop.f32.mrf.mxu0
        %v3447 = vadd.f32 %v3398, %v3446
        %3448 = vmatmul.bf16.gmra.mxu0 %v2294
        %v3449 = vpop.f32.mrf.mxu0
        %v3450 = vadd.f32 %v3401, %v3449
        %v3451 = vpop.f32.mrf.mxu0
        %v3452 = vadd.f32 %v3403, %v3451
        %3453 = vmatmul.bf16.gmra.mxu0 %v2302
        %v3454 = vpop.f32.mrf.mxu0
        %v3455 = vadd.f32 %v3406, %v3454
        %v3456 = vpop.f32.mrf.mxu0
        %v3457 = vadd.f32 %v3408, %v3456
        %3458 = vmatmul.bf16.gmra.mxu0 %v2310
        %v3459 = vpop.f32.mrf.mxu0
        %v3460 = vadd.f32 %v3411, %v3459
        %v3461 = vpop.f32.mrf.mxu0
        %v3462 = vadd.f32 %v3413, %v3461
        %3463 = vmatmul.bf16.gmra.mxu0 %v2318
        %v3464 = vpop.f32.mrf.mxu0
        %v3465 = vadd.f32 %v3416, %v3464
        %v3466 = vpop.f32.mrf.mxu0
        %v3467 = vadd.f32 %v3418, %v3466
        %3468 = vmatmul.bf16.gmra.mxu0 %v2326
        %v3469 = vpop.f32.mrf.mxu0
        %v3470 = vadd.f32 %v3421, %v3469
        %v3471 = vpop.f32.mrf.mxu0
        %v3472 = vadd.f32 %v3423, %v3471
        %3473 = vmatmul.bf16.gmra.mxu0 %v2334
        %v3474 = vpop.f32.mrf.mxu0
        %v3475 = vadd.f32 %v3426, %v3474
        %v3476 = vpop.f32.mrf.mxu0
        %v3477 = vadd.f32 %v3428, %v3476
        %3478 = vdwg.mxu0
        %3479 = vmatpush.bf16.msra.mxu0 %v1839
        %3480 = vmatpush.bf16.msra.mxu0 %v1831
        %3481 = vmatpush.bf16.msra.mxu0 %v1823
        %3482 = vmatpush.bf16.msra.mxu0 %v1815
        %3483 = vmatpush.bf16.msra.mxu0 %v1807
        %3484 = vmatpush.bf16.msra.mxu0 %v1799
        %3485 = vmatpush.bf16.msra.mxu0 %v1791
        %3486 = vmatpush.bf16.msra.mxu0 %v1783
        %3487 = vmatmul.bf16.gmra.mxu0 %v2279
        %v3488 = vpop.f32.mrf.mxu0
        %v3489 = vadd.f32 %v3440, %v3488
        %v3490 = vpop.f32.mrf.mxu0
        %v3491 = vadd.f32 %v3442, %v3490
        %3492 = vmatmul.bf16.gmra.mxu0 %v2287
        %v3493 = vpop.f32.mrf.mxu0
        %v3494 = vadd.f32 %v3445, %v3493
        %v3495 = vpop.f32.mrf.mxu0
        %v3496 = vadd.f32 %v3447, %v3495
        %3497 = vmatmul.bf16.gmra.mxu0 %v2295
        %v3498 = vpop.f32.mrf.mxu0
        %v3499 = vadd.f32 %v3450, %v3498
        %v3500 = vpop.f32.mrf.mxu0
        %v3501 = vadd.f32 %v3452, %v3500
        %3502 = vmatmul.bf16.gmra.mxu0 %v2303
        %v3503 = vpop.f32.mrf.mxu0
        %v3504 = vadd.f32 %v3455, %v3503
        %v3505 = vpop.f32.mrf.mxu0
        %v3506 = vadd.f32 %v3457, %v3505
        %3507 = vmatmul.bf16.gmra.mxu0 %v2311
        %v3508 = vpop.f32.mrf.mxu0
        %v3509 = vadd.f32 %v3460, %v3508
        %v3510 = vpop.f32.mrf.mxu0
        %v3511 = vadd.f32 %v3462, %v3510
        %3512 = vmatmul.bf16.gmra.mxu0 %v2319
        %v3513 = vpop.f32.mrf.mxu0
        %v3514 = vadd.f32 %v3465, %v3513
        %v3515 = vpop.f32.mrf.mxu0
        %v3516 = vadd.f32 %v3467, %v3515
        %3517 = vmatmul.bf16.gmra.mxu0 %v2327
        %v3518 = vpop.f32.mrf.mxu0
        %v3519 = vadd.f32 %v3470, %v3518
        %v3520 = vpop.f32.mrf.mxu0
        %v3521 = vadd.f32 %v3472, %v3520
        %3522 = vmatmul.bf16.gmra.mxu0 %v2335
        %v3523 = vpop.f32.mrf.mxu0
        %v3524 = vadd.f32 %v3475, %v3523
        %v3525 = vpop.f32.mrf.mxu0
        %v3526 = vadd.f32 %v3477, %v3525
        %3527 = vdwg.mxu0
        %3528 = vmatpush.bf16.msra.mxu0 %v1903
        %3529 = vmatpush.bf16.msra.mxu0 %v1895
        %3530 = vmatpush.bf16.msra.mxu0 %v1887
        %3531 = vmatpush.bf16.msra.mxu0 %v1879
        %3532 = vmatpush.bf16.msra.mxu0 %v1871
        %3533 = vmatpush.bf16.msra.mxu0 %v1863
        %3534 = vmatpush.bf16.msra.mxu0 %v1855
        %3535 = vmatpush.bf16.msra.mxu0 %v1847
        %3536 = vmatmul.bf16.gmra.mxu0 %v2280
        %v3537 = vpop.f32.mrf.mxu0
        %v3538 = vadd.f32 %v3489, %v3537
        %v3539 = vpop.f32.mrf.mxu0
        %v3540 = vadd.f32 %v3491, %v3539
        %3541 = vmatmul.bf16.gmra.mxu0 %v2288
        %v3542 = vpop.f32.mrf.mxu0
        %v3543 = vadd.f32 %v3494, %v3542
        %v3544 = vpop.f32.mrf.mxu0
        %v3545 = vadd.f32 %v3496, %v3544
        %3546 = vmatmul.bf16.gmra.mxu0 %v2296
        %v3547 = vpop.f32.mrf.mxu0
        %v3548 = vadd.f32 %v3499, %v3547
        %v3549 = vpop.f32.mrf.mxu0
        %v3550 = vadd.f32 %v3501, %v3549
        %3551 = vmatmul.bf16.gmra.mxu0 %v2304
        %v3552 = vpop.f32.mrf.mxu0
        %v3553 = vadd.f32 %v3504, %v3552
        %v3554 = vpop.f32.mrf.mxu0
        %v3555 = vadd.f32 %v3506, %v3554
        %3556 = vmatmul.bf16.gmra.mxu0 %v2312
        %v3557 = vpop.f32.mrf.mxu0
        %v3558 = vadd.f32 %v3509, %v3557
        %v3559 = vpop.f32.mrf.mxu0
        %v3560 = vadd.f32 %v3511, %v3559
        %3561 = vmatmul.bf16.gmra.mxu0 %v2320
        %v3562 = vpop.f32.mrf.mxu0
        %v3563 = vadd.f32 %v3514, %v3562
        %v3564 = vpop.f32.mrf.mxu0
        %v3565 = vadd.f32 %v3516, %v3564
        %3566 = vmatmul.bf16.gmra.mxu0 %v2328
        %v3567 = vpop.f32.mrf.mxu0
        %v3568 = vadd.f32 %v3519, %v3567
        %v3569 = vpop.f32.mrf.mxu0
        %v3570 = vadd.f32 %v3521, %v3569
        %3571 = vmatmul.bf16.gmra.mxu0 %v2336
        %v3572 = vpop.f32.mrf.mxu0
        %v3573 = vadd.f32 %v3524, %v3572
        %v3574 = vpop.f32.mrf.mxu0
        %v3575 = vadd.f32 %v3526, %v3574
        %3576 = vdwg.mxu0
        %3577 = vmatpush.bf16.msra.mxu0 %v1456
        %3578 = vmatpush.bf16.msra.mxu0 %v1448
        %3579 = vmatpush.bf16.msra.mxu0 %v1440
        %3580 = vmatpush.bf16.msra.mxu0 %v1432
        %3581 = vmatpush.bf16.msra.mxu0 %v1424
        %3582 = vmatpush.bf16.msra.mxu0 %v1416
        %3583 = vmatpush.bf16.msra.mxu0 %v1408
        %3584 = vmatpush.bf16.msra.mxu0 %v1400
        %3585 = vmatmul.bf16.gmra.mxu0 %v2273
        %v3586 = vpop.f32.mrf.mxu0
        %v3587 = vadd.f32 %v2004, %v3586
        %v3588 = vpop.f32.mrf.mxu0
        %v3589 = vadd.f32 %v2009, %v3588
        %3590 = vmatmul.bf16.gmra.mxu0 %v2281
        %v3591 = vpop.f32.mrf.mxu0
        %v3592 = vadd.f32 %v2014, %v3591
        %v3593 = vpop.f32.mrf.mxu0
        %v3594 = vadd.f32 %v2019, %v3593
        %3595 = vmatmul.bf16.gmra.mxu0 %v2289
        %v3596 = vpop.f32.mrf.mxu0
        %v3597 = vadd.f32 %v2024, %v3596
        %v3598 = vpop.f32.mrf.mxu0
        %v3599 = vadd.f32 %v2029, %v3598
        %3600 = vmatmul.bf16.gmra.mxu0 %v2297
        %v3601 = vpop.f32.mrf.mxu0
        %v3602 = vadd.f32 %v2034, %v3601
        %v3603 = vpop.f32.mrf.mxu0
        %v3604 = vadd.f32 %v2039, %v3603
        %3605 = vmatmul.bf16.gmra.mxu0 %v2305
        %v3606 = vpop.f32.mrf.mxu0
        %v3607 = vadd.f32 %v2044, %v3606
        %v3608 = vpop.f32.mrf.mxu0
        %v3609 = vadd.f32 %v2049, %v3608
        %3610 = vmatmul.bf16.gmra.mxu0 %v2313
        %v3611 = vpop.f32.mrf.mxu0
        %v3612 = vadd.f32 %v2054, %v3611
        %v3613 = vpop.f32.mrf.mxu0
        %v3614 = vadd.f32 %v2059, %v3613
        %3615 = vmatmul.bf16.gmra.mxu0 %v2321
        %v3616 = vpop.f32.mrf.mxu0
        %v3617 = vadd.f32 %v2064, %v3616
        %v3618 = vpop.f32.mrf.mxu0
        %v3619 = vadd.f32 %v2069, %v3618
        %3620 = vmatmul.bf16.gmra.mxu0 %v2329
        %v3621 = vpop.f32.mrf.mxu0
        %v3622 = vadd.f32 %v2074, %v3621
        %v3623 = vpop.f32.mrf.mxu0
        %v3624 = vadd.f32 %v2079, %v3623
        %3625 = vdwg.mxu0
        %3626 = vmatpush.bf16.msra.mxu0 %v1520
        %3627 = vmatpush.bf16.msra.mxu0 %v1512
        %3628 = vmatpush.bf16.msra.mxu0 %v1504
        %3629 = vmatpush.bf16.msra.mxu0 %v1496
        %3630 = vmatpush.bf16.msra.mxu0 %v1488
        %3631 = vmatpush.bf16.msra.mxu0 %v1480
        %3632 = vmatpush.bf16.msra.mxu0 %v1472
        %3633 = vmatpush.bf16.msra.mxu0 %v1464
        %3634 = vmatmul.bf16.gmra.mxu0 %v2274
        %v3635 = vpop.f32.mrf.mxu0
        %v3636 = vadd.f32 %v3587, %v3635
        %v3637 = vpop.f32.mrf.mxu0
        %v3638 = vadd.f32 %v3589, %v3637
        %3639 = vmatmul.bf16.gmra.mxu0 %v2282
        %v3640 = vpop.f32.mrf.mxu0
        %v3641 = vadd.f32 %v3592, %v3640
        %v3642 = vpop.f32.mrf.mxu0
        %v3643 = vadd.f32 %v3594, %v3642
        %3644 = vmatmul.bf16.gmra.mxu0 %v2290
        %v3645 = vpop.f32.mrf.mxu0
        %v3646 = vadd.f32 %v3597, %v3645
        %v3647 = vpop.f32.mrf.mxu0
        %v3648 = vadd.f32 %v3599, %v3647
        %3649 = vmatmul.bf16.gmra.mxu0 %v2298
        %v3650 = vpop.f32.mrf.mxu0
        %v3651 = vadd.f32 %v3602, %v3650
        %v3652 = vpop.f32.mrf.mxu0
        %v3653 = vadd.f32 %v3604, %v3652
        %3654 = vmatmul.bf16.gmra.mxu0 %v2306
        %v3655 = vpop.f32.mrf.mxu0
        %v3656 = vadd.f32 %v3607, %v3655
        %v3657 = vpop.f32.mrf.mxu0
        %v3658 = vadd.f32 %v3609, %v3657
        %3659 = vmatmul.bf16.gmra.mxu0 %v2314
        %v3660 = vpop.f32.mrf.mxu0
        %v3661 = vadd.f32 %v3612, %v3660
        %v3662 = vpop.f32.mrf.mxu0
        %v3663 = vadd.f32 %v3614, %v3662
        %3664 = vmatmul.bf16.gmra.mxu0 %v2322
        %v3665 = vpop.f32.mrf.mxu0
        %v3666 = vadd.f32 %v3617, %v3665
        %v3667 = vpop.f32.mrf.mxu0
        %v3668 = vadd.f32 %v3619, %v3667
        %3669 = vmatmul.bf16.gmra.mxu0 %v2330
        %v3670 = vpop.f32.mrf.mxu0
        %v3671 = vadd.f32 %v3622, %v3670
        %v3672 = vpop.f32.mrf.mxu0
        %v3673 = vadd.f32 %v3624, %v3672
        %3674 = vdwg.mxu0
        %3675 = vmatpush.bf16.msra.mxu0 %v1584
        %3676 = vmatpush.bf16.msra.mxu0 %v1576
        %3677 = vmatpush.bf16.msra.mxu0 %v1568
        %3678 = vmatpush.bf16.msra.mxu0 %v1560
        %3679 = vmatpush.bf16.msra.mxu0 %v1552
        %3680 = vmatpush.bf16.msra.mxu0 %v1544
        %3681 = vmatpush.bf16.msra.mxu0 %v1536
        %3682 = vmatpush.bf16.msra.mxu0 %v1528
        %3683 = vmatmul.bf16.gmra.mxu0 %v2275
        %v3684 = vpop.f32.mrf.mxu0
        %v3685 = vadd.f32 %v3636, %v3684
        %v3686 = vpop.f32.mrf.mxu0
        %v3687 = vadd.f32 %v3638, %v3686
        %3688 = vmatmul.bf16.gmra.mxu0 %v2283
        %v3689 = vpop.f32.mrf.mxu0
        %v3690 = vadd.f32 %v3641, %v3689
        %v3691 = vpop.f32.mrf.mxu0
        %v3692 = vadd.f32 %v3643, %v3691
        %3693 = vmatmul.bf16.gmra.mxu0 %v2291
        %v3694 = vpop.f32.mrf.mxu0
        %v3695 = vadd.f32 %v3646, %v3694
        %v3696 = vpop.f32.mrf.mxu0
        %v3697 = vadd.f32 %v3648, %v3696
        %3698 = vmatmul.bf16.gmra.mxu0 %v2299
        %v3699 = vpop.f32.mrf.mxu0
        %v3700 = vadd.f32 %v3651, %v3699
        %v3701 = vpop.f32.mrf.mxu0
        %v3702 = vadd.f32 %v3653, %v3701
        %3703 = vmatmul.bf16.gmra.mxu0 %v2307
        %v3704 = vpop.f32.mrf.mxu0
        %v3705 = vadd.f32 %v3656, %v3704
        %v3706 = vpop.f32.mrf.mxu0
        %v3707 = vadd.f32 %v3658, %v3706
        %3708 = vmatmul.bf16.gmra.mxu0 %v2315
        %v3709 = vpop.f32.mrf.mxu0
        %v3710 = vadd.f32 %v3661, %v3709
        %v3711 = vpop.f32.mrf.mxu0
        %v3712 = vadd.f32 %v3663, %v3711
        %3713 = vmatmul.bf16.gmra.mxu0 %v2323
        %v3714 = vpop.f32.mrf.mxu0
        %v3715 = vadd.f32 %v3666, %v3714
        %v3716 = vpop.f32.mrf.mxu0
        %v3717 = vadd.f32 %v3668, %v3716
        %3718 = vmatmul.bf16.gmra.mxu0 %v2331
        %v3719 = vpop.f32.mrf.mxu0
        %v3720 = vadd.f32 %v3671, %v3719
        %v3721 = vpop.f32.mrf.mxu0
        %v3722 = vadd.f32 %v3673, %v3721
        %3723 = vdwg.mxu0
        %3724 = vmatpush.bf16.msra.mxu0 %v1648
        %3725 = vmatpush.bf16.msra.mxu0 %v1640
        %3726 = vmatpush.bf16.msra.mxu0 %v1632
        %3727 = vmatpush.bf16.msra.mxu0 %v1624
        %3728 = vmatpush.bf16.msra.mxu0 %v1616
        %3729 = vmatpush.bf16.msra.mxu0 %v1608
        %3730 = vmatpush.bf16.msra.mxu0 %v1600
        %3731 = vmatpush.bf16.msra.mxu0 %v1592
        %3732 = vmatmul.bf16.gmra.mxu0 %v2276
        %v3733 = vpop.f32.mrf.mxu0
        %v3734 = vadd.f32 %v3685, %v3733
        %v3735 = vpop.f32.mrf.mxu0
        %v3736 = vadd.f32 %v3687, %v3735
        %3737 = vmatmul.bf16.gmra.mxu0 %v2284
        %v3738 = vpop.f32.mrf.mxu0
        %v3739 = vadd.f32 %v3690, %v3738
        %v3740 = vpop.f32.mrf.mxu0
        %v3741 = vadd.f32 %v3692, %v3740
        %3742 = vmatmul.bf16.gmra.mxu0 %v2292
        %v3743 = vpop.f32.mrf.mxu0
        %v3744 = vadd.f32 %v3695, %v3743
        %v3745 = vpop.f32.mrf.mxu0
        %v3746 = vadd.f32 %v3697, %v3745
        %3747 = vmatmul.bf16.gmra.mxu0 %v2300
        %v3748 = vpop.f32.mrf.mxu0
        %v3749 = vadd.f32 %v3700, %v3748
        %v3750 = vpop.f32.mrf.mxu0
        %v3751 = vadd.f32 %v3702, %v3750
        %3752 = vmatmul.bf16.gmra.mxu0 %v2308
        %v3753 = vpop.f32.mrf.mxu0
        %v3754 = vadd.f32 %v3705, %v3753
        %v3755 = vpop.f32.mrf.mxu0
        %v3756 = vadd.f32 %v3707, %v3755
        %3757 = vmatmul.bf16.gmra.mxu0 %v2316
        %v3758 = vpop.f32.mrf.mxu0
        %v3759 = vadd.f32 %v3710, %v3758
        %v3760 = vpop.f32.mrf.mxu0
        %v3761 = vadd.f32 %v3712, %v3760
        %3762 = vmatmul.bf16.gmra.mxu0 %v2324
        %v3763 = vpop.f32.mrf.mxu0
        %v3764 = vadd.f32 %v3715, %v3763
        %v3765 = vpop.f32.mrf.mxu0
        %v3766 = vadd.f32 %v3717, %v3765
        %3767 = vmatmul.bf16.gmra.mxu0 %v2332
        %v3768 = vpop.f32.mrf.mxu0
        %v3769 = vadd.f32 %v3720, %v3768
        %v3770 = vpop.f32.mrf.mxu0
        %v3771 = vadd.f32 %v3722, %v3770
        %3772 = vdwg.mxu0
        %3773 = vmatpush.bf16.msra.mxu0 %v1712
        %3774 = vmatpush.bf16.msra.mxu0 %v1704
        %3775 = vmatpush.bf16.msra.mxu0 %v1696
        %3776 = vmatpush.bf16.msra.mxu0 %v1688
        %3777 = vmatpush.bf16.msra.mxu0 %v1680
        %3778 = vmatpush.bf16.msra.mxu0 %v1672
        %3779 = vmatpush.bf16.msra.mxu0 %v1664
        %3780 = vmatpush.bf16.msra.mxu0 %v1656
        %3781 = vmatmul.bf16.gmra.mxu0 %v2277
        %v3782 = vpop.f32.mrf.mxu0
        %v3783 = vadd.f32 %v3734, %v3782
        %v3784 = vpop.f32.mrf.mxu0
        %v3785 = vadd.f32 %v3736, %v3784
        %3786 = vmatmul.bf16.gmra.mxu0 %v2285
        %v3787 = vpop.f32.mrf.mxu0
        %v3788 = vadd.f32 %v3739, %v3787
        %v3789 = vpop.f32.mrf.mxu0
        %v3790 = vadd.f32 %v3741, %v3789
        %3791 = vmatmul.bf16.gmra.mxu0 %v2293
        %v3792 = vpop.f32.mrf.mxu0
        %v3793 = vadd.f32 %v3744, %v3792
        %v3794 = vpop.f32.mrf.mxu0
        %v3795 = vadd.f32 %v3746, %v3794
        %3796 = vmatmul.bf16.gmra.mxu0 %v2301
        %v3797 = vpop.f32.mrf.mxu0
        %v3798 = vadd.f32 %v3749, %v3797
        %v3799 = vpop.f32.mrf.mxu0
        %v3800 = vadd.f32 %v3751, %v3799
        %3801 = vmatmul.bf16.gmra.mxu0 %v2309
        %v3802 = vpop.f32.mrf.mxu0
        %v3803 = vadd.f32 %v3754, %v3802
        %v3804 = vpop.f32.mrf.mxu0
        %v3805 = vadd.f32 %v3756, %v3804
        %3806 = vmatmul.bf16.gmra.mxu0 %v2317
        %v3807 = vpop.f32.mrf.mxu0
        %v3808 = vadd.f32 %v3759, %v3807
        %v3809 = vpop.f32.mrf.mxu0
        %v3810 = vadd.f32 %v3761, %v3809
        %3811 = vmatmul.bf16.gmra.mxu0 %v2325
        %v3812 = vpop.f32.mrf.mxu0
        %v3813 = vadd.f32 %v3764, %v3812
        %v3814 = vpop.f32.mrf.mxu0
        %v3815 = vadd.f32 %v3766, %v3814
        %3816 = vmatmul.bf16.gmra.mxu0 %v2333
        %v3817 = vpop.f32.mrf.mxu0
        %v3818 = vadd.f32 %v3769, %v3817
        %v3819 = vpop.f32.mrf.mxu0
        %v3820 = vadd.f32 %v3771, %v3819
        %3821 = vdwg.mxu0
        %3822 = vmatpush.bf16.msra.mxu0 %v1776
        %3823 = vmatpush.bf16.msra.mxu0 %v1768
        %3824 = vmatpush.bf16.msra.mxu0 %v1760
        %3825 = vmatpush.bf16.msra.mxu0 %v1752
        %3826 = vmatpush.bf16.msra.mxu0 %v1744
        %3827 = vmatpush.bf16.msra.mxu0 %v1736
        %3828 = vmatpush.bf16.msra.mxu0 %v1728
        %3829 = vmatpush.bf16.msra.mxu0 %v1720
        %3830 = vmatmul.bf16.gmra.mxu0 %v2278
        %v3831 = vpop.f32.mrf.mxu0
        %v3832 = vadd.f32 %v3783, %v3831
        %v3833 = vpop.f32.mrf.mxu0
        %v3834 = vadd.f32 %v3785, %v3833
        %3835 = vmatmul.bf16.gmra.mxu0 %v2286
        %v3836 = vpop.f32.mrf.mxu0
        %v3837 = vadd.f32 %v3788, %v3836
        %v3838 = vpop.f32.mrf.mxu0
        %v3839 = vadd.f32 %v3790, %v3838
        %3840 = vmatmul.bf16.gmra.mxu0 %v2294
        %v3841 = vpop.f32.mrf.mxu0
        %v3842 = vadd.f32 %v3793, %v3841
        %v3843 = vpop.f32.mrf.mxu0
        %v3844 = vadd.f32 %v3795, %v3843
        %3845 = vmatmul.bf16.gmra.mxu0 %v2302
        %v3846 = vpop.f32.mrf.mxu0
        %v3847 = vadd.f32 %v3798, %v3846
        %v3848 = vpop.f32.mrf.mxu0
        %v3849 = vadd.f32 %v3800, %v3848
        %3850 = vmatmul.bf16.gmra.mxu0 %v2310
        %v3851 = vpop.f32.mrf.mxu0
        %v3852 = vadd.f32 %v3803, %v3851
        %v3853 = vpop.f32.mrf.mxu0
        %v3854 = vadd.f32 %v3805, %v3853
        %3855 = vmatmul.bf16.gmra.mxu0 %v2318
        %v3856 = vpop.f32.mrf.mxu0
        %v3857 = vadd.f32 %v3808, %v3856
        %v3858 = vpop.f32.mrf.mxu0
        %v3859 = vadd.f32 %v3810, %v3858
        %3860 = vmatmul.bf16.gmra.mxu0 %v2326
        %v3861 = vpop.f32.mrf.mxu0
        %v3862 = vadd.f32 %v3813, %v3861
        %v3863 = vpop.f32.mrf.mxu0
        %v3864 = vadd.f32 %v3815, %v3863
        %3865 = vmatmul.bf16.gmra.mxu0 %v2334
        %v3866 = vpop.f32.mrf.mxu0
        %v3867 = vadd.f32 %v3818, %v3866
        %v3868 = vpop.f32.mrf.mxu0
        %v3869 = vadd.f32 %v3820, %v3868
        %3870 = vdwg.mxu0
        %3871 = vmatpush.bf16.msra.mxu0 %v1840
        %3872 = vmatpush.bf16.msra.mxu0 %v1832
        %3873 = vmatpush.bf16.msra.mxu0 %v1824
        %3874 = vmatpush.bf16.msra.mxu0 %v1816
        %3875 = vmatpush.bf16.msra.mxu0 %v1808
        %3876 = vmatpush.bf16.msra.mxu0 %v1800
        %3877 = vmatpush.bf16.msra.mxu0 %v1792
        %3878 = vmatpush.bf16.msra.mxu0 %v1784
        %3879 = vmatmul.bf16.gmra.mxu0 %v2279
        %v3880 = vpop.f32.mrf.mxu0
        %v3881 = vadd.f32 %v3832, %v3880
        %v3882 = vpop.f32.mrf.mxu0
        %v3883 = vadd.f32 %v3834, %v3882
        %3884 = vmatmul.bf16.gmra.mxu0 %v2287
        %v3885 = vpop.f32.mrf.mxu0
        %v3886 = vadd.f32 %v3837, %v3885
        %v3887 = vpop.f32.mrf.mxu0
        %v3888 = vadd.f32 %v3839, %v3887
        %3889 = vmatmul.bf16.gmra.mxu0 %v2295
        %v3890 = vpop.f32.mrf.mxu0
        %v3891 = vadd.f32 %v3842, %v3890
        %v3892 = vpop.f32.mrf.mxu0
        %v3893 = vadd.f32 %v3844, %v3892
        %3894 = vmatmul.bf16.gmra.mxu0 %v2303
        %v3895 = vpop.f32.mrf.mxu0
        %v3896 = vadd.f32 %v3847, %v3895
        %v3897 = vpop.f32.mrf.mxu0
        %v3898 = vadd.f32 %v3849, %v3897
        %3899 = vmatmul.bf16.gmra.mxu0 %v2311
        %v3900 = vpop.f32.mrf.mxu0
        %v3901 = vadd.f32 %v3852, %v3900
        %v3902 = vpop.f32.mrf.mxu0
        %v3903 = vadd.f32 %v3854, %v3902
        %3904 = vmatmul.bf16.gmra.mxu0 %v2319
        %v3905 = vpop.f32.mrf.mxu0
        %v3906 = vadd.f32 %v3857, %v3905
        %v3907 = vpop.f32.mrf.mxu0
        %v3908 = vadd.f32 %v3859, %v3907
        %3909 = vmatmul.bf16.gmra.mxu0 %v2327
        %v3910 = vpop.f32.mrf.mxu0
        %v3911 = vadd.f32 %v3862, %v3910
        %v3912 = vpop.f32.mrf.mxu0
        %v3913 = vadd.f32 %v3864, %v3912
        %3914 = vmatmul.bf16.gmra.mxu0 %v2335
        %v3915 = vpop.f32.mrf.mxu0
        %v3916 = vadd.f32 %v3867, %v3915
        %v3917 = vpop.f32.mrf.mxu0
        %v3918 = vadd.f32 %v3869, %v3917
        %3919 = vdwg.mxu0
        %3920 = vmatpush.bf16.msra.mxu0 %v1904
        %3921 = vmatpush.bf16.msra.mxu0 %v1896
        %3922 = vmatpush.bf16.msra.mxu0 %v1888
        %3923 = vmatpush.bf16.msra.mxu0 %v1880
        %3924 = vmatpush.bf16.msra.mxu0 %v1872
        %3925 = vmatpush.bf16.msra.mxu0 %v1864
        %3926 = vmatpush.bf16.msra.mxu0 %v1856
        %3927 = vmatpush.bf16.msra.mxu0 %v1848
        %3928 = vmatmul.bf16.gmra.mxu0 %v2280
        %v3929 = vpop.f32.mrf.mxu0
        %v3930 = vadd.f32 %v3881, %v3929
        %v3931 = vpop.f32.mrf.mxu0
        %v3932 = vadd.f32 %v3883, %v3931
        %3933 = vmatmul.bf16.gmra.mxu0 %v2288
        %v3934 = vpop.f32.mrf.mxu0
        %v3935 = vadd.f32 %v3886, %v3934
        %v3936 = vpop.f32.mrf.mxu0
        %v3937 = vadd.f32 %v3888, %v3936
        %3938 = vmatmul.bf16.gmra.mxu0 %v2296
        %v3939 = vpop.f32.mrf.mxu0
        %v3940 = vadd.f32 %v3891, %v3939
        %v3941 = vpop.f32.mrf.mxu0
        %v3942 = vadd.f32 %v3893, %v3941
        %3943 = vmatmul.bf16.gmra.mxu0 %v2304
        %v3944 = vpop.f32.mrf.mxu0
        %v3945 = vadd.f32 %v3896, %v3944
        %v3946 = vpop.f32.mrf.mxu0
        %v3947 = vadd.f32 %v3898, %v3946
        %3948 = vmatmul.bf16.gmra.mxu0 %v2312
        %v3949 = vpop.f32.mrf.mxu0
        %v3950 = vadd.f32 %v3901, %v3949
        %v3951 = vpop.f32.mrf.mxu0
        %v3952 = vadd.f32 %v3903, %v3951
        %3953 = vmatmul.bf16.gmra.mxu0 %v2320
        %v3954 = vpop.f32.mrf.mxu0
        %v3955 = vadd.f32 %v3906, %v3954
        %v3956 = vpop.f32.mrf.mxu0
        %v3957 = vadd.f32 %v3908, %v3956
        %3958 = vmatmul.bf16.gmra.mxu0 %v2328
        %v3959 = vpop.f32.mrf.mxu0
        %v3960 = vadd.f32 %v3911, %v3959
        %v3961 = vpop.f32.mrf.mxu0
        %v3962 = vadd.f32 %v3913, %v3961
        %3963 = vmatmul.bf16.gmra.mxu0 %v2336
        %v3964 = vpop.f32.mrf.mxu0
        %v3965 = vadd.f32 %v3916, %v3964
        %v3966 = vpop.f32.mrf.mxu0
        %v3967 = vadd.f32 %v3918, %v3966
        %3968 = vdwg.mxu0
        %3969 = vmatpush.bf16.msra.mxu0 %v1457
        %3970 = vmatpush.bf16.msra.mxu0 %v1449
        %3971 = vmatpush.bf16.msra.mxu0 %v1441
        %3972 = vmatpush.bf16.msra.mxu0 %v1433
        %3973 = vmatpush.bf16.msra.mxu0 %v1425
        %3974 = vmatpush.bf16.msra.mxu0 %v1417
        %3975 = vmatpush.bf16.msra.mxu0 %v1409
        %3976 = vmatpush.bf16.msra.mxu0 %v1401
        %3977 = vmatmul.bf16.gmra.mxu0 %v2273
        %v3978 = vpop.f32.mrf.mxu0
        %v3979 = vadd.f32 %v2004, %v3978
        %v3980 = vpop.f32.mrf.mxu0
        %v3981 = vadd.f32 %v2009, %v3980
        %3982 = vmatmul.bf16.gmra.mxu0 %v2281
        %v3983 = vpop.f32.mrf.mxu0
        %v3984 = vadd.f32 %v2014, %v3983
        %v3985 = vpop.f32.mrf.mxu0
        %v3986 = vadd.f32 %v2019, %v3985
        %3987 = vmatmul.bf16.gmra.mxu0 %v2289
        %v3988 = vpop.f32.mrf.mxu0
        %v3989 = vadd.f32 %v2024, %v3988
        %v3990 = vpop.f32.mrf.mxu0
        %v3991 = vadd.f32 %v2029, %v3990
        %3992 = vmatmul.bf16.gmra.mxu0 %v2297
        %v3993 = vpop.f32.mrf.mxu0
        %v3994 = vadd.f32 %v2034, %v3993
        %v3995 = vpop.f32.mrf.mxu0
        %v3996 = vadd.f32 %v2039, %v3995
        %3997 = vmatmul.bf16.gmra.mxu0 %v2305
        %v3998 = vpop.f32.mrf.mxu0
        %v3999 = vadd.f32 %v2044, %v3998
        %v4000 = vpop.f32.mrf.mxu0
        %v4001 = vadd.f32 %v2049, %v4000
        %4002 = vmatmul.bf16.gmra.mxu0 %v2313
        %v4003 = vpop.f32.mrf.mxu0
        %v4004 = vadd.f32 %v2054, %v4003
        %v4005 = vpop.f32.mrf.mxu0
        %v4006 = vadd.f32 %v2059, %v4005
        %4007 = vmatmul.bf16.gmra.mxu0 %v2321
        %v4008 = vpop.f32.mrf.mxu0
        %v4009 = vadd.f32 %v2064, %v4008
        %v4010 = vpop.f32.mrf.mxu0
        %v4011 = vadd.f32 %v2069, %v4010
        %4012 = vmatmul.bf16.gmra.mxu0 %v2329
        %v4013 = vpop.f32.mrf.mxu0
        %v4014 = vadd.f32 %v2074, %v4013
        %v4015 = vpop.f32.mrf.mxu0
        %v4016 = vadd.f32 %v2079, %v4015
        %4017 = vdwg.mxu0
        %4018 = vmatpush.bf16.msra.mxu0 %v1521
        %4019 = vmatpush.bf16.msra.mxu0 %v1513
        %4020 = vmatpush.bf16.msra.mxu0 %v1505
        %4021 = vmatpush.bf16.msra.mxu0 %v1497
        %4022 = vmatpush.bf16.msra.mxu0 %v1489
        %4023 = vmatpush.bf16.msra.mxu0 %v1481
        %4024 = vmatpush.bf16.msra.mxu0 %v1473
        %4025 = vmatpush.bf16.msra.mxu0 %v1465
        %4026 = vmatmul.bf16.gmra.mxu0 %v2274
        %v4027 = vpop.f32.mrf.mxu0
        %v4028 = vadd.f32 %v3979, %v4027
        %v4029 = vpop.f32.mrf.mxu0
        %v4030 = vadd.f32 %v3981, %v4029
        %4031 = vmatmul.bf16.gmra.mxu0 %v2282
        %v4032 = vpop.f32.mrf.mxu0
        %v4033 = vadd.f32 %v3984, %v4032
        %v4034 = vpop.f32.mrf.mxu0
        %v4035 = vadd.f32 %v3986, %v4034
        %4036 = vmatmul.bf16.gmra.mxu0 %v2290
        %v4037 = vpop.f32.mrf.mxu0
        %v4038 = vadd.f32 %v3989, %v4037
        %v4039 = vpop.f32.mrf.mxu0
        %v4040 = vadd.f32 %v3991, %v4039
        %4041 = vmatmul.bf16.gmra.mxu0 %v2298
        %v4042 = vpop.f32.mrf.mxu0
        %v4043 = vadd.f32 %v3994, %v4042
        %v4044 = vpop.f32.mrf.mxu0
        %v4045 = vadd.f32 %v3996, %v4044
        %4046 = vmatmul.bf16.gmra.mxu0 %v2306
        %v4047 = vpop.f32.mrf.mxu0
        %v4048 = vadd.f32 %v3999, %v4047
        %v4049 = vpop.f32.mrf.mxu0
        %v4050 = vadd.f32 %v4001, %v4049
        %4051 = vmatmul.bf16.gmra.mxu0 %v2314
        %v4052 = vpop.f32.mrf.mxu0
        %v4053 = vadd.f32 %v4004, %v4052
        %v4054 = vpop.f32.mrf.mxu0
        %v4055 = vadd.f32 %v4006, %v4054
        %4056 = vmatmul.bf16.gmra.mxu0 %v2322
        %v4057 = vpop.f32.mrf.mxu0
        %v4058 = vadd.f32 %v4009, %v4057
        %v4059 = vpop.f32.mrf.mxu0
        %v4060 = vadd.f32 %v4011, %v4059
        %4061 = vmatmul.bf16.gmra.mxu0 %v2330
        %v4062 = vpop.f32.mrf.mxu0
        %v4063 = vadd.f32 %v4014, %v4062
        %v4064 = vpop.f32.mrf.mxu0
        %v4065 = vadd.f32 %v4016, %v4064
        %4066 = vdwg.mxu0
        %4067 = vmatpush.bf16.msra.mxu0 %v1585
        %4068 = vmatpush.bf16.msra.mxu0 %v1577
        %4069 = vmatpush.bf16.msra.mxu0 %v1569
        %4070 = vmatpush.bf16.msra.mxu0 %v1561
        %4071 = vmatpush.bf16.msra.mxu0 %v1553
        %4072 = vmatpush.bf16.msra.mxu0 %v1545
        %4073 = vmatpush.bf16.msra.mxu0 %v1537
        %4074 = vmatpush.bf16.msra.mxu0 %v1529
        %4075 = vmatmul.bf16.gmra.mxu0 %v2275
        %v4076 = vpop.f32.mrf.mxu0
        %v4077 = vadd.f32 %v4028, %v4076
        %v4078 = vpop.f32.mrf.mxu0
        %v4079 = vadd.f32 %v4030, %v4078
        %4080 = vmatmul.bf16.gmra.mxu0 %v2283
        %v4081 = vpop.f32.mrf.mxu0
        %v4082 = vadd.f32 %v4033, %v4081
        %v4083 = vpop.f32.mrf.mxu0
        %v4084 = vadd.f32 %v4035, %v4083
        %4085 = vmatmul.bf16.gmra.mxu0 %v2291
        %v4086 = vpop.f32.mrf.mxu0
        %v4087 = vadd.f32 %v4038, %v4086
        %v4088 = vpop.f32.mrf.mxu0
        %v4089 = vadd.f32 %v4040, %v4088
        %4090 = vmatmul.bf16.gmra.mxu0 %v2299
        %v4091 = vpop.f32.mrf.mxu0
        %v4092 = vadd.f32 %v4043, %v4091
        %v4093 = vpop.f32.mrf.mxu0
        %v4094 = vadd.f32 %v4045, %v4093
        %4095 = vmatmul.bf16.gmra.mxu0 %v2307
        %v4096 = vpop.f32.mrf.mxu0
        %v4097 = vadd.f32 %v4048, %v4096
        %v4098 = vpop.f32.mrf.mxu0
        %v4099 = vadd.f32 %v4050, %v4098
        %4100 = vmatmul.bf16.gmra.mxu0 %v2315
        %v4101 = vpop.f32.mrf.mxu0
        %v4102 = vadd.f32 %v4053, %v4101
        %v4103 = vpop.f32.mrf.mxu0
        %v4104 = vadd.f32 %v4055, %v4103
        %4105 = vmatmul.bf16.gmra.mxu0 %v2323
        %v4106 = vpop.f32.mrf.mxu0
        %v4107 = vadd.f32 %v4058, %v4106
        %v4108 = vpop.f32.mrf.mxu0
        %v4109 = vadd.f32 %v4060, %v4108
        %4110 = vmatmul.bf16.gmra.mxu0 %v2331
        %v4111 = vpop.f32.mrf.mxu0
        %v4112 = vadd.f32 %v4063, %v4111
        %v4113 = vpop.f32.mrf.mxu0
        %v4114 = vadd.f32 %v4065, %v4113
        %4115 = vdwg.mxu0
        %4116 = vmatpush.bf16.msra.mxu0 %v1649
        %4117 = vmatpush.bf16.msra.mxu0 %v1641
        %4118 = vmatpush.bf16.msra.mxu0 %v1633
        %4119 = vmatpush.bf16.msra.mxu0 %v1625
        %4120 = vmatpush.bf16.msra.mxu0 %v1617
        %4121 = vmatpush.bf16.msra.mxu0 %v1609
        %4122 = vmatpush.bf16.msra.mxu0 %v1601
        %4123 = vmatpush.bf16.msra.mxu0 %v1593
        %4124 = vmatmul.bf16.gmra.mxu0 %v2276
        %v4125 = vpop.f32.mrf.mxu0
        %v4126 = vadd.f32 %v4077, %v4125
        %v4127 = vpop.f32.mrf.mxu0
        %v4128 = vadd.f32 %v4079, %v4127
        %4129 = vmatmul.bf16.gmra.mxu0 %v2284
        %v4130 = vpop.f32.mrf.mxu0
        %v4131 = vadd.f32 %v4082, %v4130
        %v4132 = vpop.f32.mrf.mxu0
        %v4133 = vadd.f32 %v4084, %v4132
        %4134 = vmatmul.bf16.gmra.mxu0 %v2292
        %v4135 = vpop.f32.mrf.mxu0
        %v4136 = vadd.f32 %v4087, %v4135
        %v4137 = vpop.f32.mrf.mxu0
        %v4138 = vadd.f32 %v4089, %v4137
        %4139 = vmatmul.bf16.gmra.mxu0 %v2300
        %v4140 = vpop.f32.mrf.mxu0
        %v4141 = vadd.f32 %v4092, %v4140
        %v4142 = vpop.f32.mrf.mxu0
        %v4143 = vadd.f32 %v4094, %v4142
        %4144 = vmatmul.bf16.gmra.mxu0 %v2308
        %v4145 = vpop.f32.mrf.mxu0
        %v4146 = vadd.f32 %v4097, %v4145
        %v4147 = vpop.f32.mrf.mxu0
        %v4148 = vadd.f32 %v4099, %v4147
        %4149 = vmatmul.bf16.gmra.mxu0 %v2316
        %v4150 = vpop.f32.mrf.mxu0
        %v4151 = vadd.f32 %v4102, %v4150
        %v4152 = vpop.f32.mrf.mxu0
        %v4153 = vadd.f32 %v4104, %v4152
        %4154 = vmatmul.bf16.gmra.mxu0 %v2324
        %v4155 = vpop.f32.mrf.mxu0
        %v4156 = vadd.f32 %v4107, %v4155
        %v4157 = vpop.f32.mrf.mxu0
        %v4158 = vadd.f32 %v4109, %v4157
        %4159 = vmatmul.bf16.gmra.mxu0 %v2332
        %v4160 = vpop.f32.mrf.mxu0
        %v4161 = vadd.f32 %v4112, %v4160
        %v4162 = vpop.f32.mrf.mxu0
        %v4163 = vadd.f32 %v4114, %v4162
        %4164 = vdwg.mxu0
        %4165 = vmatpush.bf16.msra.mxu0 %v1713
        %4166 = vmatpush.bf16.msra.mxu0 %v1705
        %4167 = vmatpush.bf16.msra.mxu0 %v1697
        %4168 = vmatpush.bf16.msra.mxu0 %v1689
        %4169 = vmatpush.bf16.msra.mxu0 %v1681
        %4170 = vmatpush.bf16.msra.mxu0 %v1673
        %4171 = vmatpush.bf16.msra.mxu0 %v1665
        %4172 = vmatpush.bf16.msra.mxu0 %v1657
        %4173 = vmatmul.bf16.gmra.mxu0 %v2277
        %v4174 = vpop.f32.mrf.mxu0
        %v4175 = vadd.f32 %v4126, %v4174
        %v4176 = vpop.f32.mrf.mxu0
        %v4177 = vadd.f32 %v4128, %v4176
        %4178 = vmatmul.bf16.gmra.mxu0 %v2285
        %v4179 = vpop.f32.mrf.mxu0
        %v4180 = vadd.f32 %v4131, %v4179
        %v4181 = vpop.f32.mrf.mxu0
        %v4182 = vadd.f32 %v4133, %v4181
        %4183 = vmatmul.bf16.gmra.mxu0 %v2293
        %v4184 = vpop.f32.mrf.mxu0
        %v4185 = vadd.f32 %v4136, %v4184
        %v4186 = vpop.f32.mrf.mxu0
        %v4187 = vadd.f32 %v4138, %v4186
        %4188 = vmatmul.bf16.gmra.mxu0 %v2301
        %v4189 = vpop.f32.mrf.mxu0
        %v4190 = vadd.f32 %v4141, %v4189
        %v4191 = vpop.f32.mrf.mxu0
        %v4192 = vadd.f32 %v4143, %v4191
        %4193 = vmatmul.bf16.gmra.mxu0 %v2309
        %v4194 = vpop.f32.mrf.mxu0
        %v4195 = vadd.f32 %v4146, %v4194
        %v4196 = vpop.f32.mrf.mxu0
        %v4197 = vadd.f32 %v4148, %v4196
        %4198 = vmatmul.bf16.gmra.mxu0 %v2317
        %v4199 = vpop.f32.mrf.mxu0
        %v4200 = vadd.f32 %v4151, %v4199
        %v4201 = vpop.f32.mrf.mxu0
        %v4202 = vadd.f32 %v4153, %v4201
        %4203 = vmatmul.bf16.gmra.mxu0 %v2325
        %v4204 = vpop.f32.mrf.mxu0
        %v4205 = vadd.f32 %v4156, %v4204
        %v4206 = vpop.f32.mrf.mxu0
        %v4207 = vadd.f32 %v4158, %v4206
        %4208 = vmatmul.bf16.gmra.mxu0 %v2333
        %v4209 = vpop.f32.mrf.mxu0
        %v4210 = vadd.f32 %v4161, %v4209
        %v4211 = vpop.f32.mrf.mxu0
        %v4212 = vadd.f32 %v4163, %v4211
        %4213 = vdwg.mxu0
        %4214 = vmatpush.bf16.msra.mxu0 %v1777
        %4215 = vmatpush.bf16.msra.mxu0 %v1769
        %4216 = vmatpush.bf16.msra.mxu0 %v1761
        %4217 = vmatpush.bf16.msra.mxu0 %v1753
        %4218 = vmatpush.bf16.msra.mxu0 %v1745
        %4219 = vmatpush.bf16.msra.mxu0 %v1737
        %4220 = vmatpush.bf16.msra.mxu0 %v1729
        %4221 = vmatpush.bf16.msra.mxu0 %v1721
        %4222 = vmatmul.bf16.gmra.mxu0 %v2278
        %v4223 = vpop.f32.mrf.mxu0
        %v4224 = vadd.f32 %v4175, %v4223
        %v4225 = vpop.f32.mrf.mxu0
        %v4226 = vadd.f32 %v4177, %v4225
        %4227 = vmatmul.bf16.gmra.mxu0 %v2286
        %v4228 = vpop.f32.mrf.mxu0
        %v4229 = vadd.f32 %v4180, %v4228
        %v4230 = vpop.f32.mrf.mxu0
        %v4231 = vadd.f32 %v4182, %v4230
        %4232 = vmatmul.bf16.gmra.mxu0 %v2294
        %v4233 = vpop.f32.mrf.mxu0
        %v4234 = vadd.f32 %v4185, %v4233
        %v4235 = vpop.f32.mrf.mxu0
        %v4236 = vadd.f32 %v4187, %v4235
        %4237 = vmatmul.bf16.gmra.mxu0 %v2302
        %v4238 = vpop.f32.mrf.mxu0
        %v4239 = vadd.f32 %v4190, %v4238
        %v4240 = vpop.f32.mrf.mxu0
        %v4241 = vadd.f32 %v4192, %v4240
        %4242 = vmatmul.bf16.gmra.mxu0 %v2310
        %v4243 = vpop.f32.mrf.mxu0
        %v4244 = vadd.f32 %v4195, %v4243
        %v4245 = vpop.f32.mrf.mxu0
        %v4246 = vadd.f32 %v4197, %v4245
        %4247 = vmatmul.bf16.gmra.mxu0 %v2318
        %v4248 = vpop.f32.mrf.mxu0
        %v4249 = vadd.f32 %v4200, %v4248
        %v4250 = vpop.f32.mrf.mxu0
        %v4251 = vadd.f32 %v4202, %v4250
        %4252 = vmatmul.bf16.gmra.mxu0 %v2326
        %v4253 = vpop.f32.mrf.mxu0
        %v4254 = vadd.f32 %v4205, %v4253
        %v4255 = vpop.f32.mrf.mxu0
        %v4256 = vadd.f32 %v4207, %v4255
        %4257 = vmatmul.bf16.gmra.mxu0 %v2334
        %v4258 = vpop.f32.mrf.mxu0
        %v4259 = vadd.f32 %v4210, %v4258
        %v4260 = vpop.f32.mrf.mxu0
        %v4261 = vadd.f32 %v4212, %v4260
        %4262 = vdwg.mxu0
        %4263 = vmatpush.bf16.msra.mxu0 %v1841
        %4264 = vmatpush.bf16.msra.mxu0 %v1833
        %4265 = vmatpush.bf16.msra.mxu0 %v1825
        %4266 = vmatpush.bf16.msra.mxu0 %v1817
        %4267 = vmatpush.bf16.msra.mxu0 %v1809
        %4268 = vmatpush.bf16.msra.mxu0 %v1801
        %4269 = vmatpush.bf16.msra.mxu0 %v1793
        %4270 = vmatpush.bf16.msra.mxu0 %v1785
        %4271 = vmatmul.bf16.gmra.mxu0 %v2279
        %v4272 = vpop.f32.mrf.mxu0
        %v4273 = vadd.f32 %v4224, %v4272
        %v4274 = vpop.f32.mrf.mxu0
        %v4275 = vadd.f32 %v4226, %v4274
        %4276 = vmatmul.bf16.gmra.mxu0 %v2287
        %v4277 = vpop.f32.mrf.mxu0
        %v4278 = vadd.f32 %v4229, %v4277
        %v4279 = vpop.f32.mrf.mxu0
        %v4280 = vadd.f32 %v4231, %v4279
        %4281 = vmatmul.bf16.gmra.mxu0 %v2295
        %v4282 = vpop.f32.mrf.mxu0
        %v4283 = vadd.f32 %v4234, %v4282
        %v4284 = vpop.f32.mrf.mxu0
        %v4285 = vadd.f32 %v4236, %v4284
        %4286 = vmatmul.bf16.gmra.mxu0 %v2303
        %v4287 = vpop.f32.mrf.mxu0
        %v4288 = vadd.f32 %v4239, %v4287
        %v4289 = vpop.f32.mrf.mxu0
        %v4290 = vadd.f32 %v4241, %v4289
        %4291 = vmatmul.bf16.gmra.mxu0 %v2311
        %v4292 = vpop.f32.mrf.mxu0
        %v4293 = vadd.f32 %v4244, %v4292
        %v4294 = vpop.f32.mrf.mxu0
        %v4295 = vadd.f32 %v4246, %v4294
        %4296 = vmatmul.bf16.gmra.mxu0 %v2319
        %v4297 = vpop.f32.mrf.mxu0
        %v4298 = vadd.f32 %v4249, %v4297
        %v4299 = vpop.f32.mrf.mxu0
        %v4300 = vadd.f32 %v4251, %v4299
        %4301 = vmatmul.bf16.gmra.mxu0 %v2327
        %v4302 = vpop.f32.mrf.mxu0
        %v4303 = vadd.f32 %v4254, %v4302
        %v4304 = vpop.f32.mrf.mxu0
        %v4305 = vadd.f32 %v4256, %v4304
        %4306 = vmatmul.bf16.gmra.mxu0 %v2335
        %v4307 = vpop.f32.mrf.mxu0
        %v4308 = vadd.f32 %v4259, %v4307
        %v4309 = vpop.f32.mrf.mxu0
        %v4310 = vadd.f32 %v4261, %v4309
        %4311 = vdwg.mxu0
        %4312 = vmatpush.bf16.msra.mxu0 %v1905
        %4313 = vmatpush.bf16.msra.mxu0 %v1897
        %4314 = vmatpush.bf16.msra.mxu0 %v1889
        %4315 = vmatpush.bf16.msra.mxu0 %v1881
        %4316 = vmatpush.bf16.msra.mxu0 %v1873
        %4317 = vmatpush.bf16.msra.mxu0 %v1865
        %4318 = vmatpush.bf16.msra.mxu0 %v1857
        %4319 = vmatpush.bf16.msra.mxu0 %v1849
        %4320 = vmatmul.bf16.gmra.mxu0 %v2280
        %v4321 = vpop.f32.mrf.mxu0
        %v4322 = vadd.f32 %v4273, %v4321
        %v4323 = vpop.f32.mrf.mxu0
        %v4324 = vadd.f32 %v4275, %v4323
        %4325 = vmatmul.bf16.gmra.mxu0 %v2288
        %v4326 = vpop.f32.mrf.mxu0
        %v4327 = vadd.f32 %v4278, %v4326
        %v4328 = vpop.f32.mrf.mxu0
        %v4329 = vadd.f32 %v4280, %v4328
        %4330 = vmatmul.bf16.gmra.mxu0 %v2296
        %v4331 = vpop.f32.mrf.mxu0
        %v4332 = vadd.f32 %v4283, %v4331
        %v4333 = vpop.f32.mrf.mxu0
        %v4334 = vadd.f32 %v4285, %v4333
        %4335 = vmatmul.bf16.gmra.mxu0 %v2304
        %v4336 = vpop.f32.mrf.mxu0
        %v4337 = vadd.f32 %v4288, %v4336
        %v4338 = vpop.f32.mrf.mxu0
        %v4339 = vadd.f32 %v4290, %v4338
        %4340 = vmatmul.bf16.gmra.mxu0 %v2312
        %v4341 = vpop.f32.mrf.mxu0
        %v4342 = vadd.f32 %v4293, %v4341
        %v4343 = vpop.f32.mrf.mxu0
        %v4344 = vadd.f32 %v4295, %v4343
        %4345 = vmatmul.bf16.gmra.mxu0 %v2320
        %v4346 = vpop.f32.mrf.mxu0
        %v4347 = vadd.f32 %v4298, %v4346
        %v4348 = vpop.f32.mrf.mxu0
        %v4349 = vadd.f32 %v4300, %v4348
        %4350 = vmatmul.bf16.gmra.mxu0 %v2328
        %v4351 = vpop.f32.mrf.mxu0
        %v4352 = vadd.f32 %v4303, %v4351
        %v4353 = vpop.f32.mrf.mxu0
        %v4354 = vadd.f32 %v4305, %v4353
        %4355 = vmatmul.bf16.gmra.mxu0 %v2336
        %v4356 = vpop.f32.mrf.mxu0
        %v4357 = vadd.f32 %v4308, %v4356
        %v4358 = vpop.f32.mrf.mxu0
        %v4359 = vadd.f32 %v4310, %v4358
        %4360 = vdwg.mxu0
        %4361 = vmatpush.bf16.msra.mxu0 %v1458
        %4362 = vmatpush.bf16.msra.mxu0 %v1450
        %4363 = vmatpush.bf16.msra.mxu0 %v1442
        %4364 = vmatpush.bf16.msra.mxu0 %v1434
        %4365 = vmatpush.bf16.msra.mxu0 %v1426
        %4366 = vmatpush.bf16.msra.mxu0 %v1418
        %4367 = vmatpush.bf16.msra.mxu0 %v1410
        %4368 = vmatpush.bf16.msra.mxu0 %v1402
        %4369 = vmatmul.bf16.gmra.mxu0 %v2273
        %v4370 = vpop.f32.mrf.mxu0
        %v4371 = vadd.f32 %v2004, %v4370
        %v4372 = vpop.f32.mrf.mxu0
        %v4373 = vadd.f32 %v2009, %v4372
        %4374 = vmatmul.bf16.gmra.mxu0 %v2281
        %v4375 = vpop.f32.mrf.mxu0
        %v4376 = vadd.f32 %v2014, %v4375
        %v4377 = vpop.f32.mrf.mxu0
        %v4378 = vadd.f32 %v2019, %v4377
        %4379 = vmatmul.bf16.gmra.mxu0 %v2289
        %v4380 = vpop.f32.mrf.mxu0
        %v4381 = vadd.f32 %v2024, %v4380
        %v4382 = vpop.f32.mrf.mxu0
        %v4383 = vadd.f32 %v2029, %v4382
        %4384 = vmatmul.bf16.gmra.mxu0 %v2297
        %v4385 = vpop.f32.mrf.mxu0
        %v4386 = vadd.f32 %v2034, %v4385
        %v4387 = vpop.f32.mrf.mxu0
        %v4388 = vadd.f32 %v2039, %v4387
        %4389 = vmatmul.bf16.gmra.mxu0 %v2305
        %v4390 = vpop.f32.mrf.mxu0
        %v4391 = vadd.f32 %v2044, %v4390
        %v4392 = vpop.f32.mrf.mxu0
        %v4393 = vadd.f32 %v2049, %v4392
        %4394 = vmatmul.bf16.gmra.mxu0 %v2313
        %v4395 = vpop.f32.mrf.mxu0
        %v4396 = vadd.f32 %v2054, %v4395
        %v4397 = vpop.f32.mrf.mxu0
        %v4398 = vadd.f32 %v2059, %v4397
        %4399 = vmatmul.bf16.gmra.mxu0 %v2321
        %v4400 = vpop.f32.mrf.mxu0
        %v4401 = vadd.f32 %v2064, %v4400
        %v4402 = vpop.f32.mrf.mxu0
        %v4403 = vadd.f32 %v2069, %v4402
        %4404 = vmatmul.bf16.gmra.mxu0 %v2329
        %v4405 = vpop.f32.mrf.mxu0
        %v4406 = vadd.f32 %v2074, %v4405
        %v4407 = vpop.f32.mrf.mxu0
        %v4408 = vadd.f32 %v2079, %v4407
        %4409 = vdwg.mxu0
        %4410 = vmatpush.bf16.msra.mxu0 %v1522
        %4411 = vmatpush.bf16.msra.mxu0 %v1514
        %4412 = vmatpush.bf16.msra.mxu0 %v1506
        %4413 = vmatpush.bf16.msra.mxu0 %v1498
        %4414 = vmatpush.bf16.msra.mxu0 %v1490
        %4415 = vmatpush.bf16.msra.mxu0 %v1482
        %4416 = vmatpush.bf16.msra.mxu0 %v1474
        %4417 = vmatpush.bf16.msra.mxu0 %v1466
        %4418 = vmatmul.bf16.gmra.mxu0 %v2274
        %v4419 = vpop.f32.mrf.mxu0
        %v4420 = vadd.f32 %v4371, %v4419
        %v4421 = vpop.f32.mrf.mxu0
        %v4422 = vadd.f32 %v4373, %v4421
        %4423 = vmatmul.bf16.gmra.mxu0 %v2282
        %v4424 = vpop.f32.mrf.mxu0
        %v4425 = vadd.f32 %v4376, %v4424
        %v4426 = vpop.f32.mrf.mxu0
        %v4427 = vadd.f32 %v4378, %v4426
        %4428 = vmatmul.bf16.gmra.mxu0 %v2290
        %v4429 = vpop.f32.mrf.mxu0
        %v4430 = vadd.f32 %v4381, %v4429
        %v4431 = vpop.f32.mrf.mxu0
        %v4432 = vadd.f32 %v4383, %v4431
        %4433 = vmatmul.bf16.gmra.mxu0 %v2298
        %v4434 = vpop.f32.mrf.mxu0
        %v4435 = vadd.f32 %v4386, %v4434
        %v4436 = vpop.f32.mrf.mxu0
        %v4437 = vadd.f32 %v4388, %v4436
        %4438 = vmatmul.bf16.gmra.mxu0 %v2306
        %v4439 = vpop.f32.mrf.mxu0
        %v4440 = vadd.f32 %v4391, %v4439
        %v4441 = vpop.f32.mrf.mxu0
        %v4442 = vadd.f32 %v4393, %v4441
        %4443 = vmatmul.bf16.gmra.mxu0 %v2314
        %v4444 = vpop.f32.mrf.mxu0
        %v4445 = vadd.f32 %v4396, %v4444
        %v4446 = vpop.f32.mrf.mxu0
        %v4447 = vadd.f32 %v4398, %v4446
        %4448 = vmatmul.bf16.gmra.mxu0 %v2322
        %v4449 = vpop.f32.mrf.mxu0
        %v4450 = vadd.f32 %v4401, %v4449
        %v4451 = vpop.f32.mrf.mxu0
        %v4452 = vadd.f32 %v4403, %v4451
        %4453 = vmatmul.bf16.gmra.mxu0 %v2330
        %v4454 = vpop.f32.mrf.mxu0
        %v4455 = vadd.f32 %v4406, %v4454
        %v4456 = vpop.f32.mrf.mxu0
        %v4457 = vadd.f32 %v4408, %v4456
        %4458 = vdwg.mxu0
        %4459 = vmatpush.bf16.msra.mxu0 %v1586
        %4460 = vmatpush.bf16.msra.mxu0 %v1578
        %4461 = vmatpush.bf16.msra.mxu0 %v1570
        %4462 = vmatpush.bf16.msra.mxu0 %v1562
        %4463 = vmatpush.bf16.msra.mxu0 %v1554
        %4464 = vmatpush.bf16.msra.mxu0 %v1546
        %4465 = vmatpush.bf16.msra.mxu0 %v1538
        %4466 = vmatpush.bf16.msra.mxu0 %v1530
        %4467 = vmatmul.bf16.gmra.mxu0 %v2275
        %v4468 = vpop.f32.mrf.mxu0
        %v4469 = vadd.f32 %v4420, %v4468
        %v4470 = vpop.f32.mrf.mxu0
        %v4471 = vadd.f32 %v4422, %v4470
        %4472 = vmatmul.bf16.gmra.mxu0 %v2283
        %v4473 = vpop.f32.mrf.mxu0
        %v4474 = vadd.f32 %v4425, %v4473
        %v4475 = vpop.f32.mrf.mxu0
        %v4476 = vadd.f32 %v4427, %v4475
        %4477 = vmatmul.bf16.gmra.mxu0 %v2291
        %v4478 = vpop.f32.mrf.mxu0
        %v4479 = vadd.f32 %v4430, %v4478
        %v4480 = vpop.f32.mrf.mxu0
        %v4481 = vadd.f32 %v4432, %v4480
        %4482 = vmatmul.bf16.gmra.mxu0 %v2299
        %v4483 = vpop.f32.mrf.mxu0
        %v4484 = vadd.f32 %v4435, %v4483
        %v4485 = vpop.f32.mrf.mxu0
        %v4486 = vadd.f32 %v4437, %v4485
        %4487 = vmatmul.bf16.gmra.mxu0 %v2307
        %v4488 = vpop.f32.mrf.mxu0
        %v4489 = vadd.f32 %v4440, %v4488
        %v4490 = vpop.f32.mrf.mxu0
        %v4491 = vadd.f32 %v4442, %v4490
        %4492 = vmatmul.bf16.gmra.mxu0 %v2315
        %v4493 = vpop.f32.mrf.mxu0
        %v4494 = vadd.f32 %v4445, %v4493
        %v4495 = vpop.f32.mrf.mxu0
        %v4496 = vadd.f32 %v4447, %v4495
        %4497 = vmatmul.bf16.gmra.mxu0 %v2323
        %v4498 = vpop.f32.mrf.mxu0
        %v4499 = vadd.f32 %v4450, %v4498
        %v4500 = vpop.f32.mrf.mxu0
        %v4501 = vadd.f32 %v4452, %v4500
        %4502 = vmatmul.bf16.gmra.mxu0 %v2331
        %v4503 = vpop.f32.mrf.mxu0
        %v4504 = vadd.f32 %v4455, %v4503
        %v4505 = vpop.f32.mrf.mxu0
        %v4506 = vadd.f32 %v4457, %v4505
        %4507 = vdwg.mxu0
        %4508 = vmatpush.bf16.msra.mxu0 %v1650
        %4509 = vmatpush.bf16.msra.mxu0 %v1642
        %4510 = vmatpush.bf16.msra.mxu0 %v1634
        %4511 = vmatpush.bf16.msra.mxu0 %v1626
        %4512 = vmatpush.bf16.msra.mxu0 %v1618
        %4513 = vmatpush.bf16.msra.mxu0 %v1610
        %4514 = vmatpush.bf16.msra.mxu0 %v1602
        %4515 = vmatpush.bf16.msra.mxu0 %v1594
        %4516 = vmatmul.bf16.gmra.mxu0 %v2276
        %v4517 = vpop.f32.mrf.mxu0
        %v4518 = vadd.f32 %v4469, %v4517
        %v4519 = vpop.f32.mrf.mxu0
        %v4520 = vadd.f32 %v4471, %v4519
        %4521 = vmatmul.bf16.gmra.mxu0 %v2284
        %v4522 = vpop.f32.mrf.mxu0
        %v4523 = vadd.f32 %v4474, %v4522
        %v4524 = vpop.f32.mrf.mxu0
        %v4525 = vadd.f32 %v4476, %v4524
        %4526 = vmatmul.bf16.gmra.mxu0 %v2292
        %v4527 = vpop.f32.mrf.mxu0
        %v4528 = vadd.f32 %v4479, %v4527
        %v4529 = vpop.f32.mrf.mxu0
        %v4530 = vadd.f32 %v4481, %v4529
        %4531 = vmatmul.bf16.gmra.mxu0 %v2300
        %v4532 = vpop.f32.mrf.mxu0
        %v4533 = vadd.f32 %v4484, %v4532
        %v4534 = vpop.f32.mrf.mxu0
        %v4535 = vadd.f32 %v4486, %v4534
        %4536 = vmatmul.bf16.gmra.mxu0 %v2308
        %v4537 = vpop.f32.mrf.mxu0
        %v4538 = vadd.f32 %v4489, %v4537
        %v4539 = vpop.f32.mrf.mxu0
        %v4540 = vadd.f32 %v4491, %v4539
        %4541 = vmatmul.bf16.gmra.mxu0 %v2316
        %v4542 = vpop.f32.mrf.mxu0
        %v4543 = vadd.f32 %v4494, %v4542
        %v4544 = vpop.f32.mrf.mxu0
        %v4545 = vadd.f32 %v4496, %v4544
        %4546 = vmatmul.bf16.gmra.mxu0 %v2324
        %v4547 = vpop.f32.mrf.mxu0
        %v4548 = vadd.f32 %v4499, %v4547
        %v4549 = vpop.f32.mrf.mxu0
        %v4550 = vadd.f32 %v4501, %v4549
        %4551 = vmatmul.bf16.gmra.mxu0 %v2332
        %v4552 = vpop.f32.mrf.mxu0
        %v4553 = vadd.f32 %v4504, %v4552
        %v4554 = vpop.f32.mrf.mxu0
        %v4555 = vadd.f32 %v4506, %v4554
        %4556 = vdwg.mxu0
        %4557 = vmatpush.bf16.msra.mxu0 %v1714
        %4558 = vmatpush.bf16.msra.mxu0 %v1706
        %4559 = vmatpush.bf16.msra.mxu0 %v1698
        %4560 = vmatpush.bf16.msra.mxu0 %v1690
        %4561 = vmatpush.bf16.msra.mxu0 %v1682
        %4562 = vmatpush.bf16.msra.mxu0 %v1674
        %4563 = vmatpush.bf16.msra.mxu0 %v1666
        %4564 = vmatpush.bf16.msra.mxu0 %v1658
        %4565 = vmatmul.bf16.gmra.mxu0 %v2277
        %v4566 = vpop.f32.mrf.mxu0
        %v4567 = vadd.f32 %v4518, %v4566
        %v4568 = vpop.f32.mrf.mxu0
        %v4569 = vadd.f32 %v4520, %v4568
        %4570 = vmatmul.bf16.gmra.mxu0 %v2285
        %v4571 = vpop.f32.mrf.mxu0
        %v4572 = vadd.f32 %v4523, %v4571
        %v4573 = vpop.f32.mrf.mxu0
        %v4574 = vadd.f32 %v4525, %v4573
        %4575 = vmatmul.bf16.gmra.mxu0 %v2293
        %v4576 = vpop.f32.mrf.mxu0
        %v4577 = vadd.f32 %v4528, %v4576
        %v4578 = vpop.f32.mrf.mxu0
        %v4579 = vadd.f32 %v4530, %v4578
        %4580 = vmatmul.bf16.gmra.mxu0 %v2301
        %v4581 = vpop.f32.mrf.mxu0
        %v4582 = vadd.f32 %v4533, %v4581
        %v4583 = vpop.f32.mrf.mxu0
        %v4584 = vadd.f32 %v4535, %v4583
        %4585 = vmatmul.bf16.gmra.mxu0 %v2309
        %v4586 = vpop.f32.mrf.mxu0
        %v4587 = vadd.f32 %v4538, %v4586
        %v4588 = vpop.f32.mrf.mxu0
        %v4589 = vadd.f32 %v4540, %v4588
        %4590 = vmatmul.bf16.gmra.mxu0 %v2317
        %v4591 = vpop.f32.mrf.mxu0
        %v4592 = vadd.f32 %v4543, %v4591
        %v4593 = vpop.f32.mrf.mxu0
        %v4594 = vadd.f32 %v4545, %v4593
        %4595 = vmatmul.bf16.gmra.mxu0 %v2325
        %v4596 = vpop.f32.mrf.mxu0
        %v4597 = vadd.f32 %v4548, %v4596
        %v4598 = vpop.f32.mrf.mxu0
        %v4599 = vadd.f32 %v4550, %v4598
        %4600 = vmatmul.bf16.gmra.mxu0 %v2333
        %v4601 = vpop.f32.mrf.mxu0
        %v4602 = vadd.f32 %v4553, %v4601
        %v4603 = vpop.f32.mrf.mxu0
        %v4604 = vadd.f32 %v4555, %v4603
        %4605 = vdwg.mxu0
        %4606 = vmatpush.bf16.msra.mxu0 %v1778
        %4607 = vmatpush.bf16.msra.mxu0 %v1770
        %4608 = vmatpush.bf16.msra.mxu0 %v1762
        %4609 = vmatpush.bf16.msra.mxu0 %v1754
        %4610 = vmatpush.bf16.msra.mxu0 %v1746
        %4611 = vmatpush.bf16.msra.mxu0 %v1738
        %4612 = vmatpush.bf16.msra.mxu0 %v1730
        %4613 = vmatpush.bf16.msra.mxu0 %v1722
        %4614 = vmatmul.bf16.gmra.mxu0 %v2278
        %v4615 = vpop.f32.mrf.mxu0
        %v4616 = vadd.f32 %v4567, %v4615
        %v4617 = vpop.f32.mrf.mxu0
        %v4618 = vadd.f32 %v4569, %v4617
        %4619 = vmatmul.bf16.gmra.mxu0 %v2286
        %v4620 = vpop.f32.mrf.mxu0
        %v4621 = vadd.f32 %v4572, %v4620
        %v4622 = vpop.f32.mrf.mxu0
        %v4623 = vadd.f32 %v4574, %v4622
        %4624 = vmatmul.bf16.gmra.mxu0 %v2294
        %v4625 = vpop.f32.mrf.mxu0
        %v4626 = vadd.f32 %v4577, %v4625
        %v4627 = vpop.f32.mrf.mxu0
        %v4628 = vadd.f32 %v4579, %v4627
        %4629 = vmatmul.bf16.gmra.mxu0 %v2302
        %v4630 = vpop.f32.mrf.mxu0
        %v4631 = vadd.f32 %v4582, %v4630
        %v4632 = vpop.f32.mrf.mxu0
        %v4633 = vadd.f32 %v4584, %v4632
        %4634 = vmatmul.bf16.gmra.mxu0 %v2310
        %v4635 = vpop.f32.mrf.mxu0
        %v4636 = vadd.f32 %v4587, %v4635
        %v4637 = vpop.f32.mrf.mxu0
        %v4638 = vadd.f32 %v4589, %v4637
        %4639 = vmatmul.bf16.gmra.mxu0 %v2318
        %v4640 = vpop.f32.mrf.mxu0
        %v4641 = vadd.f32 %v4592, %v4640
        %v4642 = vpop.f32.mrf.mxu0
        %v4643 = vadd.f32 %v4594, %v4642
        %4644 = vmatmul.bf16.gmra.mxu0 %v2326
        %v4645 = vpop.f32.mrf.mxu0
        %v4646 = vadd.f32 %v4597, %v4645
        %v4647 = vpop.f32.mrf.mxu0
        %v4648 = vadd.f32 %v4599, %v4647
        %4649 = vmatmul.bf16.gmra.mxu0 %v2334
        %v4650 = vpop.f32.mrf.mxu0
        %v4651 = vadd.f32 %v4602, %v4650
        %v4652 = vpop.f32.mrf.mxu0
        %v4653 = vadd.f32 %v4604, %v4652
        %4654 = vdwg.mxu0
        %4655 = vmatpush.bf16.msra.mxu0 %v1842
        %4656 = vmatpush.bf16.msra.mxu0 %v1834
        %4657 = vmatpush.bf16.msra.mxu0 %v1826
        %4658 = vmatpush.bf16.msra.mxu0 %v1818
        %4659 = vmatpush.bf16.msra.mxu0 %v1810
        %4660 = vmatpush.bf16.msra.mxu0 %v1802
        %4661 = vmatpush.bf16.msra.mxu0 %v1794
        %4662 = vmatpush.bf16.msra.mxu0 %v1786
        %4663 = vmatmul.bf16.gmra.mxu0 %v2279
        %v4664 = vpop.f32.mrf.mxu0
        %v4665 = vadd.f32 %v4616, %v4664
        %v4666 = vpop.f32.mrf.mxu0
        %v4667 = vadd.f32 %v4618, %v4666
        %4668 = vmatmul.bf16.gmra.mxu0 %v2287
        %v4669 = vpop.f32.mrf.mxu0
        %v4670 = vadd.f32 %v4621, %v4669
        %v4671 = vpop.f32.mrf.mxu0
        %v4672 = vadd.f32 %v4623, %v4671
        %4673 = vmatmul.bf16.gmra.mxu0 %v2295
        %v4674 = vpop.f32.mrf.mxu0
        %v4675 = vadd.f32 %v4626, %v4674
        %v4676 = vpop.f32.mrf.mxu0
        %v4677 = vadd.f32 %v4628, %v4676
        %4678 = vmatmul.bf16.gmra.mxu0 %v2303
        %v4679 = vpop.f32.mrf.mxu0
        %v4680 = vadd.f32 %v4631, %v4679
        %v4681 = vpop.f32.mrf.mxu0
        %v4682 = vadd.f32 %v4633, %v4681
        %4683 = vmatmul.bf16.gmra.mxu0 %v2311
        %v4684 = vpop.f32.mrf.mxu0
        %v4685 = vadd.f32 %v4636, %v4684
        %v4686 = vpop.f32.mrf.mxu0
        %v4687 = vadd.f32 %v4638, %v4686
        %4688 = vmatmul.bf16.gmra.mxu0 %v2319
        %v4689 = vpop.f32.mrf.mxu0
        %v4690 = vadd.f32 %v4641, %v4689
        %v4691 = vpop.f32.mrf.mxu0
        %v4692 = vadd.f32 %v4643, %v4691
        %4693 = vmatmul.bf16.gmra.mxu0 %v2327
        %v4694 = vpop.f32.mrf.mxu0
        %v4695 = vadd.f32 %v4646, %v4694
        %v4696 = vpop.f32.mrf.mxu0
        %v4697 = vadd.f32 %v4648, %v4696
        %4698 = vmatmul.bf16.gmra.mxu0 %v2335
        %v4699 = vpop.f32.mrf.mxu0
        %v4700 = vadd.f32 %v4651, %v4699
        %v4701 = vpop.f32.mrf.mxu0
        %v4702 = vadd.f32 %v4653, %v4701
        %4703 = vdwg.mxu0
        %4704 = vmatpush.bf16.msra.mxu0 %v1906
        %4705 = vmatpush.bf16.msra.mxu0 %v1898
        %4706 = vmatpush.bf16.msra.mxu0 %v1890
        %4707 = vmatpush.bf16.msra.mxu0 %v1882
        %4708 = vmatpush.bf16.msra.mxu0 %v1874
        %4709 = vmatpush.bf16.msra.mxu0 %v1866
        %4710 = vmatpush.bf16.msra.mxu0 %v1858
        %4711 = vmatpush.bf16.msra.mxu0 %v1850
        %4712 = vmatmul.bf16.gmra.mxu0 %v2280
        %v4713 = vpop.f32.mrf.mxu0
        %v4714 = vadd.f32 %v4665, %v4713
        %v4715 = vpop.f32.mrf.mxu0
        %v4716 = vadd.f32 %v4667, %v4715
        %4717 = vmatmul.bf16.gmra.mxu0 %v2288
        %v4718 = vpop.f32.mrf.mxu0
        %v4719 = vadd.f32 %v4670, %v4718
        %v4720 = vpop.f32.mrf.mxu0
        %v4721 = vadd.f32 %v4672, %v4720
        %4722 = vmatmul.bf16.gmra.mxu0 %v2296
        %v4723 = vpop.f32.mrf.mxu0
        %v4724 = vadd.f32 %v4675, %v4723
        %v4725 = vpop.f32.mrf.mxu0
        %v4726 = vadd.f32 %v4677, %v4725
        %4727 = vmatmul.bf16.gmra.mxu0 %v2304
        %v4728 = vpop.f32.mrf.mxu0
        %v4729 = vadd.f32 %v4680, %v4728
        %v4730 = vpop.f32.mrf.mxu0
        %v4731 = vadd.f32 %v4682, %v4730
        %4732 = vmatmul.bf16.gmra.mxu0 %v2312
        %v4733 = vpop.f32.mrf.mxu0
        %v4734 = vadd.f32 %v4685, %v4733
        %v4735 = vpop.f32.mrf.mxu0
        %v4736 = vadd.f32 %v4687, %v4735
        %4737 = vmatmul.bf16.gmra.mxu0 %v2320
        %v4738 = vpop.f32.mrf.mxu0
        %v4739 = vadd.f32 %v4690, %v4738
        %v4740 = vpop.f32.mrf.mxu0
        %v4741 = vadd.f32 %v4692, %v4740
        %4742 = vmatmul.bf16.gmra.mxu0 %v2328
        %v4743 = vpop.f32.mrf.mxu0
        %v4744 = vadd.f32 %v4695, %v4743
        %v4745 = vpop.f32.mrf.mxu0
        %v4746 = vadd.f32 %v4697, %v4745
        %4747 = vmatmul.bf16.gmra.mxu0 %v2336
        %v4748 = vpop.f32.mrf.mxu0
        %v4749 = vadd.f32 %v4700, %v4748
        %v4750 = vpop.f32.mrf.mxu0
        %v4751 = vadd.f32 %v4702, %v4750
        %4752 = vdwg.mxu0
        %4753 = vmatpush.bf16.msra.mxu0 %v1459
        %4754 = vmatpush.bf16.msra.mxu0 %v1451
        %4755 = vmatpush.bf16.msra.mxu0 %v1443
        %4756 = vmatpush.bf16.msra.mxu0 %v1435
        %4757 = vmatpush.bf16.msra.mxu0 %v1427
        %4758 = vmatpush.bf16.msra.mxu0 %v1419
        %4759 = vmatpush.bf16.msra.mxu0 %v1411
        %4760 = vmatpush.bf16.msra.mxu0 %v1403
        %4761 = vmatmul.bf16.gmra.mxu0 %v2273
        %v4762 = vpop.f32.mrf.mxu0
        %v4763 = vadd.f32 %v2004, %v4762
        %v4764 = vpop.f32.mrf.mxu0
        %v4765 = vadd.f32 %v2009, %v4764
        %4766 = vmatmul.bf16.gmra.mxu0 %v2281
        %v4767 = vpop.f32.mrf.mxu0
        %v4768 = vadd.f32 %v2014, %v4767
        %v4769 = vpop.f32.mrf.mxu0
        %v4770 = vadd.f32 %v2019, %v4769
        %4771 = vmatmul.bf16.gmra.mxu0 %v2289
        %v4772 = vpop.f32.mrf.mxu0
        %v4773 = vadd.f32 %v2024, %v4772
        %v4774 = vpop.f32.mrf.mxu0
        %v4775 = vadd.f32 %v2029, %v4774
        %4776 = vmatmul.bf16.gmra.mxu0 %v2297
        %v4777 = vpop.f32.mrf.mxu0
        %v4778 = vadd.f32 %v2034, %v4777
        %v4779 = vpop.f32.mrf.mxu0
        %v4780 = vadd.f32 %v2039, %v4779
        %4781 = vmatmul.bf16.gmra.mxu0 %v2305
        %v4782 = vpop.f32.mrf.mxu0
        %v4783 = vadd.f32 %v2044, %v4782
        %v4784 = vpop.f32.mrf.mxu0
        %v4785 = vadd.f32 %v2049, %v4784
        %4786 = vmatmul.bf16.gmra.mxu0 %v2313
        %v4787 = vpop.f32.mrf.mxu0
        %v4788 = vadd.f32 %v2054, %v4787
        %v4789 = vpop.f32.mrf.mxu0
        %v4790 = vadd.f32 %v2059, %v4789
        %4791 = vmatmul.bf16.gmra.mxu0 %v2321
        %v4792 = vpop.f32.mrf.mxu0
        %v4793 = vadd.f32 %v2064, %v4792
        %v4794 = vpop.f32.mrf.mxu0
        %v4795 = vadd.f32 %v2069, %v4794
        %4796 = vmatmul.bf16.gmra.mxu0 %v2329
        %v4797 = vpop.f32.mrf.mxu0
        %v4798 = vadd.f32 %v2074, %v4797
        %v4799 = vpop.f32.mrf.mxu0
        %v4800 = vadd.f32 %v2079, %v4799
        %4801 = vdwg.mxu0
        %4802 = vmatpush.bf16.msra.mxu0 %v1523
        %4803 = vmatpush.bf16.msra.mxu0 %v1515
        %4804 = vmatpush.bf16.msra.mxu0 %v1507
        %4805 = vmatpush.bf16.msra.mxu0 %v1499
        %4806 = vmatpush.bf16.msra.mxu0 %v1491
        %4807 = vmatpush.bf16.msra.mxu0 %v1483
        %4808 = vmatpush.bf16.msra.mxu0 %v1475
        %4809 = vmatpush.bf16.msra.mxu0 %v1467
        %4810 = vmatmul.bf16.gmra.mxu0 %v2274
        %v4811 = vpop.f32.mrf.mxu0
        %v4812 = vadd.f32 %v4763, %v4811
        %v4813 = vpop.f32.mrf.mxu0
        %v4814 = vadd.f32 %v4765, %v4813
        %4815 = vmatmul.bf16.gmra.mxu0 %v2282
        %v4816 = vpop.f32.mrf.mxu0
        %v4817 = vadd.f32 %v4768, %v4816
        %v4818 = vpop.f32.mrf.mxu0
        %v4819 = vadd.f32 %v4770, %v4818
        %4820 = vmatmul.bf16.gmra.mxu0 %v2290
        %v4821 = vpop.f32.mrf.mxu0
        %v4822 = vadd.f32 %v4773, %v4821
        %v4823 = vpop.f32.mrf.mxu0
        %v4824 = vadd.f32 %v4775, %v4823
        %4825 = vmatmul.bf16.gmra.mxu0 %v2298
        %v4826 = vpop.f32.mrf.mxu0
        %v4827 = vadd.f32 %v4778, %v4826
        %v4828 = vpop.f32.mrf.mxu0
        %v4829 = vadd.f32 %v4780, %v4828
        %4830 = vmatmul.bf16.gmra.mxu0 %v2306
        %v4831 = vpop.f32.mrf.mxu0
        %v4832 = vadd.f32 %v4783, %v4831
        %v4833 = vpop.f32.mrf.mxu0
        %v4834 = vadd.f32 %v4785, %v4833
        %4835 = vmatmul.bf16.gmra.mxu0 %v2314
        %v4836 = vpop.f32.mrf.mxu0
        %v4837 = vadd.f32 %v4788, %v4836
        %v4838 = vpop.f32.mrf.mxu0
        %v4839 = vadd.f32 %v4790, %v4838
        %4840 = vmatmul.bf16.gmra.mxu0 %v2322
        %v4841 = vpop.f32.mrf.mxu0
        %v4842 = vadd.f32 %v4793, %v4841
        %v4843 = vpop.f32.mrf.mxu0
        %v4844 = vadd.f32 %v4795, %v4843
        %4845 = vmatmul.bf16.gmra.mxu0 %v2330
        %v4846 = vpop.f32.mrf.mxu0
        %v4847 = vadd.f32 %v4798, %v4846
        %v4848 = vpop.f32.mrf.mxu0
        %v4849 = vadd.f32 %v4800, %v4848
        %4850 = vdwg.mxu0
        %4851 = vmatpush.bf16.msra.mxu0 %v1587
        %4852 = vmatpush.bf16.msra.mxu0 %v1579
        %4853 = vmatpush.bf16.msra.mxu0 %v1571
        %4854 = vmatpush.bf16.msra.mxu0 %v1563
        %4855 = vmatpush.bf16.msra.mxu0 %v1555
        %4856 = vmatpush.bf16.msra.mxu0 %v1547
        %4857 = vmatpush.bf16.msra.mxu0 %v1539
        %4858 = vmatpush.bf16.msra.mxu0 %v1531
        %4859 = vmatmul.bf16.gmra.mxu0 %v2275
        %v4860 = vpop.f32.mrf.mxu0
        %v4861 = vadd.f32 %v4812, %v4860
        %v4862 = vpop.f32.mrf.mxu0
        %v4863 = vadd.f32 %v4814, %v4862
        %4864 = vmatmul.bf16.gmra.mxu0 %v2283
        %v4865 = vpop.f32.mrf.mxu0
        %v4866 = vadd.f32 %v4817, %v4865
        %v4867 = vpop.f32.mrf.mxu0
        %v4868 = vadd.f32 %v4819, %v4867
        %4869 = vmatmul.bf16.gmra.mxu0 %v2291
        %v4870 = vpop.f32.mrf.mxu0
        %v4871 = vadd.f32 %v4822, %v4870
        %v4872 = vpop.f32.mrf.mxu0
        %v4873 = vadd.f32 %v4824, %v4872
        %4874 = vmatmul.bf16.gmra.mxu0 %v2299
        %v4875 = vpop.f32.mrf.mxu0
        %v4876 = vadd.f32 %v4827, %v4875
        %v4877 = vpop.f32.mrf.mxu0
        %v4878 = vadd.f32 %v4829, %v4877
        %4879 = vmatmul.bf16.gmra.mxu0 %v2307
        %v4880 = vpop.f32.mrf.mxu0
        %v4881 = vadd.f32 %v4832, %v4880
        %v4882 = vpop.f32.mrf.mxu0
        %v4883 = vadd.f32 %v4834, %v4882
        %4884 = vmatmul.bf16.gmra.mxu0 %v2315
        %v4885 = vpop.f32.mrf.mxu0
        %v4886 = vadd.f32 %v4837, %v4885
        %v4887 = vpop.f32.mrf.mxu0
        %v4888 = vadd.f32 %v4839, %v4887
        %4889 = vmatmul.bf16.gmra.mxu0 %v2323
        %v4890 = vpop.f32.mrf.mxu0
        %v4891 = vadd.f32 %v4842, %v4890
        %v4892 = vpop.f32.mrf.mxu0
        %v4893 = vadd.f32 %v4844, %v4892
        %4894 = vmatmul.bf16.gmra.mxu0 %v2331
        %v4895 = vpop.f32.mrf.mxu0
        %v4896 = vadd.f32 %v4847, %v4895
        %v4897 = vpop.f32.mrf.mxu0
        %v4898 = vadd.f32 %v4849, %v4897
        %4899 = vdwg.mxu0
        %4900 = vmatpush.bf16.msra.mxu0 %v1651
        %4901 = vmatpush.bf16.msra.mxu0 %v1643
        %4902 = vmatpush.bf16.msra.mxu0 %v1635
        %4903 = vmatpush.bf16.msra.mxu0 %v1627
        %4904 = vmatpush.bf16.msra.mxu0 %v1619
        %4905 = vmatpush.bf16.msra.mxu0 %v1611
        %4906 = vmatpush.bf16.msra.mxu0 %v1603
        %4907 = vmatpush.bf16.msra.mxu0 %v1595
        %4908 = vmatmul.bf16.gmra.mxu0 %v2276
        %v4909 = vpop.f32.mrf.mxu0
        %v4910 = vadd.f32 %v4861, %v4909
        %v4911 = vpop.f32.mrf.mxu0
        %v4912 = vadd.f32 %v4863, %v4911
        %4913 = vmatmul.bf16.gmra.mxu0 %v2284
        %v4914 = vpop.f32.mrf.mxu0
        %v4915 = vadd.f32 %v4866, %v4914
        %v4916 = vpop.f32.mrf.mxu0
        %v4917 = vadd.f32 %v4868, %v4916
        %4918 = vmatmul.bf16.gmra.mxu0 %v2292
        %v4919 = vpop.f32.mrf.mxu0
        %v4920 = vadd.f32 %v4871, %v4919
        %v4921 = vpop.f32.mrf.mxu0
        %v4922 = vadd.f32 %v4873, %v4921
        %4923 = vmatmul.bf16.gmra.mxu0 %v2300
        %v4924 = vpop.f32.mrf.mxu0
        %v4925 = vadd.f32 %v4876, %v4924
        %v4926 = vpop.f32.mrf.mxu0
        %v4927 = vadd.f32 %v4878, %v4926
        %4928 = vmatmul.bf16.gmra.mxu0 %v2308
        %v4929 = vpop.f32.mrf.mxu0
        %v4930 = vadd.f32 %v4881, %v4929
        %v4931 = vpop.f32.mrf.mxu0
        %v4932 = vadd.f32 %v4883, %v4931
        %4933 = vmatmul.bf16.gmra.mxu0 %v2316
        %v4934 = vpop.f32.mrf.mxu0
        %v4935 = vadd.f32 %v4886, %v4934
        %v4936 = vpop.f32.mrf.mxu0
        %v4937 = vadd.f32 %v4888, %v4936
        %4938 = vmatmul.bf16.gmra.mxu0 %v2324
        %v4939 = vpop.f32.mrf.mxu0
        %v4940 = vadd.f32 %v4891, %v4939
        %v4941 = vpop.f32.mrf.mxu0
        %v4942 = vadd.f32 %v4893, %v4941
        %4943 = vmatmul.bf16.gmra.mxu0 %v2332
        %v4944 = vpop.f32.mrf.mxu0
        %v4945 = vadd.f32 %v4896, %v4944
        %v4946 = vpop.f32.mrf.mxu0
        %v4947 = vadd.f32 %v4898, %v4946
        %4948 = vdwg.mxu0
        %4949 = vmatpush.bf16.msra.mxu0 %v1715
        %4950 = vmatpush.bf16.msra.mxu0 %v1707
        %4951 = vmatpush.bf16.msra.mxu0 %v1699
        %4952 = vmatpush.bf16.msra.mxu0 %v1691
        %4953 = vmatpush.bf16.msra.mxu0 %v1683
        %4954 = vmatpush.bf16.msra.mxu0 %v1675
        %4955 = vmatpush.bf16.msra.mxu0 %v1667
        %4956 = vmatpush.bf16.msra.mxu0 %v1659
        %4957 = vmatmul.bf16.gmra.mxu0 %v2277
        %v4958 = vpop.f32.mrf.mxu0
        %v4959 = vadd.f32 %v4910, %v4958
        %v4960 = vpop.f32.mrf.mxu0
        %v4961 = vadd.f32 %v4912, %v4960
        %4962 = vmatmul.bf16.gmra.mxu0 %v2285
        %v4963 = vpop.f32.mrf.mxu0
        %v4964 = vadd.f32 %v4915, %v4963
        %v4965 = vpop.f32.mrf.mxu0
        %v4966 = vadd.f32 %v4917, %v4965
        %4967 = vmatmul.bf16.gmra.mxu0 %v2293
        %v4968 = vpop.f32.mrf.mxu0
        %v4969 = vadd.f32 %v4920, %v4968
        %v4970 = vpop.f32.mrf.mxu0
        %v4971 = vadd.f32 %v4922, %v4970
        %4972 = vmatmul.bf16.gmra.mxu0 %v2301
        %v4973 = vpop.f32.mrf.mxu0
        %v4974 = vadd.f32 %v4925, %v4973
        %v4975 = vpop.f32.mrf.mxu0
        %v4976 = vadd.f32 %v4927, %v4975
        %4977 = vmatmul.bf16.gmra.mxu0 %v2309
        %v4978 = vpop.f32.mrf.mxu0
        %v4979 = vadd.f32 %v4930, %v4978
        %v4980 = vpop.f32.mrf.mxu0
        %v4981 = vadd.f32 %v4932, %v4980
        %4982 = vmatmul.bf16.gmra.mxu0 %v2317
        %v4983 = vpop.f32.mrf.mxu0
        %v4984 = vadd.f32 %v4935, %v4983
        %v4985 = vpop.f32.mrf.mxu0
        %v4986 = vadd.f32 %v4937, %v4985
        %4987 = vmatmul.bf16.gmra.mxu0 %v2325
        %v4988 = vpop.f32.mrf.mxu0
        %v4989 = vadd.f32 %v4940, %v4988
        %v4990 = vpop.f32.mrf.mxu0
        %v4991 = vadd.f32 %v4942, %v4990
        %4992 = vmatmul.bf16.gmra.mxu0 %v2333
        %v4993 = vpop.f32.mrf.mxu0
        %v4994 = vadd.f32 %v4945, %v4993
        %v4995 = vpop.f32.mrf.mxu0
        %v4996 = vadd.f32 %v4947, %v4995
        %4997 = vdwg.mxu0
        %4998 = vmatpush.bf16.msra.mxu0 %v1779
        %4999 = vmatpush.bf16.msra.mxu0 %v1771
        %5000 = vmatpush.bf16.msra.mxu0 %v1763
        %5001 = vmatpush.bf16.msra.mxu0 %v1755
        %5002 = vmatpush.bf16.msra.mxu0 %v1747
        %5003 = vmatpush.bf16.msra.mxu0 %v1739
        %5004 = vmatpush.bf16.msra.mxu0 %v1731
        %5005 = vmatpush.bf16.msra.mxu0 %v1723
        %5006 = vmatmul.bf16.gmra.mxu0 %v2278
        %v5007 = vpop.f32.mrf.mxu0
        %v5008 = vadd.f32 %v4959, %v5007
        %v5009 = vpop.f32.mrf.mxu0
        %v5010 = vadd.f32 %v4961, %v5009
        %5011 = vmatmul.bf16.gmra.mxu0 %v2286
        %v5012 = vpop.f32.mrf.mxu0
        %v5013 = vadd.f32 %v4964, %v5012
        %v5014 = vpop.f32.mrf.mxu0
        %v5015 = vadd.f32 %v4966, %v5014
        %5016 = vmatmul.bf16.gmra.mxu0 %v2294
        %v5017 = vpop.f32.mrf.mxu0
        %v5018 = vadd.f32 %v4969, %v5017
        %v5019 = vpop.f32.mrf.mxu0
        %v5020 = vadd.f32 %v4971, %v5019
        %5021 = vmatmul.bf16.gmra.mxu0 %v2302
        %v5022 = vpop.f32.mrf.mxu0
        %v5023 = vadd.f32 %v4974, %v5022
        %v5024 = vpop.f32.mrf.mxu0
        %v5025 = vadd.f32 %v4976, %v5024
        %5026 = vmatmul.bf16.gmra.mxu0 %v2310
        %v5027 = vpop.f32.mrf.mxu0
        %v5028 = vadd.f32 %v4979, %v5027
        %v5029 = vpop.f32.mrf.mxu0
        %v5030 = vadd.f32 %v4981, %v5029
        %5031 = vmatmul.bf16.gmra.mxu0 %v2318
        %v5032 = vpop.f32.mrf.mxu0
        %v5033 = vadd.f32 %v4984, %v5032
        %v5034 = vpop.f32.mrf.mxu0
        %v5035 = vadd.f32 %v4986, %v5034
        %5036 = vmatmul.bf16.gmra.mxu0 %v2326
        %v5037 = vpop.f32.mrf.mxu0
        %v5038 = vadd.f32 %v4989, %v5037
        %v5039 = vpop.f32.mrf.mxu0
        %v5040 = vadd.f32 %v4991, %v5039
        %5041 = vmatmul.bf16.gmra.mxu0 %v2334
        %v5042 = vpop.f32.mrf.mxu0
        %v5043 = vadd.f32 %v4994, %v5042
        %v5044 = vpop.f32.mrf.mxu0
        %v5045 = vadd.f32 %v4996, %v5044
        %5046 = vdwg.mxu0
        %5047 = vmatpush.bf16.msra.mxu0 %v1843
        %5048 = vmatpush.bf16.msra.mxu0 %v1835
        %5049 = vmatpush.bf16.msra.mxu0 %v1827
        %5050 = vmatpush.bf16.msra.mxu0 %v1819
        %5051 = vmatpush.bf16.msra.mxu0 %v1811
        %5052 = vmatpush.bf16.msra.mxu0 %v1803
        %5053 = vmatpush.bf16.msra.mxu0 %v1795
        %5054 = vmatpush.bf16.msra.mxu0 %v1787
        %5055 = vmatmul.bf16.gmra.mxu0 %v2279
        %v5056 = vpop.f32.mrf.mxu0
        %v5057 = vadd.f32 %v5008, %v5056
        %v5058 = vpop.f32.mrf.mxu0
        %v5059 = vadd.f32 %v5010, %v5058
        %5060 = vmatmul.bf16.gmra.mxu0 %v2287
        %v5061 = vpop.f32.mrf.mxu0
        %v5062 = vadd.f32 %v5013, %v5061
        %v5063 = vpop.f32.mrf.mxu0
        %v5064 = vadd.f32 %v5015, %v5063
        %5065 = vmatmul.bf16.gmra.mxu0 %v2295
        %v5066 = vpop.f32.mrf.mxu0
        %v5067 = vadd.f32 %v5018, %v5066
        %v5068 = vpop.f32.mrf.mxu0
        %v5069 = vadd.f32 %v5020, %v5068
        %5070 = vmatmul.bf16.gmra.mxu0 %v2303
        %v5071 = vpop.f32.mrf.mxu0
        %v5072 = vadd.f32 %v5023, %v5071
        %v5073 = vpop.f32.mrf.mxu0
        %v5074 = vadd.f32 %v5025, %v5073
        %5075 = vmatmul.bf16.gmra.mxu0 %v2311
        %v5076 = vpop.f32.mrf.mxu0
        %v5077 = vadd.f32 %v5028, %v5076
        %v5078 = vpop.f32.mrf.mxu0
        %v5079 = vadd.f32 %v5030, %v5078
        %5080 = vmatmul.bf16.gmra.mxu0 %v2319
        %v5081 = vpop.f32.mrf.mxu0
        %v5082 = vadd.f32 %v5033, %v5081
        %v5083 = vpop.f32.mrf.mxu0
        %v5084 = vadd.f32 %v5035, %v5083
        %5085 = vmatmul.bf16.gmra.mxu0 %v2327
        %v5086 = vpop.f32.mrf.mxu0
        %v5087 = vadd.f32 %v5038, %v5086
        %v5088 = vpop.f32.mrf.mxu0
        %v5089 = vadd.f32 %v5040, %v5088
        %5090 = vmatmul.bf16.gmra.mxu0 %v2335
        %v5091 = vpop.f32.mrf.mxu0
        %v5092 = vadd.f32 %v5043, %v5091
        %v5093 = vpop.f32.mrf.mxu0
        %v5094 = vadd.f32 %v5045, %v5093
        %5095 = vdwg.mxu0
        %5096 = vmatpush.bf16.msra.mxu0 %v1907
        %5097 = vmatpush.bf16.msra.mxu0 %v1899
        %5098 = vmatpush.bf16.msra.mxu0 %v1891
        %5099 = vmatpush.bf16.msra.mxu0 %v1883
        %5100 = vmatpush.bf16.msra.mxu0 %v1875
        %5101 = vmatpush.bf16.msra.mxu0 %v1867
        %5102 = vmatpush.bf16.msra.mxu0 %v1859
        %5103 = vmatpush.bf16.msra.mxu0 %v1851
        %5104 = vmatmul.bf16.gmra.mxu0 %v2280
        %v5105 = vpop.f32.mrf.mxu0
        %v5106 = vadd.f32 %v5057, %v5105
        %v5107 = vpop.f32.mrf.mxu0
        %v5108 = vadd.f32 %v5059, %v5107
        %5109 = vmatmul.bf16.gmra.mxu0 %v2288
        %v5110 = vpop.f32.mrf.mxu0
        %v5111 = vadd.f32 %v5062, %v5110
        %v5112 = vpop.f32.mrf.mxu0
        %v5113 = vadd.f32 %v5064, %v5112
        %5114 = vmatmul.bf16.gmra.mxu0 %v2296
        %v5115 = vpop.f32.mrf.mxu0
        %v5116 = vadd.f32 %v5067, %v5115
        %v5117 = vpop.f32.mrf.mxu0
        %v5118 = vadd.f32 %v5069, %v5117
        %5119 = vmatmul.bf16.gmra.mxu0 %v2304
        %v5120 = vpop.f32.mrf.mxu0
        %v5121 = vadd.f32 %v5072, %v5120
        %v5122 = vpop.f32.mrf.mxu0
        %v5123 = vadd.f32 %v5074, %v5122
        %5124 = vmatmul.bf16.gmra.mxu0 %v2312
        %v5125 = vpop.f32.mrf.mxu0
        %v5126 = vadd.f32 %v5077, %v5125
        %v5127 = vpop.f32.mrf.mxu0
        %v5128 = vadd.f32 %v5079, %v5127
        %5129 = vmatmul.bf16.gmra.mxu0 %v2320
        %v5130 = vpop.f32.mrf.mxu0
        %v5131 = vadd.f32 %v5082, %v5130
        %v5132 = vpop.f32.mrf.mxu0
        %v5133 = vadd.f32 %v5084, %v5132
        %5134 = vmatmul.bf16.gmra.mxu0 %v2328
        %v5135 = vpop.f32.mrf.mxu0
        %v5136 = vadd.f32 %v5087, %v5135
        %v5137 = vpop.f32.mrf.mxu0
        %v5138 = vadd.f32 %v5089, %v5137
        %5139 = vmatmul.bf16.gmra.mxu0 %v2336
        %v5140 = vpop.f32.mrf.mxu0
        %v5141 = vadd.f32 %v5092, %v5140
        %v5142 = vpop.f32.mrf.mxu0
        %v5143 = vadd.f32 %v5094, %v5142
        %5144 = vdwg.mxu0
        %5145 = vmatpush.bf16.msra.mxu0 %v1460
        %5146 = vmatpush.bf16.msra.mxu0 %v1452
        %5147 = vmatpush.bf16.msra.mxu0 %v1444
        %5148 = vmatpush.bf16.msra.mxu0 %v1436
        %5149 = vmatpush.bf16.msra.mxu0 %v1428
        %5150 = vmatpush.bf16.msra.mxu0 %v1420
        %5151 = vmatpush.bf16.msra.mxu0 %v1412
        %5152 = vmatpush.bf16.msra.mxu0 %v1404
        %5153 = vmatmul.bf16.gmra.mxu0 %v2273
        %v5154 = vpop.f32.mrf.mxu0
        %v5155 = vadd.f32 %v2004, %v5154
        %v5156 = vpop.f32.mrf.mxu0
        %v5157 = vadd.f32 %v2009, %v5156
        %5158 = vmatmul.bf16.gmra.mxu0 %v2281
        %v5159 = vpop.f32.mrf.mxu0
        %v5160 = vadd.f32 %v2014, %v5159
        %v5161 = vpop.f32.mrf.mxu0
        %v5162 = vadd.f32 %v2019, %v5161
        %5163 = vmatmul.bf16.gmra.mxu0 %v2289
        %v5164 = vpop.f32.mrf.mxu0
        %v5165 = vadd.f32 %v2024, %v5164
        %v5166 = vpop.f32.mrf.mxu0
        %v5167 = vadd.f32 %v2029, %v5166
        %5168 = vmatmul.bf16.gmra.mxu0 %v2297
        %v5169 = vpop.f32.mrf.mxu0
        %v5170 = vadd.f32 %v2034, %v5169
        %v5171 = vpop.f32.mrf.mxu0
        %v5172 = vadd.f32 %v2039, %v5171
        %5173 = vmatmul.bf16.gmra.mxu0 %v2305
        %v5174 = vpop.f32.mrf.mxu0
        %v5175 = vadd.f32 %v2044, %v5174
        %v5176 = vpop.f32.mrf.mxu0
        %v5177 = vadd.f32 %v2049, %v5176
        %5178 = vmatmul.bf16.gmra.mxu0 %v2313
        %v5179 = vpop.f32.mrf.mxu0
        %v5180 = vadd.f32 %v2054, %v5179
        %v5181 = vpop.f32.mrf.mxu0
        %v5182 = vadd.f32 %v2059, %v5181
        %5183 = vmatmul.bf16.gmra.mxu0 %v2321
        %v5184 = vpop.f32.mrf.mxu0
        %v5185 = vadd.f32 %v2064, %v5184
        %v5186 = vpop.f32.mrf.mxu0
        %v5187 = vadd.f32 %v2069, %v5186
        %5188 = vmatmul.bf16.gmra.mxu0 %v2329
        %v5189 = vpop.f32.mrf.mxu0
        %v5190 = vadd.f32 %v2074, %v5189
        %v5191 = vpop.f32.mrf.mxu0
        %v5192 = vadd.f32 %v2079, %v5191
        %5193 = vdwg.mxu0
        %5194 = vmatpush.bf16.msra.mxu0 %v1524
        %5195 = vmatpush.bf16.msra.mxu0 %v1516
        %5196 = vmatpush.bf16.msra.mxu0 %v1508
        %5197 = vmatpush.bf16.msra.mxu0 %v1500
        %5198 = vmatpush.bf16.msra.mxu0 %v1492
        %5199 = vmatpush.bf16.msra.mxu0 %v1484
        %5200 = vmatpush.bf16.msra.mxu0 %v1476
        %5201 = vmatpush.bf16.msra.mxu0 %v1468
        %5202 = vmatmul.bf16.gmra.mxu0 %v2274
        %v5203 = vpop.f32.mrf.mxu0
        %v5204 = vadd.f32 %v5155, %v5203
        %v5205 = vpop.f32.mrf.mxu0
        %v5206 = vadd.f32 %v5157, %v5205
        %5207 = vmatmul.bf16.gmra.mxu0 %v2282
        %v5208 = vpop.f32.mrf.mxu0
        %v5209 = vadd.f32 %v5160, %v5208
        %v5210 = vpop.f32.mrf.mxu0
        %v5211 = vadd.f32 %v5162, %v5210
        %5212 = vmatmul.bf16.gmra.mxu0 %v2290
        %v5213 = vpop.f32.mrf.mxu0
        %v5214 = vadd.f32 %v5165, %v5213
        %v5215 = vpop.f32.mrf.mxu0
        %v5216 = vadd.f32 %v5167, %v5215
        %5217 = vmatmul.bf16.gmra.mxu0 %v2298
        %v5218 = vpop.f32.mrf.mxu0
        %v5219 = vadd.f32 %v5170, %v5218
        %v5220 = vpop.f32.mrf.mxu0
        %v5221 = vadd.f32 %v5172, %v5220
        %5222 = vmatmul.bf16.gmra.mxu0 %v2306
        %v5223 = vpop.f32.mrf.mxu0
        %v5224 = vadd.f32 %v5175, %v5223
        %v5225 = vpop.f32.mrf.mxu0
        %v5226 = vadd.f32 %v5177, %v5225
        %5227 = vmatmul.bf16.gmra.mxu0 %v2314
        %v5228 = vpop.f32.mrf.mxu0
        %v5229 = vadd.f32 %v5180, %v5228
        %v5230 = vpop.f32.mrf.mxu0
        %v5231 = vadd.f32 %v5182, %v5230
        %5232 = vmatmul.bf16.gmra.mxu0 %v2322
        %v5233 = vpop.f32.mrf.mxu0
        %v5234 = vadd.f32 %v5185, %v5233
        %v5235 = vpop.f32.mrf.mxu0
        %v5236 = vadd.f32 %v5187, %v5235
        %5237 = vmatmul.bf16.gmra.mxu0 %v2330
        %v5238 = vpop.f32.mrf.mxu0
        %v5239 = vadd.f32 %v5190, %v5238
        %v5240 = vpop.f32.mrf.mxu0
        %v5241 = vadd.f32 %v5192, %v5240
        %5242 = vdwg.mxu0
        %5243 = vmatpush.bf16.msra.mxu0 %v1588
        %5244 = vmatpush.bf16.msra.mxu0 %v1580
        %5245 = vmatpush.bf16.msra.mxu0 %v1572
        %5246 = vmatpush.bf16.msra.mxu0 %v1564
        %5247 = vmatpush.bf16.msra.mxu0 %v1556
        %5248 = vmatpush.bf16.msra.mxu0 %v1548
        %5249 = vmatpush.bf16.msra.mxu0 %v1540
        %5250 = vmatpush.bf16.msra.mxu0 %v1532
        %5251 = vmatmul.bf16.gmra.mxu0 %v2275
        %v5252 = vpop.f32.mrf.mxu0
        %v5253 = vadd.f32 %v5204, %v5252
        %v5254 = vpop.f32.mrf.mxu0
        %v5255 = vadd.f32 %v5206, %v5254
        %5256 = vmatmul.bf16.gmra.mxu0 %v2283
        %v5257 = vpop.f32.mrf.mxu0
        %v5258 = vadd.f32 %v5209, %v5257
        %v5259 = vpop.f32.mrf.mxu0
        %v5260 = vadd.f32 %v5211, %v5259
        %5261 = vmatmul.bf16.gmra.mxu0 %v2291
        %v5262 = vpop.f32.mrf.mxu0
        %v5263 = vadd.f32 %v5214, %v5262
        %v5264 = vpop.f32.mrf.mxu0
        %v5265 = vadd.f32 %v5216, %v5264
        %5266 = vmatmul.bf16.gmra.mxu0 %v2299
        %v5267 = vpop.f32.mrf.mxu0
        %v5268 = vadd.f32 %v5219, %v5267
        %v5269 = vpop.f32.mrf.mxu0
        %v5270 = vadd.f32 %v5221, %v5269
        %5271 = vmatmul.bf16.gmra.mxu0 %v2307
        %v5272 = vpop.f32.mrf.mxu0
        %v5273 = vadd.f32 %v5224, %v5272
        %v5274 = vpop.f32.mrf.mxu0
        %v5275 = vadd.f32 %v5226, %v5274
        %5276 = vmatmul.bf16.gmra.mxu0 %v2315
        %v5277 = vpop.f32.mrf.mxu0
        %v5278 = vadd.f32 %v5229, %v5277
        %v5279 = vpop.f32.mrf.mxu0
        %v5280 = vadd.f32 %v5231, %v5279
        %5281 = vmatmul.bf16.gmra.mxu0 %v2323
        %v5282 = vpop.f32.mrf.mxu0
        %v5283 = vadd.f32 %v5234, %v5282
        %v5284 = vpop.f32.mrf.mxu0
        %v5285 = vadd.f32 %v5236, %v5284
        %5286 = vmatmul.bf16.gmra.mxu0 %v2331
        %v5287 = vpop.f32.mrf.mxu0
        %v5288 = vadd.f32 %v5239, %v5287
        %v5289 = vpop.f32.mrf.mxu0
        %v5290 = vadd.f32 %v5241, %v5289
        %5291 = vdwg.mxu0
        %5292 = vmatpush.bf16.msra.mxu0 %v1652
        %5293 = vmatpush.bf16.msra.mxu0 %v1644
        %5294 = vmatpush.bf16.msra.mxu0 %v1636
        %5295 = vmatpush.bf16.msra.mxu0 %v1628
        %5296 = vmatpush.bf16.msra.mxu0 %v1620
        %5297 = vmatpush.bf16.msra.mxu0 %v1612
        %5298 = vmatpush.bf16.msra.mxu0 %v1604
        %5299 = vmatpush.bf16.msra.mxu0 %v1596
        %5300 = vmatmul.bf16.gmra.mxu0 %v2276
        %v5301 = vpop.f32.mrf.mxu0
        %v5302 = vadd.f32 %v5253, %v5301
        %v5303 = vpop.f32.mrf.mxu0
        %v5304 = vadd.f32 %v5255, %v5303
        %5305 = vmatmul.bf16.gmra.mxu0 %v2284
        %v5306 = vpop.f32.mrf.mxu0
        %v5307 = vadd.f32 %v5258, %v5306
        %v5308 = vpop.f32.mrf.mxu0
        %v5309 = vadd.f32 %v5260, %v5308
        %5310 = vmatmul.bf16.gmra.mxu0 %v2292
        %v5311 = vpop.f32.mrf.mxu0
        %v5312 = vadd.f32 %v5263, %v5311
        %v5313 = vpop.f32.mrf.mxu0
        %v5314 = vadd.f32 %v5265, %v5313
        %5315 = vmatmul.bf16.gmra.mxu0 %v2300
        %v5316 = vpop.f32.mrf.mxu0
        %v5317 = vadd.f32 %v5268, %v5316
        %v5318 = vpop.f32.mrf.mxu0
        %v5319 = vadd.f32 %v5270, %v5318
        %5320 = vmatmul.bf16.gmra.mxu0 %v2308
        %v5321 = vpop.f32.mrf.mxu0
        %v5322 = vadd.f32 %v5273, %v5321
        %v5323 = vpop.f32.mrf.mxu0
        %v5324 = vadd.f32 %v5275, %v5323
        %5325 = vmatmul.bf16.gmra.mxu0 %v2316
        %v5326 = vpop.f32.mrf.mxu0
        %v5327 = vadd.f32 %v5278, %v5326
        %v5328 = vpop.f32.mrf.mxu0
        %v5329 = vadd.f32 %v5280, %v5328
        %5330 = vmatmul.bf16.gmra.mxu0 %v2324
        %v5331 = vpop.f32.mrf.mxu0
        %v5332 = vadd.f32 %v5283, %v5331
        %v5333 = vpop.f32.mrf.mxu0
        %v5334 = vadd.f32 %v5285, %v5333
        %5335 = vmatmul.bf16.gmra.mxu0 %v2332
        %v5336 = vpop.f32.mrf.mxu0
        %v5337 = vadd.f32 %v5288, %v5336
        %v5338 = vpop.f32.mrf.mxu0
        %v5339 = vadd.f32 %v5290, %v5338
        %5340 = vdwg.mxu0
        %5341 = vmatpush.bf16.msra.mxu0 %v1716
        %5342 = vmatpush.bf16.msra.mxu0 %v1708
        %5343 = vmatpush.bf16.msra.mxu0 %v1700
        %5344 = vmatpush.bf16.msra.mxu0 %v1692
        %5345 = vmatpush.bf16.msra.mxu0 %v1684
        %5346 = vmatpush.bf16.msra.mxu0 %v1676
        %5347 = vmatpush.bf16.msra.mxu0 %v1668
        %5348 = vmatpush.bf16.msra.mxu0 %v1660
        %5349 = vmatmul.bf16.gmra.mxu0 %v2277
        %v5350 = vpop.f32.mrf.mxu0
        %v5351 = vadd.f32 %v5302, %v5350
        %v5352 = vpop.f32.mrf.mxu0
        %v5353 = vadd.f32 %v5304, %v5352
        %5354 = vmatmul.bf16.gmra.mxu0 %v2285
        %v5355 = vpop.f32.mrf.mxu0
        %v5356 = vadd.f32 %v5307, %v5355
        %v5357 = vpop.f32.mrf.mxu0
        %v5358 = vadd.f32 %v5309, %v5357
        %5359 = vmatmul.bf16.gmra.mxu0 %v2293
        %v5360 = vpop.f32.mrf.mxu0
        %v5361 = vadd.f32 %v5312, %v5360
        %v5362 = vpop.f32.mrf.mxu0
        %v5363 = vadd.f32 %v5314, %v5362
        %5364 = vmatmul.bf16.gmra.mxu0 %v2301
        %v5365 = vpop.f32.mrf.mxu0
        %v5366 = vadd.f32 %v5317, %v5365
        %v5367 = vpop.f32.mrf.mxu0
        %v5368 = vadd.f32 %v5319, %v5367
        %5369 = vmatmul.bf16.gmra.mxu0 %v2309
        %v5370 = vpop.f32.mrf.mxu0
        %v5371 = vadd.f32 %v5322, %v5370
        %v5372 = vpop.f32.mrf.mxu0
        %v5373 = vadd.f32 %v5324, %v5372
        %5374 = vmatmul.bf16.gmra.mxu0 %v2317
        %v5375 = vpop.f32.mrf.mxu0
        %v5376 = vadd.f32 %v5327, %v5375
        %v5377 = vpop.f32.mrf.mxu0
        %v5378 = vadd.f32 %v5329, %v5377
        %5379 = vmatmul.bf16.gmra.mxu0 %v2325
        %v5380 = vpop.f32.mrf.mxu0
        %v5381 = vadd.f32 %v5332, %v5380
        %v5382 = vpop.f32.mrf.mxu0
        %v5383 = vadd.f32 %v5334, %v5382
        %5384 = vmatmul.bf16.gmra.mxu0 %v2333
        %v5385 = vpop.f32.mrf.mxu0
        %v5386 = vadd.f32 %v5337, %v5385
        %v5387 = vpop.f32.mrf.mxu0
        %v5388 = vadd.f32 %v5339, %v5387
        %5389 = vdwg.mxu0
        %5390 = vmatpush.bf16.msra.mxu0 %v1780
        %5391 = vmatpush.bf16.msra.mxu0 %v1772
        %5392 = vmatpush.bf16.msra.mxu0 %v1764
        %5393 = vmatpush.bf16.msra.mxu0 %v1756
        %5394 = vmatpush.bf16.msra.mxu0 %v1748
        %5395 = vmatpush.bf16.msra.mxu0 %v1740
        %5396 = vmatpush.bf16.msra.mxu0 %v1732
        %5397 = vmatpush.bf16.msra.mxu0 %v1724
        %5398 = vmatmul.bf16.gmra.mxu0 %v2278
        %v5399 = vpop.f32.mrf.mxu0
        %v5400 = vadd.f32 %v5351, %v5399
        %v5401 = vpop.f32.mrf.mxu0
        %v5402 = vadd.f32 %v5353, %v5401
        %5403 = vmatmul.bf16.gmra.mxu0 %v2286
        %v5404 = vpop.f32.mrf.mxu0
        %v5405 = vadd.f32 %v5356, %v5404
        %v5406 = vpop.f32.mrf.mxu0
        %v5407 = vadd.f32 %v5358, %v5406
        %5408 = vmatmul.bf16.gmra.mxu0 %v2294
        %v5409 = vpop.f32.mrf.mxu0
        %v5410 = vadd.f32 %v5361, %v5409
        %v5411 = vpop.f32.mrf.mxu0
        %v5412 = vadd.f32 %v5363, %v5411
        %5413 = vmatmul.bf16.gmra.mxu0 %v2302
        %v5414 = vpop.f32.mrf.mxu0
        %v5415 = vadd.f32 %v5366, %v5414
        %v5416 = vpop.f32.mrf.mxu0
        %v5417 = vadd.f32 %v5368, %v5416
        %5418 = vmatmul.bf16.gmra.mxu0 %v2310
        %v5419 = vpop.f32.mrf.mxu0
        %v5420 = vadd.f32 %v5371, %v5419
        %v5421 = vpop.f32.mrf.mxu0
        %v5422 = vadd.f32 %v5373, %v5421
        %5423 = vmatmul.bf16.gmra.mxu0 %v2318
        %v5424 = vpop.f32.mrf.mxu0
        %v5425 = vadd.f32 %v5376, %v5424
        %v5426 = vpop.f32.mrf.mxu0
        %v5427 = vadd.f32 %v5378, %v5426
        %5428 = vmatmul.bf16.gmra.mxu0 %v2326
        %v5429 = vpop.f32.mrf.mxu0
        %v5430 = vadd.f32 %v5381, %v5429
        %v5431 = vpop.f32.mrf.mxu0
        %v5432 = vadd.f32 %v5383, %v5431
        %5433 = vmatmul.bf16.gmra.mxu0 %v2334
        %v5434 = vpop.f32.mrf.mxu0
        %v5435 = vadd.f32 %v5386, %v5434
        %v5436 = vpop.f32.mrf.mxu0
        %v5437 = vadd.f32 %v5388, %v5436
        %5438 = vdwg.mxu0
        %5439 = vmatpush.bf16.msra.mxu0 %v1844
        %5440 = vmatpush.bf16.msra.mxu0 %v1836
        %5441 = vmatpush.bf16.msra.mxu0 %v1828
        %5442 = vmatpush.bf16.msra.mxu0 %v1820
        %5443 = vmatpush.bf16.msra.mxu0 %v1812
        %5444 = vmatpush.bf16.msra.mxu0 %v1804
        %5445 = vmatpush.bf16.msra.mxu0 %v1796
        %5446 = vmatpush.bf16.msra.mxu0 %v1788
        %5447 = vmatmul.bf16.gmra.mxu0 %v2279
        %v5448 = vpop.f32.mrf.mxu0
        %v5449 = vadd.f32 %v5400, %v5448
        %v5450 = vpop.f32.mrf.mxu0
        %v5451 = vadd.f32 %v5402, %v5450
        %5452 = vmatmul.bf16.gmra.mxu0 %v2287
        %v5453 = vpop.f32.mrf.mxu0
        %v5454 = vadd.f32 %v5405, %v5453
        %v5455 = vpop.f32.mrf.mxu0
        %v5456 = vadd.f32 %v5407, %v5455
        %5457 = vmatmul.bf16.gmra.mxu0 %v2295
        %v5458 = vpop.f32.mrf.mxu0
        %v5459 = vadd.f32 %v5410, %v5458
        %v5460 = vpop.f32.mrf.mxu0
        %v5461 = vadd.f32 %v5412, %v5460
        %5462 = vmatmul.bf16.gmra.mxu0 %v2303
        %v5463 = vpop.f32.mrf.mxu0
        %v5464 = vadd.f32 %v5415, %v5463
        %v5465 = vpop.f32.mrf.mxu0
        %v5466 = vadd.f32 %v5417, %v5465
        %5467 = vmatmul.bf16.gmra.mxu0 %v2311
        %v5468 = vpop.f32.mrf.mxu0
        %v5469 = vadd.f32 %v5420, %v5468
        %v5470 = vpop.f32.mrf.mxu0
        %v5471 = vadd.f32 %v5422, %v5470
        %5472 = vmatmul.bf16.gmra.mxu0 %v2319
        %v5473 = vpop.f32.mrf.mxu0
        %v5474 = vadd.f32 %v5425, %v5473
        %v5475 = vpop.f32.mrf.mxu0
        %v5476 = vadd.f32 %v5427, %v5475
        %5477 = vmatmul.bf16.gmra.mxu0 %v2327
        %v5478 = vpop.f32.mrf.mxu0
        %v5479 = vadd.f32 %v5430, %v5478
        %v5480 = vpop.f32.mrf.mxu0
        %v5481 = vadd.f32 %v5432, %v5480
        %5482 = vmatmul.bf16.gmra.mxu0 %v2335
        %v5483 = vpop.f32.mrf.mxu0
        %v5484 = vadd.f32 %v5435, %v5483
        %v5485 = vpop.f32.mrf.mxu0
        %v5486 = vadd.f32 %v5437, %v5485
        %5487 = vdwg.mxu0
        %5488 = vmatpush.bf16.msra.mxu0 %v1908
        %5489 = vmatpush.bf16.msra.mxu0 %v1900
        %5490 = vmatpush.bf16.msra.mxu0 %v1892
        %5491 = vmatpush.bf16.msra.mxu0 %v1884
        %5492 = vmatpush.bf16.msra.mxu0 %v1876
        %5493 = vmatpush.bf16.msra.mxu0 %v1868
        %5494 = vmatpush.bf16.msra.mxu0 %v1860
        %5495 = vmatpush.bf16.msra.mxu0 %v1852
        %5496 = vmatmul.bf16.gmra.mxu0 %v2280
        %v5497 = vpop.f32.mrf.mxu0
        %v5498 = vadd.f32 %v5449, %v5497
        %v5499 = vpop.f32.mrf.mxu0
        %v5500 = vadd.f32 %v5451, %v5499
        %5501 = vmatmul.bf16.gmra.mxu0 %v2288
        %v5502 = vpop.f32.mrf.mxu0
        %v5503 = vadd.f32 %v5454, %v5502
        %v5504 = vpop.f32.mrf.mxu0
        %v5505 = vadd.f32 %v5456, %v5504
        %5506 = vmatmul.bf16.gmra.mxu0 %v2296
        %v5507 = vpop.f32.mrf.mxu0
        %v5508 = vadd.f32 %v5459, %v5507
        %v5509 = vpop.f32.mrf.mxu0
        %v5510 = vadd.f32 %v5461, %v5509
        %5511 = vmatmul.bf16.gmra.mxu0 %v2304
        %v5512 = vpop.f32.mrf.mxu0
        %v5513 = vadd.f32 %v5464, %v5512
        %v5514 = vpop.f32.mrf.mxu0
        %v5515 = vadd.f32 %v5466, %v5514
        %5516 = vmatmul.bf16.gmra.mxu0 %v2312
        %v5517 = vpop.f32.mrf.mxu0
        %v5518 = vadd.f32 %v5469, %v5517
        %v5519 = vpop.f32.mrf.mxu0
        %v5520 = vadd.f32 %v5471, %v5519
        %5521 = vmatmul.bf16.gmra.mxu0 %v2320
        %v5522 = vpop.f32.mrf.mxu0
        %v5523 = vadd.f32 %v5474, %v5522
        %v5524 = vpop.f32.mrf.mxu0
        %v5525 = vadd.f32 %v5476, %v5524
        %5526 = vmatmul.bf16.gmra.mxu0 %v2328
        %v5527 = vpop.f32.mrf.mxu0
        %v5528 = vadd.f32 %v5479, %v5527
        %v5529 = vpop.f32.mrf.mxu0
        %v5530 = vadd.f32 %v5481, %v5529
        %5531 = vmatmul.bf16.gmra.mxu0 %v2336
        %v5532 = vpop.f32.mrf.mxu0
        %v5533 = vadd.f32 %v5484, %v5532
        %v5534 = vpop.f32.mrf.mxu0
        %v5535 = vadd.f32 %v5486, %v5534
        %5536 = vdwg.mxu0
        %v5537 = vmax.f32 %v2754, 0.0
        %v5538 = vmax.f32 %v3146, 0.0
        %v5539 = vmax.f32 %v3538, 0.0
        %v5540 = vmax.f32 %v3930, 0.0
        %v5541 = vmax.f32 %v4322, 0.0
        %v5542 = vmax.f32 %v4714, 0.0
        %v5543 = vmax.f32 %v5106, 0.0
        %v5544 = vmax.f32 %v5498, 0.0
        %v5545 = vmax.f32 %v2756, 0.0
        %v5546 = vmax.f32 %v3148, 0.0
        %v5547 = vmax.f32 %v3540, 0.0
        %v5548 = vmax.f32 %v3932, 0.0
        %v5549 = vmax.f32 %v4324, 0.0
        %v5550 = vmax.f32 %v4716, 0.0
        %v5551 = vmax.f32 %v5108, 0.0
        %v5552 = vmax.f32 %v5500, 0.0
        %v5553 = vmax.f32 %v2759, 0.0
        %v5554 = vmax.f32 %v3151, 0.0
        %v5555 = vmax.f32 %v3543, 0.0
        %v5556 = vmax.f32 %v3935, 0.0
        %v5557 = vmax.f32 %v4327, 0.0
        %v5558 = vmax.f32 %v4719, 0.0
        %v5559 = vmax.f32 %v5111, 0.0
        %v5560 = vmax.f32 %v5503, 0.0
        %v5561 = vmax.f32 %v2761, 0.0
        %v5562 = vmax.f32 %v3153, 0.0
        %v5563 = vmax.f32 %v3545, 0.0
        %v5564 = vmax.f32 %v3937, 0.0
        %v5565 = vmax.f32 %v4329, 0.0
        %v5566 = vmax.f32 %v4721, 0.0
        %v5567 = vmax.f32 %v5113, 0.0
        %v5568 = vmax.f32 %v5505, 0.0
        %v5569 = vmax.f32 %v2764, 0.0
        %v5570 = vmax.f32 %v3156, 0.0
        %v5571 = vmax.f32 %v3548, 0.0
        %v5572 = vmax.f32 %v3940, 0.0
        %v5573 = vmax.f32 %v4332, 0.0
        %v5574 = vmax.f32 %v4724, 0.0
        %v5575 = vmax.f32 %v5116, 0.0
        %v5576 = vmax.f32 %v5508, 0.0
        %v5577 = vmax.f32 %v2766, 0.0
        %v5578 = vmax.f32 %v3158, 0.0
        %v5579 = vmax.f32 %v3550, 0.0
        %v5580 = vmax.f32 %v3942, 0.0
        %v5581 = vmax.f32 %v4334, 0.0
        %v5582 = vmax.f32 %v4726, 0.0
        %v5583 = vmax.f32 %v5118, 0.0
        %v5584 = vmax.f32 %v5510, 0.0
        %v5585 = vmax.f32 %v2769, 0.0
        %v5586 = vmax.f32 %v3161, 0.0
        %v5587 = vmax.f32 %v3553, 0.0
        %v5588 = vmax.f32 %v3945, 0.0
        %v5589 = vmax.f32 %v4337, 0.0
        %v5590 = vmax.f32 %v4729, 0.0
        %v5591 = vmax.f32 %v5121, 0.0
        %v5592 = vmax.f32 %v5513, 0.0
        %v5593 = vmax.f32 %v2771, 0.0
        %v5594 = vmax.f32 %v3163, 0.0
        %v5595 = vmax.f32 %v3555, 0.0
        %v5596 = vmax.f32 %v3947, 0.0
        %v5597 = vmax.f32 %v4339, 0.0
        %v5598 = vmax.f32 %v4731, 0.0
        %v5599 = vmax.f32 %v5123, 0.0
        %v5600 = vmax.f32 %v5515, 0.0
        %v5601 = vmax.f32 %v2774, 0.0
        %v5602 = vmax.f32 %v3166, 0.0
        %v5603 = vmax.f32 %v3558, 0.0
        %v5604 = vmax.f32 %v3950, 0.0
        %v5605 = vmax.f32 %v4342, 0.0
        %v5606 = vmax.f32 %v4734, 0.0
        %v5607 = vmax.f32 %v5126, 0.0
        %v5608 = vmax.f32 %v5518, 0.0
        %v5609 = vmax.f32 %v2776, 0.0
        %v5610 = vmax.f32 %v3168, 0.0
        %v5611 = vmax.f32 %v3560, 0.0
        %v5612 = vmax.f32 %v3952, 0.0
        %v5613 = vmax.f32 %v4344, 0.0
        %v5614 = vmax.f32 %v4736, 0.0
        %v5615 = vmax.f32 %v5128, 0.0
        %v5616 = vmax.f32 %v5520, 0.0
        %v5617 = vmax.f32 %v2779, 0.0
        %v5618 = vmax.f32 %v3171, 0.0
        %v5619 = vmax.f32 %v3563, 0.0
        %v5620 = vmax.f32 %v3955, 0.0
        %v5621 = vmax.f32 %v4347, 0.0
        %v5622 = vmax.f32 %v4739, 0.0
        %v5623 = vmax.f32 %v5131, 0.0
        %v5624 = vmax.f32 %v5523, 0.0
        %v5625 = vmax.f32 %v2781, 0.0
        %v5626 = vmax.f32 %v3173, 0.0
        %v5627 = vmax.f32 %v3565, 0.0
        %v5628 = vmax.f32 %v3957, 0.0
        %v5629 = vmax.f32 %v4349, 0.0
        %v5630 = vmax.f32 %v4741, 0.0
        %v5631 = vmax.f32 %v5133, 0.0
        %v5632 = vmax.f32 %v5525, 0.0
        %v5633 = vmax.f32 %v2784, 0.0
        %v5634 = vmax.f32 %v3176, 0.0
        %v5635 = vmax.f32 %v3568, 0.0
        %v5636 = vmax.f32 %v3960, 0.0
        %v5637 = vmax.f32 %v4352, 0.0
        %v5638 = vmax.f32 %v4744, 0.0
        %v5639 = vmax.f32 %v5136, 0.0
        %v5640 = vmax.f32 %v5528, 0.0
        %v5641 = vmax.f32 %v2786, 0.0
        %v5642 = vmax.f32 %v3178, 0.0
        %v5643 = vmax.f32 %v3570, 0.0
        %v5644 = vmax.f32 %v3962, 0.0
        %v5645 = vmax.f32 %v4354, 0.0
        %v5646 = vmax.f32 %v4746, 0.0
        %v5647 = vmax.f32 %v5138, 0.0
        %v5648 = vmax.f32 %v5530, 0.0
        %v5649 = vmax.f32 %v2789, 0.0
        %v5650 = vmax.f32 %v3181, 0.0
        %v5651 = vmax.f32 %v3573, 0.0
        %v5652 = vmax.f32 %v3965, 0.0
        %v5653 = vmax.f32 %v4357, 0.0
        %v5654 = vmax.f32 %v4749, 0.0
        %v5655 = vmax.f32 %v5141, 0.0
        %v5656 = vmax.f32 %v5533, 0.0
        %v5657 = vmax.f32 %v2791, 0.0
        %v5658 = vmax.f32 %v3183, 0.0
        %v5659 = vmax.f32 %v3575, 0.0
        %v5660 = vmax.f32 %v3967, 0.0
        %v5661 = vmax.f32 %v4359, 0.0
        %v5662 = vmax.f32 %v4751, 0.0
        %v5663 = vmax.f32 %v5143, 0.0
        %v5664 = vmax.f32 %v5535, 0.0
        %5666 = vset.pattern.permute.xlu0 0
        %5667 = vperm.xlu0 %5666, %v1994
        %v5668 = vpop.permute.xlu0 %5667
        %5671 = vset.pattern.permute.xlu0 0
        %5672 = vperm.xlu0 %5671, %v1995
        %v5673 = vpop.permute.xlu0 %5672
        %5676 = vset.pattern.permute.xlu0 0
        %5677 = vperm.xlu0 %5676, %v1996
        %v5678 = vpop.permute.xlu0 %5677
        %5681 = vset.pattern.permute.xlu0 0
        %5682 = vperm.xlu0 %5681, %v1997
        %v5683 = vpop.permute.xlu0 %5682
        %5685 = vmatpush.msra.mxu0 %v5657
        %5686 = vmatpush.msra.mxu0 %v5649
        %5687 = vmatpush.msra.mxu0 %v5641
        %5688 = vmatpush.msra.mxu0 %v5633
        %5689 = vmatpush.msra.mxu0 %v5625
        %5690 = vmatpush.msra.mxu0 %v5617
        %5691 = vmatpush.msra.mxu0 %v5609
        %5692 = vmatpush.msra.mxu0 %v5601
        %5693 = vmatpush.msra.mxu0 %v5593
        %5694 = vmatpush.msra.mxu0 %v5585
        %5695 = vmatpush.msra.mxu0 %v5577
        %5696 = vmatpush.msra.mxu0 %v5569
        %5697 = vmatpush.msra.mxu0 %v5561
        %5698 = vmatpush.msra.mxu0 %v5553
        %5699 = vmatpush.msra.mxu0 %v5545
        %5700 = vmatpush.msra.mxu0 %v5537
        %5701 = vmatmul.f32.gmra.mxu0 %v1973
        %v5702 = vpop.f32.mrf.mxu0
        %v5703 = vadd.f32 %v5668, %v5702
        %5704 = vmatmul.f32.gmra.mxu0 %v1974
        %v5705 = vpop.f32.mrf.mxu0
        %v5706 = vadd.f32 %v5673, %v5705
        %5707 = vmatmul.f32.gmra.mxu0 %v1975
        %v5708 = vpop.f32.mrf.mxu0
        %v5709 = vadd.f32 %v5678, %v5708
        %5710 = vmatmul.f32.gmra.mxu0 %v1976
        %v5711 = vpop.f32.mrf.mxu0
        %v5712 = vadd.f32 %v5683, %v5711
        %5713 = vdwg.mxu0
        %5714 = vmatpush.msra.mxu0 %v5658
        %5715 = vmatpush.msra.mxu0 %v5650
        %5716 = vmatpush.msra.mxu0 %v5642
        %5717 = vmatpush.msra.mxu0 %v5634
        %5718 = vmatpush.msra.mxu0 %v5626
        %5719 = vmatpush.msra.mxu0 %v5618
        %5720 = vmatpush.msra.mxu0 %v5610
        %5721 = vmatpush.msra.mxu0 %v5602
        %5722 = vmatpush.msra.mxu0 %v5594
        %5723 = vmatpush.msra.mxu0 %v5586
        %5724 = vmatpush.msra.mxu0 %v5578
        %5725 = vmatpush.msra.mxu0 %v5570
        %5726 = vmatpush.msra.mxu0 %v5562
        %5727 = vmatpush.msra.mxu0 %v5554
        %5728 = vmatpush.msra.mxu0 %v5546
        %5729 = vmatpush.msra.mxu0 %v5538
        %5730 = vmatmul.f32.gmra.mxu0 %v1973
        %v5731 = vpop.f32.mrf.mxu0
        %v5732 = vadd.f32 %v5668, %v5731
        %5733 = vmatmul.f32.gmra.mxu0 %v1974
        %v5734 = vpop.f32.mrf.mxu0
        %v5735 = vadd.f32 %v5673, %v5734
        %5736 = vmatmul.f32.gmra.mxu0 %v1975
        %v5737 = vpop.f32.mrf.mxu0
        %v5738 = vadd.f32 %v5678, %v5737
        %5739 = vmatmul.f32.gmra.mxu0 %v1976
        %v5740 = vpop.f32.mrf.mxu0
        %v5741 = vadd.f32 %v5683, %v5740
        %5742 = vdwg.mxu0
        %5743 = vmatpush.msra.mxu0 %v5659
        %5744 = vmatpush.msra.mxu0 %v5651
        %5745 = vmatpush.msra.mxu0 %v5643
        %5746 = vmatpush.msra.mxu0 %v5635
        %5747 = vmatpush.msra.mxu0 %v5627
        %5748 = vmatpush.msra.mxu0 %v5619
        %5749 = vmatpush.msra.mxu0 %v5611
        %5750 = vmatpush.msra.mxu0 %v5603
        %5751 = vmatpush.msra.mxu0 %v5595
        %5752 = vmatpush.msra.mxu0 %v5587
        %5753 = vmatpush.msra.mxu0 %v5579
        %5754 = vmatpush.msra.mxu0 %v5571
        %5755 = vmatpush.msra.mxu0 %v5563
        %5756 = vmatpush.msra.mxu0 %v5555
        %5757 = vmatpush.msra.mxu0 %v5547
        %5758 = vmatpush.msra.mxu0 %v5539
        %5759 = vmatmul.f32.gmra.mxu0 %v1973
        %v5760 = vpop.f32.mrf.mxu0
        %v5761 = vadd.f32 %v5668, %v5760
        %5762 = vmatmul.f32.gmra.mxu0 %v1974
        %v5763 = vpop.f32.mrf.mxu0
        %v5764 = vadd.f32 %v5673, %v5763
        %5765 = vmatmul.f32.gmra.mxu0 %v1975
        %v5766 = vpop.f32.mrf.mxu0
        %v5767 = vadd.f32 %v5678, %v5766
        %5768 = vmatmul.f32.gmra.mxu0 %v1976
        %v5769 = vpop.f32.mrf.mxu0
        %v5770 = vadd.f32 %v5683, %v5769
        %5771 = vdwg.mxu0
        %5772 = vmatpush.msra.mxu0 %v5660
        %5773 = vmatpush.msra.mxu0 %v5652
        %5774 = vmatpush.msra.mxu0 %v5644
        %5775 = vmatpush.msra.mxu0 %v5636
        %5776 = vmatpush.msra.mxu0 %v5628
        %5777 = vmatpush.msra.mxu0 %v5620
        %5778 = vmatpush.msra.mxu0 %v5612
        %5779 = vmatpush.msra.mxu0 %v5604
        %5780 = vmatpush.msra.mxu0 %v5596
        %5781 = vmatpush.msra.mxu0 %v5588
        %5782 = vmatpush.msra.mxu0 %v5580
        %5783 = vmatpush.msra.mxu0 %v5572
        %5784 = vmatpush.msra.mxu0 %v5564
        %5785 = vmatpush.msra.mxu0 %v5556
        %5786 = vmatpush.msra.mxu0 %v5548
        %5787 = vmatpush.msra.mxu0 %v5540
        %5788 = vmatmul.f32.gmra.mxu0 %v1973
        %v5789 = vpop.f32.mrf.mxu0
        %v5790 = vadd.f32 %v5668, %v5789
        %5791 = vmatmul.f32.gmra.mxu0 %v1974
        %v5792 = vpop.f32.mrf.mxu0
        %v5793 = vadd.f32 %v5673, %v5792
        %5794 = vmatmul.f32.gmra.mxu0 %v1975
        %v5795 = vpop.f32.mrf.mxu0
        %v5796 = vadd.f32 %v5678, %v5795
        %5797 = vmatmul.f32.gmra.mxu0 %v1976
        %v5798 = vpop.f32.mrf.mxu0
        %v5799 = vadd.f32 %v5683, %v5798
        %5800 = vdwg.mxu0
        %5801 = vmatpush.msra.mxu0 %v5661
        %5802 = vmatpush.msra.mxu0 %v5653
        %5803 = vmatpush.msra.mxu0 %v5645
        %5804 = vmatpush.msra.mxu0 %v5637
        %5805 = vmatpush.msra.mxu0 %v5629
        %5806 = vmatpush.msra.mxu0 %v5621
        %5807 = vmatpush.msra.mxu0 %v5613
        %5808 = vmatpush.msra.mxu0 %v5605
        %5809 = vmatpush.msra.mxu0 %v5597
        %5810 = vmatpush.msra.mxu0 %v5589
        %5811 = vmatpush.msra.mxu0 %v5581
        %5812 = vmatpush.msra.mxu0 %v5573
        %5813 = vmatpush.msra.mxu0 %v5565
        %5814 = vmatpush.msra.mxu0 %v5557
        %5815 = vmatpush.msra.mxu0 %v5549
        %5816 = vmatpush.msra.mxu0 %v5541
        %5817 = vmatmul.f32.gmra.mxu0 %v1973
        %v5818 = vpop.f32.mrf.mxu0
        %v5819 = vadd.f32 %v5668, %v5818
        %5820 = vmatmul.f32.gmra.mxu0 %v1974
        %v5821 = vpop.f32.mrf.mxu0
        %v5822 = vadd.f32 %v5673, %v5821
        %5823 = vmatmul.f32.gmra.mxu0 %v1975
        %v5824 = vpop.f32.mrf.mxu0
        %v5825 = vadd.f32 %v5678, %v5824
        %5826 = vmatmul.f32.gmra.mxu0 %v1976
        %v5827 = vpop.f32.mrf.mxu0
        %v5828 = vadd.f32 %v5683, %v5827
        %5829 = vdwg.mxu0
        %5830 = vmatpush.msra.mxu0 %v5662
        %5831 = vmatpush.msra.mxu0 %v5654
        %5832 = vmatpush.msra.mxu0 %v5646
        %5833 = vmatpush.msra.mxu0 %v5638
        %5834 = vmatpush.msra.mxu0 %v5630
        %5835 = vmatpush.msra.mxu0 %v5622
        %5836 = vmatpush.msra.mxu0 %v5614
        %5837 = vmatpush.msra.mxu0 %v5606
        %5838 = vmatpush.msra.mxu0 %v5598
        %5839 = vmatpush.msra.mxu0 %v5590
        %5840 = vmatpush.msra.mxu0 %v5582
        %5841 = vmatpush.msra.mxu0 %v5574
        %5842 = vmatpush.msra.mxu0 %v5566
        %5843 = vmatpush.msra.mxu0 %v5558
        %5844 = vmatpush.msra.mxu0 %v5550
        %5845 = vmatpush.msra.mxu0 %v5542
        %5846 = vmatmul.f32.gmra.mxu0 %v1973
        %v5847 = vpop.f32.mrf.mxu0
        %v5848 = vadd.f32 %v5668, %v5847
        %5849 = vmatmul.f32.gmra.mxu0 %v1974
        %v5850 = vpop.f32.mrf.mxu0
        %v5851 = vadd.f32 %v5673, %v5850
        %5852 = vmatmul.f32.gmra.mxu0 %v1975
        %v5853 = vpop.f32.mrf.mxu0
        %v5854 = vadd.f32 %v5678, %v5853
        %5855 = vmatmul.f32.gmra.mxu0 %v1976
        %v5856 = vpop.f32.mrf.mxu0
        %v5857 = vadd.f32 %v5683, %v5856
        %5858 = vdwg.mxu0
        %5859 = vmatpush.msra.mxu0 %v5663
        %5860 = vmatpush.msra.mxu0 %v5655
        %5861 = vmatpush.msra.mxu0 %v5647
        %5862 = vmatpush.msra.mxu0 %v5639
        %5863 = vmatpush.msra.mxu0 %v5631
        %5864 = vmatpush.msra.mxu0 %v5623
        %5865 = vmatpush.msra.mxu0 %v5615
        %5866 = vmatpush.msra.mxu0 %v5607
        %5867 = vmatpush.msra.mxu0 %v5599
        %5868 = vmatpush.msra.mxu0 %v5591
        %5869 = vmatpush.msra.mxu0 %v5583
        %5870 = vmatpush.msra.mxu0 %v5575
        %5871 = vmatpush.msra.mxu0 %v5567
        %5872 = vmatpush.msra.mxu0 %v5559
        %5873 = vmatpush.msra.mxu0 %v5551
        %5874 = vmatpush.msra.mxu0 %v5543
        %5875 = vmatmul.f32.gmra.mxu0 %v1973
        %v5876 = vpop.f32.mrf.mxu0
        %v5877 = vadd.f32 %v5668, %v5876
        %5878 = vmatmul.f32.gmra.mxu0 %v1974
        %v5879 = vpop.f32.mrf.mxu0
        %v5880 = vadd.f32 %v5673, %v5879
        %5881 = vmatmul.f32.gmra.mxu0 %v1975
        %v5882 = vpop.f32.mrf.mxu0
        %v5883 = vadd.f32 %v5678, %v5882
        %5884 = vmatmul.f32.gmra.mxu0 %v1976
        %v5885 = vpop.f32.mrf.mxu0
        %v5886 = vadd.f32 %v5683, %v5885
        %5887 = vdwg.mxu0
        %5888 = vmatpush.msra.mxu0 %v5664
        %5889 = vmatpush.msra.mxu0 %v5656
        %5890 = vmatpush.msra.mxu0 %v5648
        %5891 = vmatpush.msra.mxu0 %v5640
        %5892 = vmatpush.msra.mxu0 %v5632
        %5893 = vmatpush.msra.mxu0 %v5624
        %5894 = vmatpush.msra.mxu0 %v5616
        %5895 = vmatpush.msra.mxu0 %v5608
        %5896 = vmatpush.msra.mxu0 %v5600
        %5897 = vmatpush.msra.mxu0 %v5592
        %5898 = vmatpush.msra.mxu0 %v5584
        %5899 = vmatpush.msra.mxu0 %v5576
        %5900 = vmatpush.msra.mxu0 %v5568
        %5901 = vmatpush.msra.mxu0 %v5560
        %5902 = vmatpush.msra.mxu0 %v5552
        %5903 = vmatpush.msra.mxu0 %v5544
        %5904 = vmatmul.f32.gmra.mxu0 %v1973
        %v5905 = vpop.f32.mrf.mxu0
        %v5906 = vadd.f32 %v5668, %v5905
        %5907 = vmatmul.f32.gmra.mxu0 %v1974
        %v5908 = vpop.f32.mrf.mxu0
        %v5909 = vadd.f32 %v5673, %v5908
        %5910 = vmatmul.f32.gmra.mxu0 %v1975
        %v5911 = vpop.f32.mrf.mxu0
        %v5912 = vadd.f32 %v5678, %v5911
        %5913 = vmatmul.f32.gmra.mxu0 %v1976
        %v5914 = vpop.f32.mrf.mxu0
        %v5915 = vadd.f32 %v5683, %v5914
        %5916 = vdwg.mxu0
        %v5917 = vmax.f32 %v5703, 0.0
        %v5918 = vmax.f32 %v5732, 0.0
        %v5919 = vmax.f32 %v5761, 0.0
        %v5920 = vmax.f32 %v5790, 0.0
        %v5921 = vmax.f32 %v5819, 0.0
        %v5922 = vmax.f32 %v5848, 0.0
        %v5923 = vmax.f32 %v5877, 0.0
        %v5924 = vmax.f32 %v5906, 0.0
        %v5925 = vmax.f32 %v5706, 0.0
        %v5926 = vmax.f32 %v5735, 0.0
        %v5927 = vmax.f32 %v5764, 0.0
        %v5928 = vmax.f32 %v5793, 0.0
        %v5929 = vmax.f32 %v5822, 0.0
        %v5930 = vmax.f32 %v5851, 0.0
        %v5931 = vmax.f32 %v5880, 0.0
        %v5932 = vmax.f32 %v5909, 0.0
        %v5933 = vmax.f32 %v5709, 0.0
        %v5934 = vmax.f32 %v5738, 0.0
        %v5935 = vmax.f32 %v5767, 0.0
        %v5936 = vmax.f32 %v5796, 0.0
        %v5937 = vmax.f32 %v5825, 0.0
        %v5938 = vmax.f32 %v5854, 0.0
        %v5939 = vmax.f32 %v5883, 0.0
        %v5940 = vmax.f32 %v5912, 0.0
        %v5941 = vmax.f32 %v5712, 0.0
        %v5942 = vmax.f32 %v5741, 0.0
        %v5943 = vmax.f32 %v5770, 0.0
        %v5944 = vmax.f32 %v5799, 0.0
        %v5945 = vmax.f32 %v5828, 0.0
        %v5946 = vmax.f32 %v5857, 0.0
        %v5947 = vmax.f32 %v5886, 0.0
        %v5948 = vmax.f32 %v5915, 0.0
        %5950 = vset.pattern.permute.xlu0 0
        %5951 = vperm.xlu0 %5950, %v1998
        %v5952 = vpop.permute.xlu0 %5951
        %vm5954 = vcmask 261120
        %v5956 = vsel %vm5954, %v1977, 0
        %5958 = vmatpush.msra.mxu0 0.0
        %5959 = vmatpush.msra.mxu0 0.0
        %5960 = vmatpush.msra.mxu0 0.0
        %5961 = vmatpush.msra.mxu0 0.0
        %5962 = vmatpush.msra.mxu0 0.0
        %5963 = vmatpush.msra.mxu0 0.0
        %5964 = vmatpush.msra.mxu0 0.0
        %5965 = vmatpush.msra.mxu0 0.0
        %5966 = vmatpush.msra.mxu0 0.0
        %5967 = vmatpush.msra.mxu0 0.0
        %5968 = vmatpush.msra.mxu0 0.0
        %5969 = vmatpush.msra.mxu0 0.0
        %5970 = vmatpush.msra.mxu0 %v5941
        %5971 = vmatpush.msra.mxu0 %v5933
        %5972 = vmatpush.msra.mxu0 %v5925
        %5973 = vmatpush.msra.mxu0 %v5917
        %5974 = vmatmul.f32.gmra.mxu0 %v5956
        %v5975 = vpop.f32.mrf.mxu0
        %v5976 = vadd.f32 %v5952, %v5975
        %5977 = vdwg.mxu0
        %5978 = vmatpush.msra.mxu0 0.0
        %5979 = vmatpush.msra.mxu0 0.0
        %5980 = vmatpush.msra.mxu0 0.0
        %5981 = vmatpush.msra.mxu0 0.0
        %5982 = vmatpush.msra.mxu0 0.0
        %5983 = vmatpush.msra.mxu0 0.0
        %5984 = vmatpush.msra.mxu0 0.0
        %5985 = vmatpush.msra.mxu0 0.0
        %5986 = vmatpush.msra.mxu0 0.0
        %5987 = vmatpush.msra.mxu0 0.0
        %5988 = vmatpush.msra.mxu0 0.0
        %5989 = vmatpush.msra.mxu0 0.0
        %5990 = vmatpush.msra.mxu0 %v5942
        %5991 = vmatpush.msra.mxu0 %v5934
        %5992 = vmatpush.msra.mxu0 %v5926
        %5993 = vmatpush.msra.mxu0 %v5918
        %5994 = vmatmul.f32.gmra.mxu0 %v5956
        %v5995 = vpop.f32.mrf.mxu0
        %v5996 = vadd.f32 %v5952, %v5995
        %5997 = vdwg.mxu0
        %5998 = vmatpush.msra.mxu0 0.0
        %5999 = vmatpush.msra.mxu0 0.0
        %6000 = vmatpush.msra.mxu0 0.0
        %6001 = vmatpush.msra.mxu0 0.0
        %6002 = vmatpush.msra.mxu0 0.0
        %6003 = vmatpush.msra.mxu0 0.0
        %6004 = vmatpush.msra.mxu0 0.0
        %6005 = vmatpush.msra.mxu0 0.0
        %6006 = vmatpush.msra.mxu0 0.0
        %6007 = vmatpush.msra.mxu0 0.0
        %6008 = vmatpush.msra.mxu0 0.0
        %6009 = vmatpush.msra.mxu0 0.0
        %6010 = vmatpush.msra.mxu0 %v5943
        %6011 = vmatpush.msra.mxu0 %v5935
        %6012 = vmatpush.msra.mxu0 %v5927
        %6013 = vmatpush.msra.mxu0 %v5919
        %6014 = vmatmul.f32.gmra.mxu0 %v5956
        %v6015 = vpop.f32.mrf.mxu0
        %v6016 = vadd.f32 %v5952, %v6015
        %6017 = vdwg.mxu0
        %6018 = vmatpush.msra.mxu0 0.0
        %6019 = vmatpush.msra.mxu0 0.0
        %6020 = vmatpush.msra.mxu0 0.0
        %6021 = vmatpush.msra.mxu0 0.0
        %6022 = vmatpush.msra.mxu0 0.0
        %6023 = vmatpush.msra.mxu0 0.0
        %6024 = vmatpush.msra.mxu0 0.0
        %6025 = vmatpush.msra.mxu0 0.0
        %6026 = vmatpush.msra.mxu0 0.0
        %6027 = vmatpush.msra.mxu0 0.0
        %6028 = vmatpush.msra.mxu0 0.0
        %6029 = vmatpush.msra.mxu0 0.0
        %6030 = vmatpush.msra.mxu0 %v5944
        %6031 = vmatpush.msra.mxu0 %v5936
        %6032 = vmatpush.msra.mxu0 %v5928
        %6033 = vmatpush.msra.mxu0 %v5920
        %6034 = vmatmul.f32.gmra.mxu0 %v5956
        %v6035 = vpop.f32.mrf.mxu0
        %v6036 = vadd.f32 %v5952, %v6035
        %6037 = vdwg.mxu0
        %6038 = vmatpush.msra.mxu0 0.0
        %6039 = vmatpush.msra.mxu0 0.0
        %6040 = vmatpush.msra.mxu0 0.0
        %6041 = vmatpush.msra.mxu0 0.0
        %6042 = vmatpush.msra.mxu0 0.0
        %6043 = vmatpush.msra.mxu0 0.0
        %6044 = vmatpush.msra.mxu0 0.0
        %6045 = vmatpush.msra.mxu0 0.0
        %6046 = vmatpush.msra.mxu0 0.0
        %6047 = vmatpush.msra.mxu0 0.0
        %6048 = vmatpush.msra.mxu0 0.0
        %6049 = vmatpush.msra.mxu0 0.0
        %6050 = vmatpush.msra.mxu0 %v5945
        %6051 = vmatpush.msra.mxu0 %v5937
        %6052 = vmatpush.msra.mxu0 %v5929
        %6053 = vmatpush.msra.mxu0 %v5921
        %6054 = vmatmul.f32.gmra.mxu0 %v5956
        %v6055 = vpop.f32.mrf.mxu0
        %v6056 = vadd.f32 %v5952, %v6055
        %6057 = vdwg.mxu0
        %6058 = vmatpush.msra.mxu0 0.0
        %6059 = vmatpush.msra.mxu0 0.0
        %6060 = vmatpush.msra.mxu0 0.0
        %6061 = vmatpush.msra.mxu0 0.0
        %6062 = vmatpush.msra.mxu0 0.0
        %6063 = vmatpush.msra.mxu0 0.0
        %6064 = vmatpush.msra.mxu0 0.0
        %6065 = vmatpush.msra.mxu0 0.0
        %6066 = vmatpush.msra.mxu0 0.0
        %6067 = vmatpush.msra.mxu0 0.0
        %6068 = vmatpush.msra.mxu0 0.0
        %6069 = vmatpush.msra.mxu0 0.0
        %6070 = vmatpush.msra.mxu0 %v5946
        %6071 = vmatpush.msra.mxu0 %v5938
        %6072 = vmatpush.msra.mxu0 %v5930
        %6073 = vmatpush.msra.mxu0 %v5922
        %6074 = vmatmul.f32.gmra.mxu0 %v5956
        %v6075 = vpop.f32.mrf.mxu0
        %v6076 = vadd.f32 %v5952, %v6075
        %6077 = vdwg.mxu0
        %6078 = vmatpush.msra.mxu0 0.0
        %6079 = vmatpush.msra.mxu0 0.0
        %6080 = vmatpush.msra.mxu0 0.0
        %6081 = vmatpush.msra.mxu0 0.0
        %6082 = vmatpush.msra.mxu0 0.0
        %6083 = vmatpush.msra.mxu0 0.0
        %6084 = vmatpush.msra.mxu0 0.0
        %6085 = vmatpush.msra.mxu0 0.0
        %6086 = vmatpush.msra.mxu0 0.0
        %6087 = vmatpush.msra.mxu0 0.0
        %6088 = vmatpush.msra.mxu0 0.0
        %6089 = vmatpush.msra.mxu0 0.0
        %6090 = vmatpush.msra.mxu0 %v5947
        %6091 = vmatpush.msra.mxu0 %v5939
        %6092 = vmatpush.msra.mxu0 %v5931
        %6093 = vmatpush.msra.mxu0 %v5923
        %6094 = vmatmul.f32.gmra.mxu0 %v5956
        %v6095 = vpop.f32.mrf.mxu0
        %v6096 = vadd.f32 %v5952, %v6095
        %6097 = vdwg.mxu0
        %6098 = vmatpush.msra.mxu0 0.0
        %6099 = vmatpush.msra.mxu0 0.0
        %6100 = vmatpush.msra.mxu0 0.0
        %6101 = vmatpush.msra.mxu0 0.0
        %6102 = vmatpush.msra.mxu0 0.0
        %6103 = vmatpush.msra.mxu0 0.0
        %6104 = vmatpush.msra.mxu0 0.0
        %6105 = vmatpush.msra.mxu0 0.0
        %6106 = vmatpush.msra.mxu0 0.0
        %6107 = vmatpush.msra.mxu0 0.0
        %6108 = vmatpush.msra.mxu0 0.0
        %6109 = vmatpush.msra.mxu0 0.0
        %6110 = vmatpush.msra.mxu0 %v5948
        %6111 = vmatpush.msra.mxu0 %v5940
        %6112 = vmatpush.msra.mxu0 %v5932
        %6113 = vmatpush.msra.mxu0 %v5924
        %6114 = vmatmul.f32.gmra.mxu0 %v5956
        %v6115 = vpop.f32.mrf.mxu0
        %v6116 = vadd.f32 %v5952, %v6115
        %6117 = vdwg.mxu0
        %v6118 = vmax.f32 %v5976, 0.0
        %v6119 = vmax.f32 %v5996, 0.0
        %v6120 = vmax.f32 %v6016, 0.0
        %v6121 = vmax.f32 %v6036, 0.0
        %v6122 = vmax.f32 %v6056, 0.0
        %v6123 = vmax.f32 %v6076, 0.0
        %v6124 = vmax.f32 %v6096, 0.0
        %v6125 = vmax.f32 %v6116, 0.0
        %6127 = vset.pattern.permute.xlu0 0
        %6128 = vperm.xlu0 %6127, %v1999
        %v6129 = vpop.permute.xlu0 %6128
        %v6131 = vmul.f32 %v6118, %v6129
        %v6132 = vmul.f32 %v6119, %v6129
        %v6133 = vmul.f32 %v6120, %v6129
        %v6134 = vmul.f32 %v6121, %v6129
        %v6135 = vmul.f32 %v6122, %v6129
        %v6136 = vmul.f32 %v6123, %v6129
        %v6137 = vmul.f32 %v6124, %v6129
        %v6138 = vmul.f32 %v6125, %v6129
        %v6139 = vrot.slane %v6131, 4
        %v6140 = vadd.f32 %v6131, %v6139
        %v6141 = vrot.slane %v6140, 2
        %v6142 = vadd.f32 %v6140, %v6141
        %v6143 = vrot.slane %v6142, 1
        %v6144 = vadd.f32 %v6142, %v6143
        %v6145 = vrot.slane %v6132, 4
        %v6146 = vadd.f32 %v6132, %v6145
        %v6147 = vrot.slane %v6146, 2
        %v6148 = vadd.f32 %v6146, %v6147
        %v6149 = vrot.slane %v6148, 1
        %v6150 = vadd.f32 %v6148, %v6149
        %v6151 = vrot.slane %v6133, 4
        %v6152 = vadd.f32 %v6133, %v6151
        %v6153 = vrot.slane %v6152, 2
        %v6154 = vadd.f32 %v6152, %v6153
        %v6155 = vrot.slane %v6154, 1
        %v6156 = vadd.f32 %v6154, %v6155
        %v6157 = vrot.slane %v6134, 4
        %v6158 = vadd.f32 %v6134, %v6157
        %v6159 = vrot.slane %v6158, 2
        %v6160 = vadd.f32 %v6158, %v6159
        %v6161 = vrot.slane %v6160, 1
        %v6162 = vadd.f32 %v6160, %v6161
        %v6163 = vrot.slane %v6135, 4
        %v6164 = vadd.f32 %v6135, %v6163
        %v6165 = vrot.slane %v6164, 2
        %v6166 = vadd.f32 %v6164, %v6165
        %v6167 = vrot.slane %v6166, 1
        %v6168 = vadd.f32 %v6166, %v6167
        %v6169 = vrot.slane %v6136, 4
        %v6170 = vadd.f32 %v6136, %v6169
        %v6171 = vrot.slane %v6170, 2
        %v6172 = vadd.f32 %v6170, %v6171
        %v6173 = vrot.slane %v6172, 1
        %v6174 = vadd.f32 %v6172, %v6173
        %v6175 = vrot.slane %v6137, 4
        %v6176 = vadd.f32 %v6137, %v6175
        %v6177 = vrot.slane %v6176, 2
        %v6178 = vadd.f32 %v6176, %v6177
        %v6179 = vrot.slane %v6178, 1
        %v6180 = vadd.f32 %v6178, %v6179
        %v6181 = vrot.slane %v6138, 4
        %v6182 = vadd.f32 %v6138, %v6181
        %v6183 = vrot.slane %v6182, 2
        %v6184 = vadd.f32 %v6182, %v6183
        %v6185 = vrot.slane %v6184, 1
        %v6186 = vadd.f32 %v6184, %v6185
        %v6187 = vstv %s2000
        %v6188 = vadd.f32 %v6144, %v6187
        %v6189 = vadd.f32 %v6150, %v6187
        %v6190 = vadd.f32 %v6156, %v6187
        %v6191 = vadd.f32 %v6162, %v6187
        %v6192 = vadd.f32 %v6168, %v6187
        %v6193 = vadd.f32 %v6174, %v6187
        %v6194 = vadd.f32 %v6180, %v6187
        %v6195 = vadd.f32 %v6186, %v6187
        %v6196 = vmax.f32 %v6188, 0.0
        %v6197 = vmax.f32 %v6189, 0.0
        %v6198 = vmax.f32 %v6190, 0.0
        %v6199 = vmax.f32 %v6191, 0.0
        %v6200 = vmax.f32 %v6192, 0.0
        %v6201 = vmax.f32 %v6193, 0.0
        %v6202 = vmax.f32 %v6194, 0.0
        %v6203 = vmax.f32 %v6195, 0.0
        %v6204 = vld [vmem:[#allocation10] sm:$0xff]
        %v6206 = vperm.slane %v6204, 0
        %v6207 = vperm.slane %v6204, 1
        %v6208 = vperm.slane %v6204, 2
        %v6209 = vperm.slane %v6204, 3
        %v6210 = vperm.slane %v6204, 4
        %v6211 = vperm.slane %v6204, 5
        %v6212 = vperm.slane %v6204, 6
        %v6213 = vperm.slane %v6204, 7
        %v6222 = vmul.f32 %v6196, %v6206
        %v6223 = vmul.f32 %v6197, %v6207
        %v6224 = vmul.f32 %v6198, %v6208
        %v6225 = vmul.f32 %v6199, %v6209
        %v6226 = vmul.f32 %v6200, %v6210
        %v6227 = vmul.f32 %v6201, %v6211
        %v6228 = vmul.f32 %v6202, %v6212
        %v6229 = vmul.f32 %v6203, %v6213
        %vm6230 = vcmask 1040384
        %v6231 = vsel %vm6230, %v6222, 0.0
        %v6232 = vsel %vm6230, %v6223, 0.0
        %v6233 = vadd.f32 %v6231, %v6232
        %v6234 = vsel %vm6230, %v6224, 0.0
        %v6235 = vadd.f32 %v6233, %v6234
        %v6236 = vsel %vm6230, %v6225, 0.0
        %v6237 = vadd.f32 %v6235, %v6236
        %v6238 = vsel %vm6230, %v6226, 0.0
        %v6239 = vadd.f32 %v6237, %v6238
        %v6240 = vsel %vm6230, %v6227, 0.0
        %v6241 = vadd.f32 %v6239, %v6240
        %v6242 = vsel %vm6230, %v6228, 0.0
        %v6243 = vadd.f32 %v6241, %v6242
        %v6244 = vsel %vm6230, %v6229, 0.0
        %v6245 = vadd.f32 %v6243, %v6244
        %6246 = vadd.xlane.f32.xlu0 %v6245
        %v6247 = vpop.xlane.xlu0 %6246
        %s6248 = sld [smem:[#allocation11 + $0x1]]
        %v6249 = vstv %s6248
        %v6250 = vadd.f32 %v6247, %v6249
        %v6251 = vmax.f32 %v6250, 0.0
        %vm6252 = vcmask 0
        %6253 = vst.msk [vmem:[%s372] sm:$0x1] %vm6252, %v6251
        %p6254 = scmp.lt.s32.totalorder %s24, 1
        %s6255 = scalar_select %p6254, %s24, 1
        %s6256 = scalar_lea.vmem %s7, %s6255
        // Predicated region
        $region73: #{tpu_custom_call.1} parent=47 // pred_check
          %p6257 = pneg %p194
        $region74: #{tpu_custom_call.1} parent=47 // pred_check_branch
          %6259 = sbr.rel (%p6257) target = $region76
        $region75: #{tpu_custom_call.1} parent=47 // pred_region
          _
        $region76: #{tpu_custom_call.1} parent=47 // pred_fallthru
          _
      $region48: #{tpu_custom_call.1} parent=5 // pred_fallthru
        _
      %p6260 = scmp.le.s32.totalorder 2, %s19
      // Predicated region
      $region77: #{tpu_custom_call.1} parent=5 // pred_check
        %p6261 = pneg %p6260
      $region78: #{tpu_custom_call.1} parent=5 // pred_check_branch
        %6263 = sbr.rel (%p6261) target = $region80
      $region79: #{tpu_custom_call.1} parent=5 // pred_region
        %s6264 = ssub.s32 %s19, 2
        // Predicated region
        $region81: #{tpu_custom_call.1} parent=79 // pred_check
          %p6265 = pneg %p200
        $region82: #{tpu_custom_call.1} parent=79 // pred_check_branch
          %6267 = sbr.rel (%p6265) target = $region84
        $region83: #{tpu_custom_call.1} parent=79 // pred_region
          %p6268 = scmp.lt.s32.totalorder %s25, 1
          %s6269 = scalar_select %p6268, %s25, 1
          %s6270 = scalar_lea.vmem %s7, %s6269
        $region84: #{tpu_custom_call.1} parent=79 // pred_fallthru
          _
      $region80: #{tpu_custom_call.1} parent=5 // pred_fallthru
        _
    $region6: #{tpu_custom_call.1} parent=1 // loop_footer
      %s23 = sadd.s32 1, %s19
    $region7: #{tpu_custom_call.1} parent=1 // loop_footer_branch
      %18 = sbr.rel target = $region3
    $region8: #{tpu_custom_call.1} parent=1 // loop_exit
      _
    %6271 = vsyncpa [#allocation3], 1
    %s6272 = scalar_lea.sflag [#allocation3], 1
    %6273 = vsyncpa %s6272, 1
    %6274 = vsyncpa [#allocation6], 1
    %6275 = vsyncpa [#allocation9], 1
    %6276 = vsyncpa [#allocation4], 1
    %s6277 = scalar_lea.sflag [#allocation4], 1
    %6278 = vsyncpa %s6277, 1

</llo_original>
